<compile_context>
chip_gen: v7x
topology: tpu7x:2x2x1
jax: 0.10.0
libtpu: 0.0.40
codegen_flags: <defaults>
</compile_context>

<pallas_src>
import functools

import jax
import jax.numpy as jnp
from jax.experimental import pallas as pl
from jax.experimental.pallas import tpu as pltpu

NUM_ITERATIONS = 3
EPSILON = 1e-12


def _digitcaps_kernel(w_ref, x_ref, o_ref, *, num_iterations):
    # w_ref: (D, IN, OUT, P)  -- whole tensor, VMEM-resident (single buffer)
    # x_ref: (IN, B_TILE, P)
    # o_ref: (B_TILE, D*OUT)  -- per-d 16-lane strips, static-slice stores
    d_caps, in_dim, out_dim, p_caps = w_ref.shape
    cdt = w_ref.dtype  # compute dtype of the routing multiplies (f32 / bf16)

    for d in range(d_caps):  # D is tiny (1 or n_classes): fully unrolled
        # u_hat[b, o, p] = sum_i W[d, i, o, p] * x[b, i, p]
        # Multiply in the compute dtype; accumulate the IN contraction in f32
        # (removes the 8-term bf16 accumulation error in the bf16 path).
        u32 = (w_ref[d, 0][None, :, :] *
               x_ref[0][:, None, :]).astype(jnp.float32)
        for i in range(1, in_dim):
            u32 = u32 + (w_ref[d, i][None, :, :] *
                         x_ref[i][:, None, :]).astype(jnp.float32)

        # Iteration-0 softmax of all-zero logits is exactly uniform 1/P: use
        # the f32 accumulator directly and skip the exp pass entirely.
        s0 = jnp.sum(u32, axis=-1) * (1.0 / p_caps)            # (BT, OUT) f32
        u_hat = u32.astype(cdt)                                # routing copy

        b_logits = None                                        # (BT, P) f32
        v = None
        for it in range(num_iterations):
            if it == 0:
                s = s0
            else:
                m = jnp.max(b_logits, axis=-1, keepdims=True)  # XLU
                e32 = jnp.exp(b_logits - m)                    # (BT, P) EUP
                z = jnp.sum(e32, axis=-1, keepdims=True)       # (BT, 1)
                s = jnp.sum(e32.astype(cdt)[:, None, :] * u_hat,
                            axis=-1, dtype=jnp.float32)        # (BT, OUT)
                s = s * pl.reciprocal(z, approx=True)          # EUP
            # Squash over the output-capsule dim, in f32 (EPSILON underflows
            # in bf16); rsqrt + approx reciprocal land on the idle EUP slot.
            sq = jnp.sum(s * s, axis=-1, keepdims=True)        # (BT, 1)
            inv_safe = jax.lax.rsqrt(sq + EPSILON)
            scale = sq * pl.reciprocal(1.0 + sq, approx=True)
            v = (scale * inv_safe) * s                         # (BT, OUT) f32
            if it < num_iterations - 1:
                # b[b, p] += sum_o v[b, o] * u_hat[b, o, p]
                dlog = jnp.sum(v.astype(cdt)[:, :, None] * u_hat,
                               axis=1, dtype=jnp.float32)      # (BT, P)
                b_logits = dlog if b_logits is None else b_logits + dlog

        # Direct 16-lane strip store (static slice); no epilogue concat.
        o_ref[:, d * out_dim:(d + 1) * out_dim] = v.astype(o_ref.dtype)


def prepare_digitcaps_weights(W, compute_dtype=jnp.float32):
    """One-time re-layout of the parameter (hoisted out of the forward path).

    W : (D, P, OUT, IN)  (PyTorch layout)  ->  (D, IN, OUT, P)
    compute_dtype: keep f32 on v5e (no bf16 VPU/EUP); bf16 is for v6e/v7x.
    At real CapsNet scale prefer bf16 here so the single-buffered W stays a
    small fraction of v7x's 64 MiB VMEM.
    """
    return jnp.transpose(W, (0, 3, 2, 1)).astype(compute_dtype)


def _vmem_limit_bytes(d_caps, in_dim, out_dim, p_caps, b_tile, compute_dtype):
    """Right-sized scoped-VMEM request: actual footprint + margin, not 64 MiB."""
    csize = jnp.dtype(compute_dtype).itemsize
    w_bytes = d_caps * in_dim * out_dim * p_caps * csize       # single-buffered
    x_block = in_dim * b_tile * p_caps * csize                 # double-buffered
    o_block = b_tile * d_caps * out_dim * 4                    # double-buffered
    slab_f32 = b_tile * out_dim * p_caps * 4                   # IN accumulator
    slab_cdt = b_tile * out_dim * p_caps * csize               # routing copy
    live = w_bytes + 2 * x_block + 2 * o_block + 2 * (slab_f32 + slab_cdt)
    budget = int(live * 1.5) + (2 << 20)                       # compiler margin
    return max(8 << 20, min(budget, 48 << 20))


def digit_caps_forward(W_t, x, *, b_tile=8, num_iterations=NUM_ITERATIONS):
    """DigitCaps dynamic routing forward.

    W_t : (D, IN, OUT, P)  -- from prepare_digitcaps_weights (called once)
    x   : (B, P, IN)       -- primary-capsule outputs (PyTorch layout)
    returns (B, D, OUT) float32

    Grid tuning: single-TC chips (v5e/v6e) want few large steps (b_tile=B or
    the largest tile fitting scoped VMEM); v7x wants an even >=2-step parallel
    grid so both TensorCores get balanced work.
    """
    d_caps, in_dim, out_dim, p_caps = W_t.shape
    B = x.shape[0]
    cdt = W_t.dtype

    # Per-call re-layout of x only (cheap); pad batch to a tile multiple.
    x_t = jnp.transpose(x, (2, 0, 1)).astype(cdt)              # (IN, B, P)
    grid_b = pl.cdiv(B, b_tile)
    b_pad = grid_b * b_tile
    if b_pad != B:
        x_t = jnp.pad(x_t, ((0, 0), (0, b_pad - B), (0, 0)))

    kernel = functools.partial(_digitcaps_kernel, num_iterations=num_iterations)
    out = pl.pallas_call(
        kernel,
        out_shape=jax.ShapeDtypeStruct((b_pad, d_caps * out_dim), jnp.float32),
        grid=(grid_b,),
        in_specs=[
            # Whole weight tensor resident in VMEM for the kernel's lifetime:
            # constant across the grid, so pipelined double-buffering would
            # only burn VMEM.
            pl.BlockSpec(memory_space=pltpu.MemorySpace.VMEM),
            pl.BlockSpec((in_dim, b_tile, p_caps), lambda b: (0, b, 0)),
        ],
        out_specs=pl.BlockSpec((b_tile, d_caps * out_dim), lambda b: (b, 0)),
        compiler_params=pltpu.CompilerParams(
            dimension_semantics=("parallel",),
            vmem_limit_bytes=_vmem_limit_bytes(
                d_caps, in_dim, out_dim, p_caps, b_tile, cdt),
        ),
    )(W_t, x_t)

    return out[:B].reshape(B, d_caps, out_dim)


# ---------------- pure-JAX reference (mirrors the PyTorch forward) ----------
def _squash_ref(t, axis=-1, epsilon=EPSILON):
    sq = jnp.sum(t * t, axis=axis, keepdims=True)
    safe = jnp.sqrt(sq + epsilon)
    return (sq / (1.0 + sq)) * (t / safe)


def digit_caps_reference(W, x, num_iterations=NUM_ITERATIONS):
    # u_hat = squeeze(matmul(W, x[:, None, :, :, None]), -1) -> (B, D, P, OUT)
    u_hat = jnp.einsum('dpoi,bpi->bdpo', W, x)
    B, D, P, OUT = u_hat.shape
    b = jnp.zeros((B, D, P), u_hat.dtype)
    for i in range(num_iterations):
        c = jax.nn.softmax(b, axis=-1)
        s = jnp.sum(c[..., None] * u_hat, axis=-2, keepdims=True)  # (B,D,1,OUT)
        v = _squash_ref(s)
        if i == num_iterations - 1:
            return jnp.squeeze(v, axis=-2)                          # (B, D, OUT)
        b = b + jnp.sum(v * u_hat, axis=-1)


if __name__ == "__main__":
    # Small shapes consistent with netD: aux DigitCaps head (n_classes=3) and
    # adv head (num_digit_cap=1), with a scaled-down primary-capsule count.
    B, P, OUT, IN = 16, 256, 16, 8
    D_AUX, D_ADV = 3, 1

    key = jax.random.PRNGKey(0)
    kwa, kwv, kx = jax.random.split(key, 3)
    W_aux = 0.01 * jax.random.normal(kwa, (D_AUX, P, OUT, IN), dtype=jnp.float32)
    W_adv = 0.01 * jax.random.normal(kwv, (D_ADV, P, OUT, IN), dtype=jnp.float32)
    x = jax.random.normal(kx, (B, P, IN), dtype=jnp.float32)

    ref_aux = digit_caps_reference(W_aux, x)
    ref_adv = digit_caps_reference(W_adv, x)

    # f32 aux head: b_tile=8 -> even 2-step parallel grid (v7x: one per TC).
    Wt_aux = prepare_digitcaps_weights(W_aux)     # hoisted, once per parameter
    aux_out = jax.block_until_ready(digit_caps_forward(Wt_aux, x, b_tile=8))
    assert aux_out.shape == (B, D_AUX, OUT), aux_out.shape
    assert jnp.allclose(aux_out, ref_aux, rtol=2e-2, atol=1e-7), (
        float(jnp.max(jnp.abs(aux_out - ref_aux))))

    # f32 adv head (num_digit_cap=1): one large step (v5e/v6e style).
    Wt_adv = prepare_digitcaps_weights(W_adv)
    adv_out = jax.block_until_ready(digit_caps_forward(Wt_adv, x, b_tile=B))
    assert adv_out.shape == (B, D_ADV, OUT), adv_out.shape
    assert jnp.allclose(adv_out, ref_adv, rtol=2e-2, atol=1e-7), (
        float(jnp.max(jnp.abs(adv_out - ref_adv))))

    # netD epilogue (plain XLA): capsule lengths -> validity / aux logits.
    validity = jnp.sqrt(jnp.sum(adv_out ** 2, axis=2))
    aux_len = jnp.sqrt(jnp.sum(aux_out ** 2, axis=2))
    assert validity.shape == (B, D_ADV) and aux_len.shape == (B, D_AUX)

    # bf16 VALU path (intended for v6e/v7x only -- v5e has no bf16 VPU/EUP):
    # multiplies in bf16, IN-accumulation + all reductions in f32, squash f32.
    Wt_aux_bf16 = prepare_digitcaps_weights(W_aux, compute_dtype=jnp.bfloat16)
    aux_bf16 = jax.block_until_ready(
        digit_caps_forward(Wt_aux_bf16, x, b_tile=16))
    assert aux_bf16.shape == (B, D_AUX, OUT), aux_bf16.shape
    assert bool(jnp.all(jnp.isfinite(aux_bf16)))
    assert jnp.allclose(aux_bf16, ref_aux, rtol=8e-2, atol=1e-6), (
        float(jnp.max(jnp.abs(aux_bf16 - ref_aux))))

    print("KERNEL_OK")
</pallas_src>

<mosaic_0001>
module attributes {stable_mosaic.version = 11 : i64} {
  func.func @_digitcaps_kernel(%arg0: i32, %arg1: memref<3x8x16x256xf32, #tpu.memory_space<vmem>>, %arg2: memref<8x8x256xf32, #tpu.memory_space<vmem>>, %arg3: memref<8x48xf32, #tpu.memory_space<vmem>>) attributes {dimension_semantics = [#tpu.dimension_semantics<parallel>], iteration_bounds = array<i64: 2>, scalar_prefetch = 0 : i64, scratch_operands = 0 : i64, tpu.core_type = #tpu.core_type<tc>, window_params = [{pipeline_mode = #tpu.pipeline_mode<synchronous>, transform_indices = @transform_0, window_bounds = array<i64: 3, 8, 16, 256>}, {transform_indices = @transform_1, window_bounds = array<i64: 8, 8, 256>}, {transform_indices = @transform_2, window_bounds = array<i64: 8, 48>}]} {
    %c0 = arith.constant 0 : index
    %c0_0 = arith.constant 0 : index
    %c0_1 = arith.constant 0 : index
    %c0_2 = arith.constant 0 : index
    %0 = vector.load %arg1[%c0, %c0_0, %c0_1, %c0_2] : memref<3x8x16x256xf32, #tpu.memory_space<vmem>>, vector<1x1x16x256xf32>
    %1 = vector.shape_cast %0 : vector<1x1x16x256xf32> to vector<16x256xf32>
    %2 = vector.shape_cast %1 : vector<16x256xf32> to vector<1x16x256xf32>
    %c0_3 = arith.constant 0 : index
    %c0_4 = arith.constant 0 : index
    %c0_5 = arith.constant 0 : index
    %3 = vector.load %arg2[%c0_3, %c0_4, %c0_5] : memref<8x8x256xf32, #tpu.memory_space<vmem>>, vector<1x8x256xf32>
    %4 = vector.shape_cast %3 : vector<1x8x256xf32> to vector<8x256xf32>
    %5 = vector.shape_cast %4 : vector<8x256xf32> to vector<8x1x256xf32>
    %6 = vector.broadcast %2 : vector<1x16x256xf32> to vector<8x16x256xf32>
    %7 = vector.broadcast %5 : vector<8x1x256xf32> to vector<8x16x256xf32>
    %8 = arith.mulf %6, %7 : vector<8x16x256xf32>
    %c0_6 = arith.constant 0 : index
    %c1 = arith.constant 1 : index
    %c0_7 = arith.constant 0 : index
    %c0_8 = arith.constant 0 : index
    %9 = vector.load %arg1[%c0_6, %c1, %c0_7, %c0_8] : memref<3x8x16x256xf32, #tpu.memory_space<vmem>>, vector<1x1x16x256xf32>
    %10 = vector.shape_cast %9 : vector<1x1x16x256xf32> to vector<16x256xf32>
    %11 = vector.shape_cast %10 : vector<16x256xf32> to vector<1x16x256xf32>
    %c1_9 = arith.constant 1 : index
    %c0_10 = arith.constant 0 : index
    %c0_11 = arith.constant 0 : index
    %12 = vector.load %arg2[%c1_9, %c0_10, %c0_11] : memref<8x8x256xf32, #tpu.memory_space<vmem>>, vector<1x8x256xf32>
    %13 = vector.shape_cast %12 : vector<1x8x256xf32> to vector<8x256xf32>
    %14 = vector.shape_cast %13 : vector<8x256xf32> to vector<8x1x256xf32>
    %15 = vector.broadcast %11 : vector<1x16x256xf32> to vector<8x16x256xf32>
    %16 = vector.broadcast %14 : vector<8x1x256xf32> to vector<8x16x256xf32>
    %17 = arith.mulf %15, %16 : vector<8x16x256xf32>
    %18 = arith.addf %8, %17 : vector<8x16x256xf32>
    %c0_12 = arith.constant 0 : index
    %c2 = arith.constant 2 : index
    %c0_13 = arith.constant 0 : index
    %c0_14 = arith.constant 0 : index
    %19 = vector.load %arg1[%c0_12, %c2, %c0_13, %c0_14] : memref<3x8x16x256xf32, #tpu.memory_space<vmem>>, vector<1x1x16x256xf32>
    %20 = vector.shape_cast %19 : vector<1x1x16x256xf32> to vector<16x256xf32>
    %21 = vector.shape_cast %20 : vector<16x256xf32> to vector<1x16x256xf32>
    %c2_15 = arith.constant 2 : index
    %c0_16 = arith.constant 0 : index
    %c0_17 = arith.constant 0 : index
    %22 = vector.load %arg2[%c2_15, %c0_16, %c0_17] : memref<8x8x256xf32, #tpu.memory_space<vmem>>, vector<1x8x256xf32>
    %23 = vector.shape_cast %22 : vector<1x8x256xf32> to vector<8x256xf32>
    %24 = vector.shape_cast %23 : vector<8x256xf32> to vector<8x1x256xf32>
    %25 = vector.broadcast %21 : vector<1x16x256xf32> to vector<8x16x256xf32>
    %26 = vector.broadcast %24 : vector<8x1x256xf32> to vector<8x16x256xf32>
    %27 = arith.mulf %25, %26 : vector<8x16x256xf32>
    %28 = arith.addf %18, %27 : vector<8x16x256xf32>
    %c0_18 = arith.constant 0 : index
    %c3 = arith.constant 3 : index
    %c0_19 = arith.constant 0 : index
    %c0_20 = arith.constant 0 : index
    %29 = vector.load %arg1[%c0_18, %c3, %c0_19, %c0_20] : memref<3x8x16x256xf32, #tpu.memory_space<vmem>>, vector<1x1x16x256xf32>
    %30 = vector.shape_cast %29 : vector<1x1x16x256xf32> to vector<16x256xf32>
    %31 = vector.shape_cast %30 : vector<16x256xf32> to vector<1x16x256xf32>
    %c3_21 = arith.constant 3 : index
    %c0_22 = arith.constant 0 : index
    %c0_23 = arith.constant 0 : index
    %32 = vector.load %arg2[%c3_21, %c0_22, %c0_23] : memref<8x8x256xf32, #tpu.memory_space<vmem>>, vector<1x8x256xf32>
    %33 = vector.shape_cast %32 : vector<1x8x256xf32> to vector<8x256xf32>
    %34 = vector.shape_cast %33 : vector<8x256xf32> to vector<8x1x256xf32>
    %35 = vector.broadcast %31 : vector<1x16x256xf32> to vector<8x16x256xf32>
    %36 = vector.broadcast %34 : vector<8x1x256xf32> to vector<8x16x256xf32>
    %37 = arith.mulf %35, %36 : vector<8x16x256xf32>
    %38 = arith.addf %28, %37 : vector<8x16x256xf32>
    %c0_24 = arith.constant 0 : index
    %c4 = arith.constant 4 : index
    %c0_25 = arith.constant 0 : index
    %c0_26 = arith.constant 0 : index
    %39 = vector.load %arg1[%c0_24, %c4, %c0_25, %c0_26] : memref<3x8x16x256xf32, #tpu.memory_space<vmem>>, vector<1x1x16x256xf32>
    %40 = vector.shape_cast %39 : vector<1x1x16x256xf32> to vector<16x256xf32>
    %41 = vector.shape_cast %40 : vector<16x256xf32> to vector<1x16x256xf32>
    %c4_27 = arith.constant 4 : index
    %c0_28 = arith.constant 0 : index
    %c0_29 = arith.constant 0 : index
    %42 = vector.load %arg2[%c4_27, %c0_28, %c0_29] : memref<8x8x256xf32, #tpu.memory_space<vmem>>, vector<1x8x256xf32>
    %43 = vector.shape_cast %42 : vector<1x8x256xf32> to vector<8x256xf32>
    %44 = vector.shape_cast %43 : vector<8x256xf32> to vector<8x1x256xf32>
    %45 = vector.broadcast %41 : vector<1x16x256xf32> to vector<8x16x256xf32>
    %46 = vector.broadcast %44 : vector<8x1x256xf32> to vector<8x16x256xf32>
    %47 = arith.mulf %45, %46 : vector<8x16x256xf32>
    %48 = arith.addf %38, %47 : vector<8x16x256xf32>
    %c0_30 = arith.constant 0 : index
    %c5 = arith.constant 5 : index
    %c0_31 = arith.constant 0 : index
    %c0_32 = arith.constant 0 : index
    %49 = vector.load %arg1[%c0_30, %c5, %c0_31, %c0_32] : memref<3x8x16x256xf32, #tpu.memory_space<vmem>>, vector<1x1x16x256xf32>
    %50 = vector.shape_cast %49 : vector<1x1x16x256xf32> to vector<16x256xf32>
    %51 = vector.shape_cast %50 : vector<16x256xf32> to vector<1x16x256xf32>
    %c5_33 = arith.constant 5 : index
    %c0_34 = arith.constant 0 : index
    %c0_35 = arith.constant 0 : index
    %52 = vector.load %arg2[%c5_33, %c0_34, %c0_35] : memref<8x8x256xf32, #tpu.memory_space<vmem>>, vector<1x8x256xf32>
    %53 = vector.shape_cast %52 : vector<1x8x256xf32> to vector<8x256xf32>
    %54 = vector.shape_cast %53 : vector<8x256xf32> to vector<8x1x256xf32>
    %55 = vector.broadcast %51 : vector<1x16x256xf32> to vector<8x16x256xf32>
    %56 = vector.broadcast %54 : vector<8x1x256xf32> to vector<8x16x256xf32>
    %57 = arith.mulf %55, %56 : vector<8x16x256xf32>
    %58 = arith.addf %48, %57 : vector<8x16x256xf32>
    %c0_36 = arith.constant 0 : index
    %c6 = arith.constant 6 : index
    %c0_37 = arith.constant 0 : index
    %c0_38 = arith.constant 0 : index
    %59 = vector.load %arg1[%c0_36, %c6, %c0_37, %c0_38] : memref<3x8x16x256xf32, #tpu.memory_space<vmem>>, vector<1x1x16x256xf32>
    %60 = vector.shape_cast %59 : vector<1x1x16x256xf32> to vector<16x256xf32>
    %61 = vector.shape_cast %60 : vector<16x256xf32> to vector<1x16x256xf32>
    %c6_39 = arith.constant 6 : index
    %c0_40 = arith.constant 0 : index
    %c0_41 = arith.constant 0 : index
    %62 = vector.load %arg2[%c6_39, %c0_40, %c0_41] : memref<8x8x256xf32, #tpu.memory_space<vmem>>, vector<1x8x256xf32>
    %63 = vector.shape_cast %62 : vector<1x8x256xf32> to vector<8x256xf32>
    %64 = vector.shape_cast %63 : vector<8x256xf32> to vector<8x1x256xf32>
    %65 = vector.broadcast %61 : vector<1x16x256xf32> to vector<8x16x256xf32>
    %66 = vector.broadcast %64 : vector<8x1x256xf32> to vector<8x16x256xf32>
    %67 = arith.mulf %65, %66 : vector<8x16x256xf32>
    %68 = arith.addf %58, %67 : vector<8x16x256xf32>
    %c0_42 = arith.constant 0 : index
    %c7 = arith.constant 7 : index
    %c0_43 = arith.constant 0 : index
    %c0_44 = arith.constant 0 : index
    %69 = vector.load %arg1[%c0_42, %c7, %c0_43, %c0_44] : memref<3x8x16x256xf32, #tpu.memory_space<vmem>>, vector<1x1x16x256xf32>
    %70 = vector.shape_cast %69 : vector<1x1x16x256xf32> to vector<16x256xf32>
    %71 = vector.shape_cast %70 : vector<16x256xf32> to vector<1x16x256xf32>
    %c7_45 = arith.constant 7 : index
    %c0_46 = arith.constant 0 : index
    %c0_47 = arith.constant 0 : index
    %72 = vector.load %arg2[%c7_45, %c0_46, %c0_47] : memref<8x8x256xf32, #tpu.memory_space<vmem>>, vector<1x8x256xf32>
    %73 = vector.shape_cast %72 : vector<1x8x256xf32> to vector<8x256xf32>
    %74 = vector.shape_cast %73 : vector<8x256xf32> to vector<8x1x256xf32>
    %75 = vector.broadcast %71 : vector<1x16x256xf32> to vector<8x16x256xf32>
    %76 = vector.broadcast %74 : vector<8x1x256xf32> to vector<8x16x256xf32>
    %77 = arith.mulf %75, %76 : vector<8x16x256xf32>
    %78 = arith.addf %68, %77 : vector<8x16x256xf32>
    %cst = arith.constant dense<0.000000e+00> : vector<8x16xf32>
    %79 = vector.multi_reduction <add>, %78, %cst [2] : vector<8x16x256xf32> to vector<8x16xf32>
    %cst_48 = arith.constant 3.906250e-03 : f32
    %80 = vector.broadcast %cst_48 : f32 to vector<8x16xf32>
    %81 = arith.mulf %79, %80 : vector<8x16xf32>
    %82 = arith.mulf %81, %81 : vector<8x16xf32>
    %cst_49 = arith.constant dense<0.000000e+00> : vector<8xf32>
    %83 = vector.multi_reduction <add>, %82, %cst_49 [1] : vector<8x16xf32> to vector<8xf32>
    %84 = vector.shape_cast %83 : vector<8xf32> to vector<8x1xf32>
    %cst_50 = arith.constant 9.99999996E-13 : f32
    %85 = vector.broadcast %cst_50 : f32 to vector<8x1xf32>
    %86 = arith.addf %84, %85 : vector<8x1xf32>
    %87 = math.rsqrt %86 : vector<8x1xf32>
    %cst_51 = arith.constant 1.000000e+00 : f32
    %88 = vector.broadcast %cst_51 : f32 to vector<8x1xf32>
    %89 = arith.addf %88, %84 : vector<8x1xf32>
    %90 = tpu.reciprocal %89 {approx = true} : vector<8x1xf32> -> vector<8x1xf32>
    %91 = arith.mulf %84, %90 : vector<8x1xf32>
    %92 = arith.mulf %91, %87 : vector<8x1xf32>
    %93 = vector.broadcast %92 : vector<8x1xf32> to vector<8x16xf32>
    %94 = arith.mulf %93, %81 : vector<8x16xf32>
    %95 = vector.shape_cast %94 : vector<8x16xf32> to vector<8x16x1xf32>
    %96 = vector.broadcast %95 : vector<8x16x1xf32> to vector<8x16x256xf32>
    %97 = arith.mulf %96, %78 : vector<8x16x256xf32>
    %cst_52 = arith.constant dense<0.000000e+00> : vector<8x256xf32>
    %98 = vector.multi_reduction <add>, %97, %cst_52 [1] : vector<8x16x256xf32> to vector<8x256xf32>
    %cst_53 = arith.constant dense<0xFF800000> : vector<8xf32>
    %99 = vector.multi_reduction <maximumf>, %98, %cst_53 [1] : vector<8x256xf32> to vector<8xf32>
    %100 = vector.shape_cast %99 : vector<8xf32> to vector<8x1xf32>
    %101 = vector.broadcast %100 : vector<8x1xf32> to vector<8x256xf32>
    %102 = arith.subf %98, %101 : vector<8x256xf32>
    %103 = math.exp %102 : vector<8x256xf32>
    %cst_54 = arith.constant dense<0.000000e+00> : vector<8xf32>
    %104 = vector.multi_reduction <add>, %103, %cst_54 [1] : vector<8x256xf32> to vector<8xf32>
    %105 = vector.shape_cast %104 : vector<8xf32> to vector<8x1xf32>
    %106 = vector.shape_cast %103 : vector<8x256xf32> to vector<8x1x256xf32>
    %107 = vector.broadcast %106 : vector<8x1x256xf32> to vector<8x16x256xf32>
    %108 = arith.mulf %107, %78 : vector<8x16x256xf32>
    %cst_55 = arith.constant dense<0.000000e+00> : vector<8x16xf32>
    %109 = vector.multi_reduction <add>, %108, %cst_55 [2] : vector<8x16x256xf32> to vector<8x16xf32>
    %110 = tpu.reciprocal %105 {approx = true} : vector<8x1xf32> -> vector<8x1xf32>
    %111 = vector.broadcast %110 : vector<8x1xf32> to vector<8x16xf32>
    %112 = arith.mulf %109, %111 : vector<8x16xf32>
    %113 = arith.mulf %112, %112 : vector<8x16xf32>
    %cst_56 = arith.constant dense<0.000000e+00> : vector<8xf32>
    %114 = vector.multi_reduction <add>, %113, %cst_56 [1] : vector<8x16xf32> to vector<8xf32>
    %115 = vector.shape_cast %114 : vector<8xf32> to vector<8x1xf32>
    %cst_57 = arith.constant 9.99999996E-13 : f32
    %116 = vector.broadcast %cst_57 : f32 to vector<8x1xf32>
    %117 = arith.addf %115, %116 : vector<8x1xf32>
    %118 = math.rsqrt %117 : vector<8x1xf32>
    %cst_58 = arith.constant 1.000000e+00 : f32
    %119 = vector.broadcast %cst_58 : f32 to vector<8x1xf32>
    %120 = arith.addf %119, %115 : vector<8x1xf32>
    %121 = tpu.reciprocal %120 {approx = true} : vector<8x1xf32> -> vector<8x1xf32>
    %122 = arith.mulf %115, %121 : vector<8x1xf32>
    %123 = arith.mulf %122, %118 : vector<8x1xf32>
    %124 = vector.broadcast %123 : vector<8x1xf32> to vector<8x16xf32>
    %125 = arith.mulf %124, %112 : vector<8x16xf32>
    %126 = vector.shape_cast %125 : vector<8x16xf32> to vector<8x16x1xf32>
    %127 = vector.broadcast %126 : vector<8x16x1xf32> to vector<8x16x256xf32>
    %128 = arith.mulf %127, %78 : vector<8x16x256xf32>
    %cst_59 = arith.constant dense<0.000000e+00> : vector<8x256xf32>
    %129 = vector.multi_reduction <add>, %128, %cst_59 [1] : vector<8x16x256xf32> to vector<8x256xf32>
    %130 = arith.addf %98, %129 : vector<8x256xf32>
    %cst_60 = arith.constant dense<0xFF800000> : vector<8xf32>
    %131 = vector.multi_reduction <maximumf>, %130, %cst_60 [1] : vector<8x256xf32> to vector<8xf32>
    %132 = vector.shape_cast %131 : vector<8xf32> to vector<8x1xf32>
    %133 = vector.broadcast %132 : vector<8x1xf32> to vector<8x256xf32>
    %134 = arith.subf %130, %133 : vector<8x256xf32>
    %135 = math.exp %134 : vector<8x256xf32>
    %cst_61 = arith.constant dense<0.000000e+00> : vector<8xf32>
    %136 = vector.multi_reduction <add>, %135, %cst_61 [1] : vector<8x256xf32> to vector<8xf32>
    %137 = vector.shape_cast %136 : vector<8xf32> to vector<8x1xf32>
    %138 = vector.shape_cast %135 : vector<8x256xf32> to vector<8x1x256xf32>
    %139 = vector.broadcast %138 : vector<8x1x256xf32> to vector<8x16x256xf32>
    %140 = arith.mulf %139, %78 : vector<8x16x256xf32>
    %cst_62 = arith.constant dense<0.000000e+00> : vector<8x16xf32>
    %141 = vector.multi_reduction <add>, %140, %cst_62 [2] : vector<8x16x256xf32> to vector<8x16xf32>
    %142 = tpu.reciprocal %137 {approx = true} : vector<8x1xf32> -> vector<8x1xf32>
    %143 = vector.broadcast %142 : vector<8x1xf32> to vector<8x16xf32>
    %144 = arith.mulf %141, %143 : vector<8x16xf32>
    %145 = arith.mulf %144, %144 : vector<8x16xf32>
    %cst_63 = arith.constant dense<0.000000e+00> : vector<8xf32>
    %146 = vector.multi_reduction <add>, %145, %cst_63 [1] : vector<8x16xf32> to vector<8xf32>
    %147 = vector.shape_cast %146 : vector<8xf32> to vector<8x1xf32>
    %cst_64 = arith.constant 9.99999996E-13 : f32
    %148 = vector.broadcast %cst_64 : f32 to vector<8x1xf32>
    %149 = arith.addf %147, %148 : vector<8x1xf32>
    %150 = math.rsqrt %149 : vector<8x1xf32>
    %cst_65 = arith.constant 1.000000e+00 : f32
    %151 = vector.broadcast %cst_65 : f32 to vector<8x1xf32>
    %152 = arith.addf %151, %147 : vector<8x1xf32>
    %153 = tpu.reciprocal %152 {approx = true} : vector<8x1xf32> -> vector<8x1xf32>
    %154 = arith.mulf %147, %153 : vector<8x1xf32>
    %155 = arith.mulf %154, %150 : vector<8x1xf32>
    %156 = vector.broadcast %155 : vector<8x1xf32> to vector<8x16xf32>
    %157 = arith.mulf %156, %144 : vector<8x16xf32>
    %c0_66 = arith.constant 0 : index
    %c0_67 = arith.constant 0 : index
    %158 = vector.load %arg3[%c0_66, %c0_67] : memref<8x48xf32, #tpu.memory_space<vmem>>, vector<8x16xf32>
    tpu.vector_store %arg3[%c0_66, %c0_67], %157 {strides = array<i32>} : memref<8x48xf32, #tpu.memory_space<vmem>>, vector<8x16xf32>,
    %c1_68 = arith.constant 1 : index
    %c0_69 = arith.constant 0 : index
    %c0_70 = arith.constant 0 : index
    %c0_71 = arith.constant 0 : index
    %159 = vector.load %arg1[%c1_68, %c0_69, %c0_70, %c0_71] : memref<3x8x16x256xf32, #tpu.memory_space<vmem>>, vector<1x1x16x256xf32>
    %160 = vector.shape_cast %159 : vector<1x1x16x256xf32> to vector<16x256xf32>
    %161 = vector.shape_cast %160 : vector<16x256xf32> to vector<1x16x256xf32>
    %c0_72 = arith.constant 0 : index
    %c0_73 = arith.constant 0 : index
    %c0_74 = arith.constant 0 : index
    %162 = vector.load %arg2[%c0_72, %c0_73, %c0_74] : memref<8x8x256xf32, #tpu.memory_space<vmem>>, vector<1x8x256xf32>
    %163 = vector.shape_cast %162 : vector<1x8x256xf32> to vector<8x256xf32>
    %164 = vector.shape_cast %163 : vector<8x256xf32> to vector<8x1x256xf32>
    %165 = vector.broadcast %161 : vector<1x16x256xf32> to vector<8x16x256xf32>
    %166 = vector.broadcast %164 : vector<8x1x256xf32> to vector<8x16x256xf32>
    %167 = arith.mulf %165, %166 : vector<8x16x256xf32>
    %c1_75 = arith.constant 1 : index
    %c1_76 = arith.constant 1 : index
    %c0_77 = arith.constant 0 : index
    %c0_78 = arith.constant 0 : index
    %168 = vector.load %arg1[%c1_75, %c1_76, %c0_77, %c0_78] : memref<3x8x16x256xf32, #tpu.memory_space<vmem>>, vector<1x1x16x256xf32>
    %169 = vector.shape_cast %168 : vector<1x1x16x256xf32> to vector<16x256xf32>
    %170 = vector.shape_cast %169 : vector<16x256xf32> to vector<1x16x256xf32>
    %c1_79 = arith.constant 1 : index
    %c0_80 = arith.constant 0 : index
    %c0_81 = arith.constant 0 : index
    %171 = vector.load %arg2[%c1_79, %c0_80, %c0_81] : memref<8x8x256xf32, #tpu.memory_space<vmem>>, vector<1x8x256xf32>
    %172 = vector.shape_cast %171 : vector<1x8x256xf32> to vector<8x256xf32>
    %173 = vector.shape_cast %172 : vector<8x256xf32> to vector<8x1x256xf32>
    %174 = vector.broadcast %170 : vector<1x16x256xf32> to vector<8x16x256xf32>
    %175 = vector.broadcast %173 : vector<8x1x256xf32> to vector<8x16x256xf32>
    %176 = arith.mulf %174, %175 : vector<8x16x256xf32>
    %177 = arith.addf %167, %176 : vector<8x16x256xf32>
    %c1_82 = arith.constant 1 : index
    %c2_83 = arith.constant 2 : index
    %c0_84 = arith.constant 0 : index
    %c0_85 = arith.constant 0 : index
    %178 = vector.load %arg1[%c1_82, %c2_83, %c0_84, %c0_85] : memref<3x8x16x256xf32, #tpu.memory_space<vmem>>, vector<1x1x16x256xf32>
    %179 = vector.shape_cast %178 : vector<1x1x16x256xf32> to vector<16x256xf32>
    %180 = vector.shape_cast %179 : vector<16x256xf32> to vector<1x16x256xf32>
    %c2_86 = arith.constant 2 : index
    %c0_87 = arith.constant 0 : index
    %c0_88 = arith.constant 0 : index
    %181 = vector.load %arg2[%c2_86, %c0_87, %c0_88] : memref<8x8x256xf32, #tpu.memory_space<vmem>>, vector<1x8x256xf32>
    %182 = vector.shape_cast %181 : vector<1x8x256xf32> to vector<8x256xf32>
    %183 = vector.shape_cast %182 : vector<8x256xf32> to vector<8x1x256xf32>
    %184 = vector.broadcast %180 : vector<1x16x256xf32> to vector<8x16x256xf32>
    %185 = vector.broadcast %183 : vector<8x1x256xf32> to vector<8x16x256xf32>
    %186 = arith.mulf %184, %185 : vector<8x16x256xf32>
    %187 = arith.addf %177, %186 : vector<8x16x256xf32>
    %c1_89 = arith.constant 1 : index
    %c3_90 = arith.constant 3 : index
    %c0_91 = arith.constant 0 : index
    %c0_92 = arith.constant 0 : index
    %188 = vector.load %arg1[%c1_89, %c3_90, %c0_91, %c0_92] : memref<3x8x16x256xf32, #tpu.memory_space<vmem>>, vector<1x1x16x256xf32>
    %189 = vector.shape_cast %188 : vector<1x1x16x256xf32> to vector<16x256xf32>
    %190 = vector.shape_cast %189 : vector<16x256xf32> to vector<1x16x256xf32>
    %c3_93 = arith.constant 3 : index
    %c0_94 = arith.constant 0 : index
    %c0_95 = arith.constant 0 : index
    %191 = vector.load %arg2[%c3_93, %c0_94, %c0_95] : memref<8x8x256xf32, #tpu.memory_space<vmem>>, vector<1x8x256xf32>
    %192 = vector.shape_cast %191 : vector<1x8x256xf32> to vector<8x256xf32>
    %193 = vector.shape_cast %192 : vector<8x256xf32> to vector<8x1x256xf32>
    %194 = vector.broadcast %190 : vector<1x16x256xf32> to vector<8x16x256xf32>
    %195 = vector.broadcast %193 : vector<8x1x256xf32> to vector<8x16x256xf32>
    %196 = arith.mulf %194, %195 : vector<8x16x256xf32>
    %197 = arith.addf %187, %196 : vector<8x16x256xf32>
    %c1_96 = arith.constant 1 : index
    %c4_97 = arith.constant 4 : index
    %c0_98 = arith.constant 0 : index
    %c0_99 = arith.constant 0 : index
    %198 = vector.load %arg1[%c1_96, %c4_97, %c0_98, %c0_99] : memref<3x8x16x256xf32, #tpu.memory_space<vmem>>, vector<1x1x16x256xf32>
    %199 = vector.shape_cast %198 : vector<1x1x16x256xf32> to vector<16x256xf32>
    %200 = vector.shape_cast %199 : vector<16x256xf32> to vector<1x16x256xf32>
    %c4_100 = arith.constant 4 : index
    %c0_101 = arith.constant 0 : index
    %c0_102 = arith.constant 0 : index
    %201 = vector.load %arg2[%c4_100, %c0_101, %c0_102] : memref<8x8x256xf32, #tpu.memory_space<vmem>>, vector<1x8x256xf32>
    %202 = vector.shape_cast %201 : vector<1x8x256xf32> to vector<8x256xf32>
    %203 = vector.shape_cast %202 : vector<8x256xf32> to vector<8x1x256xf32>
    %204 = vector.broadcast %200 : vector<1x16x256xf32> to vector<8x16x256xf32>
    %205 = vector.broadcast %203 : vector<8x1x256xf32> to vector<8x16x256xf32>
    %206 = arith.mulf %204, %205 : vector<8x16x256xf32>
    %207 = arith.addf %197, %206 : vector<8x16x256xf32>
    %c1_103 = arith.constant 1 : index
    %c5_104 = arith.constant 5 : index
    %c0_105 = arith.constant 0 : index
    %c0_106 = arith.constant 0 : index
    %208 = vector.load %arg1[%c1_103, %c5_104, %c0_105, %c0_106] : memref<3x8x16x256xf32, #tpu.memory_space<vmem>>, vector<1x1x16x256xf32>
    %209 = vector.shape_cast %208 : vector<1x1x16x256xf32> to vector<16x256xf32>
    %210 = vector.shape_cast %209 : vector<16x256xf32> to vector<1x16x256xf32>
    %c5_107 = arith.constant 5 : index
    %c0_108 = arith.constant 0 : index
    %c0_109 = arith.constant 0 : index
    %211 = vector.load %arg2[%c5_107, %c0_108, %c0_109] : memref<8x8x256xf32, #tpu.memory_space<vmem>>, vector<1x8x256xf32>
    %212 = vector.shape_cast %211 : vector<1x8x256xf32> to vector<8x256xf32>
    %213 = vector.shape_cast %212 : vector<8x256xf32> to vector<8x1x256xf32>
    %214 = vector.broadcast %210 : vector<1x16x256xf32> to vector<8x16x256xf32>
    %215 = vector.broadcast %213 : vector<8x1x256xf32> to vector<8x16x256xf32>
    %216 = arith.mulf %214, %215 : vector<8x16x256xf32>
    %217 = arith.addf %207, %216 : vector<8x16x256xf32>
    %c1_110 = arith.constant 1 : index
    %c6_111 = arith.constant 6 : index
    %c0_112 = arith.constant 0 : index
    %c0_113 = arith.constant 0 : index
    %218 = vector.load %arg1[%c1_110, %c6_111, %c0_112, %c0_113] : memref<3x8x16x256xf32, #tpu.memory_space<vmem>>, vector<1x1x16x256xf32>
    %219 = vector.shape_cast %218 : vector<1x1x16x256xf32> to vector<16x256xf32>
    %220 = vector.shape_cast %219 : vector<16x256xf32> to vector<1x16x256xf32>
    %c6_114 = arith.constant 6 : index
    %c0_115 = arith.constant 0 : index
    %c0_116 = arith.constant 0 : index
    %221 = vector.load %arg2[%c6_114, %c0_115, %c0_116] : memref<8x8x256xf32, #tpu.memory_space<vmem>>, vector<1x8x256xf32>
    %222 = vector.shape_cast %221 : vector<1x8x256xf32> to vector<8x256xf32>
    %223 = vector.shape_cast %222 : vector<8x256xf32> to vector<8x1x256xf32>
    %224 = vector.broadcast %220 : vector<1x16x256xf32> to vector<8x16x256xf32>
    %225 = vector.broadcast %223 : vector<8x1x256xf32> to vector<8x16x256xf32>
    %226 = arith.mulf %224, %225 : vector<8x16x256xf32>
    %227 = arith.addf %217, %226 : vector<8x16x256xf32>
    %c1_117 = arith.constant 1 : index
    %c7_118 = arith.constant 7 : index
    %c0_119 = arith.constant 0 : index
    %c0_120 = arith.constant 0 : index
    %228 = vector.load %arg1[%c1_117, %c7_118, %c0_119, %c0_120] : memref<3x8x16x256xf32, #tpu.memory_space<vmem>>, vector<1x1x16x256xf32>
    %229 = vector.shape_cast %228 : vector<1x1x16x256xf32> to vector<16x256xf32>
    %230 = vector.shape_cast %229 : vector<16x256xf32> to vector<1x16x256xf32>
    %c7_121 = arith.constant 7 : index
    %c0_122 = arith.constant 0 : index
    %c0_123 = arith.constant 0 : index
    %231 = vector.load %arg2[%c7_121, %c0_122, %c0_123] : memref<8x8x256xf32, #tpu.memory_space<vmem>>, vector<1x8x256xf32>
    %232 = vector.shape_cast %231 : vector<1x8x256xf32> to vector<8x256xf32>
    %233 = vector.shape_cast %232 : vector<8x256xf32> to vector<8x1x256xf32>
    %234 = vector.broadcast %230 : vector<1x16x256xf32> to vector<8x16x256xf32>
    %235 = vector.broadcast %233 : vector<8x1x256xf32> to vector<8x16x256xf32>
    %236 = arith.mulf %234, %235 : vector<8x16x256xf32>
    %237 = arith.addf %227, %236 : vector<8x16x256xf32>
    %cst_124 = arith.constant dense<0.000000e+00> : vector<8x16xf32>
    %238 = vector.multi_reduction <add>, %237, %cst_124 [2] : vector<8x16x256xf32> to vector<8x16xf32>
    %cst_125 = arith.constant 3.906250e-03 : f32
    %239 = vector.broadcast %cst_125 : f32 to vector<8x16xf32>
    %240 = arith.mulf %238, %239 : vector<8x16xf32>
    %241 = arith.mulf %240, %240 : vector<8x16xf32>
    %cst_126 = arith.constant dense<0.000000e+00> : vector<8xf32>
    %242 = vector.multi_reduction <add>, %241, %cst_126 [1] : vector<8x16xf32> to vector<8xf32>
    %243 = vector.shape_cast %242 : vector<8xf32> to vector<8x1xf32>
    %cst_127 = arith.constant 9.99999996E-13 : f32
    %244 = vector.broadcast %cst_127 : f32 to vector<8x1xf32>
    %245 = arith.addf %243, %244 : vector<8x1xf32>
    %246 = math.rsqrt %245 : vector<8x1xf32>
    %cst_128 = arith.constant 1.000000e+00 : f32
    %247 = vector.broadcast %cst_128 : f32 to vector<8x1xf32>
    %248 = arith.addf %247, %243 : vector<8x1xf32>
    %249 = tpu.reciprocal %248 {approx = true} : vector<8x1xf32> -> vector<8x1xf32>
    %250 = arith.mulf %243, %249 : vector<8x1xf32>
    %251 = arith.mulf %250, %246 : vector<8x1xf32>
    %252 = vector.broadcast %251 : vector<8x1xf32> to vector<8x16xf32>
    %253 = arith.mulf %252, %240 : vector<8x16xf32>
    %254 = vector.shape_cast %253 : vector<8x16xf32> to vector<8x16x1xf32>
    %255 = vector.broadcast %254 : vector<8x16x1xf32> to vector<8x16x256xf32>
    %256 = arith.mulf %255, %237 : vector<8x16x256xf32>
    %cst_129 = arith.constant dense<0.000000e+00> : vector<8x256xf32>
    %257 = vector.multi_reduction <add>, %256, %cst_129 [1] : vector<8x16x256xf32> to vector<8x256xf32>
    %cst_130 = arith.constant dense<0xFF800000> : vector<8xf32>
    %258 = vector.multi_reduction <maximumf>, %257, %cst_130 [1] : vector<8x256xf32> to vector<8xf32>
    %259 = vector.shape_cast %258 : vector<8xf32> to vector<8x1xf32>
    %260 = vector.broadcast %259 : vector<8x1xf32> to vector<8x256xf32>
    %261 = arith.subf %257, %260 : vector<8x256xf32>
    %262 = math.exp %261 : vector<8x256xf32>
    %cst_131 = arith.constant dense<0.000000e+00> : vector<8xf32>
    %263 = vector.multi_reduction <add>, %262, %cst_131 [1] : vector<8x256xf32> to vector<8xf32>
    %264 = vector.shape_cast %263 : vector<8xf32> to vector<8x1xf32>
    %265 = vector.shape_cast %262 : vector<8x256xf32> to vector<8x1x256xf32>
    %266 = vector.broadcast %265 : vector<8x1x256xf32> to vector<8x16x256xf32>
    %267 = arith.mulf %266, %237 : vector<8x16x256xf32>
    %cst_132 = arith.constant dense<0.000000e+00> : vector<8x16xf32>
    %268 = vector.multi_reduction <add>, %267, %cst_132 [2] : vector<8x16x256xf32> to vector<8x16xf32>
    %269 = tpu.reciprocal %264 {approx = true} : vector<8x1xf32> -> vector<8x1xf32>
    %270 = vector.broadcast %269 : vector<8x1xf32> to vector<8x16xf32>
    %271 = arith.mulf %268, %270 : vector<8x16xf32>
    %272 = arith.mulf %271, %271 : vector<8x16xf32>
    %cst_133 = arith.constant dense<0.000000e+00> : vector<8xf32>
    %273 = vector.multi_reduction <add>, %272, %cst_133 [1] : vector<8x16xf32> to vector<8xf32>
    %274 = vector.shape_cast %273 : vector<8xf32> to vector<8x1xf32>
    %cst_134 = arith.constant 9.99999996E-13 : f32
    %275 = vector.broadcast %cst_134 : f32 to vector<8x1xf32>
    %276 = arith.addf %274, %275 : vector<8x1xf32>
    %277 = math.rsqrt %276 : vector<8x1xf32>
    %cst_135 = arith.constant 1.000000e+00 : f32
    %278 = vector.broadcast %cst_135 : f32 to vector<8x1xf32>
    %279 = arith.addf %278, %274 : vector<8x1xf32>
    %280 = tpu.reciprocal %279 {approx = true} : vector<8x1xf32> -> vector<8x1xf32>
    %281 = arith.mulf %274, %280 : vector<8x1xf32>
    %282 = arith.mulf %281, %277 : vector<8x1xf32>
    %283 = vector.broadcast %282 : vector<8x1xf32> to vector<8x16xf32>
    %284 = arith.mulf %283, %271 : vector<8x16xf32>
    %285 = vector.shape_cast %284 : vector<8x16xf32> to vector<8x16x1xf32>
    %286 = vector.broadcast %285 : vector<8x16x1xf32> to vector<8x16x256xf32>
    %287 = arith.mulf %286, %237 : vector<8x16x256xf32>
    %cst_136 = arith.constant dense<0.000000e+00> : vector<8x256xf32>
    %288 = vector.multi_reduction <add>, %287, %cst_136 [1] : vector<8x16x256xf32> to vector<8x256xf32>
    %289 = arith.addf %257, %288 : vector<8x256xf32>
    %cst_137 = arith.constant dense<0xFF800000> : vector<8xf32>
    %290 = vector.multi_reduction <maximumf>, %289, %cst_137 [1] : vector<8x256xf32> to vector<8xf32>
    %291 = vector.shape_cast %290 : vector<8xf32> to vector<8x1xf32>
    %292 = vector.broadcast %291 : vector<8x1xf32> to vector<8x256xf32>
    %293 = arith.subf %289, %292 : vector<8x256xf32>
    %294 = math.exp %293 : vector<8x256xf32>
    %cst_138 = arith.constant dense<0.000000e+00> : vector<8xf32>
    %295 = vector.multi_reduction <add>, %294, %cst_138 [1] : vector<8x256xf32> to vector<8xf32>
    %296 = vector.shape_cast %295 : vector<8xf32> to vector<8x1xf32>
    %297 = vector.shape_cast %294 : vector<8x256xf32> to vector<8x1x256xf32>
    %298 = vector.broadcast %297 : vector<8x1x256xf32> to vector<8x16x256xf32>
    %299 = arith.mulf %298, %237 : vector<8x16x256xf32>
    %cst_139 = arith.constant dense<0.000000e+00> : vector<8x16xf32>
    %300 = vector.multi_reduction <add>, %299, %cst_139 [2] : vector<8x16x256xf32> to vector<8x16xf32>
    %301 = tpu.reciprocal %296 {approx = true} : vector<8x1xf32> -> vector<8x1xf32>
    %302 = vector.broadcast %301 : vector<8x1xf32> to vector<8x16xf32>
    %303 = arith.mulf %300, %302 : vector<8x16xf32>
    %304 = arith.mulf %303, %303 : vector<8x16xf32>
    %cst_140 = arith.constant dense<0.000000e+00> : vector<8xf32>
    %305 = vector.multi_reduction <add>, %304, %cst_140 [1] : vector<8x16xf32> to vector<8xf32>
    %306 = vector.shape_cast %305 : vector<8xf32> to vector<8x1xf32>
    %cst_141 = arith.constant 9.99999996E-13 : f32
    %307 = vector.broadcast %cst_141 : f32 to vector<8x1xf32>
    %308 = arith.addf %306, %307 : vector<8x1xf32>
    %309 = math.rsqrt %308 : vector<8x1xf32>
    %cst_142 = arith.constant 1.000000e+00 : f32
    %310 = vector.broadcast %cst_142 : f32 to vector<8x1xf32>
    %311 = arith.addf %310, %306 : vector<8x1xf32>
    %312 = tpu.reciprocal %311 {approx = true} : vector<8x1xf32> -> vector<8x1xf32>
    %313 = arith.mulf %306, %312 : vector<8x1xf32>
    %314 = arith.mulf %313, %309 : vector<8x1xf32>
    %315 = vector.broadcast %314 : vector<8x1xf32> to vector<8x16xf32>
    %316 = arith.mulf %315, %303 : vector<8x16xf32>
    %c0_143 = arith.constant 0 : index
    %c16 = arith.constant 16 : index
    %317 = vector.load %arg3[%c0_143, %c16] : memref<8x48xf32, #tpu.memory_space<vmem>>, vector<8x16xf32>
    tpu.vector_store %arg3[%c0_143, %c16], %316 {strides = array<i32>} : memref<8x48xf32, #tpu.memory_space<vmem>>, vector<8x16xf32>,
    %c2_144 = arith.constant 2 : index
    %c0_145 = arith.constant 0 : index
    %c0_146 = arith.constant 0 : index
    %c0_147 = arith.constant 0 : index
    %318 = vector.load %arg1[%c2_144, %c0_145, %c0_146, %c0_147] : memref<3x8x16x256xf32, #tpu.memory_space<vmem>>, vector<1x1x16x256xf32>
    %319 = vector.shape_cast %318 : vector<1x1x16x256xf32> to vector<16x256xf32>
    %320 = vector.shape_cast %319 : vector<16x256xf32> to vector<1x16x256xf32>
    %c0_148 = arith.constant 0 : index
    %c0_149 = arith.constant 0 : index
    %c0_150 = arith.constant 0 : index
    %321 = vector.load %arg2[%c0_148, %c0_149, %c0_150] : memref<8x8x256xf32, #tpu.memory_space<vmem>>, vector<1x8x256xf32>
    %322 = vector.shape_cast %321 : vector<1x8x256xf32> to vector<8x256xf32>
    %323 = vector.shape_cast %322 : vector<8x256xf32> to vector<8x1x256xf32>
    %324 = vector.broadcast %320 : vector<1x16x256xf32> to vector<8x16x256xf32>
    %325 = vector.broadcast %323 : vector<8x1x256xf32> to vector<8x16x256xf32>
    %326 = arith.mulf %324, %325 : vector<8x16x256xf32>
    %c2_151 = arith.constant 2 : index
    %c1_152 = arith.constant 1 : index
    %c0_153 = arith.constant 0 : index
    %c0_154 = arith.constant 0 : index
    %327 = vector.load %arg1[%c2_151, %c1_152, %c0_153, %c0_154] : memref<3x8x16x256xf32, #tpu.memory_space<vmem>>, vector<1x1x16x256xf32>
    %328 = vector.shape_cast %327 : vector<1x1x16x256xf32> to vector<16x256xf32>
    %329 = vector.shape_cast %328 : vector<16x256xf32> to vector<1x16x256xf32>
    %c1_155 = arith.constant 1 : index
    %c0_156 = arith.constant 0 : index
    %c0_157 = arith.constant 0 : index
    %330 = vector.load %arg2[%c1_155, %c0_156, %c0_157] : memref<8x8x256xf32, #tpu.memory_space<vmem>>, vector<1x8x256xf32>
    %331 = vector.shape_cast %330 : vector<1x8x256xf32> to vector<8x256xf32>
    %332 = vector.shape_cast %331 : vector<8x256xf32> to vector<8x1x256xf32>
    %333 = vector.broadcast %329 : vector<1x16x256xf32> to vector<8x16x256xf32>
    %334 = vector.broadcast %332 : vector<8x1x256xf32> to vector<8x16x256xf32>
    %335 = arith.mulf %333, %334 : vector<8x16x256xf32>
    %336 = arith.addf %326, %335 : vector<8x16x256xf32>
    %c2_158 = arith.constant 2 : index
    %c2_159 = arith.constant 2 : index
    %c0_160 = arith.constant 0 : index
    %c0_161 = arith.constant 0 : index
    %337 = vector.load %arg1[%c2_158, %c2_159, %c0_160, %c0_161] : memref<3x8x16x256xf32, #tpu.memory_space<vmem>>, vector<1x1x16x256xf32>
    %338 = vector.shape_cast %337 : vector<1x1x16x256xf32> to vector<16x256xf32>
    %339 = vector.shape_cast %338 : vector<16x256xf32> to vector<1x16x256xf32>
    %c2_162 = arith.constant 2 : index
    %c0_163 = arith.constant 0 : index
    %c0_164 = arith.constant 0 : index
    %340 = vector.load %arg2[%c2_162, %c0_163, %c0_164] : memref<8x8x256xf32, #tpu.memory_space<vmem>>, vector<1x8x256xf32>
    %341 = vector.shape_cast %340 : vector<1x8x256xf32> to vector<8x256xf32>
    %342 = vector.shape_cast %341 : vector<8x256xf32> to vector<8x1x256xf32>
    %343 = vector.broadcast %339 : vector<1x16x256xf32> to vector<8x16x256xf32>
    %344 = vector.broadcast %342 : vector<8x1x256xf32> to vector<8x16x256xf32>
    %345 = arith.mulf %343, %344 : vector<8x16x256xf32>
    %346 = arith.addf %336, %345 : vector<8x16x256xf32>
    %c2_165 = arith.constant 2 : index
    %c3_166 = arith.constant 3 : index
    %c0_167 = arith.constant 0 : index
    %c0_168 = arith.constant 0 : index
    %347 = vector.load %arg1[%c2_165, %c3_166, %c0_167, %c0_168] : memref<3x8x16x256xf32, #tpu.memory_space<vmem>>, vector<1x1x16x256xf32>
    %348 = vector.shape_cast %347 : vector<1x1x16x256xf32> to vector<16x256xf32>
    %349 = vector.shape_cast %348 : vector<16x256xf32> to vector<1x16x256xf32>
    %c3_169 = arith.constant 3 : index
    %c0_170 = arith.constant 0 : index
    %c0_171 = arith.constant 0 : index
    %350 = vector.load %arg2[%c3_169, %c0_170, %c0_171] : memref<8x8x256xf32, #tpu.memory_space<vmem>>, vector<1x8x256xf32>
    %351 = vector.shape_cast %350 : vector<1x8x256xf32> to vector<8x256xf32>
    %352 = vector.shape_cast %351 : vector<8x256xf32> to vector<8x1x256xf32>
    %353 = vector.broadcast %349 : vector<1x16x256xf32> to vector<8x16x256xf32>
    %354 = vector.broadcast %352 : vector<8x1x256xf32> to vector<8x16x256xf32>
    %355 = arith.mulf %353, %354 : vector<8x16x256xf32>
    %356 = arith.addf %346, %355 : vector<8x16x256xf32>
    %c2_172 = arith.constant 2 : index
    %c4_173 = arith.constant 4 : index
    %c0_174 = arith.constant 0 : index
    %c0_175 = arith.constant 0 : index
    %357 = vector.load %arg1[%c2_172, %c4_173, %c0_174, %c0_175] : memref<3x8x16x256xf32, #tpu.memory_space<vmem>>, vector<1x1x16x256xf32>
    %358 = vector.shape_cast %357 : vector<1x1x16x256xf32> to vector<16x256xf32>
    %359 = vector.shape_cast %358 : vector<16x256xf32> to vector<1x16x256xf32>
    %c4_176 = arith.constant 4 : index
    %c0_177 = arith.constant 0 : index
    %c0_178 = arith.constant 0 : index
    %360 = vector.load %arg2[%c4_176, %c0_177, %c0_178] : memref<8x8x256xf32, #tpu.memory_space<vmem>>, vector<1x8x256xf32>
    %361 = vector.shape_cast %360 : vector<1x8x256xf32> to vector<8x256xf32>
    %362 = vector.shape_cast %361 : vector<8x256xf32> to vector<8x1x256xf32>
    %363 = vector.broadcast %359 : vector<1x16x256xf32> to vector<8x16x256xf32>
    %364 = vector.broadcast %362 : vector<8x1x256xf32> to vector<8x16x256xf32>
    %365 = arith.mulf %363, %364 : vector<8x16x256xf32>
    %366 = arith.addf %356, %365 : vector<8x16x256xf32>
    %c2_179 = arith.constant 2 : index
    %c5_180 = arith.constant 5 : index
    %c0_181 = arith.constant 0 : index
    %c0_182 = arith.constant 0 : index
    %367 = vector.load %arg1[%c2_179, %c5_180, %c0_181, %c0_182] : memref<3x8x16x256xf32, #tpu.memory_space<vmem>>, vector<1x1x16x256xf32>
    %368 = vector.shape_cast %367 : vector<1x1x16x256xf32> to vector<16x256xf32>
    %369 = vector.shape_cast %368 : vector<16x256xf32> to vector<1x16x256xf32>
    %c5_183 = arith.constant 5 : index
    %c0_184 = arith.constant 0 : index
    %c0_185 = arith.constant 0 : index
    %370 = vector.load %arg2[%c5_183, %c0_184, %c0_185] : memref<8x8x256xf32, #tpu.memory_space<vmem>>, vector<1x8x256xf32>
    %371 = vector.shape_cast %370 : vector<1x8x256xf32> to vector<8x256xf32>
    %372 = vector.shape_cast %371 : vector<8x256xf32> to vector<8x1x256xf32>
    %373 = vector.broadcast %369 : vector<1x16x256xf32> to vector<8x16x256xf32>
    %374 = vector.broadcast %372 : vector<8x1x256xf32> to vector<8x16x256xf32>
    %375 = arith.mulf %373, %374 : vector<8x16x256xf32>
    %376 = arith.addf %366, %375 : vector<8x16x256xf32>
    %c2_186 = arith.constant 2 : index
    %c6_187 = arith.constant 6 : index
    %c0_188 = arith.constant 0 : index
    %c0_189 = arith.constant 0 : index
    %377 = vector.load %arg1[%c2_186, %c6_187, %c0_188, %c0_189] : memref<3x8x16x256xf32, #tpu.memory_space<vmem>>, vector<1x1x16x256xf32>
    %378 = vector.shape_cast %377 : vector<1x1x16x256xf32> to vector<16x256xf32>
    %379 = vector.shape_cast %378 : vector<16x256xf32> to vector<1x16x256xf32>
    %c6_190 = arith.constant 6 : index
    %c0_191 = arith.constant 0 : index
    %c0_192 = arith.constant 0 : index
    %380 = vector.load %arg2[%c6_190, %c0_191, %c0_192] : memref<8x8x256xf32, #tpu.memory_space<vmem>>, vector<1x8x256xf32>
    %381 = vector.shape_cast %380 : vector<1x8x256xf32> to vector<8x256xf32>
    %382 = vector.shape_cast %381 : vector<8x256xf32> to vector<8x1x256xf32>
    %383 = vector.broadcast %379 : vector<1x16x256xf32> to vector<8x16x256xf32>
    %384 = vector.broadcast %382 : vector<8x1x256xf32> to vector<8x16x256xf32>
    %385 = arith.mulf %383, %384 : vector<8x16x256xf32>
    %386 = arith.addf %376, %385 : vector<8x16x256xf32>
    %c2_193 = arith.constant 2 : index
    %c7_194 = arith.constant 7 : index
    %c0_195 = arith.constant 0 : index
    %c0_196 = arith.constant 0 : index
    %387 = vector.load %arg1[%c2_193, %c7_194, %c0_195, %c0_196] : memref<3x8x16x256xf32, #tpu.memory_space<vmem>>, vector<1x1x16x256xf32>
    %388 = vector.shape_cast %387 : vector<1x1x16x256xf32> to vector<16x256xf32>
    %389 = vector.shape_cast %388 : vector<16x256xf32> to vector<1x16x256xf32>
    %c7_197 = arith.constant 7 : index
    %c0_198 = arith.constant 0 : index
    %c0_199 = arith.constant 0 : index
    %390 = vector.load %arg2[%c7_197, %c0_198, %c0_199] : memref<8x8x256xf32, #tpu.memory_space<vmem>>, vector<1x8x256xf32>
    %391 = vector.shape_cast %390 : vector<1x8x256xf32> to vector<8x256xf32>
    %392 = vector.shape_cast %391 : vector<8x256xf32> to vector<8x1x256xf32>
    %393 = vector.broadcast %389 : vector<1x16x256xf32> to vector<8x16x256xf32>
    %394 = vector.broadcast %392 : vector<8x1x256xf32> to vector<8x16x256xf32>
    %395 = arith.mulf %393, %394 : vector<8x16x256xf32>
    %396 = arith.addf %386, %395 : vector<8x16x256xf32>
    %cst_200 = arith.constant dense<0.000000e+00> : vector<8x16xf32>
    %397 = vector.multi_reduction <add>, %396, %cst_200 [2] : vector<8x16x256xf32> to vector<8x16xf32>
    %cst_201 = arith.constant 3.906250e-03 : f32
    %398 = vector.broadcast %cst_201 : f32 to vector<8x16xf32>
    %399 = arith.mulf %397, %398 : vector<8x16xf32>
    %400 = arith.mulf %399, %399 : vector<8x16xf32>
    %cst_202 = arith.constant dense<0.000000e+00> : vector<8xf32>
    %401 = vector.multi_reduction <add>, %400, %cst_202 [1] : vector<8x16xf32> to vector<8xf32>
    %402 = vector.shape_cast %401 : vector<8xf32> to vector<8x1xf32>
    %cst_203 = arith.constant 9.99999996E-13 : f32
    %403 = vector.broadcast %cst_203 : f32 to vector<8x1xf32>
    %404 = arith.addf %402, %403 : vector<8x1xf32>
    %405 = math.rsqrt %404 : vector<8x1xf32>
    %cst_204 = arith.constant 1.000000e+00 : f32
    %406 = vector.broadcast %cst_204 : f32 to vector<8x1xf32>
    %407 = arith.addf %406, %402 : vector<8x1xf32>
    %408 = tpu.reciprocal %407 {approx = true} : vector<8x1xf32> -> vector<8x1xf32>
    %409 = arith.mulf %402, %408 : vector<8x1xf32>
    %410 = arith.mulf %409, %405 : vector<8x1xf32>
    %411 = vector.broadcast %410 : vector<8x1xf32> to vector<8x16xf32>
    %412 = arith.mulf %411, %399 : vector<8x16xf32>
    %413 = vector.shape_cast %412 : vector<8x16xf32> to vector<8x16x1xf32>
    %414 = vector.broadcast %413 : vector<8x16x1xf32> to vector<8x16x256xf32>
    %415 = arith.mulf %414, %396 : vector<8x16x256xf32>
    %cst_205 = arith.constant dense<0.000000e+00> : vector<8x256xf32>
    %416 = vector.multi_reduction <add>, %415, %cst_205 [1] : vector<8x16x256xf32> to vector<8x256xf32>
    %cst_206 = arith.constant dense<0xFF800000> : vector<8xf32>
    %417 = vector.multi_reduction <maximumf>, %416, %cst_206 [1] : vector<8x256xf32> to vector<8xf32>
    %418 = vector.shape_cast %417 : vector<8xf32> to vector<8x1xf32>
    %419 = vector.broadcast %418 : vector<8x1xf32> to vector<8x256xf32>
    %420 = arith.subf %416, %419 : vector<8x256xf32>
    %421 = math.exp %420 : vector<8x256xf32>
    %cst_207 = arith.constant dense<0.000000e+00> : vector<8xf32>
    %422 = vector.multi_reduction <add>, %421, %cst_207 [1] : vector<8x256xf32> to vector<8xf32>
    %423 = vector.shape_cast %422 : vector<8xf32> to vector<8x1xf32>
    %424 = vector.shape_cast %421 : vector<8x256xf32> to vector<8x1x256xf32>
    %425 = vector.broadcast %424 : vector<8x1x256xf32> to vector<8x16x256xf32>
    %426 = arith.mulf %425, %396 : vector<8x16x256xf32>
    %cst_208 = arith.constant dense<0.000000e+00> : vector<8x16xf32>
    %427 = vector.multi_reduction <add>, %426, %cst_208 [2] : vector<8x16x256xf32> to vector<8x16xf32>
    %428 = tpu.reciprocal %423 {approx = true} : vector<8x1xf32> -> vector<8x1xf32>
    %429 = vector.broadcast %428 : vector<8x1xf32> to vector<8x16xf32>
    %430 = arith.mulf %427, %429 : vector<8x16xf32>
    %431 = arith.mulf %430, %430 : vector<8x16xf32>
    %cst_209 = arith.constant dense<0.000000e+00> : vector<8xf32>
    %432 = vector.multi_reduction <add>, %431, %cst_209 [1] : vector<8x16xf32> to vector<8xf32>
    %433 = vector.shape_cast %432 : vector<8xf32> to vector<8x1xf32>
    %cst_210 = arith.constant 9.99999996E-13 : f32
    %434 = vector.broadcast %cst_210 : f32 to vector<8x1xf32>
    %435 = arith.addf %433, %434 : vector<8x1xf32>
    %436 = math.rsqrt %435 : vector<8x1xf32>
    %cst_211 = arith.constant 1.000000e+00 : f32
    %437 = vector.broadcast %cst_211 : f32 to vector<8x1xf32>
    %438 = arith.addf %437, %433 : vector<8x1xf32>
    %439 = tpu.reciprocal %438 {approx = true} : vector<8x1xf32> -> vector<8x1xf32>
    %440 = arith.mulf %433, %439 : vector<8x1xf32>
    %441 = arith.mulf %440, %436 : vector<8x1xf32>
    %442 = vector.broadcast %441 : vector<8x1xf32> to vector<8x16xf32>
    %443 = arith.mulf %442, %430 : vector<8x16xf32>
    %444 = vector.shape_cast %443 : vector<8x16xf32> to vector<8x16x1xf32>
    %445 = vector.broadcast %444 : vector<8x16x1xf32> to vector<8x16x256xf32>
    %446 = arith.mulf %445, %396 : vector<8x16x256xf32>
    %cst_212 = arith.constant dense<0.000000e+00> : vector<8x256xf32>
    %447 = vector.multi_reduction <add>, %446, %cst_212 [1] : vector<8x16x256xf32> to vector<8x256xf32>
    %448 = arith.addf %416, %447 : vector<8x256xf32>
    %cst_213 = arith.constant dense<0xFF800000> : vector<8xf32>
    %449 = vector.multi_reduction <maximumf>, %448, %cst_213 [1] : vector<8x256xf32> to vector<8xf32>
    %450 = vector.shape_cast %449 : vector<8xf32> to vector<8x1xf32>
    %451 = vector.broadcast %450 : vector<8x1xf32> to vector<8x256xf32>
    %452 = arith.subf %448, %451 : vector<8x256xf32>
    %453 = math.exp %452 : vector<8x256xf32>
    %cst_214 = arith.constant dense<0.000000e+00> : vector<8xf32>
    %454 = vector.multi_reduction <add>, %453, %cst_214 [1] : vector<8x256xf32> to vector<8xf32>
    %455 = vector.shape_cast %454 : vector<8xf32> to vector<8x1xf32>
    %456 = vector.shape_cast %453 : vector<8x256xf32> to vector<8x1x256xf32>
    %457 = vector.broadcast %456 : vector<8x1x256xf32> to vector<8x16x256xf32>
    %458 = arith.mulf %457, %396 : vector<8x16x256xf32>
    %cst_215 = arith.constant dense<0.000000e+00> : vector<8x16xf32>
    %459 = vector.multi_reduction <add>, %458, %cst_215 [2] : vector<8x16x256xf32> to vector<8x16xf32>
    %460 = tpu.reciprocal %455 {approx = true} : vector<8x1xf32> -> vector<8x1xf32>
    %461 = vector.broadcast %460 : vector<8x1xf32> to vector<8x16xf32>
    %462 = arith.mulf %459, %461 : vector<8x16xf32>
    %463 = arith.mulf %462, %462 : vector<8x16xf32>
    %cst_216 = arith.constant dense<0.000000e+00> : vector<8xf32>
    %464 = vector.multi_reduction <add>, %463, %cst_216 [1] : vector<8x16xf32> to vector<8xf32>
    %465 = vector.shape_cast %464 : vector<8xf32> to vector<8x1xf32>
    %cst_217 = arith.constant 9.99999996E-13 : f32
    %466 = vector.broadcast %cst_217 : f32 to vector<8x1xf32>
    %467 = arith.addf %465, %466 : vector<8x1xf32>
    %468 = math.rsqrt %467 : vector<8x1xf32>
    %cst_218 = arith.constant 1.000000e+00 : f32
    %469 = vector.broadcast %cst_218 : f32 to vector<8x1xf32>
    %470 = arith.addf %469, %465 : vector<8x1xf32>
    %471 = tpu.reciprocal %470 {approx = true} : vector<8x1xf32> -> vector<8x1xf32>
    %472 = arith.mulf %465, %471 : vector<8x1xf32>
    %473 = arith.mulf %472, %468 : vector<8x1xf32>
    %474 = vector.broadcast %473 : vector<8x1xf32> to vector<8x16xf32>
    %475 = arith.mulf %474, %462 : vector<8x16xf32>
    %c0_219 = arith.constant 0 : index
    %c32 = arith.constant 32 : index
    %476 = vector.load %arg3[%c0_219, %c32] : memref<8x48xf32, #tpu.memory_space<vmem>>, vector<8x16xf32>
    tpu.vector_store %arg3[%c0_219, %c32], %475 {strides = array<i32>} : memref<8x48xf32, #tpu.memory_space<vmem>>, vector<8x16xf32>,
    return
  }
  func.func @transform_0(%arg0: i32) -> (i32, i32, i32, i32) {
    %c0_i32 = arith.constant 0 : i32
    %c0_i32_0 = arith.constant 0 : i32
    %c0_i32_1 = arith.constant 0 : i32
    %c0_i32_2 = arith.constant 0 : i32
    %c0_i32_3 = arith.constant 0 : i32
    return %c0_i32, %c0_i32_0, %c0_i32_1, %c0_i32_2 : i32, i32, i32, i32
  }
  func.func @transform_1(%arg0: i32) -> (i32, i32, i32) {
    %c0_i32 = arith.constant 0 : i32
    %c0_i32_0 = arith.constant 0 : i32
    %c0_i32_1 = arith.constant 0 : i32
    return %c0_i32, %arg0, %c0_i32_0 : i32, i32, i32
  }
  func.func @transform_2(%arg0: i32) -> (i32, i32) {
    %c0_i32 = arith.constant 0 : i32
    %c0_i32_0 = arith.constant 0 : i32
    return %arg0, %c0_i32 : i32, i32
  }
}

</mosaic_0001>

<llo_original>
// kernel: tpu_custom_call.1
$region0: #{tpu_custom_call.1}
  #allocation0 [shape = 'u32[]', space=smem, size = 0x4, offset = 0x4, fixed_abs, tag = 'smem constant byte address 0x4 - core index']
  #allocation1 [shape = 'u32[144,128]{1,0:T(1,128)}', space=vmem, size = 0x12000, scoped, tag = 'internal scratch']
  %s0 = inlined_call_operand.hbm [shape: f32[3,8,16,256], index: 0, kind: input, shape index: {}]
  %s1 = inlined_call_operand.hbm [shape: f32[8,16,256], index: 1, kind: input, shape index: {}]
  %s2 = inlined_call_operand.hbm [shape: f32[16,48], index: 2, kind: output, shape index: {}]
  %s3 = sld [smem:[#allocation0]]
  $region49: #{tpu_custom_call.1} parent=0
    _
  %s5 = ssub.s32 1, %s3
  %s6 = scalar_select 0, %s5, %s3
  $region1: #{tpu_custom_call.1} parent=0
    #allocation2 [shape = 'u8[393216]{0}', space=vmem, size = 0x60000, scoped, tag = 'input window, operand 0, single buffered']
    #allocation3 [shape = 's32[2]{0}', space=sflag, size = 0x8, scoped, tag = 'scoped memory for tpu_custom_call.1']
    #allocation4 [shape = 's32[2]{0}', space=sflag, size = 0x8, scoped, tag = 'scoped memory for tpu_custom_call.1']
    #allocation5 [shape = 'u8[131072]{0}', space=vmem, size = 0x20000, scoped, tag = 'input window, operand 1']
    #allocation6 [shape = 's32[2]{0}', space=sflag, size = 0x8, scoped, tag = 'scoped memory for tpu_custom_call.1']
    #allocation7 [shape = 'u8[8192]{0}', space=vmem, size = 0x2000, scoped, tag = 'output window, operand 0']
    %7 = vsyncpa [#allocation3], 0
    %8 = vsyncpa [#allocation6], 0
    %s9 = scalar_lea.sflag [#allocation6], 1
    %10 = vsyncpa %s9, 0
    %11 = vsyncpa [#allocation4], 0
    %s12 = scalar_lea.sflag [#allocation4], 1
    %13 = vsyncpa %s12, 0
    loop: start=0, step=1, limit=4
    $region2: #{tpu_custom_call.1} parent=1 // loop_pre_header
      _
    $region3: #{tpu_custom_call.1} parent=1 // loop_header
      %s15 = sphi 0, %s19
      %p16 = scmp.ge.s32.totalorder %s15, 4
      %s23 = sphi 0, %s23
      %s25 = sphi 0, %s23
      %s26 = sphi 0, %s25
      %s40 = sphi 0, %s26
      %s46 = sphi 0, %s48
      %s49 = sphi 0, %s46
      %s50 = sphi 0, %s49
      %s66 = sphi 0, %s50
      %s72 = sphi 0, %s74
      %s75 = sphi 0, %s72
      %s76 = sphi 0, %s75
      %s92 = sphi 0, %s76
    $region4: #{tpu_custom_call.1} parent=1 // loop_header_branch
      %18 = sbr.rel (%p16) target = $region8
    $region5: #{tpu_custom_call.1} parent=1 // loop_body
      %s20 = ssub.s32 %s15, 1
      %s21 = ssub.s32 %s15, 2
      %s22 = sadd.s32 %s15, 1
      %s24 = sadd.s32 %s23, 1
      %p27 = scmp.eq.s32.totalorder %s15, 1
      %p28 = scmp.ne.s32.totalorder %s23, %s25
      %p29 = scmp.eq.s32.totalorder %s15, 0
      %p30 = por %p28, %p29
      %p31 = scmp.ne.s32.totalorder %s23, %s25
      %p32 = scmp.eq.s32.totalorder %s20, 1
      %p33 = por %p31, %p32
      %p34 = scmp.ne.s32.totalorder %s25, %s26
      %p35 = scmp.eq.s32.totalorder %s20, 0
      %p36 = por %p34, %p35
      %p37 = scmp.ne.s32.totalorder %s25, %s26
      %p38 = scmp.eq.s32.totalorder %s21, 1
      %p39 = por %p37, %p38
      %p41 = scmp.ne.s32.totalorder %s26, %s40
      %p42 = scmp.eq.s32.totalorder %s21, 0
      %p43 = por %p41, %p42
      %s44 = ssub.s32 %s15, %s22
      %p45 = scmp.eq.s32.totalorder %s44, 0
      %s47 = sadd.s32 %s46, 1
      %s48 = scalar_select %p45, %s46, %s47
      %p51 = pneg %p45
      %p52 = scmp.eq.s32.totalorder %s15, 1
      %p53 = por %p51, %p52
      %p54 = scmp.ne.s32.totalorder %s46, %s49
      %p55 = scmp.eq.s32.totalorder %s15, 0
      %p56 = por %p54, %p55
      %p57 = scmp.ne.s32.totalorder %s46, %s49
      %p58 = scmp.eq.s32.totalorder %s20, 1
      %p59 = por %p57, %p58
      %p60 = scmp.ne.s32.totalorder %s49, %s50
      %p61 = scmp.eq.s32.totalorder %s20, 0
      %p62 = por %p60, %p61
      %p63 = scmp.ne.s32.totalorder %s49, %s50
      %p64 = scmp.eq.s32.totalorder %s21, 1
      %p65 = por %p63, %p64
      %p67 = scmp.ne.s32.totalorder %s50, %s66
      %p68 = scmp.eq.s32.totalorder %s21, 0
      %p69 = por %p67, %p68
      %s70 = ssub.s32 %s15, %s22
      %p71 = scmp.eq.s32.totalorder %s70, 0
      %s73 = sadd.s32 %s72, 1
      %s74 = scalar_select %p71, %s72, %s73
      %p77 = pneg %p71
      %p78 = scmp.eq.s32.totalorder %s15, 1
      %p79 = por %p77, %p78
      %p80 = scmp.ne.s32.totalorder %s72, %s75
      %p81 = scmp.eq.s32.totalorder %s15, 0
      %p82 = por %p80, %p81
      %p83 = scmp.ne.s32.totalorder %s72, %s75
      %p84 = scmp.eq.s32.totalorder %s20, 1
      %p85 = por %p83, %p84
      %p86 = scmp.ne.s32.totalorder %s75, %s76
      %p87 = scmp.eq.s32.totalorder %s20, 0
      %p88 = por %p86, %p87
      %p89 = scmp.ne.s32.totalorder %s75, %s76
      %p90 = scmp.eq.s32.totalorder %s21, 1
      %p91 = por %p89, %p90
      %p93 = scmp.ne.s32.totalorder %s76, %s92
      %p94 = scmp.eq.s32.totalorder %s21, 0
      %p95 = por %p93, %p94
      %p96 = scmp.le.s32.totalorder 1, %s15
      %p97 = scmp.lt.s32.totalorder %s15, 3
      %p98 = pnand %p96, %p97
      %p99 = pneg %p98
      // Predicated region
      $region9: #{tpu_custom_call.1} parent=5 // pred_check
        _
      $region10: #{tpu_custom_call.1} parent=5 // pred_check_branch
        %101 = sbr.rel (%p98) target = $region12
      $region11: #{tpu_custom_call.1} parent=5 // pred_region
        %s102 = ssub.s32 %s15, 1
        // Predicated region
        $region13: #{tpu_custom_call.1} parent=11 // pred_check
          %p103 = pneg %p36
        $region14: #{tpu_custom_call.1} parent=11 // pred_check_branch
          %105 = sbr.rel (%p103) target = $region16
        $region15: #{tpu_custom_call.1} parent=11 // pred_region
          %s107 = ssub.s32 12288, 12288
          %108 = vsyncadd [#allocation3], %s107
          %s109 = sshll.u32 [#allocation2], 4
          %s110 = int_to_ptr.vmem [resolvable:$true] %s109
          %115 = dma.hbm_to_vmem [thread:$0]  %s0, 12288, %s110, [#allocation3], 256, 256, 16
        $region16: #{tpu_custom_call.1} parent=11 // pred_fallthru
          _
      $region12: #{tpu_custom_call.1} parent=5 // pred_fallthru
        _
      %p116 = scmp.lt.s32.totalorder %s15, 2
      // Predicated region
      $region17: #{tpu_custom_call.1} parent=5 // pred_check
        %p117 = pneg %p116
      $region18: #{tpu_custom_call.1} parent=5 // pred_check_branch
        %119 = sbr.rel (%p117) target = $region20
      $region19: #{tpu_custom_call.1} parent=5 // pred_region
        // Predicated region
        $region21: #{tpu_custom_call.1} parent=19 // pred_check
          %p120 = pneg %p56
        $region22: #{tpu_custom_call.1} parent=19 // pred_check_branch
          %122 = sbr.rel (%p120) target = $region24
        $region23: #{tpu_custom_call.1} parent=19 // pred_region
          %s123 = sand.u32 %s46, 1
          %s124 = scalar_lea.sflag [#allocation6], %s123
          %s125 = sand.u32 %s46, 1
          %s126 = smul.addr %s125, 128
          %s127 = scalar_lea.vmem [#allocation5], %s126
          %s129 = ssub.s32 2048, 2048
          %130 = vsyncadd %s124, %s129
          %s131 = smul.addr %s15, 2
          %s132 = smul.addr %s131, 128
          %s133 = scalar_lea.hbm %s1, %s132
          %s134 = sshll.u32 %s127, 4
          %s135 = int_to_ptr.vmem [resolvable:$true] %s134
          %140 = dma.hbm_to_vmem [thread:$0]  %s133, 2048, %s135, %s124, 512, 256, 16
        $region24: #{tpu_custom_call.1} parent=19 // pred_fallthru
          _
      $region20: #{tpu_custom_call.1} parent=5 // pred_fallthru
        _
      %p141 = scmp.le.s32.totalorder 1, %s15
      %p142 = scmp.lt.s32.totalorder %s15, 3
      %p143 = pnand %p141, %p142
      %p144 = pneg %p143
      // Predicated region
      $region25: #{tpu_custom_call.1} parent=5 // pred_check
        _
      $region26: #{tpu_custom_call.1} parent=5 // pred_check_branch
        %146 = sbr.rel (%p143) target = $region28
      $region27: #{tpu_custom_call.1} parent=5 // pred_region
        %s147 = ssub.s32 %s15, 1
        // Predicated region
        $region29: #{tpu_custom_call.1} parent=27 // pred_check
          %p148 = pneg %p36
        $region30: #{tpu_custom_call.1} parent=27 // pred_check_branch
          %150 = sbr.rel (%p148) target = $region32
        $region31: #{tpu_custom_call.1} parent=27 // pred_region
          %151 = dma.done [#allocation3], 12288
        $region32: #{tpu_custom_call.1} parent=27 // pred_fallthru
          _
        %s152 = sand.u32 %s49, 1
        %s153 = scalar_lea.sflag [#allocation6], %s152
        %s154 = sand.u32 %s49, 1
        %s155 = smul.addr %s154, 128
        %s156 = scalar_lea.vmem [#allocation5], %s155
        // Predicated region
        $region33: #{tpu_custom_call.1} parent=27 // pred_check
          %p157 = pneg %p62
        $region34: #{tpu_custom_call.1} parent=27 // pred_check_branch
          %159 = sbr.rel (%p157) target = $region36
        $region35: #{tpu_custom_call.1} parent=27 // pred_region
          %160 = dma.done %s153, 2048
        $region36: #{tpu_custom_call.1} parent=27 // pred_fallthru
          _
        %p161 = pneg %p36
        %p162 = pneg %p33
        %s163 = sand.u32 %s49, 1
        %s164 = scalar_lea.sflag [#allocation6], %s163
        %s165 = sand.u32 %s49, 1
        %s166 = smul.addr %s165, 128
        %s167 = scalar_lea.vmem [#allocation5], %s166
        %p168 = pneg %p62
        %p169 = pneg %p59
        %p170 = pneg %p88
        %p171 = pneg %p85
        %s172 = sand.u32 %s75, 1
        %s173 = scalar_lea.sflag [#allocation4], %s172
        %s174 = sand.u32 %s75, 1
        %s175 = smul.addr %s174, 8
        %s176 = scalar_lea.vmem [#allocation7], %s175
        %v177 = vld [vmem:[#allocation2] sm:$0xff]
        %v178 = vld [vmem:[#allocation2 + $0x8] sm:$0xff]
        %v179 = vld [vmem:[#allocation2 + $0x10] sm:$0xff]
        %v180 = vld [vmem:[#allocation2 + $0x18] sm:$0xff]
        %v181 = vld [vmem:[%s156] sm:$0xff]
        %v182 = vld [vmem:[%s156 + $0x8] sm:$0xff]
        %v185 = vcombine.low %v181, %v182
        %v186 = vcombine.high %v181, %v182
        %v188 = vunpack.c.l.s4 1966171168
        %v189 = vunpack.c.0.s8 %v188
        %v190 = vlaneseq
        %v191 = vshrl.u32 %v190, 7
        %v192 = vsub.s32 %v189, %v191
        %v193 = vrot.slane %v185, %v192
        %v195 = vunpack.c.l.s4 1966171168
        %v196 = vunpack.c.0.s8 %v195
        %v197 = vlaneseq
        %v198 = vshrl.u32 %v197, 7
        %v199 = vsub.s32 %v196, %v198
        %v200 = vrot.slane %v186, %v199
        %v201 = vcombine.high %v193, %v193
        %v202 = vcombine.high %v200, %v200
        %v204 = vunpack.c.l.s4 1966171168
        %v205 = vunpack.c.0.s8 %v204
        %v206 = vlaneseq
        %v207 = vshrl.u32 %v206, 7
        %v208 = vsub.s32 %v205, %v207
        %v209 = vrot.slane %v193, %v208
        %v211 = vunpack.c.l.s4 1966171168
        %v212 = vunpack.c.0.s8 %v211
        %v213 = vlaneseq
        %v214 = vshrl.u32 %v213, 7
        %v215 = vsub.s32 %v212, %v214
        %v216 = vrot.slane %v200, %v215
        %v218 = vunpack.c.l.s4 1966171168
        %v219 = vunpack.c.0.s8 %v218
        %v220 = vlaneseq
        %v221 = vshrl.u32 %v220, 7
        %v222 = vsub.s32 %v219, %v221
        %v223 = vrot.slane %v201, %v222
        %v225 = vunpack.c.l.s4 1966171168
        %v226 = vunpack.c.0.s8 %v225
        %v227 = vlaneseq
        %v228 = vshrl.u32 %v227, 7
        %v229 = vsub.s32 %v226, %v228
        %v230 = vrot.slane %v202, %v229
        %v231 = vcombine.high %v209, %v209
        %v232 = vcombine.high %v216, %v216
        %v233 = vcombine.high %v223, %v223
        %v234 = vcombine.high %v230, %v230
        %v235 = vlaneseq
        %v236 = vshrl.u32 %v235, 7
        %v237 = vsub.s32 0, %v236
        %v238 = vrot.slane %v209, %v237
        %v239 = vlaneseq
        %v240 = vshrl.u32 %v239, 7
        %v241 = vsub.s32 1, %v240
        %v242 = vrot.slane %v209, %v241
        %v243 = vlaneseq
        %v244 = vshrl.u32 %v243, 7
        %v245 = vsub.s32 0, %v244
        %v246 = vrot.slane %v223, %v245
        %v247 = vlaneseq
        %v248 = vshrl.u32 %v247, 7
        %v249 = vsub.s32 1, %v248
        %v250 = vrot.slane %v223, %v249
        %v251 = vlaneseq
        %v252 = vshrl.u32 %v251, 7
        %v253 = vsub.s32 0, %v252
        %v254 = vrot.slane %v231, %v253
        %v255 = vlaneseq
        %v256 = vshrl.u32 %v255, 7
        %v257 = vsub.s32 1, %v256
        %v258 = vrot.slane %v231, %v257
        %v259 = vlaneseq
        %v260 = vshrl.u32 %v259, 7
        %v261 = vsub.s32 0, %v260
        %v262 = vrot.slane %v233, %v261
        %v263 = vlaneseq
        %v264 = vshrl.u32 %v263, 7
        %v265 = vsub.s32 1, %v264
        %v266 = vrot.slane %v233, %v265
        %v267 = vlaneseq
        %v268 = vshrl.u32 %v267, 7
        %v269 = vsub.s32 0, %v268
        %v270 = vrot.slane %v216, %v269
        %v271 = vlaneseq
        %v272 = vshrl.u32 %v271, 7
        %v273 = vsub.s32 1, %v272
        %v274 = vrot.slane %v216, %v273
        %v275 = vlaneseq
        %v276 = vshrl.u32 %v275, 7
        %v277 = vsub.s32 0, %v276
        %v278 = vrot.slane %v230, %v277
        %v279 = vlaneseq
        %v280 = vshrl.u32 %v279, 7
        %v281 = vsub.s32 1, %v280
        %v282 = vrot.slane %v230, %v281
        %v283 = vlaneseq
        %v284 = vshrl.u32 %v283, 7
        %v285 = vsub.s32 0, %v284
        %v286 = vrot.slane %v232, %v285
        %v287 = vlaneseq
        %v288 = vshrl.u32 %v287, 7
        %v289 = vsub.s32 1, %v288
        %v290 = vrot.slane %v232, %v289
        %v291 = vlaneseq
        %v292 = vshrl.u32 %v291, 7
        %v293 = vsub.s32 0, %v292
        %v294 = vrot.slane %v234, %v293
        %v295 = vlaneseq
        %v296 = vshrl.u32 %v295, 7
        %v297 = vsub.s32 1, %v296
        %v298 = vrot.slane %v234, %v297
        %v315 = vmul.f32 %v177, %v238
        %v316 = vmul.f32 %v178, %v242
        %v317 = vmul.f32 %v179, %v238
        %v318 = vmul.f32 %v180, %v242
        %v319 = vmul.f32 %v177, %v246
        %v320 = vmul.f32 %v178, %v250
        %v321 = vmul.f32 %v179, %v246
        %v322 = vmul.f32 %v180, %v250
        %v323 = vmul.f32 %v177, %v254
        %v324 = vmul.f32 %v178, %v258
        %v325 = vmul.f32 %v179, %v254
        %v326 = vmul.f32 %v180, %v258
        %v327 = vmul.f32 %v177, %v262
        %v328 = vmul.f32 %v178, %v266
        %v329 = vmul.f32 %v179, %v262
        %v330 = vmul.f32 %v180, %v266
        %v331 = vmul.f32 %v177, %v270
        %v332 = vmul.f32 %v178, %v274
        %v333 = vmul.f32 %v179, %v270
        %v334 = vmul.f32 %v180, %v274
        %v335 = vmul.f32 %v177, %v278
        %v336 = vmul.f32 %v178, %v282
        %v337 = vmul.f32 %v179, %v278
        %v338 = vmul.f32 %v180, %v282
        %v339 = vmul.f32 %v177, %v286
        %v340 = vmul.f32 %v178, %v290
        %v341 = vmul.f32 %v179, %v286
        %v342 = vmul.f32 %v180, %v290
        %v343 = vmul.f32 %v177, %v294
        %v344 = vmul.f32 %v178, %v298
        %v345 = vmul.f32 %v179, %v294
        %v346 = vmul.f32 %v180, %v298
        %s347 = scalar_lea.vmem [#allocation2], 32
        %v348 = vld [vmem:[%s347] sm:$0xff]
        %v349 = vld [vmem:[%s347 + $0x8] sm:$0xff]
        %v350 = vld [vmem:[%s347 + $0x10] sm:$0xff]
        %v351 = vld [vmem:[%s347 + $0x18] sm:$0xff]
        %s352 = scalar_lea.vmem %s156, 16 [#allocation5]
        %v353 = vld [vmem:[%s352] sm:$0xff]
        %v354 = vld [vmem:[%s352 + $0x8] sm:$0xff]
        %v357 = vcombine.low %v353, %v354
        %v358 = vcombine.high %v353, %v354
        %v360 = vunpack.c.l.s4 1966171168
        %v361 = vunpack.c.0.s8 %v360
        %v362 = vlaneseq
        %v363 = vshrl.u32 %v362, 7
        %v364 = vsub.s32 %v361, %v363
        %v365 = vrot.slane %v357, %v364
        %v367 = vunpack.c.l.s4 1966171168
        %v368 = vunpack.c.0.s8 %v367
        %v369 = vlaneseq
        %v370 = vshrl.u32 %v369, 7
        %v371 = vsub.s32 %v368, %v370
        %v372 = vrot.slane %v358, %v371
        %v373 = vcombine.high %v365, %v365
        %v374 = vcombine.high %v372, %v372
        %v376 = vunpack.c.l.s4 1966171168
        %v377 = vunpack.c.0.s8 %v376
        %v378 = vlaneseq
        %v379 = vshrl.u32 %v378, 7
        %v380 = vsub.s32 %v377, %v379
        %v381 = vrot.slane %v365, %v380
        %v383 = vunpack.c.l.s4 1966171168
        %v384 = vunpack.c.0.s8 %v383
        %v385 = vlaneseq
        %v386 = vshrl.u32 %v385, 7
        %v387 = vsub.s32 %v384, %v386
        %v388 = vrot.slane %v372, %v387
        %v390 = vunpack.c.l.s4 1966171168
        %v391 = vunpack.c.0.s8 %v390
        %v392 = vlaneseq
        %v393 = vshrl.u32 %v392, 7
        %v394 = vsub.s32 %v391, %v393
        %v395 = vrot.slane %v373, %v394
        %v397 = vunpack.c.l.s4 1966171168
        %v398 = vunpack.c.0.s8 %v397
        %v399 = vlaneseq
        %v400 = vshrl.u32 %v399, 7
        %v401 = vsub.s32 %v398, %v400
        %v402 = vrot.slane %v374, %v401
        %v403 = vcombine.high %v381, %v381
        %v404 = vcombine.high %v388, %v388
        %v405 = vcombine.high %v395, %v395
        %v406 = vcombine.high %v402, %v402
        %v407 = vlaneseq
        %v408 = vshrl.u32 %v407, 7
        %v409 = vsub.s32 0, %v408
        %v410 = vrot.slane %v381, %v409
        %v411 = vlaneseq
        %v412 = vshrl.u32 %v411, 7
        %v413 = vsub.s32 1, %v412
        %v414 = vrot.slane %v381, %v413
        %v415 = vlaneseq
        %v416 = vshrl.u32 %v415, 7
        %v417 = vsub.s32 0, %v416
        %v418 = vrot.slane %v395, %v417
        %v419 = vlaneseq
        %v420 = vshrl.u32 %v419, 7
        %v421 = vsub.s32 1, %v420
        %v422 = vrot.slane %v395, %v421
        %v423 = vlaneseq
        %v424 = vshrl.u32 %v423, 7
        %v425 = vsub.s32 0, %v424
        %v426 = vrot.slane %v403, %v425
        %v427 = vlaneseq
        %v428 = vshrl.u32 %v427, 7
        %v429 = vsub.s32 1, %v428
        %v430 = vrot.slane %v403, %v429
        %v431 = vlaneseq
        %v432 = vshrl.u32 %v431, 7
        %v433 = vsub.s32 0, %v432
        %v434 = vrot.slane %v405, %v433
        %v435 = vlaneseq
        %v436 = vshrl.u32 %v435, 7
        %v437 = vsub.s32 1, %v436
        %v438 = vrot.slane %v405, %v437
        %v439 = vlaneseq
        %v440 = vshrl.u32 %v439, 7
        %v441 = vsub.s32 0, %v440
        %v442 = vrot.slane %v388, %v441
        %v443 = vlaneseq
        %v444 = vshrl.u32 %v443, 7
        %v445 = vsub.s32 1, %v444
        %v446 = vrot.slane %v388, %v445
        %v447 = vlaneseq
        %v448 = vshrl.u32 %v447, 7
        %v449 = vsub.s32 0, %v448
        %v450 = vrot.slane %v402, %v449
        %v451 = vlaneseq
        %v452 = vshrl.u32 %v451, 7
        %v453 = vsub.s32 1, %v452
        %v454 = vrot.slane %v402, %v453
        %v455 = vlaneseq
        %v456 = vshrl.u32 %v455, 7
        %v457 = vsub.s32 0, %v456
        %v458 = vrot.slane %v404, %v457
        %v459 = vlaneseq
        %v460 = vshrl.u32 %v459, 7
        %v461 = vsub.s32 1, %v460
        %v462 = vrot.slane %v404, %v461
        %v463 = vlaneseq
        %v464 = vshrl.u32 %v463, 7
        %v465 = vsub.s32 0, %v464
        %v466 = vrot.slane %v406, %v465
        %v467 = vlaneseq
        %v468 = vshrl.u32 %v467, 7
        %v469 = vsub.s32 1, %v468
        %v470 = vrot.slane %v406, %v469
        %v487 = vmul.f32 %v348, %v410
        %v488 = vmul.f32 %v349, %v414
        %v489 = vmul.f32 %v350, %v410
        %v490 = vmul.f32 %v351, %v414
        %v491 = vmul.f32 %v348, %v418
        %v492 = vmul.f32 %v349, %v422
        %v493 = vmul.f32 %v350, %v418
        %v494 = vmul.f32 %v351, %v422
        %v495 = vmul.f32 %v348, %v426
        %v496 = vmul.f32 %v349, %v430
        %v497 = vmul.f32 %v350, %v426
        %v498 = vmul.f32 %v351, %v430
        %v499 = vmul.f32 %v348, %v434
        %v500 = vmul.f32 %v349, %v438
        %v501 = vmul.f32 %v350, %v434
        %v502 = vmul.f32 %v351, %v438
        %v503 = vmul.f32 %v348, %v442
        %v504 = vmul.f32 %v349, %v446
        %v505 = vmul.f32 %v350, %v442
        %v506 = vmul.f32 %v351, %v446
        %v507 = vmul.f32 %v348, %v450
        %v508 = vmul.f32 %v349, %v454
        %v509 = vmul.f32 %v350, %v450
        %v510 = vmul.f32 %v351, %v454
        %v511 = vmul.f32 %v348, %v458
        %v512 = vmul.f32 %v349, %v462
        %v513 = vmul.f32 %v350, %v458
        %v514 = vmul.f32 %v351, %v462
        %v515 = vmul.f32 %v348, %v466
        %v516 = vmul.f32 %v349, %v470
        %v517 = vmul.f32 %v350, %v466
        %v518 = vmul.f32 %v351, %v470
        %v519 = vadd.f32 %v315, %v487
        %v520 = vadd.f32 %v316, %v488
        %v521 = vadd.f32 %v317, %v489
        %v522 = vadd.f32 %v318, %v490
        %v523 = vadd.f32 %v319, %v491
        %v524 = vadd.f32 %v320, %v492
        %v525 = vadd.f32 %v321, %v493
        %v526 = vadd.f32 %v322, %v494
        %v527 = vadd.f32 %v323, %v495
        %v528 = vadd.f32 %v324, %v496
        %v529 = vadd.f32 %v325, %v497
        %v530 = vadd.f32 %v326, %v498
        %v531 = vadd.f32 %v327, %v499
        %v532 = vadd.f32 %v328, %v500
        %v533 = vadd.f32 %v329, %v501
        %v534 = vadd.f32 %v330, %v502
        %v535 = vadd.f32 %v331, %v503
        %v536 = vadd.f32 %v332, %v504
        %v537 = vadd.f32 %v333, %v505
        %v538 = vadd.f32 %v334, %v506
        %v539 = vadd.f32 %v335, %v507
        %v540 = vadd.f32 %v336, %v508
        %v541 = vadd.f32 %v337, %v509
        %v542 = vadd.f32 %v338, %v510
        %v543 = vadd.f32 %v339, %v511
        %v544 = vadd.f32 %v340, %v512
        %v545 = vadd.f32 %v341, %v513
        %v546 = vadd.f32 %v342, %v514
        %v547 = vadd.f32 %v343, %v515
        %v548 = vadd.f32 %v344, %v516
        %v549 = vadd.f32 %v345, %v517
        %v550 = vadd.f32 %v346, %v518
        %s551 = scalar_lea.vmem [#allocation2], 64
        %v552 = vld [vmem:[%s551] sm:$0xff]
        %v553 = vld [vmem:[%s551 + $0x8] sm:$0xff]
        %v554 = vld [vmem:[%s551 + $0x10] sm:$0xff]
        %v555 = vld [vmem:[%s551 + $0x18] sm:$0xff]
        %s556 = scalar_lea.vmem %s156, 32 [#allocation5]
        %v557 = vld [vmem:[%s556] sm:$0xff]
        %v558 = vld [vmem:[%s556 + $0x8] sm:$0xff]
        %v561 = vcombine.low %v557, %v558
        %v562 = vcombine.high %v557, %v558
        %v564 = vunpack.c.l.s4 1966171168
        %v565 = vunpack.c.0.s8 %v564
        %v566 = vlaneseq
        %v567 = vshrl.u32 %v566, 7
        %v568 = vsub.s32 %v565, %v567
        %v569 = vrot.slane %v561, %v568
        %v571 = vunpack.c.l.s4 1966171168
        %v572 = vunpack.c.0.s8 %v571
        %v573 = vlaneseq
        %v574 = vshrl.u32 %v573, 7
        %v575 = vsub.s32 %v572, %v574
        %v576 = vrot.slane %v562, %v575
        %v577 = vcombine.high %v569, %v569
        %v578 = vcombine.high %v576, %v576
        %v580 = vunpack.c.l.s4 1966171168
        %v581 = vunpack.c.0.s8 %v580
        %v582 = vlaneseq
        %v583 = vshrl.u32 %v582, 7
        %v584 = vsub.s32 %v581, %v583
        %v585 = vrot.slane %v569, %v584
        %v587 = vunpack.c.l.s4 1966171168
        %v588 = vunpack.c.0.s8 %v587
        %v589 = vlaneseq
        %v590 = vshrl.u32 %v589, 7
        %v591 = vsub.s32 %v588, %v590
        %v592 = vrot.slane %v576, %v591
        %v594 = vunpack.c.l.s4 1966171168
        %v595 = vunpack.c.0.s8 %v594
        %v596 = vlaneseq
        %v597 = vshrl.u32 %v596, 7
        %v598 = vsub.s32 %v595, %v597
        %v599 = vrot.slane %v577, %v598
        %v601 = vunpack.c.l.s4 1966171168
        %v602 = vunpack.c.0.s8 %v601
        %v603 = vlaneseq
        %v604 = vshrl.u32 %v603, 7
        %v605 = vsub.s32 %v602, %v604
        %v606 = vrot.slane %v578, %v605
        %v607 = vcombine.high %v585, %v585
        %v608 = vcombine.high %v592, %v592
        %v609 = vcombine.high %v599, %v599
        %v610 = vcombine.high %v606, %v606
        %v611 = vlaneseq
        %v612 = vshrl.u32 %v611, 7
        %v613 = vsub.s32 0, %v612
        %v614 = vrot.slane %v585, %v613
        %v615 = vlaneseq
        %v616 = vshrl.u32 %v615, 7
        %v617 = vsub.s32 1, %v616
        %v618 = vrot.slane %v585, %v617
        %v619 = vlaneseq
        %v620 = vshrl.u32 %v619, 7
        %v621 = vsub.s32 0, %v620
        %v622 = vrot.slane %v599, %v621
        %v623 = vlaneseq
        %v624 = vshrl.u32 %v623, 7
        %v625 = vsub.s32 1, %v624
        %v626 = vrot.slane %v599, %v625
        %v627 = vlaneseq
        %v628 = vshrl.u32 %v627, 7
        %v629 = vsub.s32 0, %v628
        %v630 = vrot.slane %v607, %v629
        %v631 = vlaneseq
        %v632 = vshrl.u32 %v631, 7
        %v633 = vsub.s32 1, %v632
        %v634 = vrot.slane %v607, %v633
        %v635 = vlaneseq
        %v636 = vshrl.u32 %v635, 7
        %v637 = vsub.s32 0, %v636
        %v638 = vrot.slane %v609, %v637
        %v639 = vlaneseq
        %v640 = vshrl.u32 %v639, 7
        %v641 = vsub.s32 1, %v640
        %v642 = vrot.slane %v609, %v641
        %v643 = vlaneseq
        %v644 = vshrl.u32 %v643, 7
        %v645 = vsub.s32 0, %v644
        %v646 = vrot.slane %v592, %v645
        %v647 = vlaneseq
        %v648 = vshrl.u32 %v647, 7
        %v649 = vsub.s32 1, %v648
        %v650 = vrot.slane %v592, %v649
        %v651 = vlaneseq
        %v652 = vshrl.u32 %v651, 7
        %v653 = vsub.s32 0, %v652
        %v654 = vrot.slane %v606, %v653
        %v655 = vlaneseq
        %v656 = vshrl.u32 %v655, 7
        %v657 = vsub.s32 1, %v656
        %v658 = vrot.slane %v606, %v657
        %v659 = vlaneseq
        %v660 = vshrl.u32 %v659, 7
        %v661 = vsub.s32 0, %v660
        %v662 = vrot.slane %v608, %v661
        %v663 = vlaneseq
        %v664 = vshrl.u32 %v663, 7
        %v665 = vsub.s32 1, %v664
        %v666 = vrot.slane %v608, %v665
        %v667 = vlaneseq
        %v668 = vshrl.u32 %v667, 7
        %v669 = vsub.s32 0, %v668
        %v670 = vrot.slane %v610, %v669
        %v671 = vlaneseq
        %v672 = vshrl.u32 %v671, 7
        %v673 = vsub.s32 1, %v672
        %v674 = vrot.slane %v610, %v673
        %v691 = vmul.f32 %v552, %v614
        %v692 = vmul.f32 %v553, %v618
        %v693 = vmul.f32 %v554, %v614
        %v694 = vmul.f32 %v555, %v618
        %v695 = vmul.f32 %v552, %v622
        %v696 = vmul.f32 %v553, %v626
        %v697 = vmul.f32 %v554, %v622
        %v698 = vmul.f32 %v555, %v626
        %v699 = vmul.f32 %v552, %v630
        %v700 = vmul.f32 %v553, %v634
        %v701 = vmul.f32 %v554, %v630
        %v702 = vmul.f32 %v555, %v634
        %v703 = vmul.f32 %v552, %v638
        %v704 = vmul.f32 %v553, %v642
        %v705 = vmul.f32 %v554, %v638
        %v706 = vmul.f32 %v555, %v642
        %v707 = vmul.f32 %v552, %v646
        %v708 = vmul.f32 %v553, %v650
        %v709 = vmul.f32 %v554, %v646
        %v710 = vmul.f32 %v555, %v650
        %v711 = vmul.f32 %v552, %v654
        %v712 = vmul.f32 %v553, %v658
        %v713 = vmul.f32 %v554, %v654
        %v714 = vmul.f32 %v555, %v658
        %v715 = vmul.f32 %v552, %v662
        %v716 = vmul.f32 %v553, %v666
        %v717 = vmul.f32 %v554, %v662
        %v718 = vmul.f32 %v555, %v666
        %v719 = vmul.f32 %v552, %v670
        %v720 = vmul.f32 %v553, %v674
        %v721 = vmul.f32 %v554, %v670
        %v722 = vmul.f32 %v555, %v674
        %v723 = vadd.f32 %v519, %v691
        %v724 = vadd.f32 %v520, %v692
        %v725 = vadd.f32 %v521, %v693
        %v726 = vadd.f32 %v522, %v694
        %v727 = vadd.f32 %v523, %v695
        %v728 = vadd.f32 %v524, %v696
        %v729 = vadd.f32 %v525, %v697
        %v730 = vadd.f32 %v526, %v698
        %v731 = vadd.f32 %v527, %v699
        %v732 = vadd.f32 %v528, %v700
        %v733 = vadd.f32 %v529, %v701
        %v734 = vadd.f32 %v530, %v702
        %v735 = vadd.f32 %v531, %v703
        %v736 = vadd.f32 %v532, %v704
        %v737 = vadd.f32 %v533, %v705
        %v738 = vadd.f32 %v534, %v706
        %v739 = vadd.f32 %v535, %v707
        %v740 = vadd.f32 %v536, %v708
        %v741 = vadd.f32 %v537, %v709
        %v742 = vadd.f32 %v538, %v710
        %v743 = vadd.f32 %v539, %v711
        %v744 = vadd.f32 %v540, %v712
        %v745 = vadd.f32 %v541, %v713
        %v746 = vadd.f32 %v542, %v714
        %v747 = vadd.f32 %v543, %v715
        %v748 = vadd.f32 %v544, %v716
        %v749 = vadd.f32 %v545, %v717
        %v750 = vadd.f32 %v546, %v718
        %v751 = vadd.f32 %v547, %v719
        %v752 = vadd.f32 %v548, %v720
        %v753 = vadd.f32 %v549, %v721
        %v754 = vadd.f32 %v550, %v722
        %s755 = scalar_lea.vmem [#allocation2], 96
        %v756 = vld [vmem:[%s755] sm:$0xff]
        %v757 = vld [vmem:[%s755 + $0x8] sm:$0xff]
        %v758 = vld [vmem:[%s755 + $0x10] sm:$0xff]
        %v759 = vld [vmem:[%s755 + $0x18] sm:$0xff]
        %s760 = scalar_lea.vmem %s156, 48 [#allocation5]
        %v761 = vld [vmem:[%s760] sm:$0xff]
        %v762 = vld [vmem:[%s760 + $0x8] sm:$0xff]
        %v765 = vcombine.low %v761, %v762
        %v766 = vcombine.high %v761, %v762
        %v768 = vunpack.c.l.s4 1966171168
        %v769 = vunpack.c.0.s8 %v768
        %v770 = vlaneseq
        %v771 = vshrl.u32 %v770, 7
        %v772 = vsub.s32 %v769, %v771
        %v773 = vrot.slane %v765, %v772
        %v775 = vunpack.c.l.s4 1966171168
        %v776 = vunpack.c.0.s8 %v775
        %v777 = vlaneseq
        %v778 = vshrl.u32 %v777, 7
        %v779 = vsub.s32 %v776, %v778
        %v780 = vrot.slane %v766, %v779
        %v781 = vcombine.high %v773, %v773
        %v782 = vcombine.high %v780, %v780
        %v784 = vunpack.c.l.s4 1966171168
        %v785 = vunpack.c.0.s8 %v784
        %v786 = vlaneseq
        %v787 = vshrl.u32 %v786, 7
        %v788 = vsub.s32 %v785, %v787
        %v789 = vrot.slane %v773, %v788
        %v791 = vunpack.c.l.s4 1966171168
        %v792 = vunpack.c.0.s8 %v791
        %v793 = vlaneseq
        %v794 = vshrl.u32 %v793, 7
        %v795 = vsub.s32 %v792, %v794
        %v796 = vrot.slane %v780, %v795
        %v798 = vunpack.c.l.s4 1966171168
        %v799 = vunpack.c.0.s8 %v798
        %v800 = vlaneseq
        %v801 = vshrl.u32 %v800, 7
        %v802 = vsub.s32 %v799, %v801
        %v803 = vrot.slane %v781, %v802
        %v805 = vunpack.c.l.s4 1966171168
        %v806 = vunpack.c.0.s8 %v805
        %v807 = vlaneseq
        %v808 = vshrl.u32 %v807, 7
        %v809 = vsub.s32 %v806, %v808
        %v810 = vrot.slane %v782, %v809
        %v811 = vcombine.high %v789, %v789
        %v812 = vcombine.high %v796, %v796
        %v813 = vcombine.high %v803, %v803
        %v814 = vcombine.high %v810, %v810
        %v815 = vlaneseq
        %v816 = vshrl.u32 %v815, 7
        %v817 = vsub.s32 0, %v816
        %v818 = vrot.slane %v789, %v817
        %v819 = vlaneseq
        %v820 = vshrl.u32 %v819, 7
        %v821 = vsub.s32 1, %v820
        %v822 = vrot.slane %v789, %v821
        %v823 = vlaneseq
        %v824 = vshrl.u32 %v823, 7
        %v825 = vsub.s32 0, %v824
        %v826 = vrot.slane %v803, %v825
        %v827 = vlaneseq
        %v828 = vshrl.u32 %v827, 7
        %v829 = vsub.s32 1, %v828
        %v830 = vrot.slane %v803, %v829
        %v831 = vlaneseq
        %v832 = vshrl.u32 %v831, 7
        %v833 = vsub.s32 0, %v832
        %v834 = vrot.slane %v811, %v833
        %v835 = vlaneseq
        %v836 = vshrl.u32 %v835, 7
        %v837 = vsub.s32 1, %v836
        %v838 = vrot.slane %v811, %v837
        %v839 = vlaneseq
        %v840 = vshrl.u32 %v839, 7
        %v841 = vsub.s32 0, %v840
        %v842 = vrot.slane %v813, %v841
        %v843 = vlaneseq
        %v844 = vshrl.u32 %v843, 7
        %v845 = vsub.s32 1, %v844
        %v846 = vrot.slane %v813, %v845
        %v847 = vlaneseq
        %v848 = vshrl.u32 %v847, 7
        %v849 = vsub.s32 0, %v848
        %v850 = vrot.slane %v796, %v849
        %v851 = vlaneseq
        %v852 = vshrl.u32 %v851, 7
        %v853 = vsub.s32 1, %v852
        %v854 = vrot.slane %v796, %v853
        %v855 = vlaneseq
        %v856 = vshrl.u32 %v855, 7
        %v857 = vsub.s32 0, %v856
        %v858 = vrot.slane %v810, %v857
        %v859 = vlaneseq
        %v860 = vshrl.u32 %v859, 7
        %v861 = vsub.s32 1, %v860
        %v862 = vrot.slane %v810, %v861
        %v863 = vlaneseq
        %v864 = vshrl.u32 %v863, 7
        %v865 = vsub.s32 0, %v864
        %v866 = vrot.slane %v812, %v865
        %v867 = vlaneseq
        %v868 = vshrl.u32 %v867, 7
        %v869 = vsub.s32 1, %v868
        %v870 = vrot.slane %v812, %v869
        %v871 = vlaneseq
        %v872 = vshrl.u32 %v871, 7
        %v873 = vsub.s32 0, %v872
        %v874 = vrot.slane %v814, %v873
        %v875 = vlaneseq
        %v876 = vshrl.u32 %v875, 7
        %v877 = vsub.s32 1, %v876
        %v878 = vrot.slane %v814, %v877
        %v895 = vmul.f32 %v756, %v818
        %v896 = vmul.f32 %v757, %v822
        %v897 = vmul.f32 %v758, %v818
        %v898 = vmul.f32 %v759, %v822
        %v899 = vmul.f32 %v756, %v826
        %v900 = vmul.f32 %v757, %v830
        %v901 = vmul.f32 %v758, %v826
        %v902 = vmul.f32 %v759, %v830
        %v903 = vmul.f32 %v756, %v834
        %v904 = vmul.f32 %v757, %v838
        %v905 = vmul.f32 %v758, %v834
        %v906 = vmul.f32 %v759, %v838
        %v907 = vmul.f32 %v756, %v842
        %v908 = vmul.f32 %v757, %v846
        %v909 = vmul.f32 %v758, %v842
        %v910 = vmul.f32 %v759, %v846
        %v911 = vmul.f32 %v756, %v850
        %v912 = vmul.f32 %v757, %v854
        %v913 = vmul.f32 %v758, %v850
        %v914 = vmul.f32 %v759, %v854
        %v915 = vmul.f32 %v756, %v858
        %v916 = vmul.f32 %v757, %v862
        %v917 = vmul.f32 %v758, %v858
        %v918 = vmul.f32 %v759, %v862
        %v919 = vmul.f32 %v756, %v866
        %v920 = vmul.f32 %v757, %v870
        %v921 = vmul.f32 %v758, %v866
        %v922 = vmul.f32 %v759, %v870
        %v923 = vmul.f32 %v756, %v874
        %v924 = vmul.f32 %v757, %v878
        %v925 = vmul.f32 %v758, %v874
        %v926 = vmul.f32 %v759, %v878
        %v927 = vadd.f32 %v723, %v895
        %v928 = vadd.f32 %v724, %v896
        %v929 = vadd.f32 %v725, %v897
        %v930 = vadd.f32 %v726, %v898
        %v931 = vadd.f32 %v727, %v899
        %v932 = vadd.f32 %v728, %v900
        %v933 = vadd.f32 %v729, %v901
        %v934 = vadd.f32 %v730, %v902
        %v935 = vadd.f32 %v731, %v903
        %v936 = vadd.f32 %v732, %v904
        %v937 = vadd.f32 %v733, %v905
        %v938 = vadd.f32 %v734, %v906
        %v939 = vadd.f32 %v735, %v907
        %v940 = vadd.f32 %v736, %v908
        %v941 = vadd.f32 %v737, %v909
        %v942 = vadd.f32 %v738, %v910
        %v943 = vadd.f32 %v739, %v911
        %v944 = vadd.f32 %v740, %v912
        %v945 = vadd.f32 %v741, %v913
        %v946 = vadd.f32 %v742, %v914
        %v947 = vadd.f32 %v743, %v915
        %v948 = vadd.f32 %v744, %v916
        %v949 = vadd.f32 %v745, %v917
        %v950 = vadd.f32 %v746, %v918
        %v951 = vadd.f32 %v747, %v919
        %v952 = vadd.f32 %v748, %v920
        %v953 = vadd.f32 %v749, %v921
        %v954 = vadd.f32 %v750, %v922
        %v955 = vadd.f32 %v751, %v923
        %v956 = vadd.f32 %v752, %v924
        %v957 = vadd.f32 %v753, %v925
        %v958 = vadd.f32 %v754, %v926
        %s959 = scalar_lea.vmem [#allocation2], 128
        %v960 = vld [vmem:[%s959] sm:$0xff]
        %v961 = vld [vmem:[%s959 + $0x8] sm:$0xff]
        %v962 = vld [vmem:[%s959 + $0x10] sm:$0xff]
        %v963 = vld [vmem:[%s959 + $0x18] sm:$0xff]
        %s964 = scalar_lea.vmem %s156, 64 [#allocation5]
        %v965 = vld [vmem:[%s964] sm:$0xff]
        %v966 = vld [vmem:[%s964 + $0x8] sm:$0xff]
        %v969 = vcombine.low %v965, %v966
        %v970 = vcombine.high %v965, %v966
        %v972 = vunpack.c.l.s4 1966171168
        %v973 = vunpack.c.0.s8 %v972
        %v974 = vlaneseq
        %v975 = vshrl.u32 %v974, 7
        %v976 = vsub.s32 %v973, %v975
        %v977 = vrot.slane %v969, %v976
        %v979 = vunpack.c.l.s4 1966171168
        %v980 = vunpack.c.0.s8 %v979
        %v981 = vlaneseq
        %v982 = vshrl.u32 %v981, 7
        %v983 = vsub.s32 %v980, %v982
        %v984 = vrot.slane %v970, %v983
        %v985 = vcombine.high %v977, %v977
        %v986 = vcombine.high %v984, %v984
        %v988 = vunpack.c.l.s4 1966171168
        %v989 = vunpack.c.0.s8 %v988
        %v990 = vlaneseq
        %v991 = vshrl.u32 %v990, 7
        %v992 = vsub.s32 %v989, %v991
        %v993 = vrot.slane %v977, %v992
        %v995 = vunpack.c.l.s4 1966171168
        %v996 = vunpack.c.0.s8 %v995
        %v997 = vlaneseq
        %v998 = vshrl.u32 %v997, 7
        %v999 = vsub.s32 %v996, %v998
        %v1000 = vrot.slane %v984, %v999
        %v1002 = vunpack.c.l.s4 1966171168
        %v1003 = vunpack.c.0.s8 %v1002
        %v1004 = vlaneseq
        %v1005 = vshrl.u32 %v1004, 7
        %v1006 = vsub.s32 %v1003, %v1005
        %v1007 = vrot.slane %v985, %v1006
        %v1009 = vunpack.c.l.s4 1966171168
        %v1010 = vunpack.c.0.s8 %v1009
        %v1011 = vlaneseq
        %v1012 = vshrl.u32 %v1011, 7
        %v1013 = vsub.s32 %v1010, %v1012
        %v1014 = vrot.slane %v986, %v1013
        %v1015 = vcombine.high %v993, %v993
        %v1016 = vcombine.high %v1000, %v1000
        %v1017 = vcombine.high %v1007, %v1007
        %v1018 = vcombine.high %v1014, %v1014
        %v1019 = vlaneseq
        %v1020 = vshrl.u32 %v1019, 7
        %v1021 = vsub.s32 0, %v1020
        %v1022 = vrot.slane %v993, %v1021
        %v1023 = vlaneseq
        %v1024 = vshrl.u32 %v1023, 7
        %v1025 = vsub.s32 1, %v1024
        %v1026 = vrot.slane %v993, %v1025
        %v1027 = vlaneseq
        %v1028 = vshrl.u32 %v1027, 7
        %v1029 = vsub.s32 0, %v1028
        %v1030 = vrot.slane %v1007, %v1029
        %v1031 = vlaneseq
        %v1032 = vshrl.u32 %v1031, 7
        %v1033 = vsub.s32 1, %v1032
        %v1034 = vrot.slane %v1007, %v1033
        %v1035 = vlaneseq
        %v1036 = vshrl.u32 %v1035, 7
        %v1037 = vsub.s32 0, %v1036
        %v1038 = vrot.slane %v1015, %v1037
        %v1039 = vlaneseq
        %v1040 = vshrl.u32 %v1039, 7
        %v1041 = vsub.s32 1, %v1040
        %v1042 = vrot.slane %v1015, %v1041
        %v1043 = vlaneseq
        %v1044 = vshrl.u32 %v1043, 7
        %v1045 = vsub.s32 0, %v1044
        %v1046 = vrot.slane %v1017, %v1045
        %v1047 = vlaneseq
        %v1048 = vshrl.u32 %v1047, 7
        %v1049 = vsub.s32 1, %v1048
        %v1050 = vrot.slane %v1017, %v1049
        %v1051 = vlaneseq
        %v1052 = vshrl.u32 %v1051, 7
        %v1053 = vsub.s32 0, %v1052
        %v1054 = vrot.slane %v1000, %v1053
        %v1055 = vlaneseq
        %v1056 = vshrl.u32 %v1055, 7
        %v1057 = vsub.s32 1, %v1056
        %v1058 = vrot.slane %v1000, %v1057
        %v1059 = vlaneseq
        %v1060 = vshrl.u32 %v1059, 7
        %v1061 = vsub.s32 0, %v1060
        %v1062 = vrot.slane %v1014, %v1061
        %v1063 = vlaneseq
        %v1064 = vshrl.u32 %v1063, 7
        %v1065 = vsub.s32 1, %v1064
        %v1066 = vrot.slane %v1014, %v1065
        %v1067 = vlaneseq
        %v1068 = vshrl.u32 %v1067, 7
        %v1069 = vsub.s32 0, %v1068
        %v1070 = vrot.slane %v1016, %v1069
        %v1071 = vlaneseq
        %v1072 = vshrl.u32 %v1071, 7
        %v1073 = vsub.s32 1, %v1072
        %v1074 = vrot.slane %v1016, %v1073
        %v1075 = vlaneseq
        %v1076 = vshrl.u32 %v1075, 7
        %v1077 = vsub.s32 0, %v1076
        %v1078 = vrot.slane %v1018, %v1077
        %v1079 = vlaneseq
        %v1080 = vshrl.u32 %v1079, 7
        %v1081 = vsub.s32 1, %v1080
        %v1082 = vrot.slane %v1018, %v1081
        %v1099 = vmul.f32 %v960, %v1022
        %v1100 = vmul.f32 %v961, %v1026
        %v1101 = vmul.f32 %v962, %v1022
        %v1102 = vmul.f32 %v963, %v1026
        %v1103 = vmul.f32 %v960, %v1030
        %v1104 = vmul.f32 %v961, %v1034
        %v1105 = vmul.f32 %v962, %v1030
        %v1106 = vmul.f32 %v963, %v1034
        %v1107 = vmul.f32 %v960, %v1038
        %v1108 = vmul.f32 %v961, %v1042
        %v1109 = vmul.f32 %v962, %v1038
        %v1110 = vmul.f32 %v963, %v1042
        %v1111 = vmul.f32 %v960, %v1046
        %v1112 = vmul.f32 %v961, %v1050
        %v1113 = vmul.f32 %v962, %v1046
        %v1114 = vmul.f32 %v963, %v1050
        %v1115 = vmul.f32 %v960, %v1054
        %v1116 = vmul.f32 %v961, %v1058
        %v1117 = vmul.f32 %v962, %v1054
        %v1118 = vmul.f32 %v963, %v1058
        %v1119 = vmul.f32 %v960, %v1062
        %v1120 = vmul.f32 %v961, %v1066
        %v1121 = vmul.f32 %v962, %v1062
        %v1122 = vmul.f32 %v963, %v1066
        %v1123 = vmul.f32 %v960, %v1070
        %v1124 = vmul.f32 %v961, %v1074
        %v1125 = vmul.f32 %v962, %v1070
        %v1126 = vmul.f32 %v963, %v1074
        %v1127 = vmul.f32 %v960, %v1078
        %v1128 = vmul.f32 %v961, %v1082
        %v1129 = vmul.f32 %v962, %v1078
        %v1130 = vmul.f32 %v963, %v1082
        %v1131 = vadd.f32 %v927, %v1099
        %v1132 = vadd.f32 %v928, %v1100
        %v1133 = vadd.f32 %v929, %v1101
        %v1134 = vadd.f32 %v930, %v1102
        %v1135 = vadd.f32 %v931, %v1103
        %v1136 = vadd.f32 %v932, %v1104
        %v1137 = vadd.f32 %v933, %v1105
        %v1138 = vadd.f32 %v934, %v1106
        %v1139 = vadd.f32 %v935, %v1107
        %v1140 = vadd.f32 %v936, %v1108
        %v1141 = vadd.f32 %v937, %v1109
        %v1142 = vadd.f32 %v938, %v1110
        %v1143 = vadd.f32 %v939, %v1111
        %v1144 = vadd.f32 %v940, %v1112
        %v1145 = vadd.f32 %v941, %v1113
        %v1146 = vadd.f32 %v942, %v1114
        %v1147 = vadd.f32 %v943, %v1115
        %v1148 = vadd.f32 %v944, %v1116
        %v1149 = vadd.f32 %v945, %v1117
        %v1150 = vadd.f32 %v946, %v1118
        %v1151 = vadd.f32 %v947, %v1119
        %v1152 = vadd.f32 %v948, %v1120
        %v1153 = vadd.f32 %v949, %v1121
        %v1154 = vadd.f32 %v950, %v1122
        %v1155 = vadd.f32 %v951, %v1123
        %v1156 = vadd.f32 %v952, %v1124
        %v1157 = vadd.f32 %v953, %v1125
        %v1158 = vadd.f32 %v954, %v1126
        %v1159 = vadd.f32 %v955, %v1127
        %v1160 = vadd.f32 %v956, %v1128
        %v1161 = vadd.f32 %v957, %v1129
        %v1162 = vadd.f32 %v958, %v1130
        %s1163 = scalar_lea.vmem [#allocation2], 160
        %v1164 = vld [vmem:[%s1163] sm:$0xff]
        %v1165 = vld [vmem:[%s1163 + $0x8] sm:$0xff]
        %v1166 = vld [vmem:[%s1163 + $0x10] sm:$0xff]
        %v1167 = vld [vmem:[%s1163 + $0x18] sm:$0xff]
        %s1168 = scalar_lea.vmem %s156, 80 [#allocation5]
        %v1169 = vld [vmem:[%s1168] sm:$0xff]
        %v1170 = vld [vmem:[%s1168 + $0x8] sm:$0xff]
        %v1173 = vcombine.low %v1169, %v1170
        %v1174 = vcombine.high %v1169, %v1170
        %v1176 = vunpack.c.l.s4 1966171168
        %v1177 = vunpack.c.0.s8 %v1176
        %v1178 = vlaneseq
        %v1179 = vshrl.u32 %v1178, 7
        %v1180 = vsub.s32 %v1177, %v1179
        %v1181 = vrot.slane %v1173, %v1180
        %v1183 = vunpack.c.l.s4 1966171168
        %v1184 = vunpack.c.0.s8 %v1183
        %v1185 = vlaneseq
        %v1186 = vshrl.u32 %v1185, 7
        %v1187 = vsub.s32 %v1184, %v1186
        %v1188 = vrot.slane %v1174, %v1187
        %v1189 = vcombine.high %v1181, %v1181
        %v1190 = vcombine.high %v1188, %v1188
        %v1192 = vunpack.c.l.s4 1966171168
        %v1193 = vunpack.c.0.s8 %v1192
        %v1194 = vlaneseq
        %v1195 = vshrl.u32 %v1194, 7
        %v1196 = vsub.s32 %v1193, %v1195
        %v1197 = vrot.slane %v1181, %v1196
        %v1199 = vunpack.c.l.s4 1966171168
        %v1200 = vunpack.c.0.s8 %v1199
        %v1201 = vlaneseq
        %v1202 = vshrl.u32 %v1201, 7
        %v1203 = vsub.s32 %v1200, %v1202
        %v1204 = vrot.slane %v1188, %v1203
        %v1206 = vunpack.c.l.s4 1966171168
        %v1207 = vunpack.c.0.s8 %v1206
        %v1208 = vlaneseq
        %v1209 = vshrl.u32 %v1208, 7
        %v1210 = vsub.s32 %v1207, %v1209
        %v1211 = vrot.slane %v1189, %v1210
        %v1213 = vunpack.c.l.s4 1966171168
        %v1214 = vunpack.c.0.s8 %v1213
        %v1215 = vlaneseq
        %v1216 = vshrl.u32 %v1215, 7
        %v1217 = vsub.s32 %v1214, %v1216
        %v1218 = vrot.slane %v1190, %v1217
        %v1219 = vcombine.high %v1197, %v1197
        %v1220 = vcombine.high %v1204, %v1204
        %v1221 = vcombine.high %v1211, %v1211
        %v1222 = vcombine.high %v1218, %v1218
        %v1223 = vlaneseq
        %v1224 = vshrl.u32 %v1223, 7
        %v1225 = vsub.s32 0, %v1224
        %v1226 = vrot.slane %v1197, %v1225
        %v1227 = vlaneseq
        %v1228 = vshrl.u32 %v1227, 7
        %v1229 = vsub.s32 1, %v1228
        %v1230 = vrot.slane %v1197, %v1229
        %v1231 = vlaneseq
        %v1232 = vshrl.u32 %v1231, 7
        %v1233 = vsub.s32 0, %v1232
        %v1234 = vrot.slane %v1211, %v1233
        %v1235 = vlaneseq
        %v1236 = vshrl.u32 %v1235, 7
        %v1237 = vsub.s32 1, %v1236
        %v1238 = vrot.slane %v1211, %v1237
        %v1239 = vlaneseq
        %v1240 = vshrl.u32 %v1239, 7
        %v1241 = vsub.s32 0, %v1240
        %v1242 = vrot.slane %v1219, %v1241
        %v1243 = vlaneseq
        %v1244 = vshrl.u32 %v1243, 7
        %v1245 = vsub.s32 1, %v1244
        %v1246 = vrot.slane %v1219, %v1245
        %v1247 = vlaneseq
        %v1248 = vshrl.u32 %v1247, 7
        %v1249 = vsub.s32 0, %v1248
        %v1250 = vrot.slane %v1221, %v1249
        %v1251 = vlaneseq
        %v1252 = vshrl.u32 %v1251, 7
        %v1253 = vsub.s32 1, %v1252
        %v1254 = vrot.slane %v1221, %v1253
        %v1255 = vlaneseq
        %v1256 = vshrl.u32 %v1255, 7
        %v1257 = vsub.s32 0, %v1256
        %v1258 = vrot.slane %v1204, %v1257
        %v1259 = vlaneseq
        %v1260 = vshrl.u32 %v1259, 7
        %v1261 = vsub.s32 1, %v1260
        %v1262 = vrot.slane %v1204, %v1261
        %v1263 = vlaneseq
        %v1264 = vshrl.u32 %v1263, 7
        %v1265 = vsub.s32 0, %v1264
        %v1266 = vrot.slane %v1218, %v1265
        %v1267 = vlaneseq
        %v1268 = vshrl.u32 %v1267, 7
        %v1269 = vsub.s32 1, %v1268
        %v1270 = vrot.slane %v1218, %v1269
        %v1271 = vlaneseq
        %v1272 = vshrl.u32 %v1271, 7
        %v1273 = vsub.s32 0, %v1272
        %v1274 = vrot.slane %v1220, %v1273
        %v1275 = vlaneseq
        %v1276 = vshrl.u32 %v1275, 7
        %v1277 = vsub.s32 1, %v1276
        %v1278 = vrot.slane %v1220, %v1277
        %v1279 = vlaneseq
        %v1280 = vshrl.u32 %v1279, 7
        %v1281 = vsub.s32 0, %v1280
        %v1282 = vrot.slane %v1222, %v1281
        %v1283 = vlaneseq
        %v1284 = vshrl.u32 %v1283, 7
        %v1285 = vsub.s32 1, %v1284
        %v1286 = vrot.slane %v1222, %v1285
        %v1303 = vmul.f32 %v1164, %v1226
        %v1304 = vmul.f32 %v1165, %v1230
        %v1305 = vmul.f32 %v1166, %v1226
        %v1306 = vmul.f32 %v1167, %v1230
        %v1307 = vmul.f32 %v1164, %v1234
        %v1308 = vmul.f32 %v1165, %v1238
        %v1309 = vmul.f32 %v1166, %v1234
        %v1310 = vmul.f32 %v1167, %v1238
        %v1311 = vmul.f32 %v1164, %v1242
        %v1312 = vmul.f32 %v1165, %v1246
        %v1313 = vmul.f32 %v1166, %v1242
        %v1314 = vmul.f32 %v1167, %v1246
        %v1315 = vmul.f32 %v1164, %v1250
        %v1316 = vmul.f32 %v1165, %v1254
        %v1317 = vmul.f32 %v1166, %v1250
        %v1318 = vmul.f32 %v1167, %v1254
        %v1319 = vmul.f32 %v1164, %v1258
        %v1320 = vmul.f32 %v1165, %v1262
        %v1321 = vmul.f32 %v1166, %v1258
        %v1322 = vmul.f32 %v1167, %v1262
        %v1323 = vmul.f32 %v1164, %v1266
        %v1324 = vmul.f32 %v1165, %v1270
        %v1325 = vmul.f32 %v1166, %v1266
        %v1326 = vmul.f32 %v1167, %v1270
        %v1327 = vmul.f32 %v1164, %v1274
        %v1328 = vmul.f32 %v1165, %v1278
        %v1329 = vmul.f32 %v1166, %v1274
        %v1330 = vmul.f32 %v1167, %v1278
        %v1331 = vmul.f32 %v1164, %v1282
        %v1332 = vmul.f32 %v1165, %v1286
        %v1333 = vmul.f32 %v1166, %v1282
        %v1334 = vmul.f32 %v1167, %v1286
        %v1335 = vadd.f32 %v1131, %v1303
        %v1336 = vadd.f32 %v1132, %v1304
        %v1337 = vadd.f32 %v1133, %v1305
        %v1338 = vadd.f32 %v1134, %v1306
        %v1339 = vadd.f32 %v1135, %v1307
        %v1340 = vadd.f32 %v1136, %v1308
        %v1341 = vadd.f32 %v1137, %v1309
        %v1342 = vadd.f32 %v1138, %v1310
        %v1343 = vadd.f32 %v1139, %v1311
        %v1344 = vadd.f32 %v1140, %v1312
        %v1345 = vadd.f32 %v1141, %v1313
        %v1346 = vadd.f32 %v1142, %v1314
        %v1347 = vadd.f32 %v1143, %v1315
        %v1348 = vadd.f32 %v1144, %v1316
        %v1349 = vadd.f32 %v1145, %v1317
        %v1350 = vadd.f32 %v1146, %v1318
        %v1351 = vadd.f32 %v1147, %v1319
        %v1352 = vadd.f32 %v1148, %v1320
        %v1353 = vadd.f32 %v1149, %v1321
        %v1354 = vadd.f32 %v1150, %v1322
        %v1355 = vadd.f32 %v1151, %v1323
        %v1356 = vadd.f32 %v1152, %v1324
        %v1357 = vadd.f32 %v1153, %v1325
        %v1358 = vadd.f32 %v1154, %v1326
        %v1359 = vadd.f32 %v1155, %v1327
        %v1360 = vadd.f32 %v1156, %v1328
        %v1361 = vadd.f32 %v1157, %v1329
        %v1362 = vadd.f32 %v1158, %v1330
        %v1363 = vadd.f32 %v1159, %v1331
        %v1364 = vadd.f32 %v1160, %v1332
        %v1365 = vadd.f32 %v1161, %v1333
        %v1366 = vadd.f32 %v1162, %v1334
        %s1367 = scalar_lea.vmem [#allocation2], 192
        %v1368 = vld [vmem:[%s1367] sm:$0xff]
        %v1369 = vld [vmem:[%s1367 + $0x8] sm:$0xff]
        %v1370 = vld [vmem:[%s1367 + $0x10] sm:$0xff]
        %v1371 = vld [vmem:[%s1367 + $0x18] sm:$0xff]
        %s1372 = scalar_lea.vmem %s156, 96 [#allocation5]
        %v1373 = vld [vmem:[%s1372] sm:$0xff]
        %v1374 = vld [vmem:[%s1372 + $0x8] sm:$0xff]
        %v1377 = vcombine.low %v1373, %v1374
        %v1378 = vcombine.high %v1373, %v1374
        %v1380 = vunpack.c.l.s4 1966171168
        %v1381 = vunpack.c.0.s8 %v1380
        %v1382 = vlaneseq
        %v1383 = vshrl.u32 %v1382, 7
        %v1384 = vsub.s32 %v1381, %v1383
        %v1385 = vrot.slane %v1377, %v1384
        %v1387 = vunpack.c.l.s4 1966171168
        %v1388 = vunpack.c.0.s8 %v1387
        %v1389 = vlaneseq
        %v1390 = vshrl.u32 %v1389, 7
        %v1391 = vsub.s32 %v1388, %v1390
        %v1392 = vrot.slane %v1378, %v1391
        %v1393 = vcombine.high %v1385, %v1385
        %v1394 = vcombine.high %v1392, %v1392
        %v1396 = vunpack.c.l.s4 1966171168
        %v1397 = vunpack.c.0.s8 %v1396
        %v1398 = vlaneseq
        %v1399 = vshrl.u32 %v1398, 7
        %v1400 = vsub.s32 %v1397, %v1399
        %v1401 = vrot.slane %v1385, %v1400
        %v1403 = vunpack.c.l.s4 1966171168
        %v1404 = vunpack.c.0.s8 %v1403
        %v1405 = vlaneseq
        %v1406 = vshrl.u32 %v1405, 7
        %v1407 = vsub.s32 %v1404, %v1406
        %v1408 = vrot.slane %v1392, %v1407
        %v1410 = vunpack.c.l.s4 1966171168
        %v1411 = vunpack.c.0.s8 %v1410
        %v1412 = vlaneseq
        %v1413 = vshrl.u32 %v1412, 7
        %v1414 = vsub.s32 %v1411, %v1413
        %v1415 = vrot.slane %v1393, %v1414
        %v1417 = vunpack.c.l.s4 1966171168
        %v1418 = vunpack.c.0.s8 %v1417
        %v1419 = vlaneseq
        %v1420 = vshrl.u32 %v1419, 7
        %v1421 = vsub.s32 %v1418, %v1420
        %v1422 = vrot.slane %v1394, %v1421
        %v1423 = vcombine.high %v1401, %v1401
        %v1424 = vcombine.high %v1408, %v1408
        %v1425 = vcombine.high %v1415, %v1415
        %v1426 = vcombine.high %v1422, %v1422
        %v1427 = vlaneseq
        %v1428 = vshrl.u32 %v1427, 7
        %v1429 = vsub.s32 0, %v1428
        %v1430 = vrot.slane %v1401, %v1429
        %v1431 = vlaneseq
        %v1432 = vshrl.u32 %v1431, 7
        %v1433 = vsub.s32 1, %v1432
        %v1434 = vrot.slane %v1401, %v1433
        %v1435 = vlaneseq
        %v1436 = vshrl.u32 %v1435, 7
        %v1437 = vsub.s32 0, %v1436
        %v1438 = vrot.slane %v1415, %v1437
        %v1439 = vlaneseq
        %v1440 = vshrl.u32 %v1439, 7
        %v1441 = vsub.s32 1, %v1440
        %v1442 = vrot.slane %v1415, %v1441
        %v1443 = vlaneseq
        %v1444 = vshrl.u32 %v1443, 7
        %v1445 = vsub.s32 0, %v1444
        %v1446 = vrot.slane %v1423, %v1445
        %v1447 = vlaneseq
        %v1448 = vshrl.u32 %v1447, 7
        %v1449 = vsub.s32 1, %v1448
        %v1450 = vrot.slane %v1423, %v1449
        %v1451 = vlaneseq
        %v1452 = vshrl.u32 %v1451, 7
        %v1453 = vsub.s32 0, %v1452
        %v1454 = vrot.slane %v1425, %v1453
        %v1455 = vlaneseq
        %v1456 = vshrl.u32 %v1455, 7
        %v1457 = vsub.s32 1, %v1456
        %v1458 = vrot.slane %v1425, %v1457
        %v1459 = vlaneseq
        %v1460 = vshrl.u32 %v1459, 7
        %v1461 = vsub.s32 0, %v1460
        %v1462 = vrot.slane %v1408, %v1461
        %v1463 = vlaneseq
        %v1464 = vshrl.u32 %v1463, 7
        %v1465 = vsub.s32 1, %v1464
        %v1466 = vrot.slane %v1408, %v1465
        %v1467 = vlaneseq
        %v1468 = vshrl.u32 %v1467, 7
        %v1469 = vsub.s32 0, %v1468
        %v1470 = vrot.slane %v1422, %v1469
        %v1471 = vlaneseq
        %v1472 = vshrl.u32 %v1471, 7
        %v1473 = vsub.s32 1, %v1472
        %v1474 = vrot.slane %v1422, %v1473
        %v1475 = vlaneseq
        %v1476 = vshrl.u32 %v1475, 7
        %v1477 = vsub.s32 0, %v1476
        %v1478 = vrot.slane %v1424, %v1477
        %v1479 = vlaneseq
        %v1480 = vshrl.u32 %v1479, 7
        %v1481 = vsub.s32 1, %v1480
        %v1482 = vrot.slane %v1424, %v1481
        %v1483 = vlaneseq
        %v1484 = vshrl.u32 %v1483, 7
        %v1485 = vsub.s32 0, %v1484
        %v1486 = vrot.slane %v1426, %v1485
        %v1487 = vlaneseq
        %v1488 = vshrl.u32 %v1487, 7
        %v1489 = vsub.s32 1, %v1488
        %v1490 = vrot.slane %v1426, %v1489
        %v1507 = vmul.f32 %v1368, %v1430
        %v1508 = vmul.f32 %v1369, %v1434
        %v1509 = vmul.f32 %v1370, %v1430
        %v1510 = vmul.f32 %v1371, %v1434
        %v1511 = vmul.f32 %v1368, %v1438
        %v1512 = vmul.f32 %v1369, %v1442
        %v1513 = vmul.f32 %v1370, %v1438
        %v1514 = vmul.f32 %v1371, %v1442
        %v1515 = vmul.f32 %v1368, %v1446
        %v1516 = vmul.f32 %v1369, %v1450
        %v1517 = vmul.f32 %v1370, %v1446
        %v1518 = vmul.f32 %v1371, %v1450
        %v1519 = vmul.f32 %v1368, %v1454
        %v1520 = vmul.f32 %v1369, %v1458
        %v1521 = vmul.f32 %v1370, %v1454
        %v1522 = vmul.f32 %v1371, %v1458
        %v1523 = vmul.f32 %v1368, %v1462
        %v1524 = vmul.f32 %v1369, %v1466
        %v1525 = vmul.f32 %v1370, %v1462
        %v1526 = vmul.f32 %v1371, %v1466
        %v1527 = vmul.f32 %v1368, %v1470
        %v1528 = vmul.f32 %v1369, %v1474
        %v1529 = vmul.f32 %v1370, %v1470
        %v1530 = vmul.f32 %v1371, %v1474
        %v1531 = vmul.f32 %v1368, %v1478
        %v1532 = vmul.f32 %v1369, %v1482
        %v1533 = vmul.f32 %v1370, %v1478
        %v1534 = vmul.f32 %v1371, %v1482
        %v1535 = vmul.f32 %v1368, %v1486
        %v1536 = vmul.f32 %v1369, %v1490
        %v1537 = vmul.f32 %v1370, %v1486
        %v1538 = vmul.f32 %v1371, %v1490
        %v1539 = vadd.f32 %v1335, %v1507
        %v1540 = vadd.f32 %v1336, %v1508
        %v1541 = vadd.f32 %v1337, %v1509
        %v1542 = vadd.f32 %v1338, %v1510
        %v1543 = vadd.f32 %v1339, %v1511
        %v1544 = vadd.f32 %v1340, %v1512
        %v1545 = vadd.f32 %v1341, %v1513
        %v1546 = vadd.f32 %v1342, %v1514
        %v1547 = vadd.f32 %v1343, %v1515
        %v1548 = vadd.f32 %v1344, %v1516
        %v1549 = vadd.f32 %v1345, %v1517
        %v1550 = vadd.f32 %v1346, %v1518
        %v1551 = vadd.f32 %v1347, %v1519
        %v1552 = vadd.f32 %v1348, %v1520
        %v1553 = vadd.f32 %v1349, %v1521
        %v1554 = vadd.f32 %v1350, %v1522
        %v1555 = vadd.f32 %v1351, %v1523
        %v1556 = vadd.f32 %v1352, %v1524
        %v1557 = vadd.f32 %v1353, %v1525
        %v1558 = vadd.f32 %v1354, %v1526
        %v1559 = vadd.f32 %v1355, %v1527
        %v1560 = vadd.f32 %v1356, %v1528
        %v1561 = vadd.f32 %v1357, %v1529
        %v1562 = vadd.f32 %v1358, %v1530
        %v1563 = vadd.f32 %v1359, %v1531
        %v1564 = vadd.f32 %v1360, %v1532
        %v1565 = vadd.f32 %v1361, %v1533
        %v1566 = vadd.f32 %v1362, %v1534
        %v1567 = vadd.f32 %v1363, %v1535
        %v1568 = vadd.f32 %v1364, %v1536
        %v1569 = vadd.f32 %v1365, %v1537
        %v1570 = vadd.f32 %v1366, %v1538
        %s1571 = scalar_lea.vmem [#allocation2], 224
        %v1572 = vld [vmem:[%s1571] sm:$0xff]
        %v1573 = vld [vmem:[%s1571 + $0x8] sm:$0xff]
        %v1574 = vld [vmem:[%s1571 + $0x10] sm:$0xff]
        %v1575 = vld [vmem:[%s1571 + $0x18] sm:$0xff]
        %s1576 = scalar_lea.vmem %s156, 112 [#allocation5]
        %v1577 = vld [vmem:[%s1576] sm:$0xff]
        %v1578 = vld [vmem:[%s1576 + $0x8] sm:$0xff]
        %v1581 = vcombine.low %v1577, %v1578
        %v1582 = vcombine.high %v1577, %v1578
        %v1584 = vunpack.c.l.s4 1966171168
        %v1585 = vunpack.c.0.s8 %v1584
        %v1586 = vlaneseq
        %v1587 = vshrl.u32 %v1586, 7
        %v1588 = vsub.s32 %v1585, %v1587
        %v1589 = vrot.slane %v1581, %v1588
        %v1591 = vunpack.c.l.s4 1966171168
        %v1592 = vunpack.c.0.s8 %v1591
        %v1593 = vlaneseq
        %v1594 = vshrl.u32 %v1593, 7
        %v1595 = vsub.s32 %v1592, %v1594
        %v1596 = vrot.slane %v1582, %v1595
        %v1597 = vcombine.high %v1589, %v1589
        %v1598 = vcombine.high %v1596, %v1596
        %v1600 = vunpack.c.l.s4 1966171168
        %v1601 = vunpack.c.0.s8 %v1600
        %v1602 = vlaneseq
        %v1603 = vshrl.u32 %v1602, 7
        %v1604 = vsub.s32 %v1601, %v1603
        %v1605 = vrot.slane %v1589, %v1604
        %v1607 = vunpack.c.l.s4 1966171168
        %v1608 = vunpack.c.0.s8 %v1607
        %v1609 = vlaneseq
        %v1610 = vshrl.u32 %v1609, 7
        %v1611 = vsub.s32 %v1608, %v1610
        %v1612 = vrot.slane %v1596, %v1611
        %v1614 = vunpack.c.l.s4 1966171168
        %v1615 = vunpack.c.0.s8 %v1614
        %v1616 = vlaneseq
        %v1617 = vshrl.u32 %v1616, 7
        %v1618 = vsub.s32 %v1615, %v1617
        %v1619 = vrot.slane %v1597, %v1618
        %v1621 = vunpack.c.l.s4 1966171168
        %v1622 = vunpack.c.0.s8 %v1621
        %v1623 = vlaneseq
        %v1624 = vshrl.u32 %v1623, 7
        %v1625 = vsub.s32 %v1622, %v1624
        %v1626 = vrot.slane %v1598, %v1625
        %v1627 = vcombine.high %v1605, %v1605
        %v1628 = vcombine.high %v1612, %v1612
        %v1629 = vcombine.high %v1619, %v1619
        %v1630 = vcombine.high %v1626, %v1626
        %v1631 = vlaneseq
        %v1632 = vshrl.u32 %v1631, 7
        %v1633 = vsub.s32 0, %v1632
        %v1634 = vrot.slane %v1605, %v1633
        %v1635 = vlaneseq
        %v1636 = vshrl.u32 %v1635, 7
        %v1637 = vsub.s32 1, %v1636
        %v1638 = vrot.slane %v1605, %v1637
        %v1639 = vlaneseq
        %v1640 = vshrl.u32 %v1639, 7
        %v1641 = vsub.s32 0, %v1640
        %v1642 = vrot.slane %v1619, %v1641
        %v1643 = vlaneseq
        %v1644 = vshrl.u32 %v1643, 7
        %v1645 = vsub.s32 1, %v1644
        %v1646 = vrot.slane %v1619, %v1645
        %v1647 = vlaneseq
        %v1648 = vshrl.u32 %v1647, 7
        %v1649 = vsub.s32 0, %v1648
        %v1650 = vrot.slane %v1627, %v1649
        %v1651 = vlaneseq
        %v1652 = vshrl.u32 %v1651, 7
        %v1653 = vsub.s32 1, %v1652
        %v1654 = vrot.slane %v1627, %v1653
        %v1655 = vlaneseq
        %v1656 = vshrl.u32 %v1655, 7
        %v1657 = vsub.s32 0, %v1656
        %v1658 = vrot.slane %v1629, %v1657
        %v1659 = vlaneseq
        %v1660 = vshrl.u32 %v1659, 7
        %v1661 = vsub.s32 1, %v1660
        %v1662 = vrot.slane %v1629, %v1661
        %v1663 = vlaneseq
        %v1664 = vshrl.u32 %v1663, 7
        %v1665 = vsub.s32 0, %v1664
        %v1666 = vrot.slane %v1612, %v1665
        %v1667 = vlaneseq
        %v1668 = vshrl.u32 %v1667, 7
        %v1669 = vsub.s32 1, %v1668
        %v1670 = vrot.slane %v1612, %v1669
        %v1671 = vlaneseq
        %v1672 = vshrl.u32 %v1671, 7
        %v1673 = vsub.s32 0, %v1672
        %v1674 = vrot.slane %v1626, %v1673
        %v1675 = vlaneseq
        %v1676 = vshrl.u32 %v1675, 7
        %v1677 = vsub.s32 1, %v1676
        %v1678 = vrot.slane %v1626, %v1677
        %v1679 = vlaneseq
        %v1680 = vshrl.u32 %v1679, 7
        %v1681 = vsub.s32 0, %v1680
        %v1682 = vrot.slane %v1628, %v1681
        %v1683 = vlaneseq
        %v1684 = vshrl.u32 %v1683, 7
        %v1685 = vsub.s32 1, %v1684
        %v1686 = vrot.slane %v1628, %v1685
        %v1687 = vlaneseq
        %v1688 = vshrl.u32 %v1687, 7
        %v1689 = vsub.s32 0, %v1688
        %v1690 = vrot.slane %v1630, %v1689
        %v1691 = vlaneseq
        %v1692 = vshrl.u32 %v1691, 7
        %v1693 = vsub.s32 1, %v1692
        %v1694 = vrot.slane %v1630, %v1693
        %v1711 = vmul.f32 %v1572, %v1634
        %v1712 = vmul.f32 %v1573, %v1638
        %v1713 = vmul.f32 %v1574, %v1634
        %v1714 = vmul.f32 %v1575, %v1638
        %v1715 = vmul.f32 %v1572, %v1642
        %v1716 = vmul.f32 %v1573, %v1646
        %v1717 = vmul.f32 %v1574, %v1642
        %v1718 = vmul.f32 %v1575, %v1646
        %v1719 = vmul.f32 %v1572, %v1650
        %v1720 = vmul.f32 %v1573, %v1654
        %v1721 = vmul.f32 %v1574, %v1650
        %v1722 = vmul.f32 %v1575, %v1654
        %v1723 = vmul.f32 %v1572, %v1658
        %v1724 = vmul.f32 %v1573, %v1662
        %v1725 = vmul.f32 %v1574, %v1658
        %v1726 = vmul.f32 %v1575, %v1662
        %v1727 = vmul.f32 %v1572, %v1666
        %v1728 = vmul.f32 %v1573, %v1670
        %v1729 = vmul.f32 %v1574, %v1666
        %v1730 = vmul.f32 %v1575, %v1670
        %v1731 = vmul.f32 %v1572, %v1674
        %v1732 = vmul.f32 %v1573, %v1678
        %v1733 = vmul.f32 %v1574, %v1674
        %v1734 = vmul.f32 %v1575, %v1678
        %v1735 = vmul.f32 %v1572, %v1682
        %v1736 = vmul.f32 %v1573, %v1686
        %v1737 = vmul.f32 %v1574, %v1682
        %v1738 = vmul.f32 %v1575, %v1686
        %v1739 = vmul.f32 %v1572, %v1690
        %v1740 = vmul.f32 %v1573, %v1694
        %v1741 = vmul.f32 %v1574, %v1690
        %v1742 = vmul.f32 %v1575, %v1694
        %v1743 = vadd.f32 %v1539, %v1711
        %v1744 = vadd.f32 %v1540, %v1712
        %v1745 = vadd.f32 %v1541, %v1713
        %v1746 = vadd.f32 %v1542, %v1714
        %v1747 = vadd.f32 %v1543, %v1715
        %v1748 = vadd.f32 %v1544, %v1716
        %v1749 = vadd.f32 %v1545, %v1717
        %v1750 = vadd.f32 %v1546, %v1718
        %v1751 = vadd.f32 %v1547, %v1719
        %v1752 = vadd.f32 %v1548, %v1720
        %v1753 = vadd.f32 %v1549, %v1721
        %v1754 = vadd.f32 %v1550, %v1722
        %v1755 = vadd.f32 %v1551, %v1723
        %v1756 = vadd.f32 %v1552, %v1724
        %v1757 = vadd.f32 %v1553, %v1725
        %v1758 = vadd.f32 %v1554, %v1726
        %v1759 = vadd.f32 %v1555, %v1727
        %v1760 = vadd.f32 %v1556, %v1728
        %v1761 = vadd.f32 %v1557, %v1729
        %v1762 = vadd.f32 %v1558, %v1730
        %v1763 = vadd.f32 %v1559, %v1731
        %v1764 = vadd.f32 %v1560, %v1732
        %v1765 = vadd.f32 %v1561, %v1733
        %v1766 = vadd.f32 %v1562, %v1734
        %v1767 = vadd.f32 %v1563, %v1735
        %v1768 = vadd.f32 %v1564, %v1736
        %v1769 = vadd.f32 %v1565, %v1737
        %v1770 = vadd.f32 %v1566, %v1738
        %v1771 = vadd.f32 %v1567, %v1739
        %v1772 = vadd.f32 %v1568, %v1740
        %v1773 = vadd.f32 %v1569, %v1741
        %v1774 = vadd.f32 %v1570, %v1742
        %v1775 = vadd.f32 %v1743, %v1744
        %1776 = vadd.xlane.f32.xlu0 %v1775
        %v1777 = vpop.xlane.xlu0 %1776
        %v1778 = vadd.f32 %v1745, %v1746
        %1779 = vadd.xlane.f32.xlu0 %v1778
        %v1780 = vpop.xlane.xlu0 %1779
        %v1781 = vadd.f32 %v1747, %v1748
        %1782 = vadd.xlane.f32.xlu0 %v1781
        %v1783 = vpop.xlane.xlu0 %1782
        %v1784 = vadd.f32 %v1749, %v1750
        %1785 = vadd.xlane.f32.xlu0 %v1784
        %v1786 = vpop.xlane.xlu0 %1785
        %v1787 = vadd.f32 %v1751, %v1752
        %1788 = vadd.xlane.f32.xlu0 %v1787
        %v1789 = vpop.xlane.xlu0 %1788
        %v1790 = vadd.f32 %v1753, %v1754
        %1791 = vadd.xlane.f32.xlu0 %v1790
        %v1792 = vpop.xlane.xlu0 %1791
        %v1793 = vadd.f32 %v1755, %v1756
        %1794 = vadd.xlane.f32.xlu0 %v1793
        %v1795 = vpop.xlane.xlu0 %1794
        %v1796 = vadd.f32 %v1757, %v1758
        %1797 = vadd.xlane.f32.xlu0 %v1796
        %v1798 = vpop.xlane.xlu0 %1797
        %v1799 = vadd.f32 %v1759, %v1760
        %1800 = vadd.xlane.f32.xlu0 %v1799
        %v1801 = vpop.xlane.xlu0 %1800
        %v1802 = vadd.f32 %v1761, %v1762
        %1803 = vadd.xlane.f32.xlu0 %v1802
        %v1804 = vpop.xlane.xlu0 %1803
        %v1805 = vadd.f32 %v1763, %v1764
        %1806 = vadd.xlane.f32.xlu0 %v1805
        %v1807 = vpop.xlane.xlu0 %1806
        %v1808 = vadd.f32 %v1765, %v1766
        %1809 = vadd.xlane.f32.xlu0 %v1808
        %v1810 = vpop.xlane.xlu0 %1809
        %v1811 = vadd.f32 %v1767, %v1768
        %1812 = vadd.xlane.f32.xlu0 %v1811
        %v1813 = vpop.xlane.xlu0 %1812
        %v1814 = vadd.f32 %v1769, %v1770
        %1815 = vadd.xlane.f32.xlu0 %v1814
        %v1816 = vpop.xlane.xlu0 %1815
        %v1817 = vadd.f32 %v1771, %v1772
        %1818 = vadd.xlane.f32.xlu0 %v1817
        %v1819 = vpop.xlane.xlu0 %1818
        %v1820 = vadd.f32 %v1773, %v1774
        %1821 = vadd.xlane.f32.xlu0 %v1820
        %v1822 = vpop.xlane.xlu0 %1821
        %v1823 = vmul.f32 %v1777, 0.00390625
        %v1824 = vmul.f32 %v1780, 0.00390625
        %v1825 = vmul.f32 %v1783, 0.00390625
        %v1826 = vmul.f32 %v1786, 0.00390625
        %v1827 = vmul.f32 %v1789, 0.00390625
        %v1828 = vmul.f32 %v1792, 0.00390625
        %v1829 = vmul.f32 %v1795, 0.00390625
        %v1830 = vmul.f32 %v1798, 0.00390625
        %v1831 = vmul.f32 %v1801, 0.00390625
        %v1832 = vmul.f32 %v1804, 0.00390625
        %v1833 = vmul.f32 %v1807, 0.00390625
        %v1834 = vmul.f32 %v1810, 0.00390625
        %v1835 = vmul.f32 %v1813, 0.00390625
        %v1836 = vmul.f32 %v1816, 0.00390625
        %v1837 = vmul.f32 %v1819, 0.00390625
        %v1838 = vmul.f32 %v1822, 0.00390625
        %v1839 = vmul.f32 %v1823, %v1823
        %v1840 = vmul.f32 %v1824, %v1824
        %v1841 = vmul.f32 %v1825, %v1825
        %v1842 = vmul.f32 %v1826, %v1826
        %v1843 = vmul.f32 %v1827, %v1827
        %v1844 = vmul.f32 %v1828, %v1828
        %v1845 = vmul.f32 %v1829, %v1829
        %v1846 = vmul.f32 %v1830, %v1830
        %v1847 = vmul.f32 %v1831, %v1831
        %v1848 = vmul.f32 %v1832, %v1832
        %v1849 = vmul.f32 %v1833, %v1833
        %v1850 = vmul.f32 %v1834, %v1834
        %v1851 = vmul.f32 %v1835, %v1835
        %v1852 = vmul.f32 %v1836, %v1836
        %v1853 = vmul.f32 %v1837, %v1837
        %v1854 = vmul.f32 %v1838, %v1838
        %v1871 = vlaneseq
        %v1872 = vand.u32 %v1871, 127
        %v1873 = vlaneseq
        %v1874 = vshrl.u32 %v1873, 7
        %v1875 = vsub.s32 %v1872, %v1874
        %v1876 = vrot.slane %v1839, %v1875
        %v1877 = vadd.s32 %v1872, 4294967288
        %v1878 = vlaneseq
        %v1879 = vshrl.u32 %v1878, 7
        %v1880 = vsub.s32 %v1877, %v1879
        %v1881 = vrot.slane %v1840, %v1880
        %vm1882 = vcmask 130112
        %v1883 = vsel %vm1882, %v1881, %v1876
        %v1884 = vlaneseq
        %v1885 = vshrl.u32 %v1884, 7
        %v1886 = vsub.s32 %v1872, %v1885
        %v1887 = vrot.slane %v1841, %v1886
        %v1888 = vlaneseq
        %v1889 = vshrl.u32 %v1888, 7
        %v1890 = vsub.s32 %v1877, %v1889
        %v1891 = vrot.slane %v1842, %v1890
        %v1892 = vsel %vm1882, %v1891, %v1887
        %v1893 = vlaneseq
        %v1894 = vshrl.u32 %v1893, 7
        %v1895 = vsub.s32 %v1872, %v1894
        %v1896 = vrot.slane %v1843, %v1895
        %v1897 = vlaneseq
        %v1898 = vshrl.u32 %v1897, 7
        %v1899 = vsub.s32 %v1877, %v1898
        %v1900 = vrot.slane %v1844, %v1899
        %v1901 = vsel %vm1882, %v1900, %v1896
        %v1902 = vlaneseq
        %v1903 = vshrl.u32 %v1902, 7
        %v1904 = vsub.s32 %v1872, %v1903
        %v1905 = vrot.slane %v1845, %v1904
        %v1906 = vlaneseq
        %v1907 = vshrl.u32 %v1906, 7
        %v1908 = vsub.s32 %v1877, %v1907
        %v1909 = vrot.slane %v1846, %v1908
        %v1910 = vsel %vm1882, %v1909, %v1905
        %v1911 = vlaneseq
        %v1912 = vshrl.u32 %v1911, 7
        %v1913 = vsub.s32 %v1872, %v1912
        %v1914 = vrot.slane %v1847, %v1913
        %v1915 = vlaneseq
        %v1916 = vshrl.u32 %v1915, 7
        %v1917 = vsub.s32 %v1877, %v1916
        %v1918 = vrot.slane %v1848, %v1917
        %v1919 = vsel %vm1882, %v1918, %v1914
        %v1920 = vlaneseq
        %v1921 = vshrl.u32 %v1920, 7
        %v1922 = vsub.s32 %v1872, %v1921
        %v1923 = vrot.slane %v1849, %v1922
        %v1924 = vlaneseq
        %v1925 = vshrl.u32 %v1924, 7
        %v1926 = vsub.s32 %v1877, %v1925
        %v1927 = vrot.slane %v1850, %v1926
        %v1928 = vsel %vm1882, %v1927, %v1923
        %v1929 = vlaneseq
        %v1930 = vshrl.u32 %v1929, 7
        %v1931 = vsub.s32 %v1872, %v1930
        %v1932 = vrot.slane %v1851, %v1931
        %v1933 = vlaneseq
        %v1934 = vshrl.u32 %v1933, 7
        %v1935 = vsub.s32 %v1877, %v1934
        %v1936 = vrot.slane %v1852, %v1935
        %v1937 = vsel %vm1882, %v1936, %v1932
        %v1938 = vlaneseq
        %v1939 = vshrl.u32 %v1938, 7
        %v1940 = vsub.s32 %v1872, %v1939
        %v1941 = vrot.slane %v1853, %v1940
        %v1942 = vlaneseq
        %v1943 = vshrl.u32 %v1942, 7
        %v1944 = vsub.s32 %v1877, %v1943
        %v1945 = vrot.slane %v1854, %v1944
        %v1946 = vsel %vm1882, %v1945, %v1941
        %vm1947 = vcmask 1041409
        %v1948 = vsel %vm1947, %v1892, %v1883
        %vm1949 = vcmask 1042434
        %v1950 = vsel %vm1949, %v1901, %v1948
        %vm1951 = vcmask 1043459
        %v1952 = vsel %vm1951, %v1910, %v1950
        %vm1953 = vcmask 1044484
        %v1954 = vsel %vm1953, %v1919, %v1952
        %vm1955 = vcmask 1045509
        %v1956 = vsel %vm1955, %v1928, %v1954
        %vm1957 = vcmask 1046534
        %v1958 = vsel %vm1957, %v1937, %v1956
        %vm1959 = vcmask 1047559
        %v1960 = vsel %vm1959, %v1946, %v1958
        %vm1962 = vcmask 130048
        %v1963 = vsel %vm1962, %v1960, 0.0
        %1964 = vadd.xlane.f32.xlu0 %v1963
        %v1965 = vpop.xlane.xlu0 %1964
        %v1966 = vadd.f32 %v1965, 1e-12
        %v1967 = vrsqrt.pop %v1966
        %v1968 = vadd.f32 %v1965, 1.0
        %v1969 = vrcp.pop %v1968
        %v1970 = vmul.f32 %v1965, %v1969
        %v1971 = vmul.f32 %v1970, %v1967
        %v1988 = vlaneseq
        %v1989 = vshrl.u32 %v1988, 7
        %v1990 = vsub.s32 %v1872, %v1989
        %v1991 = vrot.slane %v1823, %v1990
        %v1992 = vlaneseq
        %v1993 = vshrl.u32 %v1992, 7
        %v1994 = vsub.s32 %v1877, %v1993
        %v1995 = vrot.slane %v1824, %v1994
        %v1996 = vsel %vm1882, %v1995, %v1991
        %v1997 = vlaneseq
        %v1998 = vshrl.u32 %v1997, 7
        %v1999 = vsub.s32 %v1872, %v1998
        %v2000 = vrot.slane %v1825, %v1999
        %v2001 = vlaneseq
        %v2002 = vshrl.u32 %v2001, 7
        %v2003 = vsub.s32 %v1877, %v2002
        %v2004 = vrot.slane %v1826, %v2003
        %v2005 = vsel %vm1882, %v2004, %v2000
        %v2006 = vlaneseq
        %v2007 = vshrl.u32 %v2006, 7
        %v2008 = vsub.s32 %v1872, %v2007
        %v2009 = vrot.slane %v1827, %v2008
        %v2010 = vlaneseq
        %v2011 = vshrl.u32 %v2010, 7
        %v2012 = vsub.s32 %v1877, %v2011
        %v2013 = vrot.slane %v1828, %v2012
        %v2014 = vsel %vm1882, %v2013, %v2009
        %v2015 = vlaneseq
        %v2016 = vshrl.u32 %v2015, 7
        %v2017 = vsub.s32 %v1872, %v2016
        %v2018 = vrot.slane %v1829, %v2017
        %v2019 = vlaneseq
        %v2020 = vshrl.u32 %v2019, 7
        %v2021 = vsub.s32 %v1877, %v2020
        %v2022 = vrot.slane %v1830, %v2021
        %v2023 = vsel %vm1882, %v2022, %v2018
        %v2024 = vlaneseq
        %v2025 = vshrl.u32 %v2024, 7
        %v2026 = vsub.s32 %v1872, %v2025
        %v2027 = vrot.slane %v1831, %v2026
        %v2028 = vlaneseq
        %v2029 = vshrl.u32 %v2028, 7
        %v2030 = vsub.s32 %v1877, %v2029
        %v2031 = vrot.slane %v1832, %v2030
        %v2032 = vsel %vm1882, %v2031, %v2027
        %v2033 = vlaneseq
        %v2034 = vshrl.u32 %v2033, 7
        %v2035 = vsub.s32 %v1872, %v2034
        %v2036 = vrot.slane %v1833, %v2035
        %v2037 = vlaneseq
        %v2038 = vshrl.u32 %v2037, 7
        %v2039 = vsub.s32 %v1877, %v2038
        %v2040 = vrot.slane %v1834, %v2039
        %v2041 = vsel %vm1882, %v2040, %v2036
        %v2042 = vlaneseq
        %v2043 = vshrl.u32 %v2042, 7
        %v2044 = vsub.s32 %v1872, %v2043
        %v2045 = vrot.slane %v1835, %v2044
        %v2046 = vlaneseq
        %v2047 = vshrl.u32 %v2046, 7
        %v2048 = vsub.s32 %v1877, %v2047
        %v2049 = vrot.slane %v1836, %v2048
        %v2050 = vsel %vm1882, %v2049, %v2045
        %v2051 = vlaneseq
        %v2052 = vshrl.u32 %v2051, 7
        %v2053 = vsub.s32 %v1872, %v2052
        %v2054 = vrot.slane %v1837, %v2053
        %v2055 = vlaneseq
        %v2056 = vshrl.u32 %v2055, 7
        %v2057 = vsub.s32 %v1877, %v2056
        %v2058 = vrot.slane %v1838, %v2057
        %v2059 = vsel %vm1882, %v2058, %v2054
        %v2060 = vsel %vm1947, %v2005, %v1996
        %v2061 = vsel %vm1949, %v2014, %v2060
        %v2062 = vsel %vm1951, %v2023, %v2061
        %v2063 = vsel %vm1953, %v2032, %v2062
        %v2064 = vsel %vm1955, %v2041, %v2063
        %v2065 = vsel %vm1957, %v2050, %v2064
        %v2066 = vsel %vm1959, %v2059, %v2065
        %v2068 = vmul.f32 %v1971, %v2066
        %v2069 = vlaneseq
        %v2070 = vshrl.u32 %v2069, 7
        %v2071 = vsub.s32 0, %v2070
        %v2072 = vrot.slane %v2068, %v2071
        %2074 = vbcast.lane.b32.xlu0 %v2072, 256
        %v2075 = vpop.permute.xlu0 %2074
        %s2077 = sor.u32 256, 8
        %2078 = vbcast.lane.b32.xlu0 %v2072, %s2077
        %v2079 = vpop.permute.xlu0 %2078
        %v2080 = vlaneseq
        %v2081 = vshrl.u32 %v2080, 7
        %v2082 = vsub.s32 1, %v2081
        %v2083 = vrot.slane %v2068, %v2082
        %2085 = vbcast.lane.b32.xlu0 %v2083, 256
        %v2086 = vpop.permute.xlu0 %2085
        %s2088 = sor.u32 256, 8
        %2089 = vbcast.lane.b32.xlu0 %v2083, %s2088
        %v2090 = vpop.permute.xlu0 %2089
        %v2091 = vlaneseq
        %v2092 = vshrl.u32 %v2091, 7
        %v2093 = vsub.s32 2, %v2092
        %v2094 = vrot.slane %v2068, %v2093
        %2096 = vbcast.lane.b32.xlu0 %v2094, 256
        %v2097 = vpop.permute.xlu0 %2096
        %s2099 = sor.u32 256, 8
        %2100 = vbcast.lane.b32.xlu0 %v2094, %s2099
        %v2101 = vpop.permute.xlu0 %2100
        %v2102 = vlaneseq
        %v2103 = vshrl.u32 %v2102, 7
        %v2104 = vsub.s32 3, %v2103
        %v2105 = vrot.slane %v2068, %v2104
        %2107 = vbcast.lane.b32.xlu0 %v2105, 256
        %v2108 = vpop.permute.xlu0 %2107
        %s2110 = sor.u32 256, 8
        %2111 = vbcast.lane.b32.xlu0 %v2105, %s2110
        %v2112 = vpop.permute.xlu0 %2111
        %v2113 = vlaneseq
        %v2114 = vshrl.u32 %v2113, 7
        %v2115 = vsub.s32 4, %v2114
        %v2116 = vrot.slane %v2068, %v2115
        %2118 = vbcast.lane.b32.xlu0 %v2116, 256
        %v2119 = vpop.permute.xlu0 %2118
        %s2121 = sor.u32 256, 8
        %2122 = vbcast.lane.b32.xlu0 %v2116, %s2121
        %v2123 = vpop.permute.xlu0 %2122
        %v2124 = vlaneseq
        %v2125 = vshrl.u32 %v2124, 7
        %v2126 = vsub.s32 5, %v2125
        %v2127 = vrot.slane %v2068, %v2126
        %2129 = vbcast.lane.b32.xlu0 %v2127, 256
        %v2130 = vpop.permute.xlu0 %2129
        %s2132 = sor.u32 256, 8
        %2133 = vbcast.lane.b32.xlu0 %v2127, %s2132
        %v2134 = vpop.permute.xlu0 %2133
        %v2135 = vlaneseq
        %v2136 = vshrl.u32 %v2135, 7
        %v2137 = vsub.s32 6, %v2136
        %v2138 = vrot.slane %v2068, %v2137
        %2140 = vbcast.lane.b32.xlu0 %v2138, 256
        %v2141 = vpop.permute.xlu0 %2140
        %s2143 = sor.u32 256, 8
        %2144 = vbcast.lane.b32.xlu0 %v2138, %s2143
        %v2145 = vpop.permute.xlu0 %2144
        %v2146 = vlaneseq
        %v2147 = vshrl.u32 %v2146, 7
        %v2148 = vsub.s32 7, %v2147
        %v2149 = vrot.slane %v2068, %v2148
        %2151 = vbcast.lane.b32.xlu0 %v2149, 256
        %v2152 = vpop.permute.xlu0 %2151
        %s2154 = sor.u32 256, 8
        %2155 = vbcast.lane.b32.xlu0 %v2149, %s2154
        %v2156 = vpop.permute.xlu0 %2155
        %v2157 = vmul.f32 %v2075, %v1743
        %v2158 = vmul.f32 %v2075, %v1744
        %v2159 = vmul.f32 %v2079, %v1745
        %v2160 = vmul.f32 %v2079, %v1746
        %v2161 = vmul.f32 %v2086, %v1747
        %v2162 = vmul.f32 %v2086, %v1748
        %v2163 = vmul.f32 %v2090, %v1749
        %v2164 = vmul.f32 %v2090, %v1750
        %v2165 = vmul.f32 %v2097, %v1751
        %v2166 = vmul.f32 %v2097, %v1752
        %v2167 = vmul.f32 %v2101, %v1753
        %v2168 = vmul.f32 %v2101, %v1754
        %v2169 = vmul.f32 %v2108, %v1755
        %v2170 = vmul.f32 %v2108, %v1756
        %v2171 = vmul.f32 %v2112, %v1757
        %v2172 = vmul.f32 %v2112, %v1758
        %v2173 = vmul.f32 %v2119, %v1759
        %v2174 = vmul.f32 %v2119, %v1760
        %v2175 = vmul.f32 %v2123, %v1761
        %v2176 = vmul.f32 %v2123, %v1762
        %v2177 = vmul.f32 %v2130, %v1763
        %v2178 = vmul.f32 %v2130, %v1764
        %v2179 = vmul.f32 %v2134, %v1765
        %v2180 = vmul.f32 %v2134, %v1766
        %v2181 = vmul.f32 %v2141, %v1767
        %v2182 = vmul.f32 %v2141, %v1768
        %v2183 = vmul.f32 %v2145, %v1769
        %v2184 = vmul.f32 %v2145, %v1770
        %v2185 = vmul.f32 %v2152, %v1771
        %v2186 = vmul.f32 %v2152, %v1772
        %v2187 = vmul.f32 %v2156, %v1773
        %v2188 = vmul.f32 %v2156, %v1774
        %v2189 = vadd.f32 %v2157, %v2159
        %v2190 = vrot.slane %v2189, 4
        %v2191 = vadd.f32 %v2189, %v2190
        %v2192 = vrot.slane %v2191, 2
        %v2193 = vadd.f32 %v2191, %v2192
        %v2194 = vrot.slane %v2193, 1
        %v2195 = vadd.f32 %v2193, %v2194
        %v2196 = vadd.f32 %v2158, %v2160
        %v2197 = vrot.slane %v2196, 4
        %v2198 = vadd.f32 %v2196, %v2197
        %v2199 = vrot.slane %v2198, 2
        %v2200 = vadd.f32 %v2198, %v2199
        %v2201 = vrot.slane %v2200, 1
        %v2202 = vadd.f32 %v2200, %v2201
        %v2203 = vadd.f32 %v2161, %v2163
        %v2204 = vrot.slane %v2203, 4
        %v2205 = vadd.f32 %v2203, %v2204
        %v2206 = vrot.slane %v2205, 2
        %v2207 = vadd.f32 %v2205, %v2206
        %v2208 = vrot.slane %v2207, 1
        %v2209 = vadd.f32 %v2207, %v2208
        %v2210 = vadd.f32 %v2162, %v2164
        %v2211 = vrot.slane %v2210, 4
        %v2212 = vadd.f32 %v2210, %v2211
        %v2213 = vrot.slane %v2212, 2
        %v2214 = vadd.f32 %v2212, %v2213
        %v2215 = vrot.slane %v2214, 1
        %v2216 = vadd.f32 %v2214, %v2215
        %v2217 = vadd.f32 %v2165, %v2167
        %v2218 = vrot.slane %v2217, 4
        %v2219 = vadd.f32 %v2217, %v2218
        %v2220 = vrot.slane %v2219, 2
        %v2221 = vadd.f32 %v2219, %v2220
        %v2222 = vrot.slane %v2221, 1
        %v2223 = vadd.f32 %v2221, %v2222
        %v2224 = vadd.f32 %v2166, %v2168
        %v2225 = vrot.slane %v2224, 4
        %v2226 = vadd.f32 %v2224, %v2225
        %v2227 = vrot.slane %v2226, 2
        %v2228 = vadd.f32 %v2226, %v2227
        %v2229 = vrot.slane %v2228, 1
        %v2230 = vadd.f32 %v2228, %v2229
        %v2231 = vadd.f32 %v2169, %v2171
        %v2232 = vrot.slane %v2231, 4
        %v2233 = vadd.f32 %v2231, %v2232
        %v2234 = vrot.slane %v2233, 2
        %v2235 = vadd.f32 %v2233, %v2234
        %v2236 = vrot.slane %v2235, 1
        %v2237 = vadd.f32 %v2235, %v2236
        %v2238 = vadd.f32 %v2170, %v2172
        %v2239 = vrot.slane %v2238, 4
        %v2240 = vadd.f32 %v2238, %v2239
        %v2241 = vrot.slane %v2240, 2
        %v2242 = vadd.f32 %v2240, %v2241
        %v2243 = vrot.slane %v2242, 1
        %v2244 = vadd.f32 %v2242, %v2243
        %v2245 = vadd.f32 %v2173, %v2175
        %v2246 = vrot.slane %v2245, 4
        %v2247 = vadd.f32 %v2245, %v2246
        %v2248 = vrot.slane %v2247, 2
        %v2249 = vadd.f32 %v2247, %v2248
        %v2250 = vrot.slane %v2249, 1
        %v2251 = vadd.f32 %v2249, %v2250
        %v2252 = vadd.f32 %v2174, %v2176
        %v2253 = vrot.slane %v2252, 4
        %v2254 = vadd.f32 %v2252, %v2253
        %v2255 = vrot.slane %v2254, 2
        %v2256 = vadd.f32 %v2254, %v2255
        %v2257 = vrot.slane %v2256, 1
        %v2258 = vadd.f32 %v2256, %v2257
        %v2259 = vadd.f32 %v2177, %v2179
        %v2260 = vrot.slane %v2259, 4
        %v2261 = vadd.f32 %v2259, %v2260
        %v2262 = vrot.slane %v2261, 2
        %v2263 = vadd.f32 %v2261, %v2262
        %v2264 = vrot.slane %v2263, 1
        %v2265 = vadd.f32 %v2263, %v2264
        %v2266 = vadd.f32 %v2178, %v2180
        %v2267 = vrot.slane %v2266, 4
        %v2268 = vadd.f32 %v2266, %v2267
        %v2269 = vrot.slane %v2268, 2
        %v2270 = vadd.f32 %v2268, %v2269
        %v2271 = vrot.slane %v2270, 1
        %v2272 = vadd.f32 %v2270, %v2271
        %v2273 = vadd.f32 %v2181, %v2183
        %v2274 = vrot.slane %v2273, 4
        %v2275 = vadd.f32 %v2273, %v2274
        %v2276 = vrot.slane %v2275, 2
        %v2277 = vadd.f32 %v2275, %v2276
        %v2278 = vrot.slane %v2277, 1
        %v2279 = vadd.f32 %v2277, %v2278
        %v2280 = vadd.f32 %v2182, %v2184
        %v2281 = vrot.slane %v2280, 4
        %v2282 = vadd.f32 %v2280, %v2281
        %v2283 = vrot.slane %v2282, 2
        %v2284 = vadd.f32 %v2282, %v2283
        %v2285 = vrot.slane %v2284, 1
        %v2286 = vadd.f32 %v2284, %v2285
        %v2287 = vadd.f32 %v2185, %v2187
        %v2288 = vrot.slane %v2287, 4
        %v2289 = vadd.f32 %v2287, %v2288
        %v2290 = vrot.slane %v2289, 2
        %v2291 = vadd.f32 %v2289, %v2290
        %v2292 = vrot.slane %v2291, 1
        %v2293 = vadd.f32 %v2291, %v2292
        %v2294 = vadd.f32 %v2186, %v2188
        %v2295 = vrot.slane %v2294, 4
        %v2296 = vadd.f32 %v2294, %v2295
        %v2297 = vrot.slane %v2296, 2
        %v2298 = vadd.f32 %v2296, %v2297
        %v2299 = vrot.slane %v2298, 1
        %v2300 = vadd.f32 %v2298, %v2299
        %v2317 = vsel %vm1947, %v2209, %v2195
        %v2318 = vsel %vm1949, %v2223, %v2317
        %v2319 = vsel %vm1951, %v2237, %v2318
        %v2320 = vsel %vm1953, %v2251, %v2319
        %v2321 = vsel %vm1955, %v2265, %v2320
        %v2322 = vsel %vm1957, %v2279, %v2321
        %v2323 = vsel %vm1959, %v2293, %v2322
        %v2324 = vsel %vm1947, %v2216, %v2202
        %v2325 = vsel %vm1949, %v2230, %v2324
        %v2326 = vsel %vm1951, %v2244, %v2325
        %v2327 = vsel %vm1953, %v2258, %v2326
        %v2328 = vsel %vm1955, %v2272, %v2327
        %v2329 = vsel %vm1957, %v2286, %v2328
        %v2330 = vsel %vm1959, %v2300, %v2329
        %v2333 = vmax.f32 %v2323, %v2330
        %2334 = vmax.xlane.f32.xlu0 %v2333
        %v2335 = vpop.xlane.xlu0 %2334
        %v2337 = vrot.slane %v2335, 1
        %v2338 = vrot.slane %v2335, 2
        %v2339 = vrot.slane %v2335, 3
        %v2340 = vrot.slane %v2335, 4
        %v2341 = vrot.slane %v2335, 5
        %v2342 = vrot.slane %v2335, 6
        %v2343 = vrot.slane %v2335, 7
        %v2352 = vsub.f32 %v2195, %v2335
        %v2353 = vsub.f32 %v2202, %v2335
        %v2354 = vsub.f32 %v2209, %v2337
        %v2355 = vsub.f32 %v2216, %v2337
        %v2356 = vsub.f32 %v2223, %v2338
        %v2357 = vsub.f32 %v2230, %v2338
        %v2358 = vsub.f32 %v2237, %v2339
        %v2359 = vsub.f32 %v2244, %v2339
        %v2360 = vsub.f32 %v2251, %v2340
        %v2361 = vsub.f32 %v2258, %v2340
        %v2362 = vsub.f32 %v2265, %v2341
        %v2363 = vsub.f32 %v2272, %v2341
        %v2364 = vsub.f32 %v2279, %v2342
        %v2365 = vsub.f32 %v2286, %v2342
        %v2366 = vsub.f32 %v2293, %v2343
        %v2367 = vsub.f32 %v2300, %v2343
        %v2368 = vmul.f32 %v2352, 1.442695
        %v2369 = vpow.pop %v2368
        %v2370 = vmul.f32 %v2353, 1.442695
        %v2371 = vpow.pop %v2370
        %v2372 = vmul.f32 %v2354, 1.442695
        %v2373 = vpow.pop %v2372
        %v2374 = vmul.f32 %v2355, 1.442695
        %v2375 = vpow.pop %v2374
        %v2376 = vmul.f32 %v2356, 1.442695
        %v2377 = vpow.pop %v2376
        %v2378 = vmul.f32 %v2357, 1.442695
        %v2379 = vpow.pop %v2378
        %v2380 = vmul.f32 %v2358, 1.442695
        %v2381 = vpow.pop %v2380
        %v2382 = vmul.f32 %v2359, 1.442695
        %v2383 = vpow.pop %v2382
        %v2384 = vmul.f32 %v2360, 1.442695
        %v2385 = vpow.pop %v2384
        %v2386 = vmul.f32 %v2361, 1.442695
        %v2387 = vpow.pop %v2386
        %v2388 = vmul.f32 %v2362, 1.442695
        %v2389 = vpow.pop %v2388
        %v2390 = vmul.f32 %v2363, 1.442695
        %v2391 = vpow.pop %v2390
        %v2392 = vmul.f32 %v2364, 1.442695
        %v2393 = vpow.pop %v2392
        %v2394 = vmul.f32 %v2365, 1.442695
        %v2395 = vpow.pop %v2394
        %v2396 = vmul.f32 %v2366, 1.442695
        %v2397 = vpow.pop %v2396
        %v2398 = vmul.f32 %v2367, 1.442695
        %v2399 = vpow.pop %v2398
        %v2416 = vrot.slane %v2373, 7
        %v2417 = vsel %vm1947, %v2416, %v2369
        %v2418 = vrot.slane %v2377, 6
        %v2419 = vsel %vm1949, %v2418, %v2417
        %v2420 = vrot.slane %v2381, 5
        %v2421 = vsel %vm1951, %v2420, %v2419
        %v2422 = vrot.slane %v2385, 4
        %v2423 = vsel %vm1953, %v2422, %v2421
        %v2424 = vrot.slane %v2389, 3
        %v2425 = vsel %vm1955, %v2424, %v2423
        %v2426 = vrot.slane %v2393, 2
        %v2427 = vsel %vm1957, %v2426, %v2425
        %v2428 = vrot.slane %v2397, 1
        %v2429 = vsel %vm1959, %v2428, %v2427
        %v2430 = vrot.slane %v2375, 7
        %v2431 = vsel %vm1947, %v2430, %v2371
        %v2432 = vrot.slane %v2379, 6
        %v2433 = vsel %vm1949, %v2432, %v2431
        %v2434 = vrot.slane %v2383, 5
        %v2435 = vsel %vm1951, %v2434, %v2433
        %v2436 = vrot.slane %v2387, 4
        %v2437 = vsel %vm1953, %v2436, %v2435
        %v2438 = vrot.slane %v2391, 3
        %v2439 = vsel %vm1955, %v2438, %v2437
        %v2440 = vrot.slane %v2395, 2
        %v2441 = vsel %vm1957, %v2440, %v2439
        %v2442 = vrot.slane %v2399, 1
        %v2443 = vsel %vm1959, %v2442, %v2441
        %v2446 = vadd.f32 %v2429, %v2443
        %2447 = vadd.xlane.f32.xlu0 %v2446
        %v2448 = vpop.xlane.xlu0 %2447
        %v2449 = vlaneseq
        %v2450 = vshrl.u32 %v2449, 7
        %v2451 = vsub.s32 0, %v2450
        %v2452 = vrot.slane %v2369, %v2451
        %v2453 = vlaneseq
        %v2454 = vshrl.u32 %v2453, 7
        %v2455 = vsub.s32 0, %v2454
        %v2456 = vrot.slane %v2371, %v2455
        %v2457 = vlaneseq
        %v2458 = vshrl.u32 %v2457, 7
        %v2459 = vsub.s32 0, %v2458
        %v2460 = vrot.slane %v2373, %v2459
        %v2461 = vlaneseq
        %v2462 = vshrl.u32 %v2461, 7
        %v2463 = vsub.s32 0, %v2462
        %v2464 = vrot.slane %v2375, %v2463
        %v2465 = vlaneseq
        %v2466 = vshrl.u32 %v2465, 7
        %v2467 = vsub.s32 0, %v2466
        %v2468 = vrot.slane %v2377, %v2467
        %v2469 = vlaneseq
        %v2470 = vshrl.u32 %v2469, 7
        %v2471 = vsub.s32 0, %v2470
        %v2472 = vrot.slane %v2379, %v2471
        %v2473 = vlaneseq
        %v2474 = vshrl.u32 %v2473, 7
        %v2475 = vsub.s32 0, %v2474
        %v2476 = vrot.slane %v2381, %v2475
        %v2477 = vlaneseq
        %v2478 = vshrl.u32 %v2477, 7
        %v2479 = vsub.s32 0, %v2478
        %v2480 = vrot.slane %v2383, %v2479
        %v2481 = vlaneseq
        %v2482 = vshrl.u32 %v2481, 7
        %v2483 = vsub.s32 0, %v2482
        %v2484 = vrot.slane %v2385, %v2483
        %v2485 = vlaneseq
        %v2486 = vshrl.u32 %v2485, 7
        %v2487 = vsub.s32 0, %v2486
        %v2488 = vrot.slane %v2387, %v2487
        %v2489 = vlaneseq
        %v2490 = vshrl.u32 %v2489, 7
        %v2491 = vsub.s32 0, %v2490
        %v2492 = vrot.slane %v2389, %v2491
        %v2493 = vlaneseq
        %v2494 = vshrl.u32 %v2493, 7
        %v2495 = vsub.s32 0, %v2494
        %v2496 = vrot.slane %v2391, %v2495
        %v2497 = vlaneseq
        %v2498 = vshrl.u32 %v2497, 7
        %v2499 = vsub.s32 0, %v2498
        %v2500 = vrot.slane %v2393, %v2499
        %v2501 = vlaneseq
        %v2502 = vshrl.u32 %v2501, 7
        %v2503 = vsub.s32 0, %v2502
        %v2504 = vrot.slane %v2395, %v2503
        %v2505 = vlaneseq
        %v2506 = vshrl.u32 %v2505, 7
        %v2507 = vsub.s32 0, %v2506
        %v2508 = vrot.slane %v2397, %v2507
        %v2509 = vlaneseq
        %v2510 = vshrl.u32 %v2509, 7
        %v2511 = vsub.s32 0, %v2510
        %v2512 = vrot.slane %v2399, %v2511
        %v2513 = vmul.f32 %v2452, %v1743
        %v2514 = vmul.f32 %v2456, %v1744
        %v2515 = vmul.f32 %v2452, %v1745
        %v2516 = vmul.f32 %v2456, %v1746
        %v2517 = vmul.f32 %v2460, %v1747
        %v2518 = vmul.f32 %v2464, %v1748
        %v2519 = vmul.f32 %v2460, %v1749
        %v2520 = vmul.f32 %v2464, %v1750
        %v2521 = vmul.f32 %v2468, %v1751
        %v2522 = vmul.f32 %v2472, %v1752
        %v2523 = vmul.f32 %v2468, %v1753
        %v2524 = vmul.f32 %v2472, %v1754
        %v2525 = vmul.f32 %v2476, %v1755
        %v2526 = vmul.f32 %v2480, %v1756
        %v2527 = vmul.f32 %v2476, %v1757
        %v2528 = vmul.f32 %v2480, %v1758
        %v2529 = vmul.f32 %v2484, %v1759
        %v2530 = vmul.f32 %v2488, %v1760
        %v2531 = vmul.f32 %v2484, %v1761
        %v2532 = vmul.f32 %v2488, %v1762
        %v2533 = vmul.f32 %v2492, %v1763
        %v2534 = vmul.f32 %v2496, %v1764
        %v2535 = vmul.f32 %v2492, %v1765
        %v2536 = vmul.f32 %v2496, %v1766
        %v2537 = vmul.f32 %v2500, %v1767
        %v2538 = vmul.f32 %v2504, %v1768
        %v2539 = vmul.f32 %v2500, %v1769
        %v2540 = vmul.f32 %v2504, %v1770
        %v2541 = vmul.f32 %v2508, %v1771
        %v2542 = vmul.f32 %v2512, %v1772
        %v2543 = vmul.f32 %v2508, %v1773
        %v2544 = vmul.f32 %v2512, %v1774
        %v2545 = vadd.f32 %v2513, %v2514
        %2546 = vadd.xlane.f32.xlu0 %v2545
        %v2547 = vpop.xlane.xlu0 %2546
        %v2548 = vadd.f32 %v2515, %v2516
        %2549 = vadd.xlane.f32.xlu0 %v2548
        %v2550 = vpop.xlane.xlu0 %2549
        %v2551 = vadd.f32 %v2517, %v2518
        %2552 = vadd.xlane.f32.xlu0 %v2551
        %v2553 = vpop.xlane.xlu0 %2552
        %v2554 = vadd.f32 %v2519, %v2520
        %2555 = vadd.xlane.f32.xlu0 %v2554
        %v2556 = vpop.xlane.xlu0 %2555
        %v2557 = vadd.f32 %v2521, %v2522
        %2558 = vadd.xlane.f32.xlu0 %v2557
        %v2559 = vpop.xlane.xlu0 %2558
        %v2560 = vadd.f32 %v2523, %v2524
        %2561 = vadd.xlane.f32.xlu0 %v2560
        %v2562 = vpop.xlane.xlu0 %2561
        %v2563 = vadd.f32 %v2525, %v2526
        %2564 = vadd.xlane.f32.xlu0 %v2563
        %v2565 = vpop.xlane.xlu0 %2564
        %v2566 = vadd.f32 %v2527, %v2528
        %2567 = vadd.xlane.f32.xlu0 %v2566
        %v2568 = vpop.xlane.xlu0 %2567
        %v2569 = vadd.f32 %v2529, %v2530
        %2570 = vadd.xlane.f32.xlu0 %v2569
        %v2571 = vpop.xlane.xlu0 %2570
        %v2572 = vadd.f32 %v2531, %v2532
        %2573 = vadd.xlane.f32.xlu0 %v2572
        %v2574 = vpop.xlane.xlu0 %2573
        %v2575 = vadd.f32 %v2533, %v2534
        %2576 = vadd.xlane.f32.xlu0 %v2575
        %v2577 = vpop.xlane.xlu0 %2576
        %v2578 = vadd.f32 %v2535, %v2536
        %2579 = vadd.xlane.f32.xlu0 %v2578
        %v2580 = vpop.xlane.xlu0 %2579
        %v2581 = vadd.f32 %v2537, %v2538
        %2582 = vadd.xlane.f32.xlu0 %v2581
        %v2583 = vpop.xlane.xlu0 %2582
        %v2584 = vadd.f32 %v2539, %v2540
        %2585 = vadd.xlane.f32.xlu0 %v2584
        %v2586 = vpop.xlane.xlu0 %2585
        %v2587 = vadd.f32 %v2541, %v2542
        %2588 = vadd.xlane.f32.xlu0 %v2587
        %v2589 = vpop.xlane.xlu0 %2588
        %v2590 = vadd.f32 %v2543, %v2544
        %2591 = vadd.xlane.f32.xlu0 %v2590
        %v2592 = vpop.xlane.xlu0 %2591
        %v2593 = vrcp.pop %v2448
        %v2595 = vlaneseq
        %v2596 = vshrl.u32 %v2595, 7
        %v2597 = vsub.s32 0, %v2596
        %v2598 = vrot.slane %v2593, %v2597
        %v2599 = vlaneseq
        %v2600 = vshrl.u32 %v2599, 7
        %v2601 = vsub.s32 1, %v2600
        %v2602 = vrot.slane %v2593, %v2601
        %v2603 = vlaneseq
        %v2604 = vshrl.u32 %v2603, 7
        %v2605 = vsub.s32 2, %v2604
        %v2606 = vrot.slane %v2593, %v2605
        %v2607 = vlaneseq
        %v2608 = vshrl.u32 %v2607, 7
        %v2609 = vsub.s32 3, %v2608
        %v2610 = vrot.slane %v2593, %v2609
        %v2611 = vlaneseq
        %v2612 = vshrl.u32 %v2611, 7
        %v2613 = vsub.s32 4, %v2612
        %v2614 = vrot.slane %v2593, %v2613
        %v2615 = vlaneseq
        %v2616 = vshrl.u32 %v2615, 7
        %v2617 = vsub.s32 5, %v2616
        %v2618 = vrot.slane %v2593, %v2617
        %v2619 = vlaneseq
        %v2620 = vshrl.u32 %v2619, 7
        %v2621 = vsub.s32 6, %v2620
        %v2622 = vrot.slane %v2593, %v2621
        %v2623 = vlaneseq
        %v2624 = vshrl.u32 %v2623, 7
        %v2625 = vsub.s32 7, %v2624
        %v2626 = vrot.slane %v2593, %v2625
        %v2635 = vmul.f32 %v2547, %v2598
        %v2636 = vmul.f32 %v2550, %v2598
        %v2637 = vmul.f32 %v2553, %v2602
        %v2638 = vmul.f32 %v2556, %v2602
        %v2639 = vmul.f32 %v2559, %v2606
        %v2640 = vmul.f32 %v2562, %v2606
        %v2641 = vmul.f32 %v2565, %v2610
        %v2642 = vmul.f32 %v2568, %v2610
        %v2643 = vmul.f32 %v2571, %v2614
        %v2644 = vmul.f32 %v2574, %v2614
        %v2645 = vmul.f32 %v2577, %v2618
        %v2646 = vmul.f32 %v2580, %v2618
        %v2647 = vmul.f32 %v2583, %v2622
        %v2648 = vmul.f32 %v2586, %v2622
        %v2649 = vmul.f32 %v2589, %v2626
        %v2650 = vmul.f32 %v2592, %v2626
        %v2651 = vmul.f32 %v2635, %v2635
        %v2652 = vmul.f32 %v2636, %v2636
        %v2653 = vmul.f32 %v2637, %v2637
        %v2654 = vmul.f32 %v2638, %v2638
        %v2655 = vmul.f32 %v2639, %v2639
        %v2656 = vmul.f32 %v2640, %v2640
        %v2657 = vmul.f32 %v2641, %v2641
        %v2658 = vmul.f32 %v2642, %v2642
        %v2659 = vmul.f32 %v2643, %v2643
        %v2660 = vmul.f32 %v2644, %v2644
        %v2661 = vmul.f32 %v2645, %v2645
        %v2662 = vmul.f32 %v2646, %v2646
        %v2663 = vmul.f32 %v2647, %v2647
        %v2664 = vmul.f32 %v2648, %v2648
        %v2665 = vmul.f32 %v2649, %v2649
        %v2666 = vmul.f32 %v2650, %v2650
        %2683 = vset.pattern.permute.xlu0 0
        %2684 = vperm.xlu0 %2683, %v2651
        %v2685 = vpop.permute.xlu0 %2684
        %2686 = vset.pattern.permute.xlu0 0
        %2687 = vperm.xlu0 %2686, %v2652
        %v2688 = vpop.permute.xlu0 %2687
        %2689 = vset.pattern.permute.xlu0 0
        %2690 = vperm.xlu0 %2689, %v2653
        %v2691 = vpop.permute.xlu0 %2690
        %2692 = vset.pattern.permute.xlu0 0
        %2693 = vperm.xlu0 %2692, %v2654
        %v2694 = vpop.permute.xlu0 %2693
        %2695 = vset.pattern.permute.xlu0 0
        %2696 = vperm.xlu0 %2695, %v2655
        %v2697 = vpop.permute.xlu0 %2696
        %2698 = vset.pattern.permute.xlu0 0
        %2699 = vperm.xlu0 %2698, %v2656
        %v2700 = vpop.permute.xlu0 %2699
        %2701 = vset.pattern.permute.xlu0 0
        %2702 = vperm.xlu0 %2701, %v2657
        %v2703 = vpop.permute.xlu0 %2702
        %2704 = vset.pattern.permute.xlu0 0
        %2705 = vperm.xlu0 %2704, %v2658
        %v2706 = vpop.permute.xlu0 %2705
        %2707 = vset.pattern.permute.xlu0 0
        %2708 = vperm.xlu0 %2707, %v2659
        %v2709 = vpop.permute.xlu0 %2708
        %2710 = vset.pattern.permute.xlu0 0
        %2711 = vperm.xlu0 %2710, %v2660
        %v2712 = vpop.permute.xlu0 %2711
        %2713 = vset.pattern.permute.xlu0 0
        %2714 = vperm.xlu0 %2713, %v2661
        %v2715 = vpop.permute.xlu0 %2714
        %2716 = vset.pattern.permute.xlu0 0
        %2717 = vperm.xlu0 %2716, %v2662
        %v2718 = vpop.permute.xlu0 %2717
        %2719 = vset.pattern.permute.xlu0 0
        %2720 = vperm.xlu0 %2719, %v2663
        %v2721 = vpop.permute.xlu0 %2720
        %2722 = vset.pattern.permute.xlu0 0
        %2723 = vperm.xlu0 %2722, %v2664
        %v2724 = vpop.permute.xlu0 %2723
        %2725 = vset.pattern.permute.xlu0 0
        %2726 = vperm.xlu0 %2725, %v2665
        %v2727 = vpop.permute.xlu0 %2726
        %2728 = vset.pattern.permute.xlu0 0
        %2729 = vperm.xlu0 %2728, %v2666
        %v2730 = vpop.permute.xlu0 %2729
        %v2731 = vlaneseq
        %v2732 = vshrl.u32 %v2731, 7
        %v2733 = vsub.s32 %v1872, %v2732
        %v2734 = vrot.slane %v2685, %v2733
        %v2735 = vlaneseq
        %v2736 = vshrl.u32 %v2735, 7
        %v2737 = vsub.s32 %v1877, %v2736
        %v2738 = vrot.slane %v2688, %v2737
        %v2739 = vsel %vm1882, %v2738, %v2734
        %v2740 = vlaneseq
        %v2741 = vshrl.u32 %v2740, 7
        %v2742 = vsub.s32 %v1872, %v2741
        %v2743 = vrot.slane %v2691, %v2742
        %v2744 = vlaneseq
        %v2745 = vshrl.u32 %v2744, 7
        %v2746 = vsub.s32 %v1877, %v2745
        %v2747 = vrot.slane %v2694, %v2746
        %v2748 = vsel %vm1882, %v2747, %v2743
        %v2749 = vlaneseq
        %v2750 = vshrl.u32 %v2749, 7
        %v2751 = vsub.s32 %v1872, %v2750
        %v2752 = vrot.slane %v2697, %v2751
        %v2753 = vlaneseq
        %v2754 = vshrl.u32 %v2753, 7
        %v2755 = vsub.s32 %v1877, %v2754
        %v2756 = vrot.slane %v2700, %v2755
        %v2757 = vsel %vm1882, %v2756, %v2752
        %v2758 = vlaneseq
        %v2759 = vshrl.u32 %v2758, 7
        %v2760 = vsub.s32 %v1872, %v2759
        %v2761 = vrot.slane %v2703, %v2760
        %v2762 = vlaneseq
        %v2763 = vshrl.u32 %v2762, 7
        %v2764 = vsub.s32 %v1877, %v2763
        %v2765 = vrot.slane %v2706, %v2764
        %v2766 = vsel %vm1882, %v2765, %v2761
        %v2767 = vlaneseq
        %v2768 = vshrl.u32 %v2767, 7
        %v2769 = vsub.s32 %v1872, %v2768
        %v2770 = vrot.slane %v2709, %v2769
        %v2771 = vlaneseq
        %v2772 = vshrl.u32 %v2771, 7
        %v2773 = vsub.s32 %v1877, %v2772
        %v2774 = vrot.slane %v2712, %v2773
        %v2775 = vsel %vm1882, %v2774, %v2770
        %v2776 = vlaneseq
        %v2777 = vshrl.u32 %v2776, 7
        %v2778 = vsub.s32 %v1872, %v2777
        %v2779 = vrot.slane %v2715, %v2778
        %v2780 = vlaneseq
        %v2781 = vshrl.u32 %v2780, 7
        %v2782 = vsub.s32 %v1877, %v2781
        %v2783 = vrot.slane %v2718, %v2782
        %v2784 = vsel %vm1882, %v2783, %v2779
        %v2785 = vlaneseq
        %v2786 = vshrl.u32 %v2785, 7
        %v2787 = vsub.s32 %v1872, %v2786
        %v2788 = vrot.slane %v2721, %v2787
        %v2789 = vlaneseq
        %v2790 = vshrl.u32 %v2789, 7
        %v2791 = vsub.s32 %v1877, %v2790
        %v2792 = vrot.slane %v2724, %v2791
        %v2793 = vsel %vm1882, %v2792, %v2788
        %v2794 = vlaneseq
        %v2795 = vshrl.u32 %v2794, 7
        %v2796 = vsub.s32 %v1872, %v2795
        %v2797 = vrot.slane %v2727, %v2796
        %v2798 = vlaneseq
        %v2799 = vshrl.u32 %v2798, 7
        %v2800 = vsub.s32 %v1877, %v2799
        %v2801 = vrot.slane %v2730, %v2800
        %v2802 = vsel %vm1882, %v2801, %v2797
        %v2803 = vsel %vm1947, %v2748, %v2739
        %v2804 = vsel %vm1949, %v2757, %v2803
        %v2805 = vsel %vm1951, %v2766, %v2804
        %v2806 = vsel %vm1953, %v2775, %v2805
        %v2807 = vsel %vm1955, %v2784, %v2806
        %v2808 = vsel %vm1957, %v2793, %v2807
        %v2809 = vsel %vm1959, %v2802, %v2808
        %v2811 = vsel %vm1962, %v2809, 0.0
        %2812 = vadd.xlane.f32.xlu0 %v2811
        %v2813 = vpop.xlane.xlu0 %2812
        %v2814 = vadd.f32 %v2813, 1e-12
        %v2815 = vrsqrt.pop %v2814
        %v2816 = vadd.f32 %v2813, 1.0
        %v2817 = vrcp.pop %v2816
        %v2818 = vmul.f32 %v2813, %v2817
        %v2819 = vmul.f32 %v2818, %v2815
        %2836 = vset.pattern.permute.xlu0 0
        %2837 = vperm.xlu0 %2836, %v2635
        %v2838 = vpop.permute.xlu0 %2837
        %2839 = vset.pattern.permute.xlu0 0
        %2840 = vperm.xlu0 %2839, %v2636
        %v2841 = vpop.permute.xlu0 %2840
        %2842 = vset.pattern.permute.xlu0 0
        %2843 = vperm.xlu0 %2842, %v2637
        %v2844 = vpop.permute.xlu0 %2843
        %2845 = vset.pattern.permute.xlu0 0
        %2846 = vperm.xlu0 %2845, %v2638
        %v2847 = vpop.permute.xlu0 %2846
        %2848 = vset.pattern.permute.xlu0 0
        %2849 = vperm.xlu0 %2848, %v2639
        %v2850 = vpop.permute.xlu0 %2849
        %2851 = vset.pattern.permute.xlu0 0
        %2852 = vperm.xlu0 %2851, %v2640
        %v2853 = vpop.permute.xlu0 %2852
        %2854 = vset.pattern.permute.xlu0 0
        %2855 = vperm.xlu0 %2854, %v2641
        %v2856 = vpop.permute.xlu0 %2855
        %2857 = vset.pattern.permute.xlu0 0
        %2858 = vperm.xlu0 %2857, %v2642
        %v2859 = vpop.permute.xlu0 %2858
        %2860 = vset.pattern.permute.xlu0 0
        %2861 = vperm.xlu0 %2860, %v2643
        %v2862 = vpop.permute.xlu0 %2861
        %2863 = vset.pattern.permute.xlu0 0
        %2864 = vperm.xlu0 %2863, %v2644
        %v2865 = vpop.permute.xlu0 %2864
        %2866 = vset.pattern.permute.xlu0 0
        %2867 = vperm.xlu0 %2866, %v2645
        %v2868 = vpop.permute.xlu0 %2867
        %2869 = vset.pattern.permute.xlu0 0
        %2870 = vperm.xlu0 %2869, %v2646
        %v2871 = vpop.permute.xlu0 %2870
        %2872 = vset.pattern.permute.xlu0 0
        %2873 = vperm.xlu0 %2872, %v2647
        %v2874 = vpop.permute.xlu0 %2873
        %2875 = vset.pattern.permute.xlu0 0
        %2876 = vperm.xlu0 %2875, %v2648
        %v2877 = vpop.permute.xlu0 %2876
        %2878 = vset.pattern.permute.xlu0 0
        %2879 = vperm.xlu0 %2878, %v2649
        %v2880 = vpop.permute.xlu0 %2879
        %2881 = vset.pattern.permute.xlu0 0
        %2882 = vperm.xlu0 %2881, %v2650
        %v2883 = vpop.permute.xlu0 %2882
        %v2884 = vlaneseq
        %v2885 = vshrl.u32 %v2884, 7
        %v2886 = vsub.s32 %v1872, %v2885
        %v2887 = vrot.slane %v2838, %v2886
        %v2888 = vlaneseq
        %v2889 = vshrl.u32 %v2888, 7
        %v2890 = vsub.s32 %v1877, %v2889
        %v2891 = vrot.slane %v2841, %v2890
        %v2892 = vsel %vm1882, %v2891, %v2887
        %v2893 = vlaneseq
        %v2894 = vshrl.u32 %v2893, 7
        %v2895 = vsub.s32 %v1872, %v2894
        %v2896 = vrot.slane %v2844, %v2895
        %v2897 = vlaneseq
        %v2898 = vshrl.u32 %v2897, 7
        %v2899 = vsub.s32 %v1877, %v2898
        %v2900 = vrot.slane %v2847, %v2899
        %v2901 = vsel %vm1882, %v2900, %v2896
        %v2902 = vlaneseq
        %v2903 = vshrl.u32 %v2902, 7
        %v2904 = vsub.s32 %v1872, %v2903
        %v2905 = vrot.slane %v2850, %v2904
        %v2906 = vlaneseq
        %v2907 = vshrl.u32 %v2906, 7
        %v2908 = vsub.s32 %v1877, %v2907
        %v2909 = vrot.slane %v2853, %v2908
        %v2910 = vsel %vm1882, %v2909, %v2905
        %v2911 = vlaneseq
        %v2912 = vshrl.u32 %v2911, 7
        %v2913 = vsub.s32 %v1872, %v2912
        %v2914 = vrot.slane %v2856, %v2913
        %v2915 = vlaneseq
        %v2916 = vshrl.u32 %v2915, 7
        %v2917 = vsub.s32 %v1877, %v2916
        %v2918 = vrot.slane %v2859, %v2917
        %v2919 = vsel %vm1882, %v2918, %v2914
        %v2920 = vlaneseq
        %v2921 = vshrl.u32 %v2920, 7
        %v2922 = vsub.s32 %v1872, %v2921
        %v2923 = vrot.slane %v2862, %v2922
        %v2924 = vlaneseq
        %v2925 = vshrl.u32 %v2924, 7
        %v2926 = vsub.s32 %v1877, %v2925
        %v2927 = vrot.slane %v2865, %v2926
        %v2928 = vsel %vm1882, %v2927, %v2923
        %v2929 = vlaneseq
        %v2930 = vshrl.u32 %v2929, 7
        %v2931 = vsub.s32 %v1872, %v2930
        %v2932 = vrot.slane %v2868, %v2931
        %v2933 = vlaneseq
        %v2934 = vshrl.u32 %v2933, 7
        %v2935 = vsub.s32 %v1877, %v2934
        %v2936 = vrot.slane %v2871, %v2935
        %v2937 = vsel %vm1882, %v2936, %v2932
        %v2938 = vlaneseq
        %v2939 = vshrl.u32 %v2938, 7
        %v2940 = vsub.s32 %v1872, %v2939
        %v2941 = vrot.slane %v2874, %v2940
        %v2942 = vlaneseq
        %v2943 = vshrl.u32 %v2942, 7
        %v2944 = vsub.s32 %v1877, %v2943
        %v2945 = vrot.slane %v2877, %v2944
        %v2946 = vsel %vm1882, %v2945, %v2941
        %v2947 = vlaneseq
        %v2948 = vshrl.u32 %v2947, 7
        %v2949 = vsub.s32 %v1872, %v2948
        %v2950 = vrot.slane %v2880, %v2949
        %v2951 = vlaneseq
        %v2952 = vshrl.u32 %v2951, 7
        %v2953 = vsub.s32 %v1877, %v2952
        %v2954 = vrot.slane %v2883, %v2953
        %v2955 = vsel %vm1882, %v2954, %v2950
        %v2956 = vsel %vm1947, %v2901, %v2892
        %v2957 = vsel %vm1949, %v2910, %v2956
        %v2958 = vsel %vm1951, %v2919, %v2957
        %v2959 = vsel %vm1953, %v2928, %v2958
        %v2960 = vsel %vm1955, %v2937, %v2959
        %v2961 = vsel %vm1957, %v2946, %v2960
        %v2962 = vsel %vm1959, %v2955, %v2961
        %v2964 = vmul.f32 %v2819, %v2962
        %v2965 = vlaneseq
        %v2966 = vshrl.u32 %v2965, 7
        %v2967 = vsub.s32 0, %v2966
        %v2968 = vrot.slane %v2964, %v2967
        %2970 = vbcast.lane.b32.xlu0 %v2968, 256
        %v2971 = vpop.permute.xlu0 %2970
        %s2973 = sor.u32 256, 8
        %2974 = vbcast.lane.b32.xlu0 %v2968, %s2973
        %v2975 = vpop.permute.xlu0 %2974
        %v2976 = vlaneseq
        %v2977 = vshrl.u32 %v2976, 7
        %v2978 = vsub.s32 1, %v2977
        %v2979 = vrot.slane %v2964, %v2978
        %2981 = vbcast.lane.b32.xlu0 %v2979, 256
        %v2982 = vpop.permute.xlu0 %2981
        %s2984 = sor.u32 256, 8
        %2985 = vbcast.lane.b32.xlu0 %v2979, %s2984
        %v2986 = vpop.permute.xlu0 %2985
        %v2987 = vlaneseq
        %v2988 = vshrl.u32 %v2987, 7
        %v2989 = vsub.s32 2, %v2988
        %v2990 = vrot.slane %v2964, %v2989
        %2992 = vbcast.lane.b32.xlu0 %v2990, 256
        %v2993 = vpop.permute.xlu0 %2992
        %s2995 = sor.u32 256, 8
        %2996 = vbcast.lane.b32.xlu0 %v2990, %s2995
        %v2997 = vpop.permute.xlu0 %2996
        %v2998 = vlaneseq
        %v2999 = vshrl.u32 %v2998, 7
        %v3000 = vsub.s32 3, %v2999
        %v3001 = vrot.slane %v2964, %v3000
        %3003 = vbcast.lane.b32.xlu0 %v3001, 256
        %v3004 = vpop.permute.xlu0 %3003
        %s3006 = sor.u32 256, 8
        %3007 = vbcast.lane.b32.xlu0 %v3001, %s3006
        %v3008 = vpop.permute.xlu0 %3007
        %v3009 = vlaneseq
        %v3010 = vshrl.u32 %v3009, 7
        %v3011 = vsub.s32 4, %v3010
        %v3012 = vrot.slane %v2964, %v3011
        %3014 = vbcast.lane.b32.xlu0 %v3012, 256
        %v3015 = vpop.permute.xlu0 %3014
        %s3017 = sor.u32 256, 8
        %3018 = vbcast.lane.b32.xlu0 %v3012, %s3017
        %v3019 = vpop.permute.xlu0 %3018
        %v3020 = vlaneseq
        %v3021 = vshrl.u32 %v3020, 7
        %v3022 = vsub.s32 5, %v3021
        %v3023 = vrot.slane %v2964, %v3022
        %3025 = vbcast.lane.b32.xlu0 %v3023, 256
        %v3026 = vpop.permute.xlu0 %3025
        %s3028 = sor.u32 256, 8
        %3029 = vbcast.lane.b32.xlu0 %v3023, %s3028
        %v3030 = vpop.permute.xlu0 %3029
        %v3031 = vlaneseq
        %v3032 = vshrl.u32 %v3031, 7
        %v3033 = vsub.s32 6, %v3032
        %v3034 = vrot.slane %v2964, %v3033
        %3036 = vbcast.lane.b32.xlu0 %v3034, 256
        %v3037 = vpop.permute.xlu0 %3036
        %s3039 = sor.u32 256, 8
        %3040 = vbcast.lane.b32.xlu0 %v3034, %s3039
        %v3041 = vpop.permute.xlu0 %3040
        %v3042 = vlaneseq
        %v3043 = vshrl.u32 %v3042, 7
        %v3044 = vsub.s32 7, %v3043
        %v3045 = vrot.slane %v2964, %v3044
        %3047 = vbcast.lane.b32.xlu0 %v3045, 256
        %v3048 = vpop.permute.xlu0 %3047
        %s3050 = sor.u32 256, 8
        %3051 = vbcast.lane.b32.xlu0 %v3045, %s3050
        %v3052 = vpop.permute.xlu0 %3051
        %v3053 = vmul.f32 %v2971, %v1743
        %v3054 = vmul.f32 %v2971, %v1744
        %v3055 = vmul.f32 %v2975, %v1745
        %v3056 = vmul.f32 %v2975, %v1746
        %v3057 = vmul.f32 %v2982, %v1747
        %v3058 = vmul.f32 %v2982, %v1748
        %v3059 = vmul.f32 %v2986, %v1749
        %v3060 = vmul.f32 %v2986, %v1750
        %v3061 = vmul.f32 %v2993, %v1751
        %v3062 = vmul.f32 %v2993, %v1752
        %v3063 = vmul.f32 %v2997, %v1753
        %v3064 = vmul.f32 %v2997, %v1754
        %v3065 = vmul.f32 %v3004, %v1755
        %v3066 = vmul.f32 %v3004, %v1756
        %v3067 = vmul.f32 %v3008, %v1757
        %v3068 = vmul.f32 %v3008, %v1758
        %v3069 = vmul.f32 %v3015, %v1759
        %v3070 = vmul.f32 %v3015, %v1760
        %v3071 = vmul.f32 %v3019, %v1761
        %v3072 = vmul.f32 %v3019, %v1762
        %v3073 = vmul.f32 %v3026, %v1763
        %v3074 = vmul.f32 %v3026, %v1764
        %v3075 = vmul.f32 %v3030, %v1765
        %v3076 = vmul.f32 %v3030, %v1766
        %v3077 = vmul.f32 %v3037, %v1767
        %v3078 = vmul.f32 %v3037, %v1768
        %v3079 = vmul.f32 %v3041, %v1769
        %v3080 = vmul.f32 %v3041, %v1770
        %v3081 = vmul.f32 %v3048, %v1771
        %v3082 = vmul.f32 %v3048, %v1772
        %v3083 = vmul.f32 %v3052, %v1773
        %v3084 = vmul.f32 %v3052, %v1774
        %v3085 = vadd.f32 %v3053, %v3055
        %v3086 = vrot.slane %v3085, 4
        %v3087 = vadd.f32 %v3085, %v3086
        %v3088 = vrot.slane %v3087, 2
        %v3089 = vadd.f32 %v3087, %v3088
        %v3090 = vrot.slane %v3089, 1
        %v3091 = vadd.f32 %v3089, %v3090
        %v3092 = vadd.f32 %v3054, %v3056
        %v3093 = vrot.slane %v3092, 4
        %v3094 = vadd.f32 %v3092, %v3093
        %v3095 = vrot.slane %v3094, 2
        %v3096 = vadd.f32 %v3094, %v3095
        %v3097 = vrot.slane %v3096, 1
        %v3098 = vadd.f32 %v3096, %v3097
        %v3099 = vadd.f32 %v3057, %v3059
        %v3100 = vrot.slane %v3099, 4
        %v3101 = vadd.f32 %v3099, %v3100
        %v3102 = vrot.slane %v3101, 2
        %v3103 = vadd.f32 %v3101, %v3102
        %v3104 = vrot.slane %v3103, 1
        %v3105 = vadd.f32 %v3103, %v3104
        %v3106 = vadd.f32 %v3058, %v3060
        %v3107 = vrot.slane %v3106, 4
        %v3108 = vadd.f32 %v3106, %v3107
        %v3109 = vrot.slane %v3108, 2
        %v3110 = vadd.f32 %v3108, %v3109
        %v3111 = vrot.slane %v3110, 1
        %v3112 = vadd.f32 %v3110, %v3111
        %v3113 = vadd.f32 %v3061, %v3063
        %v3114 = vrot.slane %v3113, 4
        %v3115 = vadd.f32 %v3113, %v3114
        %v3116 = vrot.slane %v3115, 2
        %v3117 = vadd.f32 %v3115, %v3116
        %v3118 = vrot.slane %v3117, 1
        %v3119 = vadd.f32 %v3117, %v3118
        %v3120 = vadd.f32 %v3062, %v3064
        %v3121 = vrot.slane %v3120, 4
        %v3122 = vadd.f32 %v3120, %v3121
        %v3123 = vrot.slane %v3122, 2
        %v3124 = vadd.f32 %v3122, %v3123
        %v3125 = vrot.slane %v3124, 1
        %v3126 = vadd.f32 %v3124, %v3125
        %v3127 = vadd.f32 %v3065, %v3067
        %v3128 = vrot.slane %v3127, 4
        %v3129 = vadd.f32 %v3127, %v3128
        %v3130 = vrot.slane %v3129, 2
        %v3131 = vadd.f32 %v3129, %v3130
        %v3132 = vrot.slane %v3131, 1
        %v3133 = vadd.f32 %v3131, %v3132
        %v3134 = vadd.f32 %v3066, %v3068
        %v3135 = vrot.slane %v3134, 4
        %v3136 = vadd.f32 %v3134, %v3135
        %v3137 = vrot.slane %v3136, 2
        %v3138 = vadd.f32 %v3136, %v3137
        %v3139 = vrot.slane %v3138, 1
        %v3140 = vadd.f32 %v3138, %v3139
        %v3141 = vadd.f32 %v3069, %v3071
        %v3142 = vrot.slane %v3141, 4
        %v3143 = vadd.f32 %v3141, %v3142
        %v3144 = vrot.slane %v3143, 2
        %v3145 = vadd.f32 %v3143, %v3144
        %v3146 = vrot.slane %v3145, 1
        %v3147 = vadd.f32 %v3145, %v3146
        %v3148 = vadd.f32 %v3070, %v3072
        %v3149 = vrot.slane %v3148, 4
        %v3150 = vadd.f32 %v3148, %v3149
        %v3151 = vrot.slane %v3150, 2
        %v3152 = vadd.f32 %v3150, %v3151
        %v3153 = vrot.slane %v3152, 1
        %v3154 = vadd.f32 %v3152, %v3153
        %v3155 = vadd.f32 %v3073, %v3075
        %v3156 = vrot.slane %v3155, 4
        %v3157 = vadd.f32 %v3155, %v3156
        %v3158 = vrot.slane %v3157, 2
        %v3159 = vadd.f32 %v3157, %v3158
        %v3160 = vrot.slane %v3159, 1
        %v3161 = vadd.f32 %v3159, %v3160
        %v3162 = vadd.f32 %v3074, %v3076
        %v3163 = vrot.slane %v3162, 4
        %v3164 = vadd.f32 %v3162, %v3163
        %v3165 = vrot.slane %v3164, 2
        %v3166 = vadd.f32 %v3164, %v3165
        %v3167 = vrot.slane %v3166, 1
        %v3168 = vadd.f32 %v3166, %v3167
        %v3169 = vadd.f32 %v3077, %v3079
        %v3170 = vrot.slane %v3169, 4
        %v3171 = vadd.f32 %v3169, %v3170
        %v3172 = vrot.slane %v3171, 2
        %v3173 = vadd.f32 %v3171, %v3172
        %v3174 = vrot.slane %v3173, 1
        %v3175 = vadd.f32 %v3173, %v3174
        %v3176 = vadd.f32 %v3078, %v3080
        %v3177 = vrot.slane %v3176, 4
        %v3178 = vadd.f32 %v3176, %v3177
        %v3179 = vrot.slane %v3178, 2
        %v3180 = vadd.f32 %v3178, %v3179
        %v3181 = vrot.slane %v3180, 1
        %v3182 = vadd.f32 %v3180, %v3181
        %v3183 = vadd.f32 %v3081, %v3083
        %v3184 = vrot.slane %v3183, 4
        %v3185 = vadd.f32 %v3183, %v3184
        %v3186 = vrot.slane %v3185, 2
        %v3187 = vadd.f32 %v3185, %v3186
        %v3188 = vrot.slane %v3187, 1
        %v3189 = vadd.f32 %v3187, %v3188
        %v3190 = vadd.f32 %v3082, %v3084
        %v3191 = vrot.slane %v3190, 4
        %v3192 = vadd.f32 %v3190, %v3191
        %v3193 = vrot.slane %v3192, 2
        %v3194 = vadd.f32 %v3192, %v3193
        %v3195 = vrot.slane %v3194, 1
        %v3196 = vadd.f32 %v3194, %v3195
        %v3197 = vadd.f32 %v2195, %v3091
        %v3198 = vadd.f32 %v2202, %v3098
        %v3199 = vadd.f32 %v2209, %v3105
        %v3200 = vadd.f32 %v2216, %v3112
        %v3201 = vadd.f32 %v2223, %v3119
        %v3202 = vadd.f32 %v2230, %v3126
        %v3203 = vadd.f32 %v2237, %v3133
        %v3204 = vadd.f32 %v2244, %v3140
        %v3205 = vadd.f32 %v2251, %v3147
        %v3206 = vadd.f32 %v2258, %v3154
        %v3207 = vadd.f32 %v2265, %v3161
        %v3208 = vadd.f32 %v2272, %v3168
        %v3209 = vadd.f32 %v2279, %v3175
        %v3210 = vadd.f32 %v2286, %v3182
        %v3211 = vadd.f32 %v2293, %v3189
        %v3212 = vadd.f32 %v2300, %v3196
        %v3229 = vsel %vm1947, %v3199, %v3197
        %v3230 = vsel %vm1949, %v3201, %v3229
        %v3231 = vsel %vm1951, %v3203, %v3230
        %v3232 = vsel %vm1953, %v3205, %v3231
        %v3233 = vsel %vm1955, %v3207, %v3232
        %v3234 = vsel %vm1957, %v3209, %v3233
        %v3235 = vsel %vm1959, %v3211, %v3234
        %v3236 = vsel %vm1947, %v3200, %v3198
        %v3237 = vsel %vm1949, %v3202, %v3236
        %v3238 = vsel %vm1951, %v3204, %v3237
        %v3239 = vsel %vm1953, %v3206, %v3238
        %v3240 = vsel %vm1955, %v3208, %v3239
        %v3241 = vsel %vm1957, %v3210, %v3240
        %v3242 = vsel %vm1959, %v3212, %v3241
        %v3245 = vmax.f32 %v3235, %v3242
        %3246 = vmax.xlane.f32.xlu0 %v3245
        %v3247 = vpop.xlane.xlu0 %3246
        %v3249 = vrot.slane %v3247, 1
        %v3250 = vrot.slane %v3247, 2
        %v3251 = vrot.slane %v3247, 3
        %v3252 = vrot.slane %v3247, 4
        %v3253 = vrot.slane %v3247, 5
        %v3254 = vrot.slane %v3247, 6
        %v3255 = vrot.slane %v3247, 7
        %v3264 = vsub.f32 %v3197, %v3247
        %v3265 = vsub.f32 %v3198, %v3247
        %v3266 = vsub.f32 %v3199, %v3249
        %v3267 = vsub.f32 %v3200, %v3249
        %v3268 = vsub.f32 %v3201, %v3250
        %v3269 = vsub.f32 %v3202, %v3250
        %v3270 = vsub.f32 %v3203, %v3251
        %v3271 = vsub.f32 %v3204, %v3251
        %v3272 = vsub.f32 %v3205, %v3252
        %v3273 = vsub.f32 %v3206, %v3252
        %v3274 = vsub.f32 %v3207, %v3253
        %v3275 = vsub.f32 %v3208, %v3253
        %v3276 = vsub.f32 %v3209, %v3254
        %v3277 = vsub.f32 %v3210, %v3254
        %v3278 = vsub.f32 %v3211, %v3255
        %v3279 = vsub.f32 %v3212, %v3255
        %v3280 = vmul.f32 %v3264, 1.442695
        %v3281 = vpow.pop %v3280
        %v3282 = vmul.f32 %v3265, 1.442695
        %v3283 = vpow.pop %v3282
        %v3284 = vmul.f32 %v3266, 1.442695
        %v3285 = vpow.pop %v3284
        %v3286 = vmul.f32 %v3267, 1.442695
        %v3287 = vpow.pop %v3286
        %v3288 = vmul.f32 %v3268, 1.442695
        %v3289 = vpow.pop %v3288
        %v3290 = vmul.f32 %v3269, 1.442695
        %v3291 = vpow.pop %v3290
        %v3292 = vmul.f32 %v3270, 1.442695
        %v3293 = vpow.pop %v3292
        %v3294 = vmul.f32 %v3271, 1.442695
        %v3295 = vpow.pop %v3294
        %v3296 = vmul.f32 %v3272, 1.442695
        %v3297 = vpow.pop %v3296
        %v3298 = vmul.f32 %v3273, 1.442695
        %v3299 = vpow.pop %v3298
        %v3300 = vmul.f32 %v3274, 1.442695
        %v3301 = vpow.pop %v3300
        %v3302 = vmul.f32 %v3275, 1.442695
        %v3303 = vpow.pop %v3302
        %v3304 = vmul.f32 %v3276, 1.442695
        %v3305 = vpow.pop %v3304
        %v3306 = vmul.f32 %v3277, 1.442695
        %v3307 = vpow.pop %v3306
        %v3308 = vmul.f32 %v3278, 1.442695
        %v3309 = vpow.pop %v3308
        %v3310 = vmul.f32 %v3279, 1.442695
        %v3311 = vpow.pop %v3310
        %v3328 = vrot.slane %v3285, 7
        %v3329 = vsel %vm1947, %v3328, %v3281
        %v3330 = vrot.slane %v3289, 6
        %v3331 = vsel %vm1949, %v3330, %v3329
        %v3332 = vrot.slane %v3293, 5
        %v3333 = vsel %vm1951, %v3332, %v3331
        %v3334 = vrot.slane %v3297, 4
        %v3335 = vsel %vm1953, %v3334, %v3333
        %v3336 = vrot.slane %v3301, 3
        %v3337 = vsel %vm1955, %v3336, %v3335
        %v3338 = vrot.slane %v3305, 2
        %v3339 = vsel %vm1957, %v3338, %v3337
        %v3340 = vrot.slane %v3309, 1
        %v3341 = vsel %vm1959, %v3340, %v3339
        %v3342 = vrot.slane %v3287, 7
        %v3343 = vsel %vm1947, %v3342, %v3283
        %v3344 = vrot.slane %v3291, 6
        %v3345 = vsel %vm1949, %v3344, %v3343
        %v3346 = vrot.slane %v3295, 5
        %v3347 = vsel %vm1951, %v3346, %v3345
        %v3348 = vrot.slane %v3299, 4
        %v3349 = vsel %vm1953, %v3348, %v3347
        %v3350 = vrot.slane %v3303, 3
        %v3351 = vsel %vm1955, %v3350, %v3349
        %v3352 = vrot.slane %v3307, 2
        %v3353 = vsel %vm1957, %v3352, %v3351
        %v3354 = vrot.slane %v3311, 1
        %v3355 = vsel %vm1959, %v3354, %v3353
        %v3358 = vadd.f32 %v3341, %v3355
        %3359 = vadd.xlane.f32.xlu0 %v3358
        %v3360 = vpop.xlane.xlu0 %3359
        %v3361 = vlaneseq
        %v3362 = vshrl.u32 %v3361, 7
        %v3363 = vsub.s32 0, %v3362
        %v3364 = vrot.slane %v3281, %v3363
        %v3365 = vlaneseq
        %v3366 = vshrl.u32 %v3365, 7
        %v3367 = vsub.s32 0, %v3366
        %v3368 = vrot.slane %v3283, %v3367
        %v3369 = vlaneseq
        %v3370 = vshrl.u32 %v3369, 7
        %v3371 = vsub.s32 0, %v3370
        %v3372 = vrot.slane %v3285, %v3371
        %v3373 = vlaneseq
        %v3374 = vshrl.u32 %v3373, 7
        %v3375 = vsub.s32 0, %v3374
        %v3376 = vrot.slane %v3287, %v3375
        %v3377 = vlaneseq
        %v3378 = vshrl.u32 %v3377, 7
        %v3379 = vsub.s32 0, %v3378
        %v3380 = vrot.slane %v3289, %v3379
        %v3381 = vlaneseq
        %v3382 = vshrl.u32 %v3381, 7
        %v3383 = vsub.s32 0, %v3382
        %v3384 = vrot.slane %v3291, %v3383
        %v3385 = vlaneseq
        %v3386 = vshrl.u32 %v3385, 7
        %v3387 = vsub.s32 0, %v3386
        %v3388 = vrot.slane %v3293, %v3387
        %v3389 = vlaneseq
        %v3390 = vshrl.u32 %v3389, 7
        %v3391 = vsub.s32 0, %v3390
        %v3392 = vrot.slane %v3295, %v3391
        %v3393 = vlaneseq
        %v3394 = vshrl.u32 %v3393, 7
        %v3395 = vsub.s32 0, %v3394
        %v3396 = vrot.slane %v3297, %v3395
        %v3397 = vlaneseq
        %v3398 = vshrl.u32 %v3397, 7
        %v3399 = vsub.s32 0, %v3398
        %v3400 = vrot.slane %v3299, %v3399
        %v3401 = vlaneseq
        %v3402 = vshrl.u32 %v3401, 7
        %v3403 = vsub.s32 0, %v3402
        %v3404 = vrot.slane %v3301, %v3403
        %v3405 = vlaneseq
        %v3406 = vshrl.u32 %v3405, 7
        %v3407 = vsub.s32 0, %v3406
        %v3408 = vrot.slane %v3303, %v3407
        %v3409 = vlaneseq
        %v3410 = vshrl.u32 %v3409, 7
        %v3411 = vsub.s32 0, %v3410
        %v3412 = vrot.slane %v3305, %v3411
        %v3413 = vlaneseq
        %v3414 = vshrl.u32 %v3413, 7
        %v3415 = vsub.s32 0, %v3414
        %v3416 = vrot.slane %v3307, %v3415
        %v3417 = vlaneseq
        %v3418 = vshrl.u32 %v3417, 7
        %v3419 = vsub.s32 0, %v3418
        %v3420 = vrot.slane %v3309, %v3419
        %v3421 = vlaneseq
        %v3422 = vshrl.u32 %v3421, 7
        %v3423 = vsub.s32 0, %v3422
        %v3424 = vrot.slane %v3311, %v3423
        %v3425 = vmul.f32 %v3364, %v1743
        %v3426 = vmul.f32 %v3368, %v1744
        %v3427 = vmul.f32 %v3364, %v1745
        %v3428 = vmul.f32 %v3368, %v1746
        %v3429 = vmul.f32 %v3372, %v1747
        %v3430 = vmul.f32 %v3376, %v1748
        %v3431 = vmul.f32 %v3372, %v1749
        %v3432 = vmul.f32 %v3376, %v1750
        %v3433 = vmul.f32 %v3380, %v1751
        %v3434 = vmul.f32 %v3384, %v1752
        %v3435 = vmul.f32 %v3380, %v1753
        %v3436 = vmul.f32 %v3384, %v1754
        %v3437 = vmul.f32 %v3388, %v1755
        %v3438 = vmul.f32 %v3392, %v1756
        %v3439 = vmul.f32 %v3388, %v1757
        %v3440 = vmul.f32 %v3392, %v1758
        %v3441 = vmul.f32 %v3396, %v1759
        %v3442 = vmul.f32 %v3400, %v1760
        %v3443 = vmul.f32 %v3396, %v1761
        %v3444 = vmul.f32 %v3400, %v1762
        %v3445 = vmul.f32 %v3404, %v1763
        %v3446 = vmul.f32 %v3408, %v1764
        %v3447 = vmul.f32 %v3404, %v1765
        %v3448 = vmul.f32 %v3408, %v1766
        %v3449 = vmul.f32 %v3412, %v1767
        %v3450 = vmul.f32 %v3416, %v1768
        %v3451 = vmul.f32 %v3412, %v1769
        %v3452 = vmul.f32 %v3416, %v1770
        %v3453 = vmul.f32 %v3420, %v1771
        %v3454 = vmul.f32 %v3424, %v1772
        %v3455 = vmul.f32 %v3420, %v1773
        %v3456 = vmul.f32 %v3424, %v1774
        %v3457 = vadd.f32 %v3425, %v3426
        %3458 = vadd.xlane.f32.xlu0 %v3457
        %v3459 = vpop.xlane.xlu0 %3458
        %v3460 = vadd.f32 %v3427, %v3428
        %3461 = vadd.xlane.f32.xlu0 %v3460
        %v3462 = vpop.xlane.xlu0 %3461
        %v3463 = vadd.f32 %v3429, %v3430
        %3464 = vadd.xlane.f32.xlu0 %v3463
        %v3465 = vpop.xlane.xlu0 %3464
        %v3466 = vadd.f32 %v3431, %v3432
        %3467 = vadd.xlane.f32.xlu0 %v3466
        %v3468 = vpop.xlane.xlu0 %3467
        %v3469 = vadd.f32 %v3433, %v3434
        %3470 = vadd.xlane.f32.xlu0 %v3469
        %v3471 = vpop.xlane.xlu0 %3470
        %v3472 = vadd.f32 %v3435, %v3436
        %3473 = vadd.xlane.f32.xlu0 %v3472
        %v3474 = vpop.xlane.xlu0 %3473
        %v3475 = vadd.f32 %v3437, %v3438
        %3476 = vadd.xlane.f32.xlu0 %v3475
        %v3477 = vpop.xlane.xlu0 %3476
        %v3478 = vadd.f32 %v3439, %v3440
        %3479 = vadd.xlane.f32.xlu0 %v3478
        %v3480 = vpop.xlane.xlu0 %3479
        %v3481 = vadd.f32 %v3441, %v3442
        %3482 = vadd.xlane.f32.xlu0 %v3481
        %v3483 = vpop.xlane.xlu0 %3482
        %v3484 = vadd.f32 %v3443, %v3444
        %3485 = vadd.xlane.f32.xlu0 %v3484
        %v3486 = vpop.xlane.xlu0 %3485
        %v3487 = vadd.f32 %v3445, %v3446
        %3488 = vadd.xlane.f32.xlu0 %v3487
        %v3489 = vpop.xlane.xlu0 %3488
        %v3490 = vadd.f32 %v3447, %v3448
        %3491 = vadd.xlane.f32.xlu0 %v3490
        %v3492 = vpop.xlane.xlu0 %3491
        %v3493 = vadd.f32 %v3449, %v3450
        %3494 = vadd.xlane.f32.xlu0 %v3493
        %v3495 = vpop.xlane.xlu0 %3494
        %v3496 = vadd.f32 %v3451, %v3452
        %3497 = vadd.xlane.f32.xlu0 %v3496
        %v3498 = vpop.xlane.xlu0 %3497
        %v3499 = vadd.f32 %v3453, %v3454
        %3500 = vadd.xlane.f32.xlu0 %v3499
        %v3501 = vpop.xlane.xlu0 %3500
        %v3502 = vadd.f32 %v3455, %v3456
        %3503 = vadd.xlane.f32.xlu0 %v3502
        %v3504 = vpop.xlane.xlu0 %3503
        %v3505 = vrcp.pop %v3360
        %v3507 = vlaneseq
        %v3508 = vshrl.u32 %v3507, 7
        %v3509 = vsub.s32 0, %v3508
        %v3510 = vrot.slane %v3505, %v3509
        %v3511 = vlaneseq
        %v3512 = vshrl.u32 %v3511, 7
        %v3513 = vsub.s32 1, %v3512
        %v3514 = vrot.slane %v3505, %v3513
        %v3515 = vlaneseq
        %v3516 = vshrl.u32 %v3515, 7
        %v3517 = vsub.s32 2, %v3516
        %v3518 = vrot.slane %v3505, %v3517
        %v3519 = vlaneseq
        %v3520 = vshrl.u32 %v3519, 7
        %v3521 = vsub.s32 3, %v3520
        %v3522 = vrot.slane %v3505, %v3521
        %v3523 = vlaneseq
        %v3524 = vshrl.u32 %v3523, 7
        %v3525 = vsub.s32 4, %v3524
        %v3526 = vrot.slane %v3505, %v3525
        %v3527 = vlaneseq
        %v3528 = vshrl.u32 %v3527, 7
        %v3529 = vsub.s32 5, %v3528
        %v3530 = vrot.slane %v3505, %v3529
        %v3531 = vlaneseq
        %v3532 = vshrl.u32 %v3531, 7
        %v3533 = vsub.s32 6, %v3532
        %v3534 = vrot.slane %v3505, %v3533
        %v3535 = vlaneseq
        %v3536 = vshrl.u32 %v3535, 7
        %v3537 = vsub.s32 7, %v3536
        %v3538 = vrot.slane %v3505, %v3537
        %v3547 = vmul.f32 %v3459, %v3510
        %v3548 = vmul.f32 %v3462, %v3510
        %v3549 = vmul.f32 %v3465, %v3514
        %v3550 = vmul.f32 %v3468, %v3514
        %v3551 = vmul.f32 %v3471, %v3518
        %v3552 = vmul.f32 %v3474, %v3518
        %v3553 = vmul.f32 %v3477, %v3522
        %v3554 = vmul.f32 %v3480, %v3522
        %v3555 = vmul.f32 %v3483, %v3526
        %v3556 = vmul.f32 %v3486, %v3526
        %v3557 = vmul.f32 %v3489, %v3530
        %v3558 = vmul.f32 %v3492, %v3530
        %v3559 = vmul.f32 %v3495, %v3534
        %v3560 = vmul.f32 %v3498, %v3534
        %v3561 = vmul.f32 %v3501, %v3538
        %v3562 = vmul.f32 %v3504, %v3538
        %v3563 = vmul.f32 %v3547, %v3547
        %v3564 = vmul.f32 %v3548, %v3548
        %v3565 = vmul.f32 %v3549, %v3549
        %v3566 = vmul.f32 %v3550, %v3550
        %v3567 = vmul.f32 %v3551, %v3551
        %v3568 = vmul.f32 %v3552, %v3552
        %v3569 = vmul.f32 %v3553, %v3553
        %v3570 = vmul.f32 %v3554, %v3554
        %v3571 = vmul.f32 %v3555, %v3555
        %v3572 = vmul.f32 %v3556, %v3556
        %v3573 = vmul.f32 %v3557, %v3557
        %v3574 = vmul.f32 %v3558, %v3558
        %v3575 = vmul.f32 %v3559, %v3559
        %v3576 = vmul.f32 %v3560, %v3560
        %v3577 = vmul.f32 %v3561, %v3561
        %v3578 = vmul.f32 %v3562, %v3562
        %3595 = vset.pattern.permute.xlu0 0
        %3596 = vperm.xlu0 %3595, %v3563
        %v3597 = vpop.permute.xlu0 %3596
        %3598 = vset.pattern.permute.xlu0 0
        %3599 = vperm.xlu0 %3598, %v3564
        %v3600 = vpop.permute.xlu0 %3599
        %3601 = vset.pattern.permute.xlu0 0
        %3602 = vperm.xlu0 %3601, %v3565
        %v3603 = vpop.permute.xlu0 %3602
        %3604 = vset.pattern.permute.xlu0 0
        %3605 = vperm.xlu0 %3604, %v3566
        %v3606 = vpop.permute.xlu0 %3605
        %3607 = vset.pattern.permute.xlu0 0
        %3608 = vperm.xlu0 %3607, %v3567
        %v3609 = vpop.permute.xlu0 %3608
        %3610 = vset.pattern.permute.xlu0 0
        %3611 = vperm.xlu0 %3610, %v3568
        %v3612 = vpop.permute.xlu0 %3611
        %3613 = vset.pattern.permute.xlu0 0
        %3614 = vperm.xlu0 %3613, %v3569
        %v3615 = vpop.permute.xlu0 %3614
        %3616 = vset.pattern.permute.xlu0 0
        %3617 = vperm.xlu0 %3616, %v3570
        %v3618 = vpop.permute.xlu0 %3617
        %3619 = vset.pattern.permute.xlu0 0
        %3620 = vperm.xlu0 %3619, %v3571
        %v3621 = vpop.permute.xlu0 %3620
        %3622 = vset.pattern.permute.xlu0 0
        %3623 = vperm.xlu0 %3622, %v3572
        %v3624 = vpop.permute.xlu0 %3623
        %3625 = vset.pattern.permute.xlu0 0
        %3626 = vperm.xlu0 %3625, %v3573
        %v3627 = vpop.permute.xlu0 %3626
        %3628 = vset.pattern.permute.xlu0 0
        %3629 = vperm.xlu0 %3628, %v3574
        %v3630 = vpop.permute.xlu0 %3629
        %3631 = vset.pattern.permute.xlu0 0
        %3632 = vperm.xlu0 %3631, %v3575
        %v3633 = vpop.permute.xlu0 %3632
        %3634 = vset.pattern.permute.xlu0 0
        %3635 = vperm.xlu0 %3634, %v3576
        %v3636 = vpop.permute.xlu0 %3635
        %3637 = vset.pattern.permute.xlu0 0
        %3638 = vperm.xlu0 %3637, %v3577
        %v3639 = vpop.permute.xlu0 %3638
        %3640 = vset.pattern.permute.xlu0 0
        %3641 = vperm.xlu0 %3640, %v3578
        %v3642 = vpop.permute.xlu0 %3641
        %v3643 = vlaneseq
        %v3644 = vshrl.u32 %v3643, 7
        %v3645 = vsub.s32 %v1872, %v3644
        %v3646 = vrot.slane %v3597, %v3645
        %v3647 = vlaneseq
        %v3648 = vshrl.u32 %v3647, 7
        %v3649 = vsub.s32 %v1877, %v3648
        %v3650 = vrot.slane %v3600, %v3649
        %v3651 = vsel %vm1882, %v3650, %v3646
        %v3652 = vlaneseq
        %v3653 = vshrl.u32 %v3652, 7
        %v3654 = vsub.s32 %v1872, %v3653
        %v3655 = vrot.slane %v3603, %v3654
        %v3656 = vlaneseq
        %v3657 = vshrl.u32 %v3656, 7
        %v3658 = vsub.s32 %v1877, %v3657
        %v3659 = vrot.slane %v3606, %v3658
        %v3660 = vsel %vm1882, %v3659, %v3655
        %v3661 = vlaneseq
        %v3662 = vshrl.u32 %v3661, 7
        %v3663 = vsub.s32 %v1872, %v3662
        %v3664 = vrot.slane %v3609, %v3663
        %v3665 = vlaneseq
        %v3666 = vshrl.u32 %v3665, 7
        %v3667 = vsub.s32 %v1877, %v3666
        %v3668 = vrot.slane %v3612, %v3667
        %v3669 = vsel %vm1882, %v3668, %v3664
        %v3670 = vlaneseq
        %v3671 = vshrl.u32 %v3670, 7
        %v3672 = vsub.s32 %v1872, %v3671
        %v3673 = vrot.slane %v3615, %v3672
        %v3674 = vlaneseq
        %v3675 = vshrl.u32 %v3674, 7
        %v3676 = vsub.s32 %v1877, %v3675
        %v3677 = vrot.slane %v3618, %v3676
        %v3678 = vsel %vm1882, %v3677, %v3673
        %v3679 = vlaneseq
        %v3680 = vshrl.u32 %v3679, 7
        %v3681 = vsub.s32 %v1872, %v3680
        %v3682 = vrot.slane %v3621, %v3681
        %v3683 = vlaneseq
        %v3684 = vshrl.u32 %v3683, 7
        %v3685 = vsub.s32 %v1877, %v3684
        %v3686 = vrot.slane %v3624, %v3685
        %v3687 = vsel %vm1882, %v3686, %v3682
        %v3688 = vlaneseq
        %v3689 = vshrl.u32 %v3688, 7
        %v3690 = vsub.s32 %v1872, %v3689
        %v3691 = vrot.slane %v3627, %v3690
        %v3692 = vlaneseq
        %v3693 = vshrl.u32 %v3692, 7
        %v3694 = vsub.s32 %v1877, %v3693
        %v3695 = vrot.slane %v3630, %v3694
        %v3696 = vsel %vm1882, %v3695, %v3691
        %v3697 = vlaneseq
        %v3698 = vshrl.u32 %v3697, 7
        %v3699 = vsub.s32 %v1872, %v3698
        %v3700 = vrot.slane %v3633, %v3699
        %v3701 = vlaneseq
        %v3702 = vshrl.u32 %v3701, 7
        %v3703 = vsub.s32 %v1877, %v3702
        %v3704 = vrot.slane %v3636, %v3703
        %v3705 = vsel %vm1882, %v3704, %v3700
        %v3706 = vlaneseq
        %v3707 = vshrl.u32 %v3706, 7
        %v3708 = vsub.s32 %v1872, %v3707
        %v3709 = vrot.slane %v3639, %v3708
        %v3710 = vlaneseq
        %v3711 = vshrl.u32 %v3710, 7
        %v3712 = vsub.s32 %v1877, %v3711
        %v3713 = vrot.slane %v3642, %v3712
        %v3714 = vsel %vm1882, %v3713, %v3709
        %v3715 = vsel %vm1947, %v3660, %v3651
        %v3716 = vsel %vm1949, %v3669, %v3715
        %v3717 = vsel %vm1951, %v3678, %v3716
        %v3718 = vsel %vm1953, %v3687, %v3717
        %v3719 = vsel %vm1955, %v3696, %v3718
        %v3720 = vsel %vm1957, %v3705, %v3719
        %v3721 = vsel %vm1959, %v3714, %v3720
        %v3723 = vsel %vm1962, %v3721, 0.0
        %3724 = vadd.xlane.f32.xlu0 %v3723
        %v3725 = vpop.xlane.xlu0 %3724
        %v3726 = vadd.f32 %v3725, 1e-12
        %v3727 = vrsqrt.pop %v3726
        %v3728 = vadd.f32 %v3725, 1.0
        %v3729 = vrcp.pop %v3728
        %v3730 = vmul.f32 %v3725, %v3729
        %v3731 = vmul.f32 %v3730, %v3727
        %3748 = vset.pattern.permute.xlu0 0
        %3749 = vperm.xlu0 %3748, %v3547
        %v3750 = vpop.permute.xlu0 %3749
        %3751 = vset.pattern.permute.xlu0 0
        %3752 = vperm.xlu0 %3751, %v3548
        %v3753 = vpop.permute.xlu0 %3752
        %3754 = vset.pattern.permute.xlu0 0
        %3755 = vperm.xlu0 %3754, %v3549
        %v3756 = vpop.permute.xlu0 %3755
        %3757 = vset.pattern.permute.xlu0 0
        %3758 = vperm.xlu0 %3757, %v3550
        %v3759 = vpop.permute.xlu0 %3758
        %3760 = vset.pattern.permute.xlu0 0
        %3761 = vperm.xlu0 %3760, %v3551
        %v3762 = vpop.permute.xlu0 %3761
        %3763 = vset.pattern.permute.xlu0 0
        %3764 = vperm.xlu0 %3763, %v3552
        %v3765 = vpop.permute.xlu0 %3764
        %3766 = vset.pattern.permute.xlu0 0
        %3767 = vperm.xlu0 %3766, %v3553
        %v3768 = vpop.permute.xlu0 %3767
        %3769 = vset.pattern.permute.xlu0 0
        %3770 = vperm.xlu0 %3769, %v3554
        %v3771 = vpop.permute.xlu0 %3770
        %3772 = vset.pattern.permute.xlu0 0
        %3773 = vperm.xlu0 %3772, %v3555
        %v3774 = vpop.permute.xlu0 %3773
        %3775 = vset.pattern.permute.xlu0 0
        %3776 = vperm.xlu0 %3775, %v3556
        %v3777 = vpop.permute.xlu0 %3776
        %3778 = vset.pattern.permute.xlu0 0
        %3779 = vperm.xlu0 %3778, %v3557
        %v3780 = vpop.permute.xlu0 %3779
        %3781 = vset.pattern.permute.xlu0 0
        %3782 = vperm.xlu0 %3781, %v3558
        %v3783 = vpop.permute.xlu0 %3782
        %3784 = vset.pattern.permute.xlu0 0
        %3785 = vperm.xlu0 %3784, %v3559
        %v3786 = vpop.permute.xlu0 %3785
        %3787 = vset.pattern.permute.xlu0 0
        %3788 = vperm.xlu0 %3787, %v3560
        %v3789 = vpop.permute.xlu0 %3788
        %3790 = vset.pattern.permute.xlu0 0
        %3791 = vperm.xlu0 %3790, %v3561
        %v3792 = vpop.permute.xlu0 %3791
        %3793 = vset.pattern.permute.xlu0 0
        %3794 = vperm.xlu0 %3793, %v3562
        %v3795 = vpop.permute.xlu0 %3794
        %v3796 = vlaneseq
        %v3797 = vshrl.u32 %v3796, 7
        %v3798 = vsub.s32 %v1872, %v3797
        %v3799 = vrot.slane %v3750, %v3798
        %v3800 = vlaneseq
        %v3801 = vshrl.u32 %v3800, 7
        %v3802 = vsub.s32 %v1877, %v3801
        %v3803 = vrot.slane %v3753, %v3802
        %v3804 = vsel %vm1882, %v3803, %v3799
        %v3805 = vlaneseq
        %v3806 = vshrl.u32 %v3805, 7
        %v3807 = vsub.s32 %v1872, %v3806
        %v3808 = vrot.slane %v3756, %v3807
        %v3809 = vlaneseq
        %v3810 = vshrl.u32 %v3809, 7
        %v3811 = vsub.s32 %v1877, %v3810
        %v3812 = vrot.slane %v3759, %v3811
        %v3813 = vsel %vm1882, %v3812, %v3808
        %v3814 = vlaneseq
        %v3815 = vshrl.u32 %v3814, 7
        %v3816 = vsub.s32 %v1872, %v3815
        %v3817 = vrot.slane %v3762, %v3816
        %v3818 = vlaneseq
        %v3819 = vshrl.u32 %v3818, 7
        %v3820 = vsub.s32 %v1877, %v3819
        %v3821 = vrot.slane %v3765, %v3820
        %v3822 = vsel %vm1882, %v3821, %v3817
        %v3823 = vlaneseq
        %v3824 = vshrl.u32 %v3823, 7
        %v3825 = vsub.s32 %v1872, %v3824
        %v3826 = vrot.slane %v3768, %v3825
        %v3827 = vlaneseq
        %v3828 = vshrl.u32 %v3827, 7
        %v3829 = vsub.s32 %v1877, %v3828
        %v3830 = vrot.slane %v3771, %v3829
        %v3831 = vsel %vm1882, %v3830, %v3826
        %v3832 = vlaneseq
        %v3833 = vshrl.u32 %v3832, 7
        %v3834 = vsub.s32 %v1872, %v3833
        %v3835 = vrot.slane %v3774, %v3834
        %v3836 = vlaneseq
        %v3837 = vshrl.u32 %v3836, 7
        %v3838 = vsub.s32 %v1877, %v3837
        %v3839 = vrot.slane %v3777, %v3838
        %v3840 = vsel %vm1882, %v3839, %v3835
        %v3841 = vlaneseq
        %v3842 = vshrl.u32 %v3841, 7
        %v3843 = vsub.s32 %v1872, %v3842
        %v3844 = vrot.slane %v3780, %v3843
        %v3845 = vlaneseq
        %v3846 = vshrl.u32 %v3845, 7
        %v3847 = vsub.s32 %v1877, %v3846
        %v3848 = vrot.slane %v3783, %v3847
        %v3849 = vsel %vm1882, %v3848, %v3844
        %v3850 = vlaneseq
        %v3851 = vshrl.u32 %v3850, 7
        %v3852 = vsub.s32 %v1872, %v3851
        %v3853 = vrot.slane %v3786, %v3852
        %v3854 = vlaneseq
        %v3855 = vshrl.u32 %v3854, 7
        %v3856 = vsub.s32 %v1877, %v3855
        %v3857 = vrot.slane %v3789, %v3856
        %v3858 = vsel %vm1882, %v3857, %v3853
        %v3859 = vlaneseq
        %v3860 = vshrl.u32 %v3859, 7
        %v3861 = vsub.s32 %v1872, %v3860
        %v3862 = vrot.slane %v3792, %v3861
        %v3863 = vlaneseq
        %v3864 = vshrl.u32 %v3863, 7
        %v3865 = vsub.s32 %v1877, %v3864
        %v3866 = vrot.slane %v3795, %v3865
        %v3867 = vsel %vm1882, %v3866, %v3862
        %v3868 = vsel %vm1947, %v3813, %v3804
        %v3869 = vsel %vm1949, %v3822, %v3868
        %v3870 = vsel %vm1951, %v3831, %v3869
        %v3871 = vsel %vm1953, %v3840, %v3870
        %v3872 = vsel %vm1955, %v3849, %v3871
        %v3873 = vsel %vm1957, %v3858, %v3872
        %v3874 = vsel %vm1959, %v3867, %v3873
        %v3876 = vmul.f32 %v3731, %v3874
        %3877 = vst.msk [vmem:[%s176] sm:$0xff] %vm1962, %v3876
        %s3878 = scalar_lea.vmem [#allocation2], 256
        %v3879 = vld [vmem:[%s3878] sm:$0xff]
        %v3880 = vld [vmem:[%s3878 + $0x8] sm:$0xff]
        %v3881 = vld [vmem:[%s3878 + $0x10] sm:$0xff]
        %v3882 = vld [vmem:[%s3878 + $0x18] sm:$0xff]
        %v3883 = vld [vmem:[%s156] sm:$0xff]
        %v3884 = vld [vmem:[%s156 + $0x8] sm:$0xff]
        %v3887 = vcombine.low %v3883, %v3884
        %v3888 = vcombine.high %v3883, %v3884
        %v3890 = vunpack.c.l.s4 1966171168
        %v3891 = vunpack.c.0.s8 %v3890
        %v3892 = vlaneseq
        %v3893 = vshrl.u32 %v3892, 7
        %v3894 = vsub.s32 %v3891, %v3893
        %v3895 = vrot.slane %v3887, %v3894
        %v3897 = vunpack.c.l.s4 1966171168
        %v3898 = vunpack.c.0.s8 %v3897
        %v3899 = vlaneseq
        %v3900 = vshrl.u32 %v3899, 7
        %v3901 = vsub.s32 %v3898, %v3900
        %v3902 = vrot.slane %v3888, %v3901
        %v3903 = vcombine.high %v3895, %v3895
        %v3904 = vcombine.high %v3902, %v3902
        %v3906 = vunpack.c.l.s4 1966171168
        %v3907 = vunpack.c.0.s8 %v3906
        %v3908 = vlaneseq
        %v3909 = vshrl.u32 %v3908, 7
        %v3910 = vsub.s32 %v3907, %v3909
        %v3911 = vrot.slane %v3895, %v3910
        %v3913 = vunpack.c.l.s4 1966171168
        %v3914 = vunpack.c.0.s8 %v3913
        %v3915 = vlaneseq
        %v3916 = vshrl.u32 %v3915, 7
        %v3917 = vsub.s32 %v3914, %v3916
        %v3918 = vrot.slane %v3902, %v3917
        %v3920 = vunpack.c.l.s4 1966171168
        %v3921 = vunpack.c.0.s8 %v3920
        %v3922 = vlaneseq
        %v3923 = vshrl.u32 %v3922, 7
        %v3924 = vsub.s32 %v3921, %v3923
        %v3925 = vrot.slane %v3903, %v3924
        %v3927 = vunpack.c.l.s4 1966171168
        %v3928 = vunpack.c.0.s8 %v3927
        %v3929 = vlaneseq
        %v3930 = vshrl.u32 %v3929, 7
        %v3931 = vsub.s32 %v3928, %v3930
        %v3932 = vrot.slane %v3904, %v3931
        %v3933 = vcombine.high %v3911, %v3911
        %v3934 = vcombine.high %v3918, %v3918
        %v3935 = vcombine.high %v3925, %v3925
        %v3936 = vcombine.high %v3932, %v3932
        %v3937 = vlaneseq
        %v3938 = vshrl.u32 %v3937, 7
        %v3939 = vsub.s32 0, %v3938
        %v3940 = vrot.slane %v3911, %v3939
        %v3941 = vlaneseq
        %v3942 = vshrl.u32 %v3941, 7
        %v3943 = vsub.s32 1, %v3942
        %v3944 = vrot.slane %v3911, %v3943
        %v3945 = vlaneseq
        %v3946 = vshrl.u32 %v3945, 7
        %v3947 = vsub.s32 0, %v3946
        %v3948 = vrot.slane %v3925, %v3947
        %v3949 = vlaneseq
        %v3950 = vshrl.u32 %v3949, 7
        %v3951 = vsub.s32 1, %v3950
        %v3952 = vrot.slane %v3925, %v3951
        %v3953 = vlaneseq
        %v3954 = vshrl.u32 %v3953, 7
        %v3955 = vsub.s32 0, %v3954
        %v3956 = vrot.slane %v3933, %v3955
        %v3957 = vlaneseq
        %v3958 = vshrl.u32 %v3957, 7
        %v3959 = vsub.s32 1, %v3958
        %v3960 = vrot.slane %v3933, %v3959
        %v3961 = vlaneseq
        %v3962 = vshrl.u32 %v3961, 7
        %v3963 = vsub.s32 0, %v3962
        %v3964 = vrot.slane %v3935, %v3963
        %v3965 = vlaneseq
        %v3966 = vshrl.u32 %v3965, 7
        %v3967 = vsub.s32 1, %v3966
        %v3968 = vrot.slane %v3935, %v3967
        %v3969 = vlaneseq
        %v3970 = vshrl.u32 %v3969, 7
        %v3971 = vsub.s32 0, %v3970
        %v3972 = vrot.slane %v3918, %v3971
        %v3973 = vlaneseq
        %v3974 = vshrl.u32 %v3973, 7
        %v3975 = vsub.s32 1, %v3974
        %v3976 = vrot.slane %v3918, %v3975
        %v3977 = vlaneseq
        %v3978 = vshrl.u32 %v3977, 7
        %v3979 = vsub.s32 0, %v3978
        %v3980 = vrot.slane %v3932, %v3979
        %v3981 = vlaneseq
        %v3982 = vshrl.u32 %v3981, 7
        %v3983 = vsub.s32 1, %v3982
        %v3984 = vrot.slane %v3932, %v3983
        %v3985 = vlaneseq
        %v3986 = vshrl.u32 %v3985, 7
        %v3987 = vsub.s32 0, %v3986
        %v3988 = vrot.slane %v3934, %v3987
        %v3989 = vlaneseq
        %v3990 = vshrl.u32 %v3989, 7
        %v3991 = vsub.s32 1, %v3990
        %v3992 = vrot.slane %v3934, %v3991
        %v3993 = vlaneseq
        %v3994 = vshrl.u32 %v3993, 7
        %v3995 = vsub.s32 0, %v3994
        %v3996 = vrot.slane %v3936, %v3995
        %v3997 = vlaneseq
        %v3998 = vshrl.u32 %v3997, 7
        %v3999 = vsub.s32 1, %v3998
        %v4000 = vrot.slane %v3936, %v3999
        %v4017 = vmul.f32 %v3879, %v3940
        %v4018 = vmul.f32 %v3880, %v3944
        %v4019 = vmul.f32 %v3881, %v3940
        %v4020 = vmul.f32 %v3882, %v3944
        %v4021 = vmul.f32 %v3879, %v3948
        %v4022 = vmul.f32 %v3880, %v3952
        %v4023 = vmul.f32 %v3881, %v3948
        %v4024 = vmul.f32 %v3882, %v3952
        %v4025 = vmul.f32 %v3879, %v3956
        %v4026 = vmul.f32 %v3880, %v3960
        %v4027 = vmul.f32 %v3881, %v3956
        %v4028 = vmul.f32 %v3882, %v3960
        %v4029 = vmul.f32 %v3879, %v3964
        %v4030 = vmul.f32 %v3880, %v3968
        %v4031 = vmul.f32 %v3881, %v3964
        %v4032 = vmul.f32 %v3882, %v3968
        %v4033 = vmul.f32 %v3879, %v3972
        %v4034 = vmul.f32 %v3880, %v3976
        %v4035 = vmul.f32 %v3881, %v3972
        %v4036 = vmul.f32 %v3882, %v3976
        %v4037 = vmul.f32 %v3879, %v3980
        %v4038 = vmul.f32 %v3880, %v3984
        %v4039 = vmul.f32 %v3881, %v3980
        %v4040 = vmul.f32 %v3882, %v3984
        %v4041 = vmul.f32 %v3879, %v3988
        %v4042 = vmul.f32 %v3880, %v3992
        %v4043 = vmul.f32 %v3881, %v3988
        %v4044 = vmul.f32 %v3882, %v3992
        %v4045 = vmul.f32 %v3879, %v3996
        %v4046 = vmul.f32 %v3880, %v4000
        %v4047 = vmul.f32 %v3881, %v3996
        %v4048 = vmul.f32 %v3882, %v4000
        %s4049 = scalar_lea.vmem [#allocation2], 288
        %v4050 = vld [vmem:[%s4049] sm:$0xff]
        %v4051 = vld [vmem:[%s4049 + $0x8] sm:$0xff]
        %v4052 = vld [vmem:[%s4049 + $0x10] sm:$0xff]
        %v4053 = vld [vmem:[%s4049 + $0x18] sm:$0xff]
        %v4054 = vld [vmem:[%s352] sm:$0xff]
        %v4055 = vld [vmem:[%s352 + $0x8] sm:$0xff]
        %v4058 = vcombine.low %v4054, %v4055
        %v4059 = vcombine.high %v4054, %v4055
        %v4061 = vunpack.c.l.s4 1966171168
        %v4062 = vunpack.c.0.s8 %v4061
        %v4063 = vlaneseq
        %v4064 = vshrl.u32 %v4063, 7
        %v4065 = vsub.s32 %v4062, %v4064
        %v4066 = vrot.slane %v4058, %v4065
        %v4068 = vunpack.c.l.s4 1966171168
        %v4069 = vunpack.c.0.s8 %v4068
        %v4070 = vlaneseq
        %v4071 = vshrl.u32 %v4070, 7
        %v4072 = vsub.s32 %v4069, %v4071
        %v4073 = vrot.slane %v4059, %v4072
        %v4074 = vcombine.high %v4066, %v4066
        %v4075 = vcombine.high %v4073, %v4073
        %v4077 = vunpack.c.l.s4 1966171168
        %v4078 = vunpack.c.0.s8 %v4077
        %v4079 = vlaneseq
        %v4080 = vshrl.u32 %v4079, 7
        %v4081 = vsub.s32 %v4078, %v4080
        %v4082 = vrot.slane %v4066, %v4081
        %v4084 = vunpack.c.l.s4 1966171168
        %v4085 = vunpack.c.0.s8 %v4084
        %v4086 = vlaneseq
        %v4087 = vshrl.u32 %v4086, 7
        %v4088 = vsub.s32 %v4085, %v4087
        %v4089 = vrot.slane %v4073, %v4088
        %v4091 = vunpack.c.l.s4 1966171168
        %v4092 = vunpack.c.0.s8 %v4091
        %v4093 = vlaneseq
        %v4094 = vshrl.u32 %v4093, 7
        %v4095 = vsub.s32 %v4092, %v4094
        %v4096 = vrot.slane %v4074, %v4095
        %v4098 = vunpack.c.l.s4 1966171168
        %v4099 = vunpack.c.0.s8 %v4098
        %v4100 = vlaneseq
        %v4101 = vshrl.u32 %v4100, 7
        %v4102 = vsub.s32 %v4099, %v4101
        %v4103 = vrot.slane %v4075, %v4102
        %v4104 = vcombine.high %v4082, %v4082
        %v4105 = vcombine.high %v4089, %v4089
        %v4106 = vcombine.high %v4096, %v4096
        %v4107 = vcombine.high %v4103, %v4103
        %v4108 = vlaneseq
        %v4109 = vshrl.u32 %v4108, 7
        %v4110 = vsub.s32 0, %v4109
        %v4111 = vrot.slane %v4082, %v4110
        %v4112 = vlaneseq
        %v4113 = vshrl.u32 %v4112, 7
        %v4114 = vsub.s32 1, %v4113
        %v4115 = vrot.slane %v4082, %v4114
        %v4116 = vlaneseq
        %v4117 = vshrl.u32 %v4116, 7
        %v4118 = vsub.s32 0, %v4117
        %v4119 = vrot.slane %v4096, %v4118
        %v4120 = vlaneseq
        %v4121 = vshrl.u32 %v4120, 7
        %v4122 = vsub.s32 1, %v4121
        %v4123 = vrot.slane %v4096, %v4122
        %v4124 = vlaneseq
        %v4125 = vshrl.u32 %v4124, 7
        %v4126 = vsub.s32 0, %v4125
        %v4127 = vrot.slane %v4104, %v4126
        %v4128 = vlaneseq
        %v4129 = vshrl.u32 %v4128, 7
        %v4130 = vsub.s32 1, %v4129
        %v4131 = vrot.slane %v4104, %v4130
        %v4132 = vlaneseq
        %v4133 = vshrl.u32 %v4132, 7
        %v4134 = vsub.s32 0, %v4133
        %v4135 = vrot.slane %v4106, %v4134
        %v4136 = vlaneseq
        %v4137 = vshrl.u32 %v4136, 7
        %v4138 = vsub.s32 1, %v4137
        %v4139 = vrot.slane %v4106, %v4138
        %v4140 = vlaneseq
        %v4141 = vshrl.u32 %v4140, 7
        %v4142 = vsub.s32 0, %v4141
        %v4143 = vrot.slane %v4089, %v4142
        %v4144 = vlaneseq
        %v4145 = vshrl.u32 %v4144, 7
        %v4146 = vsub.s32 1, %v4145
        %v4147 = vrot.slane %v4089, %v4146
        %v4148 = vlaneseq
        %v4149 = vshrl.u32 %v4148, 7
        %v4150 = vsub.s32 0, %v4149
        %v4151 = vrot.slane %v4103, %v4150
        %v4152 = vlaneseq
        %v4153 = vshrl.u32 %v4152, 7
        %v4154 = vsub.s32 1, %v4153
        %v4155 = vrot.slane %v4103, %v4154
        %v4156 = vlaneseq
        %v4157 = vshrl.u32 %v4156, 7
        %v4158 = vsub.s32 0, %v4157
        %v4159 = vrot.slane %v4105, %v4158
        %v4160 = vlaneseq
        %v4161 = vshrl.u32 %v4160, 7
        %v4162 = vsub.s32 1, %v4161
        %v4163 = vrot.slane %v4105, %v4162
        %v4164 = vlaneseq
        %v4165 = vshrl.u32 %v4164, 7
        %v4166 = vsub.s32 0, %v4165
        %v4167 = vrot.slane %v4107, %v4166
        %v4168 = vlaneseq
        %v4169 = vshrl.u32 %v4168, 7
        %v4170 = vsub.s32 1, %v4169
        %v4171 = vrot.slane %v4107, %v4170
        %v4188 = vmul.f32 %v4050, %v4111
        %v4189 = vmul.f32 %v4051, %v4115
        %v4190 = vmul.f32 %v4052, %v4111
        %v4191 = vmul.f32 %v4053, %v4115
        %v4192 = vmul.f32 %v4050, %v4119
        %v4193 = vmul.f32 %v4051, %v4123
        %v4194 = vmul.f32 %v4052, %v4119
        %v4195 = vmul.f32 %v4053, %v4123
        %v4196 = vmul.f32 %v4050, %v4127
        %v4197 = vmul.f32 %v4051, %v4131
        %v4198 = vmul.f32 %v4052, %v4127
        %v4199 = vmul.f32 %v4053, %v4131
        %v4200 = vmul.f32 %v4050, %v4135
        %v4201 = vmul.f32 %v4051, %v4139
        %v4202 = vmul.f32 %v4052, %v4135
        %v4203 = vmul.f32 %v4053, %v4139
        %v4204 = vmul.f32 %v4050, %v4143
        %v4205 = vmul.f32 %v4051, %v4147
        %v4206 = vmul.f32 %v4052, %v4143
        %v4207 = vmul.f32 %v4053, %v4147
        %v4208 = vmul.f32 %v4050, %v4151
        %v4209 = vmul.f32 %v4051, %v4155
        %v4210 = vmul.f32 %v4052, %v4151
        %v4211 = vmul.f32 %v4053, %v4155
        %v4212 = vmul.f32 %v4050, %v4159
        %v4213 = vmul.f32 %v4051, %v4163
        %v4214 = vmul.f32 %v4052, %v4159
        %v4215 = vmul.f32 %v4053, %v4163
        %v4216 = vmul.f32 %v4050, %v4167
        %v4217 = vmul.f32 %v4051, %v4171
        %v4218 = vmul.f32 %v4052, %v4167
        %v4219 = vmul.f32 %v4053, %v4171
        %v4220 = vadd.f32 %v4017, %v4188
        %v4221 = vadd.f32 %v4018, %v4189
        %v4222 = vadd.f32 %v4019, %v4190
        %v4223 = vadd.f32 %v4020, %v4191
        %v4224 = vadd.f32 %v4021, %v4192
        %v4225 = vadd.f32 %v4022, %v4193
        %v4226 = vadd.f32 %v4023, %v4194
        %v4227 = vadd.f32 %v4024, %v4195
        %v4228 = vadd.f32 %v4025, %v4196
        %v4229 = vadd.f32 %v4026, %v4197
        %v4230 = vadd.f32 %v4027, %v4198
        %v4231 = vadd.f32 %v4028, %v4199
        %v4232 = vadd.f32 %v4029, %v4200
        %v4233 = vadd.f32 %v4030, %v4201
        %v4234 = vadd.f32 %v4031, %v4202
        %v4235 = vadd.f32 %v4032, %v4203
        %v4236 = vadd.f32 %v4033, %v4204
        %v4237 = vadd.f32 %v4034, %v4205
        %v4238 = vadd.f32 %v4035, %v4206
        %v4239 = vadd.f32 %v4036, %v4207
        %v4240 = vadd.f32 %v4037, %v4208
        %v4241 = vadd.f32 %v4038, %v4209
        %v4242 = vadd.f32 %v4039, %v4210
        %v4243 = vadd.f32 %v4040, %v4211
        %v4244 = vadd.f32 %v4041, %v4212
        %v4245 = vadd.f32 %v4042, %v4213
        %v4246 = vadd.f32 %v4043, %v4214
        %v4247 = vadd.f32 %v4044, %v4215
        %v4248 = vadd.f32 %v4045, %v4216
        %v4249 = vadd.f32 %v4046, %v4217
        %v4250 = vadd.f32 %v4047, %v4218
        %v4251 = vadd.f32 %v4048, %v4219
        %s4252 = scalar_lea.vmem [#allocation2], 320
        %v4253 = vld [vmem:[%s4252] sm:$0xff]
        %v4254 = vld [vmem:[%s4252 + $0x8] sm:$0xff]
        %v4255 = vld [vmem:[%s4252 + $0x10] sm:$0xff]
        %v4256 = vld [vmem:[%s4252 + $0x18] sm:$0xff]
        %v4257 = vld [vmem:[%s556] sm:$0xff]
        %v4258 = vld [vmem:[%s556 + $0x8] sm:$0xff]
        %v4261 = vcombine.low %v4257, %v4258
        %v4262 = vcombine.high %v4257, %v4258
        %v4264 = vunpack.c.l.s4 1966171168
        %v4265 = vunpack.c.0.s8 %v4264
        %v4266 = vlaneseq
        %v4267 = vshrl.u32 %v4266, 7
        %v4268 = vsub.s32 %v4265, %v4267
        %v4269 = vrot.slane %v4261, %v4268
        %v4271 = vunpack.c.l.s4 1966171168
        %v4272 = vunpack.c.0.s8 %v4271
        %v4273 = vlaneseq
        %v4274 = vshrl.u32 %v4273, 7
        %v4275 = vsub.s32 %v4272, %v4274
        %v4276 = vrot.slane %v4262, %v4275
        %v4277 = vcombine.high %v4269, %v4269
        %v4278 = vcombine.high %v4276, %v4276
        %v4280 = vunpack.c.l.s4 1966171168
        %v4281 = vunpack.c.0.s8 %v4280
        %v4282 = vlaneseq
        %v4283 = vshrl.u32 %v4282, 7
        %v4284 = vsub.s32 %v4281, %v4283
        %v4285 = vrot.slane %v4269, %v4284
        %v4287 = vunpack.c.l.s4 1966171168
        %v4288 = vunpack.c.0.s8 %v4287
        %v4289 = vlaneseq
        %v4290 = vshrl.u32 %v4289, 7
        %v4291 = vsub.s32 %v4288, %v4290
        %v4292 = vrot.slane %v4276, %v4291
        %v4294 = vunpack.c.l.s4 1966171168
        %v4295 = vunpack.c.0.s8 %v4294
        %v4296 = vlaneseq
        %v4297 = vshrl.u32 %v4296, 7
        %v4298 = vsub.s32 %v4295, %v4297
        %v4299 = vrot.slane %v4277, %v4298
        %v4301 = vunpack.c.l.s4 1966171168
        %v4302 = vunpack.c.0.s8 %v4301
        %v4303 = vlaneseq
        %v4304 = vshrl.u32 %v4303, 7
        %v4305 = vsub.s32 %v4302, %v4304
        %v4306 = vrot.slane %v4278, %v4305
        %v4307 = vcombine.high %v4285, %v4285
        %v4308 = vcombine.high %v4292, %v4292
        %v4309 = vcombine.high %v4299, %v4299
        %v4310 = vcombine.high %v4306, %v4306
        %v4311 = vlaneseq
        %v4312 = vshrl.u32 %v4311, 7
        %v4313 = vsub.s32 0, %v4312
        %v4314 = vrot.slane %v4285, %v4313
        %v4315 = vlaneseq
        %v4316 = vshrl.u32 %v4315, 7
        %v4317 = vsub.s32 1, %v4316
        %v4318 = vrot.slane %v4285, %v4317
        %v4319 = vlaneseq
        %v4320 = vshrl.u32 %v4319, 7
        %v4321 = vsub.s32 0, %v4320
        %v4322 = vrot.slane %v4299, %v4321
        %v4323 = vlaneseq
        %v4324 = vshrl.u32 %v4323, 7
        %v4325 = vsub.s32 1, %v4324
        %v4326 = vrot.slane %v4299, %v4325
        %v4327 = vlaneseq
        %v4328 = vshrl.u32 %v4327, 7
        %v4329 = vsub.s32 0, %v4328
        %v4330 = vrot.slane %v4307, %v4329
        %v4331 = vlaneseq
        %v4332 = vshrl.u32 %v4331, 7
        %v4333 = vsub.s32 1, %v4332
        %v4334 = vrot.slane %v4307, %v4333
        %v4335 = vlaneseq
        %v4336 = vshrl.u32 %v4335, 7
        %v4337 = vsub.s32 0, %v4336
        %v4338 = vrot.slane %v4309, %v4337
        %v4339 = vlaneseq
        %v4340 = vshrl.u32 %v4339, 7
        %v4341 = vsub.s32 1, %v4340
        %v4342 = vrot.slane %v4309, %v4341
        %v4343 = vlaneseq
        %v4344 = vshrl.u32 %v4343, 7
        %v4345 = vsub.s32 0, %v4344
        %v4346 = vrot.slane %v4292, %v4345
        %v4347 = vlaneseq
        %v4348 = vshrl.u32 %v4347, 7
        %v4349 = vsub.s32 1, %v4348
        %v4350 = vrot.slane %v4292, %v4349
        %v4351 = vlaneseq
        %v4352 = vshrl.u32 %v4351, 7
        %v4353 = vsub.s32 0, %v4352
        %v4354 = vrot.slane %v4306, %v4353
        %v4355 = vlaneseq
        %v4356 = vshrl.u32 %v4355, 7
        %v4357 = vsub.s32 1, %v4356
        %v4358 = vrot.slane %v4306, %v4357
        %v4359 = vlaneseq
        %v4360 = vshrl.u32 %v4359, 7
        %v4361 = vsub.s32 0, %v4360
        %v4362 = vrot.slane %v4308, %v4361
        %v4363 = vlaneseq
        %v4364 = vshrl.u32 %v4363, 7
        %v4365 = vsub.s32 1, %v4364
        %v4366 = vrot.slane %v4308, %v4365
        %v4367 = vlaneseq
        %v4368 = vshrl.u32 %v4367, 7
        %v4369 = vsub.s32 0, %v4368
        %v4370 = vrot.slane %v4310, %v4369
        %v4371 = vlaneseq
        %v4372 = vshrl.u32 %v4371, 7
        %v4373 = vsub.s32 1, %v4372
        %v4374 = vrot.slane %v4310, %v4373
        %v4391 = vmul.f32 %v4253, %v4314
        %v4392 = vmul.f32 %v4254, %v4318
        %v4393 = vmul.f32 %v4255, %v4314
        %v4394 = vmul.f32 %v4256, %v4318
        %v4395 = vmul.f32 %v4253, %v4322
        %v4396 = vmul.f32 %v4254, %v4326
        %v4397 = vmul.f32 %v4255, %v4322
        %v4398 = vmul.f32 %v4256, %v4326
        %v4399 = vmul.f32 %v4253, %v4330
        %v4400 = vmul.f32 %v4254, %v4334
        %v4401 = vmul.f32 %v4255, %v4330
        %v4402 = vmul.f32 %v4256, %v4334
        %v4403 = vmul.f32 %v4253, %v4338
        %v4404 = vmul.f32 %v4254, %v4342
        %v4405 = vmul.f32 %v4255, %v4338
        %v4406 = vmul.f32 %v4256, %v4342
        %v4407 = vmul.f32 %v4253, %v4346
        %v4408 = vmul.f32 %v4254, %v4350
        %v4409 = vmul.f32 %v4255, %v4346
        %v4410 = vmul.f32 %v4256, %v4350
        %v4411 = vmul.f32 %v4253, %v4354
        %v4412 = vmul.f32 %v4254, %v4358
        %v4413 = vmul.f32 %v4255, %v4354
        %v4414 = vmul.f32 %v4256, %v4358
        %v4415 = vmul.f32 %v4253, %v4362
        %v4416 = vmul.f32 %v4254, %v4366
        %v4417 = vmul.f32 %v4255, %v4362
        %v4418 = vmul.f32 %v4256, %v4366
        %v4419 = vmul.f32 %v4253, %v4370
        %v4420 = vmul.f32 %v4254, %v4374
        %v4421 = vmul.f32 %v4255, %v4370
        %v4422 = vmul.f32 %v4256, %v4374
        %v4423 = vadd.f32 %v4220, %v4391
        %v4424 = vadd.f32 %v4221, %v4392
        %v4425 = vadd.f32 %v4222, %v4393
        %v4426 = vadd.f32 %v4223, %v4394
        %v4427 = vadd.f32 %v4224, %v4395
        %v4428 = vadd.f32 %v4225, %v4396
        %v4429 = vadd.f32 %v4226, %v4397
        %v4430 = vadd.f32 %v4227, %v4398
        %v4431 = vadd.f32 %v4228, %v4399
        %v4432 = vadd.f32 %v4229, %v4400
        %v4433 = vadd.f32 %v4230, %v4401
        %v4434 = vadd.f32 %v4231, %v4402
        %v4435 = vadd.f32 %v4232, %v4403
        %v4436 = vadd.f32 %v4233, %v4404
        %v4437 = vadd.f32 %v4234, %v4405
        %v4438 = vadd.f32 %v4235, %v4406
        %v4439 = vadd.f32 %v4236, %v4407
        %v4440 = vadd.f32 %v4237, %v4408
        %v4441 = vadd.f32 %v4238, %v4409
        %v4442 = vadd.f32 %v4239, %v4410
        %v4443 = vadd.f32 %v4240, %v4411
        %v4444 = vadd.f32 %v4241, %v4412
        %v4445 = vadd.f32 %v4242, %v4413
        %v4446 = vadd.f32 %v4243, %v4414
        %v4447 = vadd.f32 %v4244, %v4415
        %v4448 = vadd.f32 %v4245, %v4416
        %v4449 = vadd.f32 %v4246, %v4417
        %v4450 = vadd.f32 %v4247, %v4418
        %v4451 = vadd.f32 %v4248, %v4419
        %v4452 = vadd.f32 %v4249, %v4420
        %v4453 = vadd.f32 %v4250, %v4421
        %v4454 = vadd.f32 %v4251, %v4422
        %s4455 = scalar_lea.vmem [#allocation2], 352
        %v4456 = vld [vmem:[%s4455] sm:$0xff]
        %v4457 = vld [vmem:[%s4455 + $0x8] sm:$0xff]
        %v4458 = vld [vmem:[%s4455 + $0x10] sm:$0xff]
        %v4459 = vld [vmem:[%s4455 + $0x18] sm:$0xff]
        %v4460 = vld [vmem:[%s760] sm:$0xff]
        %v4461 = vld [vmem:[%s760 + $0x8] sm:$0xff]
        %v4464 = vcombine.low %v4460, %v4461
        %v4465 = vcombine.high %v4460, %v4461
        %v4467 = vunpack.c.l.s4 1966171168
        %v4468 = vunpack.c.0.s8 %v4467
        %v4469 = vlaneseq
        %v4470 = vshrl.u32 %v4469, 7
        %v4471 = vsub.s32 %v4468, %v4470
        %v4472 = vrot.slane %v4464, %v4471
        %v4474 = vunpack.c.l.s4 1966171168
        %v4475 = vunpack.c.0.s8 %v4474
        %v4476 = vlaneseq
        %v4477 = vshrl.u32 %v4476, 7
        %v4478 = vsub.s32 %v4475, %v4477
        %v4479 = vrot.slane %v4465, %v4478
        %v4480 = vcombine.high %v4472, %v4472
        %v4481 = vcombine.high %v4479, %v4479
        %v4483 = vunpack.c.l.s4 1966171168
        %v4484 = vunpack.c.0.s8 %v4483
        %v4485 = vlaneseq
        %v4486 = vshrl.u32 %v4485, 7
        %v4487 = vsub.s32 %v4484, %v4486
        %v4488 = vrot.slane %v4472, %v4487
        %v4490 = vunpack.c.l.s4 1966171168
        %v4491 = vunpack.c.0.s8 %v4490
        %v4492 = vlaneseq
        %v4493 = vshrl.u32 %v4492, 7
        %v4494 = vsub.s32 %v4491, %v4493
        %v4495 = vrot.slane %v4479, %v4494
        %v4497 = vunpack.c.l.s4 1966171168
        %v4498 = vunpack.c.0.s8 %v4497
        %v4499 = vlaneseq
        %v4500 = vshrl.u32 %v4499, 7
        %v4501 = vsub.s32 %v4498, %v4500
        %v4502 = vrot.slane %v4480, %v4501
        %v4504 = vunpack.c.l.s4 1966171168
        %v4505 = vunpack.c.0.s8 %v4504
        %v4506 = vlaneseq
        %v4507 = vshrl.u32 %v4506, 7
        %v4508 = vsub.s32 %v4505, %v4507
        %v4509 = vrot.slane %v4481, %v4508
        %v4510 = vcombine.high %v4488, %v4488
        %v4511 = vcombine.high %v4495, %v4495
        %v4512 = vcombine.high %v4502, %v4502
        %v4513 = vcombine.high %v4509, %v4509
        %v4514 = vlaneseq
        %v4515 = vshrl.u32 %v4514, 7
        %v4516 = vsub.s32 0, %v4515
        %v4517 = vrot.slane %v4488, %v4516
        %v4518 = vlaneseq
        %v4519 = vshrl.u32 %v4518, 7
        %v4520 = vsub.s32 1, %v4519
        %v4521 = vrot.slane %v4488, %v4520
        %v4522 = vlaneseq
        %v4523 = vshrl.u32 %v4522, 7
        %v4524 = vsub.s32 0, %v4523
        %v4525 = vrot.slane %v4502, %v4524
        %v4526 = vlaneseq
        %v4527 = vshrl.u32 %v4526, 7
        %v4528 = vsub.s32 1, %v4527
        %v4529 = vrot.slane %v4502, %v4528
        %v4530 = vlaneseq
        %v4531 = vshrl.u32 %v4530, 7
        %v4532 = vsub.s32 0, %v4531
        %v4533 = vrot.slane %v4510, %v4532
        %v4534 = vlaneseq
        %v4535 = vshrl.u32 %v4534, 7
        %v4536 = vsub.s32 1, %v4535
        %v4537 = vrot.slane %v4510, %v4536
        %v4538 = vlaneseq
        %v4539 = vshrl.u32 %v4538, 7
        %v4540 = vsub.s32 0, %v4539
        %v4541 = vrot.slane %v4512, %v4540
        %v4542 = vlaneseq
        %v4543 = vshrl.u32 %v4542, 7
        %v4544 = vsub.s32 1, %v4543
        %v4545 = vrot.slane %v4512, %v4544
        %v4546 = vlaneseq
        %v4547 = vshrl.u32 %v4546, 7
        %v4548 = vsub.s32 0, %v4547
        %v4549 = vrot.slane %v4495, %v4548
        %v4550 = vlaneseq
        %v4551 = vshrl.u32 %v4550, 7
        %v4552 = vsub.s32 1, %v4551
        %v4553 = vrot.slane %v4495, %v4552
        %v4554 = vlaneseq
        %v4555 = vshrl.u32 %v4554, 7
        %v4556 = vsub.s32 0, %v4555
        %v4557 = vrot.slane %v4509, %v4556
        %v4558 = vlaneseq
        %v4559 = vshrl.u32 %v4558, 7
        %v4560 = vsub.s32 1, %v4559
        %v4561 = vrot.slane %v4509, %v4560
        %v4562 = vlaneseq
        %v4563 = vshrl.u32 %v4562, 7
        %v4564 = vsub.s32 0, %v4563
        %v4565 = vrot.slane %v4511, %v4564
        %v4566 = vlaneseq
        %v4567 = vshrl.u32 %v4566, 7
        %v4568 = vsub.s32 1, %v4567
        %v4569 = vrot.slane %v4511, %v4568
        %v4570 = vlaneseq
        %v4571 = vshrl.u32 %v4570, 7
        %v4572 = vsub.s32 0, %v4571
        %v4573 = vrot.slane %v4513, %v4572
        %v4574 = vlaneseq
        %v4575 = vshrl.u32 %v4574, 7
        %v4576 = vsub.s32 1, %v4575
        %v4577 = vrot.slane %v4513, %v4576
        %v4594 = vmul.f32 %v4456, %v4517
        %v4595 = vmul.f32 %v4457, %v4521
        %v4596 = vmul.f32 %v4458, %v4517
        %v4597 = vmul.f32 %v4459, %v4521
        %v4598 = vmul.f32 %v4456, %v4525
        %v4599 = vmul.f32 %v4457, %v4529
        %v4600 = vmul.f32 %v4458, %v4525
        %v4601 = vmul.f32 %v4459, %v4529
        %v4602 = vmul.f32 %v4456, %v4533
        %v4603 = vmul.f32 %v4457, %v4537
        %v4604 = vmul.f32 %v4458, %v4533
        %v4605 = vmul.f32 %v4459, %v4537
        %v4606 = vmul.f32 %v4456, %v4541
        %v4607 = vmul.f32 %v4457, %v4545
        %v4608 = vmul.f32 %v4458, %v4541
        %v4609 = vmul.f32 %v4459, %v4545
        %v4610 = vmul.f32 %v4456, %v4549
        %v4611 = vmul.f32 %v4457, %v4553
        %v4612 = vmul.f32 %v4458, %v4549
        %v4613 = vmul.f32 %v4459, %v4553
        %v4614 = vmul.f32 %v4456, %v4557
        %v4615 = vmul.f32 %v4457, %v4561
        %v4616 = vmul.f32 %v4458, %v4557
        %v4617 = vmul.f32 %v4459, %v4561
        %v4618 = vmul.f32 %v4456, %v4565
        %v4619 = vmul.f32 %v4457, %v4569
        %v4620 = vmul.f32 %v4458, %v4565
        %v4621 = vmul.f32 %v4459, %v4569
        %v4622 = vmul.f32 %v4456, %v4573
        %v4623 = vmul.f32 %v4457, %v4577
        %v4624 = vmul.f32 %v4458, %v4573
        %v4625 = vmul.f32 %v4459, %v4577
        %v4626 = vadd.f32 %v4423, %v4594
        %v4627 = vadd.f32 %v4424, %v4595
        %v4628 = vadd.f32 %v4425, %v4596
        %v4629 = vadd.f32 %v4426, %v4597
        %v4630 = vadd.f32 %v4427, %v4598
        %v4631 = vadd.f32 %v4428, %v4599
        %v4632 = vadd.f32 %v4429, %v4600
        %v4633 = vadd.f32 %v4430, %v4601
        %v4634 = vadd.f32 %v4431, %v4602
        %v4635 = vadd.f32 %v4432, %v4603
        %v4636 = vadd.f32 %v4433, %v4604
        %v4637 = vadd.f32 %v4434, %v4605
        %v4638 = vadd.f32 %v4435, %v4606
        %v4639 = vadd.f32 %v4436, %v4607
        %v4640 = vadd.f32 %v4437, %v4608
        %v4641 = vadd.f32 %v4438, %v4609
        %v4642 = vadd.f32 %v4439, %v4610
        %v4643 = vadd.f32 %v4440, %v4611
        %v4644 = vadd.f32 %v4441, %v4612
        %v4645 = vadd.f32 %v4442, %v4613
        %v4646 = vadd.f32 %v4443, %v4614
        %v4647 = vadd.f32 %v4444, %v4615
        %v4648 = vadd.f32 %v4445, %v4616
        %v4649 = vadd.f32 %v4446, %v4617
        %v4650 = vadd.f32 %v4447, %v4618
        %v4651 = vadd.f32 %v4448, %v4619
        %v4652 = vadd.f32 %v4449, %v4620
        %v4653 = vadd.f32 %v4450, %v4621
        %v4654 = vadd.f32 %v4451, %v4622
        %v4655 = vadd.f32 %v4452, %v4623
        %v4656 = vadd.f32 %v4453, %v4624
        %v4657 = vadd.f32 %v4454, %v4625
        %s4658 = scalar_lea.vmem [#allocation2], 384
        %v4659 = vld [vmem:[%s4658] sm:$0xff]
        %v4660 = vld [vmem:[%s4658 + $0x8] sm:$0xff]
        %v4661 = vld [vmem:[%s4658 + $0x10] sm:$0xff]
        %v4662 = vld [vmem:[%s4658 + $0x18] sm:$0xff]
        %v4663 = vld [vmem:[%s964] sm:$0xff]
        %v4664 = vld [vmem:[%s964 + $0x8] sm:$0xff]
        %v4667 = vcombine.low %v4663, %v4664
        %v4668 = vcombine.high %v4663, %v4664
        %v4670 = vunpack.c.l.s4 1966171168
        %v4671 = vunpack.c.0.s8 %v4670
        %v4672 = vlaneseq
        %v4673 = vshrl.u32 %v4672, 7
        %v4674 = vsub.s32 %v4671, %v4673
        %v4675 = vrot.slane %v4667, %v4674
        %v4677 = vunpack.c.l.s4 1966171168
        %v4678 = vunpack.c.0.s8 %v4677
        %v4679 = vlaneseq
        %v4680 = vshrl.u32 %v4679, 7
        %v4681 = vsub.s32 %v4678, %v4680
        %v4682 = vrot.slane %v4668, %v4681
        %v4683 = vcombine.high %v4675, %v4675
        %v4684 = vcombine.high %v4682, %v4682
        %v4686 = vunpack.c.l.s4 1966171168
        %v4687 = vunpack.c.0.s8 %v4686
        %v4688 = vlaneseq
        %v4689 = vshrl.u32 %v4688, 7
        %v4690 = vsub.s32 %v4687, %v4689
        %v4691 = vrot.slane %v4675, %v4690
        %v4693 = vunpack.c.l.s4 1966171168
        %v4694 = vunpack.c.0.s8 %v4693
        %v4695 = vlaneseq
        %v4696 = vshrl.u32 %v4695, 7
        %v4697 = vsub.s32 %v4694, %v4696
        %v4698 = vrot.slane %v4682, %v4697
        %v4700 = vunpack.c.l.s4 1966171168
        %v4701 = vunpack.c.0.s8 %v4700
        %v4702 = vlaneseq
        %v4703 = vshrl.u32 %v4702, 7
        %v4704 = vsub.s32 %v4701, %v4703
        %v4705 = vrot.slane %v4683, %v4704
        %v4707 = vunpack.c.l.s4 1966171168
        %v4708 = vunpack.c.0.s8 %v4707
        %v4709 = vlaneseq
        %v4710 = vshrl.u32 %v4709, 7
        %v4711 = vsub.s32 %v4708, %v4710
        %v4712 = vrot.slane %v4684, %v4711
        %v4713 = vcombine.high %v4691, %v4691
        %v4714 = vcombine.high %v4698, %v4698
        %v4715 = vcombine.high %v4705, %v4705
        %v4716 = vcombine.high %v4712, %v4712
        %v4717 = vlaneseq
        %v4718 = vshrl.u32 %v4717, 7
        %v4719 = vsub.s32 0, %v4718
        %v4720 = vrot.slane %v4691, %v4719
        %v4721 = vlaneseq
        %v4722 = vshrl.u32 %v4721, 7
        %v4723 = vsub.s32 1, %v4722
        %v4724 = vrot.slane %v4691, %v4723
        %v4725 = vlaneseq
        %v4726 = vshrl.u32 %v4725, 7
        %v4727 = vsub.s32 0, %v4726
        %v4728 = vrot.slane %v4705, %v4727
        %v4729 = vlaneseq
        %v4730 = vshrl.u32 %v4729, 7
        %v4731 = vsub.s32 1, %v4730
        %v4732 = vrot.slane %v4705, %v4731
        %v4733 = vlaneseq
        %v4734 = vshrl.u32 %v4733, 7
        %v4735 = vsub.s32 0, %v4734
        %v4736 = vrot.slane %v4713, %v4735
        %v4737 = vlaneseq
        %v4738 = vshrl.u32 %v4737, 7
        %v4739 = vsub.s32 1, %v4738
        %v4740 = vrot.slane %v4713, %v4739
        %v4741 = vlaneseq
        %v4742 = vshrl.u32 %v4741, 7
        %v4743 = vsub.s32 0, %v4742
        %v4744 = vrot.slane %v4715, %v4743
        %v4745 = vlaneseq
        %v4746 = vshrl.u32 %v4745, 7
        %v4747 = vsub.s32 1, %v4746
        %v4748 = vrot.slane %v4715, %v4747
        %v4749 = vlaneseq
        %v4750 = vshrl.u32 %v4749, 7
        %v4751 = vsub.s32 0, %v4750
        %v4752 = vrot.slane %v4698, %v4751
        %v4753 = vlaneseq
        %v4754 = vshrl.u32 %v4753, 7
        %v4755 = vsub.s32 1, %v4754
        %v4756 = vrot.slane %v4698, %v4755
        %v4757 = vlaneseq
        %v4758 = vshrl.u32 %v4757, 7
        %v4759 = vsub.s32 0, %v4758
        %v4760 = vrot.slane %v4712, %v4759
        %v4761 = vlaneseq
        %v4762 = vshrl.u32 %v4761, 7
        %v4763 = vsub.s32 1, %v4762
        %v4764 = vrot.slane %v4712, %v4763
        %v4765 = vlaneseq
        %v4766 = vshrl.u32 %v4765, 7
        %v4767 = vsub.s32 0, %v4766
        %v4768 = vrot.slane %v4714, %v4767
        %v4769 = vlaneseq
        %v4770 = vshrl.u32 %v4769, 7
        %v4771 = vsub.s32 1, %v4770
        %v4772 = vrot.slane %v4714, %v4771
        %v4773 = vlaneseq
        %v4774 = vshrl.u32 %v4773, 7
        %v4775 = vsub.s32 0, %v4774
        %v4776 = vrot.slane %v4716, %v4775
        %v4777 = vlaneseq
        %v4778 = vshrl.u32 %v4777, 7
        %v4779 = vsub.s32 1, %v4778
        %v4780 = vrot.slane %v4716, %v4779
        %v4797 = vmul.f32 %v4659, %v4720
        %v4798 = vmul.f32 %v4660, %v4724
        %v4799 = vmul.f32 %v4661, %v4720
        %v4800 = vmul.f32 %v4662, %v4724
        %v4801 = vmul.f32 %v4659, %v4728
        %v4802 = vmul.f32 %v4660, %v4732
        %v4803 = vmul.f32 %v4661, %v4728
        %v4804 = vmul.f32 %v4662, %v4732
        %v4805 = vmul.f32 %v4659, %v4736
        %v4806 = vmul.f32 %v4660, %v4740
        %v4807 = vmul.f32 %v4661, %v4736
        %v4808 = vmul.f32 %v4662, %v4740
        %v4809 = vmul.f32 %v4659, %v4744
        %v4810 = vmul.f32 %v4660, %v4748
        %v4811 = vmul.f32 %v4661, %v4744
        %v4812 = vmul.f32 %v4662, %v4748
        %v4813 = vmul.f32 %v4659, %v4752
        %v4814 = vmul.f32 %v4660, %v4756
        %v4815 = vmul.f32 %v4661, %v4752
        %v4816 = vmul.f32 %v4662, %v4756
        %v4817 = vmul.f32 %v4659, %v4760
        %v4818 = vmul.f32 %v4660, %v4764
        %v4819 = vmul.f32 %v4661, %v4760
        %v4820 = vmul.f32 %v4662, %v4764
        %v4821 = vmul.f32 %v4659, %v4768
        %v4822 = vmul.f32 %v4660, %v4772
        %v4823 = vmul.f32 %v4661, %v4768
        %v4824 = vmul.f32 %v4662, %v4772
        %v4825 = vmul.f32 %v4659, %v4776
        %v4826 = vmul.f32 %v4660, %v4780
        %v4827 = vmul.f32 %v4661, %v4776
        %v4828 = vmul.f32 %v4662, %v4780
        %v4829 = vadd.f32 %v4626, %v4797
        %v4830 = vadd.f32 %v4627, %v4798
        %v4831 = vadd.f32 %v4628, %v4799
        %v4832 = vadd.f32 %v4629, %v4800
        %v4833 = vadd.f32 %v4630, %v4801
        %v4834 = vadd.f32 %v4631, %v4802
        %v4835 = vadd.f32 %v4632, %v4803
        %v4836 = vadd.f32 %v4633, %v4804
        %v4837 = vadd.f32 %v4634, %v4805
        %v4838 = vadd.f32 %v4635, %v4806
        %v4839 = vadd.f32 %v4636, %v4807
        %v4840 = vadd.f32 %v4637, %v4808
        %v4841 = vadd.f32 %v4638, %v4809
        %v4842 = vadd.f32 %v4639, %v4810
        %v4843 = vadd.f32 %v4640, %v4811
        %v4844 = vadd.f32 %v4641, %v4812
        %v4845 = vadd.f32 %v4642, %v4813
        %v4846 = vadd.f32 %v4643, %v4814
        %v4847 = vadd.f32 %v4644, %v4815
        %v4848 = vadd.f32 %v4645, %v4816
        %v4849 = vadd.f32 %v4646, %v4817
        %v4850 = vadd.f32 %v4647, %v4818
        %v4851 = vadd.f32 %v4648, %v4819
        %v4852 = vadd.f32 %v4649, %v4820
        %v4853 = vadd.f32 %v4650, %v4821
        %v4854 = vadd.f32 %v4651, %v4822
        %v4855 = vadd.f32 %v4652, %v4823
        %v4856 = vadd.f32 %v4653, %v4824
        %v4857 = vadd.f32 %v4654, %v4825
        %v4858 = vadd.f32 %v4655, %v4826
        %v4859 = vadd.f32 %v4656, %v4827
        %v4860 = vadd.f32 %v4657, %v4828
        %s4861 = scalar_lea.vmem [#allocation2], 416
        %v4862 = vld [vmem:[%s4861] sm:$0xff]
        %v4863 = vld [vmem:[%s4861 + $0x8] sm:$0xff]
        %v4864 = vld [vmem:[%s4861 + $0x10] sm:$0xff]
        %v4865 = vld [vmem:[%s4861 + $0x18] sm:$0xff]
        %v4866 = vld [vmem:[%s1168] sm:$0xff]
        %v4867 = vld [vmem:[%s1168 + $0x8] sm:$0xff]
        %v4870 = vcombine.low %v4866, %v4867
        %v4871 = vcombine.high %v4866, %v4867
        %v4873 = vunpack.c.l.s4 1966171168
        %v4874 = vunpack.c.0.s8 %v4873
        %v4875 = vlaneseq
        %v4876 = vshrl.u32 %v4875, 7
        %v4877 = vsub.s32 %v4874, %v4876
        %v4878 = vrot.slane %v4870, %v4877
        %v4880 = vunpack.c.l.s4 1966171168
        %v4881 = vunpack.c.0.s8 %v4880
        %v4882 = vlaneseq
        %v4883 = vshrl.u32 %v4882, 7
        %v4884 = vsub.s32 %v4881, %v4883
        %v4885 = vrot.slane %v4871, %v4884
        %v4886 = vcombine.high %v4878, %v4878
        %v4887 = vcombine.high %v4885, %v4885
        %v4889 = vunpack.c.l.s4 1966171168
        %v4890 = vunpack.c.0.s8 %v4889
        %v4891 = vlaneseq
        %v4892 = vshrl.u32 %v4891, 7
        %v4893 = vsub.s32 %v4890, %v4892
        %v4894 = vrot.slane %v4878, %v4893
        %v4896 = vunpack.c.l.s4 1966171168
        %v4897 = vunpack.c.0.s8 %v4896
        %v4898 = vlaneseq
        %v4899 = vshrl.u32 %v4898, 7
        %v4900 = vsub.s32 %v4897, %v4899
        %v4901 = vrot.slane %v4885, %v4900
        %v4903 = vunpack.c.l.s4 1966171168
        %v4904 = vunpack.c.0.s8 %v4903
        %v4905 = vlaneseq
        %v4906 = vshrl.u32 %v4905, 7
        %v4907 = vsub.s32 %v4904, %v4906
        %v4908 = vrot.slane %v4886, %v4907
        %v4910 = vunpack.c.l.s4 1966171168
        %v4911 = vunpack.c.0.s8 %v4910
        %v4912 = vlaneseq
        %v4913 = vshrl.u32 %v4912, 7
        %v4914 = vsub.s32 %v4911, %v4913
        %v4915 = vrot.slane %v4887, %v4914
        %v4916 = vcombine.high %v4894, %v4894
        %v4917 = vcombine.high %v4901, %v4901
        %v4918 = vcombine.high %v4908, %v4908
        %v4919 = vcombine.high %v4915, %v4915
        %v4920 = vlaneseq
        %v4921 = vshrl.u32 %v4920, 7
        %v4922 = vsub.s32 0, %v4921
        %v4923 = vrot.slane %v4894, %v4922
        %v4924 = vlaneseq
        %v4925 = vshrl.u32 %v4924, 7
        %v4926 = vsub.s32 1, %v4925
        %v4927 = vrot.slane %v4894, %v4926
        %v4928 = vlaneseq
        %v4929 = vshrl.u32 %v4928, 7
        %v4930 = vsub.s32 0, %v4929
        %v4931 = vrot.slane %v4908, %v4930
        %v4932 = vlaneseq
        %v4933 = vshrl.u32 %v4932, 7
        %v4934 = vsub.s32 1, %v4933
        %v4935 = vrot.slane %v4908, %v4934
        %v4936 = vlaneseq
        %v4937 = vshrl.u32 %v4936, 7
        %v4938 = vsub.s32 0, %v4937
        %v4939 = vrot.slane %v4916, %v4938
        %v4940 = vlaneseq
        %v4941 = vshrl.u32 %v4940, 7
        %v4942 = vsub.s32 1, %v4941
        %v4943 = vrot.slane %v4916, %v4942
        %v4944 = vlaneseq
        %v4945 = vshrl.u32 %v4944, 7
        %v4946 = vsub.s32 0, %v4945
        %v4947 = vrot.slane %v4918, %v4946
        %v4948 = vlaneseq
        %v4949 = vshrl.u32 %v4948, 7
        %v4950 = vsub.s32 1, %v4949
        %v4951 = vrot.slane %v4918, %v4950
        %v4952 = vlaneseq
        %v4953 = vshrl.u32 %v4952, 7
        %v4954 = vsub.s32 0, %v4953
        %v4955 = vrot.slane %v4901, %v4954
        %v4956 = vlaneseq
        %v4957 = vshrl.u32 %v4956, 7
        %v4958 = vsub.s32 1, %v4957
        %v4959 = vrot.slane %v4901, %v4958
        %v4960 = vlaneseq
        %v4961 = vshrl.u32 %v4960, 7
        %v4962 = vsub.s32 0, %v4961
        %v4963 = vrot.slane %v4915, %v4962
        %v4964 = vlaneseq
        %v4965 = vshrl.u32 %v4964, 7
        %v4966 = vsub.s32 1, %v4965
        %v4967 = vrot.slane %v4915, %v4966
        %v4968 = vlaneseq
        %v4969 = vshrl.u32 %v4968, 7
        %v4970 = vsub.s32 0, %v4969
        %v4971 = vrot.slane %v4917, %v4970
        %v4972 = vlaneseq
        %v4973 = vshrl.u32 %v4972, 7
        %v4974 = vsub.s32 1, %v4973
        %v4975 = vrot.slane %v4917, %v4974
        %v4976 = vlaneseq
        %v4977 = vshrl.u32 %v4976, 7
        %v4978 = vsub.s32 0, %v4977
        %v4979 = vrot.slane %v4919, %v4978
        %v4980 = vlaneseq
        %v4981 = vshrl.u32 %v4980, 7
        %v4982 = vsub.s32 1, %v4981
        %v4983 = vrot.slane %v4919, %v4982
        %v5000 = vmul.f32 %v4862, %v4923
        %v5001 = vmul.f32 %v4863, %v4927
        %v5002 = vmul.f32 %v4864, %v4923
        %v5003 = vmul.f32 %v4865, %v4927
        %v5004 = vmul.f32 %v4862, %v4931
        %v5005 = vmul.f32 %v4863, %v4935
        %v5006 = vmul.f32 %v4864, %v4931
        %v5007 = vmul.f32 %v4865, %v4935
        %v5008 = vmul.f32 %v4862, %v4939
        %v5009 = vmul.f32 %v4863, %v4943
        %v5010 = vmul.f32 %v4864, %v4939
        %v5011 = vmul.f32 %v4865, %v4943
        %v5012 = vmul.f32 %v4862, %v4947
        %v5013 = vmul.f32 %v4863, %v4951
        %v5014 = vmul.f32 %v4864, %v4947
        %v5015 = vmul.f32 %v4865, %v4951
        %v5016 = vmul.f32 %v4862, %v4955
        %v5017 = vmul.f32 %v4863, %v4959
        %v5018 = vmul.f32 %v4864, %v4955
        %v5019 = vmul.f32 %v4865, %v4959
        %v5020 = vmul.f32 %v4862, %v4963
        %v5021 = vmul.f32 %v4863, %v4967
        %v5022 = vmul.f32 %v4864, %v4963
        %v5023 = vmul.f32 %v4865, %v4967
        %v5024 = vmul.f32 %v4862, %v4971
        %v5025 = vmul.f32 %v4863, %v4975
        %v5026 = vmul.f32 %v4864, %v4971
        %v5027 = vmul.f32 %v4865, %v4975
        %v5028 = vmul.f32 %v4862, %v4979
        %v5029 = vmul.f32 %v4863, %v4983
        %v5030 = vmul.f32 %v4864, %v4979
        %v5031 = vmul.f32 %v4865, %v4983
        %v5032 = vadd.f32 %v4829, %v5000
        %v5033 = vadd.f32 %v4830, %v5001
        %v5034 = vadd.f32 %v4831, %v5002
        %v5035 = vadd.f32 %v4832, %v5003
        %v5036 = vadd.f32 %v4833, %v5004
        %v5037 = vadd.f32 %v4834, %v5005
        %v5038 = vadd.f32 %v4835, %v5006
        %v5039 = vadd.f32 %v4836, %v5007
        %v5040 = vadd.f32 %v4837, %v5008
        %v5041 = vadd.f32 %v4838, %v5009
        %v5042 = vadd.f32 %v4839, %v5010
        %v5043 = vadd.f32 %v4840, %v5011
        %v5044 = vadd.f32 %v4841, %v5012
        %v5045 = vadd.f32 %v4842, %v5013
        %v5046 = vadd.f32 %v4843, %v5014
        %v5047 = vadd.f32 %v4844, %v5015
        %v5048 = vadd.f32 %v4845, %v5016
        %v5049 = vadd.f32 %v4846, %v5017
        %v5050 = vadd.f32 %v4847, %v5018
        %v5051 = vadd.f32 %v4848, %v5019
        %v5052 = vadd.f32 %v4849, %v5020
        %v5053 = vadd.f32 %v4850, %v5021
        %v5054 = vadd.f32 %v4851, %v5022
        %v5055 = vadd.f32 %v4852, %v5023
        %v5056 = vadd.f32 %v4853, %v5024
        %v5057 = vadd.f32 %v4854, %v5025
        %v5058 = vadd.f32 %v4855, %v5026
        %v5059 = vadd.f32 %v4856, %v5027
        %v5060 = vadd.f32 %v4857, %v5028
        %v5061 = vadd.f32 %v4858, %v5029
        %v5062 = vadd.f32 %v4859, %v5030
        %v5063 = vadd.f32 %v4860, %v5031
        %s5064 = scalar_lea.vmem [#allocation2], 448
        %v5065 = vld [vmem:[%s5064] sm:$0xff]
        %v5066 = vld [vmem:[%s5064 + $0x8] sm:$0xff]
        %v5067 = vld [vmem:[%s5064 + $0x10] sm:$0xff]
        %v5068 = vld [vmem:[%s5064 + $0x18] sm:$0xff]
        %v5069 = vld [vmem:[%s1372] sm:$0xff]
        %v5070 = vld [vmem:[%s1372 + $0x8] sm:$0xff]
        %v5073 = vcombine.low %v5069, %v5070
        %v5074 = vcombine.high %v5069, %v5070
        %v5076 = vunpack.c.l.s4 1966171168
        %v5077 = vunpack.c.0.s8 %v5076
        %v5078 = vlaneseq
        %v5079 = vshrl.u32 %v5078, 7
        %v5080 = vsub.s32 %v5077, %v5079
        %v5081 = vrot.slane %v5073, %v5080
        %v5083 = vunpack.c.l.s4 1966171168
        %v5084 = vunpack.c.0.s8 %v5083
        %v5085 = vlaneseq
        %v5086 = vshrl.u32 %v5085, 7
        %v5087 = vsub.s32 %v5084, %v5086
        %v5088 = vrot.slane %v5074, %v5087
        %v5089 = vcombine.high %v5081, %v5081
        %v5090 = vcombine.high %v5088, %v5088
        %v5092 = vunpack.c.l.s4 1966171168
        %v5093 = vunpack.c.0.s8 %v5092
        %v5094 = vlaneseq
        %v5095 = vshrl.u32 %v5094, 7
        %v5096 = vsub.s32 %v5093, %v5095
        %v5097 = vrot.slane %v5081, %v5096
        %v5099 = vunpack.c.l.s4 1966171168
        %v5100 = vunpack.c.0.s8 %v5099
        %v5101 = vlaneseq
        %v5102 = vshrl.u32 %v5101, 7
        %v5103 = vsub.s32 %v5100, %v5102
        %v5104 = vrot.slane %v5088, %v5103
        %v5106 = vunpack.c.l.s4 1966171168
        %v5107 = vunpack.c.0.s8 %v5106
        %v5108 = vlaneseq
        %v5109 = vshrl.u32 %v5108, 7
        %v5110 = vsub.s32 %v5107, %v5109
        %v5111 = vrot.slane %v5089, %v5110
        %v5113 = vunpack.c.l.s4 1966171168
        %v5114 = vunpack.c.0.s8 %v5113
        %v5115 = vlaneseq
        %v5116 = vshrl.u32 %v5115, 7
        %v5117 = vsub.s32 %v5114, %v5116
        %v5118 = vrot.slane %v5090, %v5117
        %v5119 = vcombine.high %v5097, %v5097
        %v5120 = vcombine.high %v5104, %v5104
        %v5121 = vcombine.high %v5111, %v5111
        %v5122 = vcombine.high %v5118, %v5118
        %v5123 = vlaneseq
        %v5124 = vshrl.u32 %v5123, 7
        %v5125 = vsub.s32 0, %v5124
        %v5126 = vrot.slane %v5097, %v5125
        %v5127 = vlaneseq
        %v5128 = vshrl.u32 %v5127, 7
        %v5129 = vsub.s32 1, %v5128
        %v5130 = vrot.slane %v5097, %v5129
        %v5131 = vlaneseq
        %v5132 = vshrl.u32 %v5131, 7
        %v5133 = vsub.s32 0, %v5132
        %v5134 = vrot.slane %v5111, %v5133
        %v5135 = vlaneseq
        %v5136 = vshrl.u32 %v5135, 7
        %v5137 = vsub.s32 1, %v5136
        %v5138 = vrot.slane %v5111, %v5137
        %v5139 = vlaneseq
        %v5140 = vshrl.u32 %v5139, 7
        %v5141 = vsub.s32 0, %v5140
        %v5142 = vrot.slane %v5119, %v5141
        %v5143 = vlaneseq
        %v5144 = vshrl.u32 %v5143, 7
        %v5145 = vsub.s32 1, %v5144
        %v5146 = vrot.slane %v5119, %v5145
        %v5147 = vlaneseq
        %v5148 = vshrl.u32 %v5147, 7
        %v5149 = vsub.s32 0, %v5148
        %v5150 = vrot.slane %v5121, %v5149
        %v5151 = vlaneseq
        %v5152 = vshrl.u32 %v5151, 7
        %v5153 = vsub.s32 1, %v5152
        %v5154 = vrot.slane %v5121, %v5153
        %v5155 = vlaneseq
        %v5156 = vshrl.u32 %v5155, 7
        %v5157 = vsub.s32 0, %v5156
        %v5158 = vrot.slane %v5104, %v5157
        %v5159 = vlaneseq
        %v5160 = vshrl.u32 %v5159, 7
        %v5161 = vsub.s32 1, %v5160
        %v5162 = vrot.slane %v5104, %v5161
        %v5163 = vlaneseq
        %v5164 = vshrl.u32 %v5163, 7
        %v5165 = vsub.s32 0, %v5164
        %v5166 = vrot.slane %v5118, %v5165
        %v5167 = vlaneseq
        %v5168 = vshrl.u32 %v5167, 7
        %v5169 = vsub.s32 1, %v5168
        %v5170 = vrot.slane %v5118, %v5169
        %v5171 = vlaneseq
        %v5172 = vshrl.u32 %v5171, 7
        %v5173 = vsub.s32 0, %v5172
        %v5174 = vrot.slane %v5120, %v5173
        %v5175 = vlaneseq
        %v5176 = vshrl.u32 %v5175, 7
        %v5177 = vsub.s32 1, %v5176
        %v5178 = vrot.slane %v5120, %v5177
        %v5179 = vlaneseq
        %v5180 = vshrl.u32 %v5179, 7
        %v5181 = vsub.s32 0, %v5180
        %v5182 = vrot.slane %v5122, %v5181
        %v5183 = vlaneseq
        %v5184 = vshrl.u32 %v5183, 7
        %v5185 = vsub.s32 1, %v5184
        %v5186 = vrot.slane %v5122, %v5185
        %v5203 = vmul.f32 %v5065, %v5126
        %v5204 = vmul.f32 %v5066, %v5130
        %v5205 = vmul.f32 %v5067, %v5126
        %v5206 = vmul.f32 %v5068, %v5130
        %v5207 = vmul.f32 %v5065, %v5134
        %v5208 = vmul.f32 %v5066, %v5138
        %v5209 = vmul.f32 %v5067, %v5134
        %v5210 = vmul.f32 %v5068, %v5138
        %v5211 = vmul.f32 %v5065, %v5142
        %v5212 = vmul.f32 %v5066, %v5146
        %v5213 = vmul.f32 %v5067, %v5142
        %v5214 = vmul.f32 %v5068, %v5146
        %v5215 = vmul.f32 %v5065, %v5150
        %v5216 = vmul.f32 %v5066, %v5154
        %v5217 = vmul.f32 %v5067, %v5150
        %v5218 = vmul.f32 %v5068, %v5154
        %v5219 = vmul.f32 %v5065, %v5158
        %v5220 = vmul.f32 %v5066, %v5162
        %v5221 = vmul.f32 %v5067, %v5158
        %v5222 = vmul.f32 %v5068, %v5162
        %v5223 = vmul.f32 %v5065, %v5166
        %v5224 = vmul.f32 %v5066, %v5170
        %v5225 = vmul.f32 %v5067, %v5166
        %v5226 = vmul.f32 %v5068, %v5170
        %v5227 = vmul.f32 %v5065, %v5174
        %v5228 = vmul.f32 %v5066, %v5178
        %v5229 = vmul.f32 %v5067, %v5174
        %v5230 = vmul.f32 %v5068, %v5178
        %v5231 = vmul.f32 %v5065, %v5182
        %v5232 = vmul.f32 %v5066, %v5186
        %v5233 = vmul.f32 %v5067, %v5182
        %v5234 = vmul.f32 %v5068, %v5186
        %v5235 = vadd.f32 %v5032, %v5203
        %v5236 = vadd.f32 %v5033, %v5204
        %v5237 = vadd.f32 %v5034, %v5205
        %v5238 = vadd.f32 %v5035, %v5206
        %v5239 = vadd.f32 %v5036, %v5207
        %v5240 = vadd.f32 %v5037, %v5208
        %v5241 = vadd.f32 %v5038, %v5209
        %v5242 = vadd.f32 %v5039, %v5210
        %v5243 = vadd.f32 %v5040, %v5211
        %v5244 = vadd.f32 %v5041, %v5212
        %v5245 = vadd.f32 %v5042, %v5213
        %v5246 = vadd.f32 %v5043, %v5214
        %v5247 = vadd.f32 %v5044, %v5215
        %v5248 = vadd.f32 %v5045, %v5216
        %v5249 = vadd.f32 %v5046, %v5217
        %v5250 = vadd.f32 %v5047, %v5218
        %v5251 = vadd.f32 %v5048, %v5219
        %v5252 = vadd.f32 %v5049, %v5220
        %v5253 = vadd.f32 %v5050, %v5221
        %v5254 = vadd.f32 %v5051, %v5222
        %v5255 = vadd.f32 %v5052, %v5223
        %v5256 = vadd.f32 %v5053, %v5224
        %v5257 = vadd.f32 %v5054, %v5225
        %v5258 = vadd.f32 %v5055, %v5226
        %v5259 = vadd.f32 %v5056, %v5227
        %v5260 = vadd.f32 %v5057, %v5228
        %v5261 = vadd.f32 %v5058, %v5229
        %v5262 = vadd.f32 %v5059, %v5230
        %v5263 = vadd.f32 %v5060, %v5231
        %v5264 = vadd.f32 %v5061, %v5232
        %v5265 = vadd.f32 %v5062, %v5233
        %v5266 = vadd.f32 %v5063, %v5234
        %s5267 = scalar_lea.vmem [#allocation2], 480
        %v5268 = vld [vmem:[%s5267] sm:$0xff]
        %v5269 = vld [vmem:[%s5267 + $0x8] sm:$0xff]
        %v5270 = vld [vmem:[%s5267 + $0x10] sm:$0xff]
        %v5271 = vld [vmem:[%s5267 + $0x18] sm:$0xff]
        %v5272 = vld [vmem:[%s1576] sm:$0xff]
        %v5273 = vld [vmem:[%s1576 + $0x8] sm:$0xff]
        %v5276 = vcombine.low %v5272, %v5273
        %v5277 = vcombine.high %v5272, %v5273
        %v5279 = vunpack.c.l.s4 1966171168
        %v5280 = vunpack.c.0.s8 %v5279
        %v5281 = vlaneseq
        %v5282 = vshrl.u32 %v5281, 7
        %v5283 = vsub.s32 %v5280, %v5282
        %v5284 = vrot.slane %v5276, %v5283
        %v5286 = vunpack.c.l.s4 1966171168
        %v5287 = vunpack.c.0.s8 %v5286
        %v5288 = vlaneseq
        %v5289 = vshrl.u32 %v5288, 7
        %v5290 = vsub.s32 %v5287, %v5289
        %v5291 = vrot.slane %v5277, %v5290
        %v5292 = vcombine.high %v5284, %v5284
        %v5293 = vcombine.high %v5291, %v5291
        %v5295 = vunpack.c.l.s4 1966171168
        %v5296 = vunpack.c.0.s8 %v5295
        %v5297 = vlaneseq
        %v5298 = vshrl.u32 %v5297, 7
        %v5299 = vsub.s32 %v5296, %v5298
        %v5300 = vrot.slane %v5284, %v5299
        %v5302 = vunpack.c.l.s4 1966171168
        %v5303 = vunpack.c.0.s8 %v5302
        %v5304 = vlaneseq
        %v5305 = vshrl.u32 %v5304, 7
        %v5306 = vsub.s32 %v5303, %v5305
        %v5307 = vrot.slane %v5291, %v5306
        %v5309 = vunpack.c.l.s4 1966171168
        %v5310 = vunpack.c.0.s8 %v5309
        %v5311 = vlaneseq
        %v5312 = vshrl.u32 %v5311, 7
        %v5313 = vsub.s32 %v5310, %v5312
        %v5314 = vrot.slane %v5292, %v5313
        %v5316 = vunpack.c.l.s4 1966171168
        %v5317 = vunpack.c.0.s8 %v5316
        %v5318 = vlaneseq
        %v5319 = vshrl.u32 %v5318, 7
        %v5320 = vsub.s32 %v5317, %v5319
        %v5321 = vrot.slane %v5293, %v5320
        %v5322 = vcombine.high %v5300, %v5300
        %v5323 = vcombine.high %v5307, %v5307
        %v5324 = vcombine.high %v5314, %v5314
        %v5325 = vcombine.high %v5321, %v5321
        %v5326 = vlaneseq
        %v5327 = vshrl.u32 %v5326, 7
        %v5328 = vsub.s32 0, %v5327
        %v5329 = vrot.slane %v5300, %v5328
        %v5330 = vlaneseq
        %v5331 = vshrl.u32 %v5330, 7
        %v5332 = vsub.s32 1, %v5331
        %v5333 = vrot.slane %v5300, %v5332
        %v5334 = vlaneseq
        %v5335 = vshrl.u32 %v5334, 7
        %v5336 = vsub.s32 0, %v5335
        %v5337 = vrot.slane %v5314, %v5336
        %v5338 = vlaneseq
        %v5339 = vshrl.u32 %v5338, 7
        %v5340 = vsub.s32 1, %v5339
        %v5341 = vrot.slane %v5314, %v5340
        %v5342 = vlaneseq
        %v5343 = vshrl.u32 %v5342, 7
        %v5344 = vsub.s32 0, %v5343
        %v5345 = vrot.slane %v5322, %v5344
        %v5346 = vlaneseq
        %v5347 = vshrl.u32 %v5346, 7
        %v5348 = vsub.s32 1, %v5347
        %v5349 = vrot.slane %v5322, %v5348
        %v5350 = vlaneseq
        %v5351 = vshrl.u32 %v5350, 7
        %v5352 = vsub.s32 0, %v5351
        %v5353 = vrot.slane %v5324, %v5352
        %v5354 = vlaneseq
        %v5355 = vshrl.u32 %v5354, 7
        %v5356 = vsub.s32 1, %v5355
        %v5357 = vrot.slane %v5324, %v5356
        %v5358 = vlaneseq
        %v5359 = vshrl.u32 %v5358, 7
        %v5360 = vsub.s32 0, %v5359
        %v5361 = vrot.slane %v5307, %v5360
        %v5362 = vlaneseq
        %v5363 = vshrl.u32 %v5362, 7
        %v5364 = vsub.s32 1, %v5363
        %v5365 = vrot.slane %v5307, %v5364
        %v5366 = vlaneseq
        %v5367 = vshrl.u32 %v5366, 7
        %v5368 = vsub.s32 0, %v5367
        %v5369 = vrot.slane %v5321, %v5368
        %v5370 = vlaneseq
        %v5371 = vshrl.u32 %v5370, 7
        %v5372 = vsub.s32 1, %v5371
        %v5373 = vrot.slane %v5321, %v5372
        %v5374 = vlaneseq
        %v5375 = vshrl.u32 %v5374, 7
        %v5376 = vsub.s32 0, %v5375
        %v5377 = vrot.slane %v5323, %v5376
        %v5378 = vlaneseq
        %v5379 = vshrl.u32 %v5378, 7
        %v5380 = vsub.s32 1, %v5379
        %v5381 = vrot.slane %v5323, %v5380
        %v5382 = vlaneseq
        %v5383 = vshrl.u32 %v5382, 7
        %v5384 = vsub.s32 0, %v5383
        %v5385 = vrot.slane %v5325, %v5384
        %v5386 = vlaneseq
        %v5387 = vshrl.u32 %v5386, 7
        %v5388 = vsub.s32 1, %v5387
        %v5389 = vrot.slane %v5325, %v5388
        %v5406 = vmul.f32 %v5268, %v5329
        %v5407 = vmul.f32 %v5269, %v5333
        %v5408 = vmul.f32 %v5270, %v5329
        %v5409 = vmul.f32 %v5271, %v5333
        %v5410 = vmul.f32 %v5268, %v5337
        %v5411 = vmul.f32 %v5269, %v5341
        %v5412 = vmul.f32 %v5270, %v5337
        %v5413 = vmul.f32 %v5271, %v5341
        %v5414 = vmul.f32 %v5268, %v5345
        %v5415 = vmul.f32 %v5269, %v5349
        %v5416 = vmul.f32 %v5270, %v5345
        %v5417 = vmul.f32 %v5271, %v5349
        %v5418 = vmul.f32 %v5268, %v5353
        %v5419 = vmul.f32 %v5269, %v5357
        %v5420 = vmul.f32 %v5270, %v5353
        %v5421 = vmul.f32 %v5271, %v5357
        %v5422 = vmul.f32 %v5268, %v5361
        %v5423 = vmul.f32 %v5269, %v5365
        %v5424 = vmul.f32 %v5270, %v5361
        %v5425 = vmul.f32 %v5271, %v5365
        %v5426 = vmul.f32 %v5268, %v5369
        %v5427 = vmul.f32 %v5269, %v5373
        %v5428 = vmul.f32 %v5270, %v5369
        %v5429 = vmul.f32 %v5271, %v5373
        %v5430 = vmul.f32 %v5268, %v5377
        %v5431 = vmul.f32 %v5269, %v5381
        %v5432 = vmul.f32 %v5270, %v5377
        %v5433 = vmul.f32 %v5271, %v5381
        %v5434 = vmul.f32 %v5268, %v5385
        %v5435 = vmul.f32 %v5269, %v5389
        %v5436 = vmul.f32 %v5270, %v5385
        %v5437 = vmul.f32 %v5271, %v5389
        %v5438 = vadd.f32 %v5235, %v5406
        %v5439 = vadd.f32 %v5236, %v5407
        %v5440 = vadd.f32 %v5237, %v5408
        %v5441 = vadd.f32 %v5238, %v5409
        %v5442 = vadd.f32 %v5239, %v5410
        %v5443 = vadd.f32 %v5240, %v5411
        %v5444 = vadd.f32 %v5241, %v5412
        %v5445 = vadd.f32 %v5242, %v5413
        %v5446 = vadd.f32 %v5243, %v5414
        %v5447 = vadd.f32 %v5244, %v5415
        %v5448 = vadd.f32 %v5245, %v5416
        %v5449 = vadd.f32 %v5246, %v5417
        %v5450 = vadd.f32 %v5247, %v5418
        %v5451 = vadd.f32 %v5248, %v5419
        %v5452 = vadd.f32 %v5249, %v5420
        %v5453 = vadd.f32 %v5250, %v5421
        %v5454 = vadd.f32 %v5251, %v5422
        %v5455 = vadd.f32 %v5252, %v5423
        %v5456 = vadd.f32 %v5253, %v5424
        %v5457 = vadd.f32 %v5254, %v5425
        %v5458 = vadd.f32 %v5255, %v5426
        %v5459 = vadd.f32 %v5256, %v5427
        %v5460 = vadd.f32 %v5257, %v5428
        %v5461 = vadd.f32 %v5258, %v5429
        %v5462 = vadd.f32 %v5259, %v5430
        %v5463 = vadd.f32 %v5260, %v5431
        %v5464 = vadd.f32 %v5261, %v5432
        %v5465 = vadd.f32 %v5262, %v5433
        %v5466 = vadd.f32 %v5263, %v5434
        %v5467 = vadd.f32 %v5264, %v5435
        %v5468 = vadd.f32 %v5265, %v5436
        %v5469 = vadd.f32 %v5266, %v5437
        %v5470 = vadd.f32 %v5438, %v5439
        %5471 = vadd.xlane.f32.xlu0 %v5470
        %v5472 = vpop.xlane.xlu0 %5471
        %v5473 = vadd.f32 %v5440, %v5441
        %5474 = vadd.xlane.f32.xlu0 %v5473
        %v5475 = vpop.xlane.xlu0 %5474
        %v5476 = vadd.f32 %v5442, %v5443
        %5477 = vadd.xlane.f32.xlu0 %v5476
        %v5478 = vpop.xlane.xlu0 %5477
        %v5479 = vadd.f32 %v5444, %v5445
        %5480 = vadd.xlane.f32.xlu0 %v5479
        %v5481 = vpop.xlane.xlu0 %5480
        %v5482 = vadd.f32 %v5446, %v5447
        %5483 = vadd.xlane.f32.xlu0 %v5482
        %v5484 = vpop.xlane.xlu0 %5483
        %v5485 = vadd.f32 %v5448, %v5449
        %5486 = vadd.xlane.f32.xlu0 %v5485
        %v5487 = vpop.xlane.xlu0 %5486
        %v5488 = vadd.f32 %v5450, %v5451
        %5489 = vadd.xlane.f32.xlu0 %v5488
        %v5490 = vpop.xlane.xlu0 %5489
        %v5491 = vadd.f32 %v5452, %v5453
        %5492 = vadd.xlane.f32.xlu0 %v5491
        %v5493 = vpop.xlane.xlu0 %5492
        %v5494 = vadd.f32 %v5454, %v5455
        %5495 = vadd.xlane.f32.xlu0 %v5494
        %v5496 = vpop.xlane.xlu0 %5495
        %v5497 = vadd.f32 %v5456, %v5457
        %5498 = vadd.xlane.f32.xlu0 %v5497
        %v5499 = vpop.xlane.xlu0 %5498
        %v5500 = vadd.f32 %v5458, %v5459
        %5501 = vadd.xlane.f32.xlu0 %v5500
        %v5502 = vpop.xlane.xlu0 %5501
        %v5503 = vadd.f32 %v5460, %v5461
        %5504 = vadd.xlane.f32.xlu0 %v5503
        %v5505 = vpop.xlane.xlu0 %5504
        %v5506 = vadd.f32 %v5462, %v5463
        %5507 = vadd.xlane.f32.xlu0 %v5506
        %v5508 = vpop.xlane.xlu0 %5507
        %v5509 = vadd.f32 %v5464, %v5465
        %5510 = vadd.xlane.f32.xlu0 %v5509
        %v5511 = vpop.xlane.xlu0 %5510
        %v5512 = vadd.f32 %v5466, %v5467
        %5513 = vadd.xlane.f32.xlu0 %v5512
        %v5514 = vpop.xlane.xlu0 %5513
        %v5515 = vadd.f32 %v5468, %v5469
        %5516 = vadd.xlane.f32.xlu0 %v5515
        %v5517 = vpop.xlane.xlu0 %5516
        %v5518 = vmul.f32 %v5472, 0.00390625
        %v5519 = vmul.f32 %v5475, 0.00390625
        %v5520 = vmul.f32 %v5478, 0.00390625
        %v5521 = vmul.f32 %v5481, 0.00390625
        %v5522 = vmul.f32 %v5484, 0.00390625
        %v5523 = vmul.f32 %v5487, 0.00390625
        %v5524 = vmul.f32 %v5490, 0.00390625
        %v5525 = vmul.f32 %v5493, 0.00390625
        %v5526 = vmul.f32 %v5496, 0.00390625
        %v5527 = vmul.f32 %v5499, 0.00390625
        %v5528 = vmul.f32 %v5502, 0.00390625
        %v5529 = vmul.f32 %v5505, 0.00390625
        %v5530 = vmul.f32 %v5508, 0.00390625
        %v5531 = vmul.f32 %v5511, 0.00390625
        %v5532 = vmul.f32 %v5514, 0.00390625
        %v5533 = vmul.f32 %v5517, 0.00390625
        %v5534 = vmul.f32 %v5518, %v5518
        %v5535 = vmul.f32 %v5519, %v5519
        %v5536 = vmul.f32 %v5520, %v5520
        %v5537 = vmul.f32 %v5521, %v5521
        %v5538 = vmul.f32 %v5522, %v5522
        %v5539 = vmul.f32 %v5523, %v5523
        %v5540 = vmul.f32 %v5524, %v5524
        %v5541 = vmul.f32 %v5525, %v5525
        %v5542 = vmul.f32 %v5526, %v5526
        %v5543 = vmul.f32 %v5527, %v5527
        %v5544 = vmul.f32 %v5528, %v5528
        %v5545 = vmul.f32 %v5529, %v5529
        %v5546 = vmul.f32 %v5530, %v5530
        %v5547 = vmul.f32 %v5531, %v5531
        %v5548 = vmul.f32 %v5532, %v5532
        %v5549 = vmul.f32 %v5533, %v5533
        %v5566 = vlaneseq
        %v5567 = vshrl.u32 %v5566, 7
        %v5568 = vsub.s32 %v1872, %v5567
        %v5569 = vrot.slane %v5534, %v5568
        %v5570 = vlaneseq
        %v5571 = vshrl.u32 %v5570, 7
        %v5572 = vsub.s32 %v1877, %v5571
        %v5573 = vrot.slane %v5535, %v5572
        %v5574 = vsel %vm1882, %v5573, %v5569
        %v5575 = vlaneseq
        %v5576 = vshrl.u32 %v5575, 7
        %v5577 = vsub.s32 %v1872, %v5576
        %v5578 = vrot.slane %v5536, %v5577
        %v5579 = vlaneseq
        %v5580 = vshrl.u32 %v5579, 7
        %v5581 = vsub.s32 %v1877, %v5580
        %v5582 = vrot.slane %v5537, %v5581
        %v5583 = vsel %vm1882, %v5582, %v5578
        %v5584 = vlaneseq
        %v5585 = vshrl.u32 %v5584, 7
        %v5586 = vsub.s32 %v1872, %v5585
        %v5587 = vrot.slane %v5538, %v5586
        %v5588 = vlaneseq
        %v5589 = vshrl.u32 %v5588, 7
        %v5590 = vsub.s32 %v1877, %v5589
        %v5591 = vrot.slane %v5539, %v5590
        %v5592 = vsel %vm1882, %v5591, %v5587
        %v5593 = vlaneseq
        %v5594 = vshrl.u32 %v5593, 7
        %v5595 = vsub.s32 %v1872, %v5594
        %v5596 = vrot.slane %v5540, %v5595
        %v5597 = vlaneseq
        %v5598 = vshrl.u32 %v5597, 7
        %v5599 = vsub.s32 %v1877, %v5598
        %v5600 = vrot.slane %v5541, %v5599
        %v5601 = vsel %vm1882, %v5600, %v5596
        %v5602 = vlaneseq
        %v5603 = vshrl.u32 %v5602, 7
        %v5604 = vsub.s32 %v1872, %v5603
        %v5605 = vrot.slane %v5542, %v5604
        %v5606 = vlaneseq
        %v5607 = vshrl.u32 %v5606, 7
        %v5608 = vsub.s32 %v1877, %v5607
        %v5609 = vrot.slane %v5543, %v5608
        %v5610 = vsel %vm1882, %v5609, %v5605
        %v5611 = vlaneseq
        %v5612 = vshrl.u32 %v5611, 7
        %v5613 = vsub.s32 %v1872, %v5612
        %v5614 = vrot.slane %v5544, %v5613
        %v5615 = vlaneseq
        %v5616 = vshrl.u32 %v5615, 7
        %v5617 = vsub.s32 %v1877, %v5616
        %v5618 = vrot.slane %v5545, %v5617
        %v5619 = vsel %vm1882, %v5618, %v5614
        %v5620 = vlaneseq
        %v5621 = vshrl.u32 %v5620, 7
        %v5622 = vsub.s32 %v1872, %v5621
        %v5623 = vrot.slane %v5546, %v5622
        %v5624 = vlaneseq
        %v5625 = vshrl.u32 %v5624, 7
        %v5626 = vsub.s32 %v1877, %v5625
        %v5627 = vrot.slane %v5547, %v5626
        %v5628 = vsel %vm1882, %v5627, %v5623
        %v5629 = vlaneseq
        %v5630 = vshrl.u32 %v5629, 7
        %v5631 = vsub.s32 %v1872, %v5630
        %v5632 = vrot.slane %v5548, %v5631
        %v5633 = vlaneseq
        %v5634 = vshrl.u32 %v5633, 7
        %v5635 = vsub.s32 %v1877, %v5634
        %v5636 = vrot.slane %v5549, %v5635
        %v5637 = vsel %vm1882, %v5636, %v5632
        %v5638 = vsel %vm1947, %v5583, %v5574
        %v5639 = vsel %vm1949, %v5592, %v5638
        %v5640 = vsel %vm1951, %v5601, %v5639
        %v5641 = vsel %vm1953, %v5610, %v5640
        %v5642 = vsel %vm1955, %v5619, %v5641
        %v5643 = vsel %vm1957, %v5628, %v5642
        %v5644 = vsel %vm1959, %v5637, %v5643
        %v5646 = vsel %vm1962, %v5644, 0.0
        %5647 = vadd.xlane.f32.xlu0 %v5646
        %v5648 = vpop.xlane.xlu0 %5647
        %v5649 = vadd.f32 %v5648, 1e-12
        %v5650 = vrsqrt.pop %v5649
        %v5651 = vadd.f32 %v5648, 1.0
        %v5652 = vrcp.pop %v5651
        %v5653 = vmul.f32 %v5648, %v5652
        %v5654 = vmul.f32 %v5653, %v5650
        %v5671 = vlaneseq
        %v5672 = vshrl.u32 %v5671, 7
        %v5673 = vsub.s32 %v1872, %v5672
        %v5674 = vrot.slane %v5518, %v5673
        %v5675 = vlaneseq
        %v5676 = vshrl.u32 %v5675, 7
        %v5677 = vsub.s32 %v1877, %v5676
        %v5678 = vrot.slane %v5519, %v5677
        %v5679 = vsel %vm1882, %v5678, %v5674
        %v5680 = vlaneseq
        %v5681 = vshrl.u32 %v5680, 7
        %v5682 = vsub.s32 %v1872, %v5681
        %v5683 = vrot.slane %v5520, %v5682
        %v5684 = vlaneseq
        %v5685 = vshrl.u32 %v5684, 7
        %v5686 = vsub.s32 %v1877, %v5685
        %v5687 = vrot.slane %v5521, %v5686
        %v5688 = vsel %vm1882, %v5687, %v5683
        %v5689 = vlaneseq
        %v5690 = vshrl.u32 %v5689, 7
        %v5691 = vsub.s32 %v1872, %v5690
        %v5692 = vrot.slane %v5522, %v5691
        %v5693 = vlaneseq
        %v5694 = vshrl.u32 %v5693, 7
        %v5695 = vsub.s32 %v1877, %v5694
        %v5696 = vrot.slane %v5523, %v5695
        %v5697 = vsel %vm1882, %v5696, %v5692
        %v5698 = vlaneseq
        %v5699 = vshrl.u32 %v5698, 7
        %v5700 = vsub.s32 %v1872, %v5699
        %v5701 = vrot.slane %v5524, %v5700
        %v5702 = vlaneseq
        %v5703 = vshrl.u32 %v5702, 7
        %v5704 = vsub.s32 %v1877, %v5703
        %v5705 = vrot.slane %v5525, %v5704
        %v5706 = vsel %vm1882, %v5705, %v5701
        %v5707 = vlaneseq
        %v5708 = vshrl.u32 %v5707, 7
        %v5709 = vsub.s32 %v1872, %v5708
        %v5710 = vrot.slane %v5526, %v5709
        %v5711 = vlaneseq
        %v5712 = vshrl.u32 %v5711, 7
        %v5713 = vsub.s32 %v1877, %v5712
        %v5714 = vrot.slane %v5527, %v5713
        %v5715 = vsel %vm1882, %v5714, %v5710
        %v5716 = vlaneseq
        %v5717 = vshrl.u32 %v5716, 7
        %v5718 = vsub.s32 %v1872, %v5717
        %v5719 = vrot.slane %v5528, %v5718
        %v5720 = vlaneseq
        %v5721 = vshrl.u32 %v5720, 7
        %v5722 = vsub.s32 %v1877, %v5721
        %v5723 = vrot.slane %v5529, %v5722
        %v5724 = vsel %vm1882, %v5723, %v5719
        %v5725 = vlaneseq
        %v5726 = vshrl.u32 %v5725, 7
        %v5727 = vsub.s32 %v1872, %v5726
        %v5728 = vrot.slane %v5530, %v5727
        %v5729 = vlaneseq
        %v5730 = vshrl.u32 %v5729, 7
        %v5731 = vsub.s32 %v1877, %v5730
        %v5732 = vrot.slane %v5531, %v5731
        %v5733 = vsel %vm1882, %v5732, %v5728
        %v5734 = vlaneseq
        %v5735 = vshrl.u32 %v5734, 7
        %v5736 = vsub.s32 %v1872, %v5735
        %v5737 = vrot.slane %v5532, %v5736
        %v5738 = vlaneseq
        %v5739 = vshrl.u32 %v5738, 7
        %v5740 = vsub.s32 %v1877, %v5739
        %v5741 = vrot.slane %v5533, %v5740
        %v5742 = vsel %vm1882, %v5741, %v5737
        %v5743 = vsel %vm1947, %v5688, %v5679
        %v5744 = vsel %vm1949, %v5697, %v5743
        %v5745 = vsel %vm1951, %v5706, %v5744
        %v5746 = vsel %vm1953, %v5715, %v5745
        %v5747 = vsel %vm1955, %v5724, %v5746
        %v5748 = vsel %vm1957, %v5733, %v5747
        %v5749 = vsel %vm1959, %v5742, %v5748
        %v5751 = vmul.f32 %v5654, %v5749
        %v5752 = vlaneseq
        %v5753 = vshrl.u32 %v5752, 7
        %v5754 = vsub.s32 0, %v5753
        %v5755 = vrot.slane %v5751, %v5754
        %5757 = vbcast.lane.b32.xlu0 %v5755, 256
        %v5758 = vpop.permute.xlu0 %5757
        %s5760 = sor.u32 256, 8
        %5761 = vbcast.lane.b32.xlu0 %v5755, %s5760
        %v5762 = vpop.permute.xlu0 %5761
        %v5763 = vlaneseq
        %v5764 = vshrl.u32 %v5763, 7
        %v5765 = vsub.s32 1, %v5764
        %v5766 = vrot.slane %v5751, %v5765
        %5768 = vbcast.lane.b32.xlu0 %v5766, 256
        %v5769 = vpop.permute.xlu0 %5768
        %s5771 = sor.u32 256, 8
        %5772 = vbcast.lane.b32.xlu0 %v5766, %s5771
        %v5773 = vpop.permute.xlu0 %5772
        %v5774 = vlaneseq
        %v5775 = vshrl.u32 %v5774, 7
        %v5776 = vsub.s32 2, %v5775
        %v5777 = vrot.slane %v5751, %v5776
        %5779 = vbcast.lane.b32.xlu0 %v5777, 256
        %v5780 = vpop.permute.xlu0 %5779
        %s5782 = sor.u32 256, 8
        %5783 = vbcast.lane.b32.xlu0 %v5777, %s5782
        %v5784 = vpop.permute.xlu0 %5783
        %v5785 = vlaneseq
        %v5786 = vshrl.u32 %v5785, 7
        %v5787 = vsub.s32 3, %v5786
        %v5788 = vrot.slane %v5751, %v5787
        %5790 = vbcast.lane.b32.xlu0 %v5788, 256
        %v5791 = vpop.permute.xlu0 %5790
        %s5793 = sor.u32 256, 8
        %5794 = vbcast.lane.b32.xlu0 %v5788, %s5793
        %v5795 = vpop.permute.xlu0 %5794
        %v5796 = vlaneseq
        %v5797 = vshrl.u32 %v5796, 7
        %v5798 = vsub.s32 4, %v5797
        %v5799 = vrot.slane %v5751, %v5798
        %5801 = vbcast.lane.b32.xlu0 %v5799, 256
        %v5802 = vpop.permute.xlu0 %5801
        %s5804 = sor.u32 256, 8
        %5805 = vbcast.lane.b32.xlu0 %v5799, %s5804
        %v5806 = vpop.permute.xlu0 %5805
        %v5807 = vlaneseq
        %v5808 = vshrl.u32 %v5807, 7
        %v5809 = vsub.s32 5, %v5808
        %v5810 = vrot.slane %v5751, %v5809
        %5812 = vbcast.lane.b32.xlu0 %v5810, 256
        %v5813 = vpop.permute.xlu0 %5812
        %s5815 = sor.u32 256, 8
        %5816 = vbcast.lane.b32.xlu0 %v5810, %s5815
        %v5817 = vpop.permute.xlu0 %5816
        %v5818 = vlaneseq
        %v5819 = vshrl.u32 %v5818, 7
        %v5820 = vsub.s32 6, %v5819
        %v5821 = vrot.slane %v5751, %v5820
        %5823 = vbcast.lane.b32.xlu0 %v5821, 256
        %v5824 = vpop.permute.xlu0 %5823
        %s5826 = sor.u32 256, 8
        %5827 = vbcast.lane.b32.xlu0 %v5821, %s5826
        %v5828 = vpop.permute.xlu0 %5827
        %v5829 = vlaneseq
        %v5830 = vshrl.u32 %v5829, 7
        %v5831 = vsub.s32 7, %v5830
        %v5832 = vrot.slane %v5751, %v5831
        %5834 = vbcast.lane.b32.xlu0 %v5832, 256
        %v5835 = vpop.permute.xlu0 %5834
        %s5837 = sor.u32 256, 8
        %5838 = vbcast.lane.b32.xlu0 %v5832, %s5837
        %v5839 = vpop.permute.xlu0 %5838
        %v5840 = vmul.f32 %v5758, %v5438
        %v5841 = vmul.f32 %v5758, %v5439
        %v5842 = vmul.f32 %v5762, %v5440
        %v5843 = vmul.f32 %v5762, %v5441
        %v5844 = vmul.f32 %v5769, %v5442
        %v5845 = vmul.f32 %v5769, %v5443
        %v5846 = vmul.f32 %v5773, %v5444
        %v5847 = vmul.f32 %v5773, %v5445
        %v5848 = vmul.f32 %v5780, %v5446
        %v5849 = vmul.f32 %v5780, %v5447
        %v5850 = vmul.f32 %v5784, %v5448
        %v5851 = vmul.f32 %v5784, %v5449
        %v5852 = vmul.f32 %v5791, %v5450
        %v5853 = vmul.f32 %v5791, %v5451
        %v5854 = vmul.f32 %v5795, %v5452
        %v5855 = vmul.f32 %v5795, %v5453
        %v5856 = vmul.f32 %v5802, %v5454
        %v5857 = vmul.f32 %v5802, %v5455
        %v5858 = vmul.f32 %v5806, %v5456
        %v5859 = vmul.f32 %v5806, %v5457
        %v5860 = vmul.f32 %v5813, %v5458
        %v5861 = vmul.f32 %v5813, %v5459
        %v5862 = vmul.f32 %v5817, %v5460
        %v5863 = vmul.f32 %v5817, %v5461
        %v5864 = vmul.f32 %v5824, %v5462
        %v5865 = vmul.f32 %v5824, %v5463
        %v5866 = vmul.f32 %v5828, %v5464
        %v5867 = vmul.f32 %v5828, %v5465
        %v5868 = vmul.f32 %v5835, %v5466
        %v5869 = vmul.f32 %v5835, %v5467
        %v5870 = vmul.f32 %v5839, %v5468
        %v5871 = vmul.f32 %v5839, %v5469
        %v5872 = vadd.f32 %v5840, %v5842
        %v5873 = vrot.slane %v5872, 4
        %v5874 = vadd.f32 %v5872, %v5873
        %v5875 = vrot.slane %v5874, 2
        %v5876 = vadd.f32 %v5874, %v5875
        %v5877 = vrot.slane %v5876, 1
        %v5878 = vadd.f32 %v5876, %v5877
        %v5879 = vadd.f32 %v5841, %v5843
        %v5880 = vrot.slane %v5879, 4
        %v5881 = vadd.f32 %v5879, %v5880
        %v5882 = vrot.slane %v5881, 2
        %v5883 = vadd.f32 %v5881, %v5882
        %v5884 = vrot.slane %v5883, 1
        %v5885 = vadd.f32 %v5883, %v5884
        %v5886 = vadd.f32 %v5844, %v5846
        %v5887 = vrot.slane %v5886, 4
        %v5888 = vadd.f32 %v5886, %v5887
        %v5889 = vrot.slane %v5888, 2
        %v5890 = vadd.f32 %v5888, %v5889
        %v5891 = vrot.slane %v5890, 1
        %v5892 = vadd.f32 %v5890, %v5891
        %v5893 = vadd.f32 %v5845, %v5847
        %v5894 = vrot.slane %v5893, 4
        %v5895 = vadd.f32 %v5893, %v5894
        %v5896 = vrot.slane %v5895, 2
        %v5897 = vadd.f32 %v5895, %v5896
        %v5898 = vrot.slane %v5897, 1
        %v5899 = vadd.f32 %v5897, %v5898
        %v5900 = vadd.f32 %v5848, %v5850
        %v5901 = vrot.slane %v5900, 4
        %v5902 = vadd.f32 %v5900, %v5901
        %v5903 = vrot.slane %v5902, 2
        %v5904 = vadd.f32 %v5902, %v5903
        %v5905 = vrot.slane %v5904, 1
        %v5906 = vadd.f32 %v5904, %v5905
        %v5907 = vadd.f32 %v5849, %v5851
        %v5908 = vrot.slane %v5907, 4
        %v5909 = vadd.f32 %v5907, %v5908
        %v5910 = vrot.slane %v5909, 2
        %v5911 = vadd.f32 %v5909, %v5910
        %v5912 = vrot.slane %v5911, 1
        %v5913 = vadd.f32 %v5911, %v5912
        %v5914 = vadd.f32 %v5852, %v5854
        %v5915 = vrot.slane %v5914, 4
        %v5916 = vadd.f32 %v5914, %v5915
        %v5917 = vrot.slane %v5916, 2
        %v5918 = vadd.f32 %v5916, %v5917
        %v5919 = vrot.slane %v5918, 1
        %v5920 = vadd.f32 %v5918, %v5919
        %v5921 = vadd.f32 %v5853, %v5855
        %v5922 = vrot.slane %v5921, 4
        %v5923 = vadd.f32 %v5921, %v5922
        %v5924 = vrot.slane %v5923, 2
        %v5925 = vadd.f32 %v5923, %v5924
        %v5926 = vrot.slane %v5925, 1
        %v5927 = vadd.f32 %v5925, %v5926
        %v5928 = vadd.f32 %v5856, %v5858
        %v5929 = vrot.slane %v5928, 4
        %v5930 = vadd.f32 %v5928, %v5929
        %v5931 = vrot.slane %v5930, 2
        %v5932 = vadd.f32 %v5930, %v5931
        %v5933 = vrot.slane %v5932, 1
        %v5934 = vadd.f32 %v5932, %v5933
        %v5935 = vadd.f32 %v5857, %v5859
        %v5936 = vrot.slane %v5935, 4
        %v5937 = vadd.f32 %v5935, %v5936
        %v5938 = vrot.slane %v5937, 2
        %v5939 = vadd.f32 %v5937, %v5938
        %v5940 = vrot.slane %v5939, 1
        %v5941 = vadd.f32 %v5939, %v5940
        %v5942 = vadd.f32 %v5860, %v5862
        %v5943 = vrot.slane %v5942, 4
        %v5944 = vadd.f32 %v5942, %v5943
        %v5945 = vrot.slane %v5944, 2
        %v5946 = vadd.f32 %v5944, %v5945
        %v5947 = vrot.slane %v5946, 1
        %v5948 = vadd.f32 %v5946, %v5947
        %v5949 = vadd.f32 %v5861, %v5863
        %v5950 = vrot.slane %v5949, 4
        %v5951 = vadd.f32 %v5949, %v5950
        %v5952 = vrot.slane %v5951, 2
        %v5953 = vadd.f32 %v5951, %v5952
        %v5954 = vrot.slane %v5953, 1
        %v5955 = vadd.f32 %v5953, %v5954
        %v5956 = vadd.f32 %v5864, %v5866
        %v5957 = vrot.slane %v5956, 4
        %v5958 = vadd.f32 %v5956, %v5957
        %v5959 = vrot.slane %v5958, 2
        %v5960 = vadd.f32 %v5958, %v5959
        %v5961 = vrot.slane %v5960, 1
        %v5962 = vadd.f32 %v5960, %v5961
        %v5963 = vadd.f32 %v5865, %v5867
        %v5964 = vrot.slane %v5963, 4
        %v5965 = vadd.f32 %v5963, %v5964
        %v5966 = vrot.slane %v5965, 2
        %v5967 = vadd.f32 %v5965, %v5966
        %v5968 = vrot.slane %v5967, 1
        %v5969 = vadd.f32 %v5967, %v5968
        %v5970 = vadd.f32 %v5868, %v5870
        %v5971 = vrot.slane %v5970, 4
        %v5972 = vadd.f32 %v5970, %v5971
        %v5973 = vrot.slane %v5972, 2
        %v5974 = vadd.f32 %v5972, %v5973
        %v5975 = vrot.slane %v5974, 1
        %v5976 = vadd.f32 %v5974, %v5975
        %v5977 = vadd.f32 %v5869, %v5871
        %v5978 = vrot.slane %v5977, 4
        %v5979 = vadd.f32 %v5977, %v5978
        %v5980 = vrot.slane %v5979, 2
        %v5981 = vadd.f32 %v5979, %v5980
        %v5982 = vrot.slane %v5981, 1
        %v5983 = vadd.f32 %v5981, %v5982
        %v6000 = vsel %vm1947, %v5892, %v5878
        %v6001 = vsel %vm1949, %v5906, %v6000
        %v6002 = vsel %vm1951, %v5920, %v6001
        %v6003 = vsel %vm1953, %v5934, %v6002
        %v6004 = vsel %vm1955, %v5948, %v6003
        %v6005 = vsel %vm1957, %v5962, %v6004
        %v6006 = vsel %vm1959, %v5976, %v6005
        %v6007 = vsel %vm1947, %v5899, %v5885
        %v6008 = vsel %vm1949, %v5913, %v6007
        %v6009 = vsel %vm1951, %v5927, %v6008
        %v6010 = vsel %vm1953, %v5941, %v6009
        %v6011 = vsel %vm1955, %v5955, %v6010
        %v6012 = vsel %vm1957, %v5969, %v6011
        %v6013 = vsel %vm1959, %v5983, %v6012
        %v6016 = vmax.f32 %v6006, %v6013
        %6017 = vmax.xlane.f32.xlu0 %v6016
        %v6018 = vpop.xlane.xlu0 %6017
        %v6020 = vrot.slane %v6018, 1
        %v6021 = vrot.slane %v6018, 2
        %v6022 = vrot.slane %v6018, 3
        %v6023 = vrot.slane %v6018, 4
        %v6024 = vrot.slane %v6018, 5
        %v6025 = vrot.slane %v6018, 6
        %v6026 = vrot.slane %v6018, 7
        %v6035 = vsub.f32 %v5878, %v6018
        %v6036 = vsub.f32 %v5885, %v6018
        %v6037 = vsub.f32 %v5892, %v6020
        %v6038 = vsub.f32 %v5899, %v6020
        %v6039 = vsub.f32 %v5906, %v6021
        %v6040 = vsub.f32 %v5913, %v6021
        %v6041 = vsub.f32 %v5920, %v6022
        %v6042 = vsub.f32 %v5927, %v6022
        %v6043 = vsub.f32 %v5934, %v6023
        %v6044 = vsub.f32 %v5941, %v6023
        %v6045 = vsub.f32 %v5948, %v6024
        %v6046 = vsub.f32 %v5955, %v6024
        %v6047 = vsub.f32 %v5962, %v6025
        %v6048 = vsub.f32 %v5969, %v6025
        %v6049 = vsub.f32 %v5976, %v6026
        %v6050 = vsub.f32 %v5983, %v6026
        %v6051 = vmul.f32 %v6035, 1.442695
        %v6052 = vpow.pop %v6051
        %v6053 = vmul.f32 %v6036, 1.442695
        %v6054 = vpow.pop %v6053
        %v6055 = vmul.f32 %v6037, 1.442695
        %v6056 = vpow.pop %v6055
        %v6057 = vmul.f32 %v6038, 1.442695
        %v6058 = vpow.pop %v6057
        %v6059 = vmul.f32 %v6039, 1.442695
        %v6060 = vpow.pop %v6059
        %v6061 = vmul.f32 %v6040, 1.442695
        %v6062 = vpow.pop %v6061
        %v6063 = vmul.f32 %v6041, 1.442695
        %v6064 = vpow.pop %v6063
        %v6065 = vmul.f32 %v6042, 1.442695
        %v6066 = vpow.pop %v6065
        %v6067 = vmul.f32 %v6043, 1.442695
        %v6068 = vpow.pop %v6067
        %v6069 = vmul.f32 %v6044, 1.442695
        %v6070 = vpow.pop %v6069
        %v6071 = vmul.f32 %v6045, 1.442695
        %v6072 = vpow.pop %v6071
        %v6073 = vmul.f32 %v6046, 1.442695
        %v6074 = vpow.pop %v6073
        %v6075 = vmul.f32 %v6047, 1.442695
        %v6076 = vpow.pop %v6075
        %v6077 = vmul.f32 %v6048, 1.442695
        %v6078 = vpow.pop %v6077
        %v6079 = vmul.f32 %v6049, 1.442695
        %v6080 = vpow.pop %v6079
        %v6081 = vmul.f32 %v6050, 1.442695
        %v6082 = vpow.pop %v6081
        %v6099 = vrot.slane %v6056, 7
        %v6100 = vsel %vm1947, %v6099, %v6052
        %v6101 = vrot.slane %v6060, 6
        %v6102 = vsel %vm1949, %v6101, %v6100
        %v6103 = vrot.slane %v6064, 5
        %v6104 = vsel %vm1951, %v6103, %v6102
        %v6105 = vrot.slane %v6068, 4
        %v6106 = vsel %vm1953, %v6105, %v6104
        %v6107 = vrot.slane %v6072, 3
        %v6108 = vsel %vm1955, %v6107, %v6106
        %v6109 = vrot.slane %v6076, 2
        %v6110 = vsel %vm1957, %v6109, %v6108
        %v6111 = vrot.slane %v6080, 1
        %v6112 = vsel %vm1959, %v6111, %v6110
        %v6113 = vrot.slane %v6058, 7
        %v6114 = vsel %vm1947, %v6113, %v6054
        %v6115 = vrot.slane %v6062, 6
        %v6116 = vsel %vm1949, %v6115, %v6114
        %v6117 = vrot.slane %v6066, 5
        %v6118 = vsel %vm1951, %v6117, %v6116
        %v6119 = vrot.slane %v6070, 4
        %v6120 = vsel %vm1953, %v6119, %v6118
        %v6121 = vrot.slane %v6074, 3
        %v6122 = vsel %vm1955, %v6121, %v6120
        %v6123 = vrot.slane %v6078, 2
        %v6124 = vsel %vm1957, %v6123, %v6122
        %v6125 = vrot.slane %v6082, 1
        %v6126 = vsel %vm1959, %v6125, %v6124
        %v6129 = vadd.f32 %v6112, %v6126
        %6130 = vadd.xlane.f32.xlu0 %v6129
        %v6131 = vpop.xlane.xlu0 %6130
        %v6132 = vlaneseq
        %v6133 = vshrl.u32 %v6132, 7
        %v6134 = vsub.s32 0, %v6133
        %v6135 = vrot.slane %v6052, %v6134
        %v6136 = vlaneseq
        %v6137 = vshrl.u32 %v6136, 7
        %v6138 = vsub.s32 0, %v6137
        %v6139 = vrot.slane %v6054, %v6138
        %v6140 = vlaneseq
        %v6141 = vshrl.u32 %v6140, 7
        %v6142 = vsub.s32 0, %v6141
        %v6143 = vrot.slane %v6056, %v6142
        %v6144 = vlaneseq
        %v6145 = vshrl.u32 %v6144, 7
        %v6146 = vsub.s32 0, %v6145
        %v6147 = vrot.slane %v6058, %v6146
        %v6148 = vlaneseq
        %v6149 = vshrl.u32 %v6148, 7
        %v6150 = vsub.s32 0, %v6149
        %v6151 = vrot.slane %v6060, %v6150
        %v6152 = vlaneseq
        %v6153 = vshrl.u32 %v6152, 7
        %v6154 = vsub.s32 0, %v6153
        %v6155 = vrot.slane %v6062, %v6154
        %v6156 = vlaneseq
        %v6157 = vshrl.u32 %v6156, 7
        %v6158 = vsub.s32 0, %v6157
        %v6159 = vrot.slane %v6064, %v6158
        %v6160 = vlaneseq
        %v6161 = vshrl.u32 %v6160, 7
        %v6162 = vsub.s32 0, %v6161
        %v6163 = vrot.slane %v6066, %v6162
        %v6164 = vlaneseq
        %v6165 = vshrl.u32 %v6164, 7
        %v6166 = vsub.s32 0, %v6165
        %v6167 = vrot.slane %v6068, %v6166
        %v6168 = vlaneseq
        %v6169 = vshrl.u32 %v6168, 7
        %v6170 = vsub.s32 0, %v6169
        %v6171 = vrot.slane %v6070, %v6170
        %v6172 = vlaneseq
        %v6173 = vshrl.u32 %v6172, 7
        %v6174 = vsub.s32 0, %v6173
        %v6175 = vrot.slane %v6072, %v6174
        %v6176 = vlaneseq
        %v6177 = vshrl.u32 %v6176, 7
        %v6178 = vsub.s32 0, %v6177
        %v6179 = vrot.slane %v6074, %v6178
        %v6180 = vlaneseq
        %v6181 = vshrl.u32 %v6180, 7
        %v6182 = vsub.s32 0, %v6181
        %v6183 = vrot.slane %v6076, %v6182
        %v6184 = vlaneseq
        %v6185 = vshrl.u32 %v6184, 7
        %v6186 = vsub.s32 0, %v6185
        %v6187 = vrot.slane %v6078, %v6186
        %v6188 = vlaneseq
        %v6189 = vshrl.u32 %v6188, 7
        %v6190 = vsub.s32 0, %v6189
        %v6191 = vrot.slane %v6080, %v6190
        %v6192 = vlaneseq
        %v6193 = vshrl.u32 %v6192, 7
        %v6194 = vsub.s32 0, %v6193
        %v6195 = vrot.slane %v6082, %v6194
        %v6196 = vmul.f32 %v6135, %v5438
        %v6197 = vmul.f32 %v6139, %v5439
        %v6198 = vmul.f32 %v6135, %v5440
        %v6199 = vmul.f32 %v6139, %v5441
        %v6200 = vmul.f32 %v6143, %v5442
        %v6201 = vmul.f32 %v6147, %v5443
        %v6202 = vmul.f32 %v6143, %v5444
        %v6203 = vmul.f32 %v6147, %v5445
        %v6204 = vmul.f32 %v6151, %v5446
        %v6205 = vmul.f32 %v6155, %v5447
        %v6206 = vmul.f32 %v6151, %v5448
        %v6207 = vmul.f32 %v6155, %v5449
        %v6208 = vmul.f32 %v6159, %v5450
        %v6209 = vmul.f32 %v6163, %v5451
        %v6210 = vmul.f32 %v6159, %v5452
        %v6211 = vmul.f32 %v6163, %v5453
        %v6212 = vmul.f32 %v6167, %v5454
        %v6213 = vmul.f32 %v6171, %v5455
        %v6214 = vmul.f32 %v6167, %v5456
        %v6215 = vmul.f32 %v6171, %v5457
        %v6216 = vmul.f32 %v6175, %v5458
        %v6217 = vmul.f32 %v6179, %v5459
        %v6218 = vmul.f32 %v6175, %v5460
        %v6219 = vmul.f32 %v6179, %v5461
        %v6220 = vmul.f32 %v6183, %v5462
        %v6221 = vmul.f32 %v6187, %v5463
        %v6222 = vmul.f32 %v6183, %v5464
        %v6223 = vmul.f32 %v6187, %v5465
        %v6224 = vmul.f32 %v6191, %v5466
        %v6225 = vmul.f32 %v6195, %v5467
        %v6226 = vmul.f32 %v6191, %v5468
        %v6227 = vmul.f32 %v6195, %v5469
        %v6228 = vadd.f32 %v6196, %v6197
        %6229 = vadd.xlane.f32.xlu0 %v6228
        %v6230 = vpop.xlane.xlu0 %6229
        %v6231 = vadd.f32 %v6198, %v6199
        %6232 = vadd.xlane.f32.xlu0 %v6231
        %v6233 = vpop.xlane.xlu0 %6232
        %v6234 = vadd.f32 %v6200, %v6201
        %6235 = vadd.xlane.f32.xlu0 %v6234
        %v6236 = vpop.xlane.xlu0 %6235
        %v6237 = vadd.f32 %v6202, %v6203
        %6238 = vadd.xlane.f32.xlu0 %v6237
        %v6239 = vpop.xlane.xlu0 %6238
        %v6240 = vadd.f32 %v6204, %v6205
        %6241 = vadd.xlane.f32.xlu0 %v6240
        %v6242 = vpop.xlane.xlu0 %6241
        %v6243 = vadd.f32 %v6206, %v6207
        %6244 = vadd.xlane.f32.xlu0 %v6243
        %v6245 = vpop.xlane.xlu0 %6244
        %v6246 = vadd.f32 %v6208, %v6209
        %6247 = vadd.xlane.f32.xlu0 %v6246
        %v6248 = vpop.xlane.xlu0 %6247
        %v6249 = vadd.f32 %v6210, %v6211
        %6250 = vadd.xlane.f32.xlu0 %v6249
        %v6251 = vpop.xlane.xlu0 %6250
        %v6252 = vadd.f32 %v6212, %v6213
        %6253 = vadd.xlane.f32.xlu0 %v6252
        %v6254 = vpop.xlane.xlu0 %6253
        %v6255 = vadd.f32 %v6214, %v6215
        %6256 = vadd.xlane.f32.xlu0 %v6255
        %v6257 = vpop.xlane.xlu0 %6256
        %v6258 = vadd.f32 %v6216, %v6217
        %6259 = vadd.xlane.f32.xlu0 %v6258
        %v6260 = vpop.xlane.xlu0 %6259
        %v6261 = vadd.f32 %v6218, %v6219
        %6262 = vadd.xlane.f32.xlu0 %v6261
        %v6263 = vpop.xlane.xlu0 %6262
        %v6264 = vadd.f32 %v6220, %v6221
        %6265 = vadd.xlane.f32.xlu0 %v6264
        %v6266 = vpop.xlane.xlu0 %6265
        %v6267 = vadd.f32 %v6222, %v6223
        %6268 = vadd.xlane.f32.xlu0 %v6267
        %v6269 = vpop.xlane.xlu0 %6268
        %v6270 = vadd.f32 %v6224, %v6225
        %6271 = vadd.xlane.f32.xlu0 %v6270
        %v6272 = vpop.xlane.xlu0 %6271
        %v6273 = vadd.f32 %v6226, %v6227
        %6274 = vadd.xlane.f32.xlu0 %v6273
        %v6275 = vpop.xlane.xlu0 %6274
        %v6276 = vrcp.pop %v6131
        %v6278 = vlaneseq
        %v6279 = vshrl.u32 %v6278, 7
        %v6280 = vsub.s32 0, %v6279
        %v6281 = vrot.slane %v6276, %v6280
        %v6282 = vlaneseq
        %v6283 = vshrl.u32 %v6282, 7
        %v6284 = vsub.s32 1, %v6283
        %v6285 = vrot.slane %v6276, %v6284
        %v6286 = vlaneseq
        %v6287 = vshrl.u32 %v6286, 7
        %v6288 = vsub.s32 2, %v6287
        %v6289 = vrot.slane %v6276, %v6288
        %v6290 = vlaneseq
        %v6291 = vshrl.u32 %v6290, 7
        %v6292 = vsub.s32 3, %v6291
        %v6293 = vrot.slane %v6276, %v6292
        %v6294 = vlaneseq
        %v6295 = vshrl.u32 %v6294, 7
        %v6296 = vsub.s32 4, %v6295
        %v6297 = vrot.slane %v6276, %v6296
        %v6298 = vlaneseq
        %v6299 = vshrl.u32 %v6298, 7
        %v6300 = vsub.s32 5, %v6299
        %v6301 = vrot.slane %v6276, %v6300
        %v6302 = vlaneseq
        %v6303 = vshrl.u32 %v6302, 7
        %v6304 = vsub.s32 6, %v6303
        %v6305 = vrot.slane %v6276, %v6304
        %v6306 = vlaneseq
        %v6307 = vshrl.u32 %v6306, 7
        %v6308 = vsub.s32 7, %v6307
        %v6309 = vrot.slane %v6276, %v6308
        %v6318 = vmul.f32 %v6230, %v6281
        %v6319 = vmul.f32 %v6233, %v6281
        %v6320 = vmul.f32 %v6236, %v6285
        %v6321 = vmul.f32 %v6239, %v6285
        %v6322 = vmul.f32 %v6242, %v6289
        %v6323 = vmul.f32 %v6245, %v6289
        %v6324 = vmul.f32 %v6248, %v6293
        %v6325 = vmul.f32 %v6251, %v6293
        %v6326 = vmul.f32 %v6254, %v6297
        %v6327 = vmul.f32 %v6257, %v6297
        %v6328 = vmul.f32 %v6260, %v6301
        %v6329 = vmul.f32 %v6263, %v6301
        %v6330 = vmul.f32 %v6266, %v6305
        %v6331 = vmul.f32 %v6269, %v6305
        %v6332 = vmul.f32 %v6272, %v6309
        %v6333 = vmul.f32 %v6275, %v6309
        %v6334 = vmul.f32 %v6318, %v6318
        %v6335 = vmul.f32 %v6319, %v6319
        %v6336 = vmul.f32 %v6320, %v6320
        %v6337 = vmul.f32 %v6321, %v6321
        %v6338 = vmul.f32 %v6322, %v6322
        %v6339 = vmul.f32 %v6323, %v6323
        %v6340 = vmul.f32 %v6324, %v6324
        %v6341 = vmul.f32 %v6325, %v6325
        %v6342 = vmul.f32 %v6326, %v6326
        %v6343 = vmul.f32 %v6327, %v6327
        %v6344 = vmul.f32 %v6328, %v6328
        %v6345 = vmul.f32 %v6329, %v6329
        %v6346 = vmul.f32 %v6330, %v6330
        %v6347 = vmul.f32 %v6331, %v6331
        %v6348 = vmul.f32 %v6332, %v6332
        %v6349 = vmul.f32 %v6333, %v6333
        %6366 = vset.pattern.permute.xlu0 0
        %6367 = vperm.xlu0 %6366, %v6334
        %v6368 = vpop.permute.xlu0 %6367
        %6369 = vset.pattern.permute.xlu0 0
        %6370 = vperm.xlu0 %6369, %v6335
        %v6371 = vpop.permute.xlu0 %6370
        %6372 = vset.pattern.permute.xlu0 0
        %6373 = vperm.xlu0 %6372, %v6336
        %v6374 = vpop.permute.xlu0 %6373
        %6375 = vset.pattern.permute.xlu0 0
        %6376 = vperm.xlu0 %6375, %v6337
        %v6377 = vpop.permute.xlu0 %6376
        %6378 = vset.pattern.permute.xlu0 0
        %6379 = vperm.xlu0 %6378, %v6338
        %v6380 = vpop.permute.xlu0 %6379
        %6381 = vset.pattern.permute.xlu0 0
        %6382 = vperm.xlu0 %6381, %v6339
        %v6383 = vpop.permute.xlu0 %6382
        %6384 = vset.pattern.permute.xlu0 0
        %6385 = vperm.xlu0 %6384, %v6340
        %v6386 = vpop.permute.xlu0 %6385
        %6387 = vset.pattern.permute.xlu0 0
        %6388 = vperm.xlu0 %6387, %v6341
        %v6389 = vpop.permute.xlu0 %6388
        %6390 = vset.pattern.permute.xlu0 0
        %6391 = vperm.xlu0 %6390, %v6342
        %v6392 = vpop.permute.xlu0 %6391
        %6393 = vset.pattern.permute.xlu0 0
        %6394 = vperm.xlu0 %6393, %v6343
        %v6395 = vpop.permute.xlu0 %6394
        %6396 = vset.pattern.permute.xlu0 0
        %6397 = vperm.xlu0 %6396, %v6344
        %v6398 = vpop.permute.xlu0 %6397
        %6399 = vset.pattern.permute.xlu0 0
        %6400 = vperm.xlu0 %6399, %v6345
        %v6401 = vpop.permute.xlu0 %6400
        %6402 = vset.pattern.permute.xlu0 0
        %6403 = vperm.xlu0 %6402, %v6346
        %v6404 = vpop.permute.xlu0 %6403
        %6405 = vset.pattern.permute.xlu0 0
        %6406 = vperm.xlu0 %6405, %v6347
        %v6407 = vpop.permute.xlu0 %6406
        %6408 = vset.pattern.permute.xlu0 0
        %6409 = vperm.xlu0 %6408, %v6348
        %v6410 = vpop.permute.xlu0 %6409
        %6411 = vset.pattern.permute.xlu0 0
        %6412 = vperm.xlu0 %6411, %v6349
        %v6413 = vpop.permute.xlu0 %6412
        %v6414 = vlaneseq
        %v6415 = vshrl.u32 %v6414, 7
        %v6416 = vsub.s32 %v1872, %v6415
        %v6417 = vrot.slane %v6368, %v6416
        %v6418 = vlaneseq
        %v6419 = vshrl.u32 %v6418, 7
        %v6420 = vsub.s32 %v1877, %v6419
        %v6421 = vrot.slane %v6371, %v6420
        %v6422 = vsel %vm1882, %v6421, %v6417
        %v6423 = vlaneseq
        %v6424 = vshrl.u32 %v6423, 7
        %v6425 = vsub.s32 %v1872, %v6424
        %v6426 = vrot.slane %v6374, %v6425
        %v6427 = vlaneseq
        %v6428 = vshrl.u32 %v6427, 7
        %v6429 = vsub.s32 %v1877, %v6428
        %v6430 = vrot.slane %v6377, %v6429
        %v6431 = vsel %vm1882, %v6430, %v6426
        %v6432 = vlaneseq
        %v6433 = vshrl.u32 %v6432, 7
        %v6434 = vsub.s32 %v1872, %v6433
        %v6435 = vrot.slane %v6380, %v6434
        %v6436 = vlaneseq
        %v6437 = vshrl.u32 %v6436, 7
        %v6438 = vsub.s32 %v1877, %v6437
        %v6439 = vrot.slane %v6383, %v6438
        %v6440 = vsel %vm1882, %v6439, %v6435
        %v6441 = vlaneseq
        %v6442 = vshrl.u32 %v6441, 7
        %v6443 = vsub.s32 %v1872, %v6442
        %v6444 = vrot.slane %v6386, %v6443
        %v6445 = vlaneseq
        %v6446 = vshrl.u32 %v6445, 7
        %v6447 = vsub.s32 %v1877, %v6446
        %v6448 = vrot.slane %v6389, %v6447
        %v6449 = vsel %vm1882, %v6448, %v6444
        %v6450 = vlaneseq
        %v6451 = vshrl.u32 %v6450, 7
        %v6452 = vsub.s32 %v1872, %v6451
        %v6453 = vrot.slane %v6392, %v6452
        %v6454 = vlaneseq
        %v6455 = vshrl.u32 %v6454, 7
        %v6456 = vsub.s32 %v1877, %v6455
        %v6457 = vrot.slane %v6395, %v6456
        %v6458 = vsel %vm1882, %v6457, %v6453
        %v6459 = vlaneseq
        %v6460 = vshrl.u32 %v6459, 7
        %v6461 = vsub.s32 %v1872, %v6460
        %v6462 = vrot.slane %v6398, %v6461
        %v6463 = vlaneseq
        %v6464 = vshrl.u32 %v6463, 7
        %v6465 = vsub.s32 %v1877, %v6464
        %v6466 = vrot.slane %v6401, %v6465
        %v6467 = vsel %vm1882, %v6466, %v6462
        %v6468 = vlaneseq
        %v6469 = vshrl.u32 %v6468, 7
        %v6470 = vsub.s32 %v1872, %v6469
        %v6471 = vrot.slane %v6404, %v6470
        %v6472 = vlaneseq
        %v6473 = vshrl.u32 %v6472, 7
        %v6474 = vsub.s32 %v1877, %v6473
        %v6475 = vrot.slane %v6407, %v6474
        %v6476 = vsel %vm1882, %v6475, %v6471
        %v6477 = vlaneseq
        %v6478 = vshrl.u32 %v6477, 7
        %v6479 = vsub.s32 %v1872, %v6478
        %v6480 = vrot.slane %v6410, %v6479
        %v6481 = vlaneseq
        %v6482 = vshrl.u32 %v6481, 7
        %v6483 = vsub.s32 %v1877, %v6482
        %v6484 = vrot.slane %v6413, %v6483
        %v6485 = vsel %vm1882, %v6484, %v6480
        %v6486 = vsel %vm1947, %v6431, %v6422
        %v6487 = vsel %vm1949, %v6440, %v6486
        %v6488 = vsel %vm1951, %v6449, %v6487
        %v6489 = vsel %vm1953, %v6458, %v6488
        %v6490 = vsel %vm1955, %v6467, %v6489
        %v6491 = vsel %vm1957, %v6476, %v6490
        %v6492 = vsel %vm1959, %v6485, %v6491
        %v6494 = vsel %vm1962, %v6492, 0.0
        %6495 = vadd.xlane.f32.xlu0 %v6494
        %v6496 = vpop.xlane.xlu0 %6495
        %v6497 = vadd.f32 %v6496, 1e-12
        %v6498 = vrsqrt.pop %v6497
        %v6499 = vadd.f32 %v6496, 1.0
        %v6500 = vrcp.pop %v6499
        %v6501 = vmul.f32 %v6496, %v6500
        %v6502 = vmul.f32 %v6501, %v6498
        %6519 = vset.pattern.permute.xlu0 0
        %6520 = vperm.xlu0 %6519, %v6318
        %v6521 = vpop.permute.xlu0 %6520
        %6522 = vset.pattern.permute.xlu0 0
        %6523 = vperm.xlu0 %6522, %v6319
        %v6524 = vpop.permute.xlu0 %6523
        %6525 = vset.pattern.permute.xlu0 0
        %6526 = vperm.xlu0 %6525, %v6320
        %v6527 = vpop.permute.xlu0 %6526
        %6528 = vset.pattern.permute.xlu0 0
        %6529 = vperm.xlu0 %6528, %v6321
        %v6530 = vpop.permute.xlu0 %6529
        %6531 = vset.pattern.permute.xlu0 0
        %6532 = vperm.xlu0 %6531, %v6322
        %v6533 = vpop.permute.xlu0 %6532
        %6534 = vset.pattern.permute.xlu0 0
        %6535 = vperm.xlu0 %6534, %v6323
        %v6536 = vpop.permute.xlu0 %6535
        %6537 = vset.pattern.permute.xlu0 0
        %6538 = vperm.xlu0 %6537, %v6324
        %v6539 = vpop.permute.xlu0 %6538
        %6540 = vset.pattern.permute.xlu0 0
        %6541 = vperm.xlu0 %6540, %v6325
        %v6542 = vpop.permute.xlu0 %6541
        %6543 = vset.pattern.permute.xlu0 0
        %6544 = vperm.xlu0 %6543, %v6326
        %v6545 = vpop.permute.xlu0 %6544
        %6546 = vset.pattern.permute.xlu0 0
        %6547 = vperm.xlu0 %6546, %v6327
        %v6548 = vpop.permute.xlu0 %6547
        %6549 = vset.pattern.permute.xlu0 0
        %6550 = vperm.xlu0 %6549, %v6328
        %v6551 = vpop.permute.xlu0 %6550
        %6552 = vset.pattern.permute.xlu0 0
        %6553 = vperm.xlu0 %6552, %v6329
        %v6554 = vpop.permute.xlu0 %6553
        %6555 = vset.pattern.permute.xlu0 0
        %6556 = vperm.xlu0 %6555, %v6330
        %v6557 = vpop.permute.xlu0 %6556
        %6558 = vset.pattern.permute.xlu0 0
        %6559 = vperm.xlu0 %6558, %v6331
        %v6560 = vpop.permute.xlu0 %6559
        %6561 = vset.pattern.permute.xlu0 0
        %6562 = vperm.xlu0 %6561, %v6332
        %v6563 = vpop.permute.xlu0 %6562
        %6564 = vset.pattern.permute.xlu0 0
        %6565 = vperm.xlu0 %6564, %v6333
        %v6566 = vpop.permute.xlu0 %6565
        %v6567 = vlaneseq
        %v6568 = vshrl.u32 %v6567, 7
        %v6569 = vsub.s32 %v1872, %v6568
        %v6570 = vrot.slane %v6521, %v6569
        %v6571 = vlaneseq
        %v6572 = vshrl.u32 %v6571, 7
        %v6573 = vsub.s32 %v1877, %v6572
        %v6574 = vrot.slane %v6524, %v6573
        %v6575 = vsel %vm1882, %v6574, %v6570
        %v6576 = vlaneseq
        %v6577 = vshrl.u32 %v6576, 7
        %v6578 = vsub.s32 %v1872, %v6577
        %v6579 = vrot.slane %v6527, %v6578
        %v6580 = vlaneseq
        %v6581 = vshrl.u32 %v6580, 7
        %v6582 = vsub.s32 %v1877, %v6581
        %v6583 = vrot.slane %v6530, %v6582
        %v6584 = vsel %vm1882, %v6583, %v6579
        %v6585 = vlaneseq
        %v6586 = vshrl.u32 %v6585, 7
        %v6587 = vsub.s32 %v1872, %v6586
        %v6588 = vrot.slane %v6533, %v6587
        %v6589 = vlaneseq
        %v6590 = vshrl.u32 %v6589, 7
        %v6591 = vsub.s32 %v1877, %v6590
        %v6592 = vrot.slane %v6536, %v6591
        %v6593 = vsel %vm1882, %v6592, %v6588
        %v6594 = vlaneseq
        %v6595 = vshrl.u32 %v6594, 7
        %v6596 = vsub.s32 %v1872, %v6595
        %v6597 = vrot.slane %v6539, %v6596
        %v6598 = vlaneseq
        %v6599 = vshrl.u32 %v6598, 7
        %v6600 = vsub.s32 %v1877, %v6599
        %v6601 = vrot.slane %v6542, %v6600
        %v6602 = vsel %vm1882, %v6601, %v6597
        %v6603 = vlaneseq
        %v6604 = vshrl.u32 %v6603, 7
        %v6605 = vsub.s32 %v1872, %v6604
        %v6606 = vrot.slane %v6545, %v6605
        %v6607 = vlaneseq
        %v6608 = vshrl.u32 %v6607, 7
        %v6609 = vsub.s32 %v1877, %v6608
        %v6610 = vrot.slane %v6548, %v6609
        %v6611 = vsel %vm1882, %v6610, %v6606
        %v6612 = vlaneseq
        %v6613 = vshrl.u32 %v6612, 7
        %v6614 = vsub.s32 %v1872, %v6613
        %v6615 = vrot.slane %v6551, %v6614
        %v6616 = vlaneseq
        %v6617 = vshrl.u32 %v6616, 7
        %v6618 = vsub.s32 %v1877, %v6617
        %v6619 = vrot.slane %v6554, %v6618
        %v6620 = vsel %vm1882, %v6619, %v6615
        %v6621 = vlaneseq
        %v6622 = vshrl.u32 %v6621, 7
        %v6623 = vsub.s32 %v1872, %v6622
        %v6624 = vrot.slane %v6557, %v6623
        %v6625 = vlaneseq
        %v6626 = vshrl.u32 %v6625, 7
        %v6627 = vsub.s32 %v1877, %v6626
        %v6628 = vrot.slane %v6560, %v6627
        %v6629 = vsel %vm1882, %v6628, %v6624
        %v6630 = vlaneseq
        %v6631 = vshrl.u32 %v6630, 7
        %v6632 = vsub.s32 %v1872, %v6631
        %v6633 = vrot.slane %v6563, %v6632
        %v6634 = vlaneseq
        %v6635 = vshrl.u32 %v6634, 7
        %v6636 = vsub.s32 %v1877, %v6635
        %v6637 = vrot.slane %v6566, %v6636
        %v6638 = vsel %vm1882, %v6637, %v6633
        %v6639 = vsel %vm1947, %v6584, %v6575
        %v6640 = vsel %vm1949, %v6593, %v6639
        %v6641 = vsel %vm1951, %v6602, %v6640
        %v6642 = vsel %vm1953, %v6611, %v6641
        %v6643 = vsel %vm1955, %v6620, %v6642
        %v6644 = vsel %vm1957, %v6629, %v6643
        %v6645 = vsel %vm1959, %v6638, %v6644
        %v6647 = vmul.f32 %v6502, %v6645
        %v6648 = vlaneseq
        %v6649 = vshrl.u32 %v6648, 7
        %v6650 = vsub.s32 0, %v6649
        %v6651 = vrot.slane %v6647, %v6650
        %6653 = vbcast.lane.b32.xlu0 %v6651, 256
        %v6654 = vpop.permute.xlu0 %6653
        %s6656 = sor.u32 256, 8
        %6657 = vbcast.lane.b32.xlu0 %v6651, %s6656
        %v6658 = vpop.permute.xlu0 %6657
        %v6659 = vlaneseq
        %v6660 = vshrl.u32 %v6659, 7
        %v6661 = vsub.s32 1, %v6660
        %v6662 = vrot.slane %v6647, %v6661
        %6664 = vbcast.lane.b32.xlu0 %v6662, 256
        %v6665 = vpop.permute.xlu0 %6664
        %s6667 = sor.u32 256, 8
        %6668 = vbcast.lane.b32.xlu0 %v6662, %s6667
        %v6669 = vpop.permute.xlu0 %6668
        %v6670 = vlaneseq
        %v6671 = vshrl.u32 %v6670, 7
        %v6672 = vsub.s32 2, %v6671
        %v6673 = vrot.slane %v6647, %v6672
        %6675 = vbcast.lane.b32.xlu0 %v6673, 256
        %v6676 = vpop.permute.xlu0 %6675
        %s6678 = sor.u32 256, 8
        %6679 = vbcast.lane.b32.xlu0 %v6673, %s6678
        %v6680 = vpop.permute.xlu0 %6679
        %v6681 = vlaneseq
        %v6682 = vshrl.u32 %v6681, 7
        %v6683 = vsub.s32 3, %v6682
        %v6684 = vrot.slane %v6647, %v6683
        %6686 = vbcast.lane.b32.xlu0 %v6684, 256
        %v6687 = vpop.permute.xlu0 %6686
        %s6689 = sor.u32 256, 8
        %6690 = vbcast.lane.b32.xlu0 %v6684, %s6689
        %v6691 = vpop.permute.xlu0 %6690
        %v6692 = vlaneseq
        %v6693 = vshrl.u32 %v6692, 7
        %v6694 = vsub.s32 4, %v6693
        %v6695 = vrot.slane %v6647, %v6694
        %6697 = vbcast.lane.b32.xlu0 %v6695, 256
        %v6698 = vpop.permute.xlu0 %6697
        %s6700 = sor.u32 256, 8
        %6701 = vbcast.lane.b32.xlu0 %v6695, %s6700
        %v6702 = vpop.permute.xlu0 %6701
        %v6703 = vlaneseq
        %v6704 = vshrl.u32 %v6703, 7
        %v6705 = vsub.s32 5, %v6704
        %v6706 = vrot.slane %v6647, %v6705
        %6708 = vbcast.lane.b32.xlu0 %v6706, 256
        %v6709 = vpop.permute.xlu0 %6708
        %s6711 = sor.u32 256, 8
        %6712 = vbcast.lane.b32.xlu0 %v6706, %s6711
        %v6713 = vpop.permute.xlu0 %6712
        %v6714 = vlaneseq
        %v6715 = vshrl.u32 %v6714, 7
        %v6716 = vsub.s32 6, %v6715
        %v6717 = vrot.slane %v6647, %v6716
        %6719 = vbcast.lane.b32.xlu0 %v6717, 256
        %v6720 = vpop.permute.xlu0 %6719
        %s6722 = sor.u32 256, 8
        %6723 = vbcast.lane.b32.xlu0 %v6717, %s6722
        %v6724 = vpop.permute.xlu0 %6723
        %v6725 = vlaneseq
        %v6726 = vshrl.u32 %v6725, 7
        %v6727 = vsub.s32 7, %v6726
        %v6728 = vrot.slane %v6647, %v6727
        %6730 = vbcast.lane.b32.xlu0 %v6728, 256
        %v6731 = vpop.permute.xlu0 %6730
        %s6733 = sor.u32 256, 8
        %6734 = vbcast.lane.b32.xlu0 %v6728, %s6733
        %v6735 = vpop.permute.xlu0 %6734
        %v6736 = vmul.f32 %v6654, %v5438
        %v6737 = vmul.f32 %v6654, %v5439
        %v6738 = vmul.f32 %v6658, %v5440
        %v6739 = vmul.f32 %v6658, %v5441
        %v6740 = vmul.f32 %v6665, %v5442
        %v6741 = vmul.f32 %v6665, %v5443
        %v6742 = vmul.f32 %v6669, %v5444
        %v6743 = vmul.f32 %v6669, %v5445
        %v6744 = vmul.f32 %v6676, %v5446
        %v6745 = vmul.f32 %v6676, %v5447
        %v6746 = vmul.f32 %v6680, %v5448
        %v6747 = vmul.f32 %v6680, %v5449
        %v6748 = vmul.f32 %v6687, %v5450
        %v6749 = vmul.f32 %v6687, %v5451
        %v6750 = vmul.f32 %v6691, %v5452
        %v6751 = vmul.f32 %v6691, %v5453
        %v6752 = vmul.f32 %v6698, %v5454
        %v6753 = vmul.f32 %v6698, %v5455
        %v6754 = vmul.f32 %v6702, %v5456
        %v6755 = vmul.f32 %v6702, %v5457
        %v6756 = vmul.f32 %v6709, %v5458
        %v6757 = vmul.f32 %v6709, %v5459
        %v6758 = vmul.f32 %v6713, %v5460
        %v6759 = vmul.f32 %v6713, %v5461
        %v6760 = vmul.f32 %v6720, %v5462
        %v6761 = vmul.f32 %v6720, %v5463
        %v6762 = vmul.f32 %v6724, %v5464
        %v6763 = vmul.f32 %v6724, %v5465
        %v6764 = vmul.f32 %v6731, %v5466
        %v6765 = vmul.f32 %v6731, %v5467
        %v6766 = vmul.f32 %v6735, %v5468
        %v6767 = vmul.f32 %v6735, %v5469
        %v6768 = vadd.f32 %v6736, %v6738
        %v6769 = vrot.slane %v6768, 4
        %v6770 = vadd.f32 %v6768, %v6769
        %v6771 = vrot.slane %v6770, 2
        %v6772 = vadd.f32 %v6770, %v6771
        %v6773 = vrot.slane %v6772, 1
        %v6774 = vadd.f32 %v6772, %v6773
        %v6775 = vadd.f32 %v6737, %v6739
        %v6776 = vrot.slane %v6775, 4
        %v6777 = vadd.f32 %v6775, %v6776
        %v6778 = vrot.slane %v6777, 2
        %v6779 = vadd.f32 %v6777, %v6778
        %v6780 = vrot.slane %v6779, 1
        %v6781 = vadd.f32 %v6779, %v6780
        %v6782 = vadd.f32 %v6740, %v6742
        %v6783 = vrot.slane %v6782, 4
        %v6784 = vadd.f32 %v6782, %v6783
        %v6785 = vrot.slane %v6784, 2
        %v6786 = vadd.f32 %v6784, %v6785
        %v6787 = vrot.slane %v6786, 1
        %v6788 = vadd.f32 %v6786, %v6787
        %v6789 = vadd.f32 %v6741, %v6743
        %v6790 = vrot.slane %v6789, 4
        %v6791 = vadd.f32 %v6789, %v6790
        %v6792 = vrot.slane %v6791, 2
        %v6793 = vadd.f32 %v6791, %v6792
        %v6794 = vrot.slane %v6793, 1
        %v6795 = vadd.f32 %v6793, %v6794
        %v6796 = vadd.f32 %v6744, %v6746
        %v6797 = vrot.slane %v6796, 4
        %v6798 = vadd.f32 %v6796, %v6797
        %v6799 = vrot.slane %v6798, 2
        %v6800 = vadd.f32 %v6798, %v6799
        %v6801 = vrot.slane %v6800, 1
        %v6802 = vadd.f32 %v6800, %v6801
        %v6803 = vadd.f32 %v6745, %v6747
        %v6804 = vrot.slane %v6803, 4
        %v6805 = vadd.f32 %v6803, %v6804
        %v6806 = vrot.slane %v6805, 2
        %v6807 = vadd.f32 %v6805, %v6806
        %v6808 = vrot.slane %v6807, 1
        %v6809 = vadd.f32 %v6807, %v6808
        %v6810 = vadd.f32 %v6748, %v6750
        %v6811 = vrot.slane %v6810, 4
        %v6812 = vadd.f32 %v6810, %v6811
        %v6813 = vrot.slane %v6812, 2
        %v6814 = vadd.f32 %v6812, %v6813
        %v6815 = vrot.slane %v6814, 1
        %v6816 = vadd.f32 %v6814, %v6815
        %v6817 = vadd.f32 %v6749, %v6751
        %v6818 = vrot.slane %v6817, 4
        %v6819 = vadd.f32 %v6817, %v6818
        %v6820 = vrot.slane %v6819, 2
        %v6821 = vadd.f32 %v6819, %v6820
        %v6822 = vrot.slane %v6821, 1
        %v6823 = vadd.f32 %v6821, %v6822
        %v6824 = vadd.f32 %v6752, %v6754
        %v6825 = vrot.slane %v6824, 4
        %v6826 = vadd.f32 %v6824, %v6825
        %v6827 = vrot.slane %v6826, 2
        %v6828 = vadd.f32 %v6826, %v6827
        %v6829 = vrot.slane %v6828, 1
        %v6830 = vadd.f32 %v6828, %v6829
        %v6831 = vadd.f32 %v6753, %v6755
        %v6832 = vrot.slane %v6831, 4
        %v6833 = vadd.f32 %v6831, %v6832
        %v6834 = vrot.slane %v6833, 2
        %v6835 = vadd.f32 %v6833, %v6834
        %v6836 = vrot.slane %v6835, 1
        %v6837 = vadd.f32 %v6835, %v6836
        %v6838 = vadd.f32 %v6756, %v6758
        %v6839 = vrot.slane %v6838, 4
        %v6840 = vadd.f32 %v6838, %v6839
        %v6841 = vrot.slane %v6840, 2
        %v6842 = vadd.f32 %v6840, %v6841
        %v6843 = vrot.slane %v6842, 1
        %v6844 = vadd.f32 %v6842, %v6843
        %v6845 = vadd.f32 %v6757, %v6759
        %v6846 = vrot.slane %v6845, 4
        %v6847 = vadd.f32 %v6845, %v6846
        %v6848 = vrot.slane %v6847, 2
        %v6849 = vadd.f32 %v6847, %v6848
        %v6850 = vrot.slane %v6849, 1
        %v6851 = vadd.f32 %v6849, %v6850
        %v6852 = vadd.f32 %v6760, %v6762
        %v6853 = vrot.slane %v6852, 4
        %v6854 = vadd.f32 %v6852, %v6853
        %v6855 = vrot.slane %v6854, 2
        %v6856 = vadd.f32 %v6854, %v6855
        %v6857 = vrot.slane %v6856, 1
        %v6858 = vadd.f32 %v6856, %v6857
        %v6859 = vadd.f32 %v6761, %v6763
        %v6860 = vrot.slane %v6859, 4
        %v6861 = vadd.f32 %v6859, %v6860
        %v6862 = vrot.slane %v6861, 2
        %v6863 = vadd.f32 %v6861, %v6862
        %v6864 = vrot.slane %v6863, 1
        %v6865 = vadd.f32 %v6863, %v6864
        %v6866 = vadd.f32 %v6764, %v6766
        %v6867 = vrot.slane %v6866, 4
        %v6868 = vadd.f32 %v6866, %v6867
        %v6869 = vrot.slane %v6868, 2
        %v6870 = vadd.f32 %v6868, %v6869
        %v6871 = vrot.slane %v6870, 1
        %v6872 = vadd.f32 %v6870, %v6871
        %v6873 = vadd.f32 %v6765, %v6767
        %v6874 = vrot.slane %v6873, 4
        %v6875 = vadd.f32 %v6873, %v6874
        %v6876 = vrot.slane %v6875, 2
        %v6877 = vadd.f32 %v6875, %v6876
        %v6878 = vrot.slane %v6877, 1
        %v6879 = vadd.f32 %v6877, %v6878
        %v6880 = vadd.f32 %v5878, %v6774
        %v6881 = vadd.f32 %v5885, %v6781
        %v6882 = vadd.f32 %v5892, %v6788
        %v6883 = vadd.f32 %v5899, %v6795
        %v6884 = vadd.f32 %v5906, %v6802
        %v6885 = vadd.f32 %v5913, %v6809
        %v6886 = vadd.f32 %v5920, %v6816
        %v6887 = vadd.f32 %v5927, %v6823
        %v6888 = vadd.f32 %v5934, %v6830
        %v6889 = vadd.f32 %v5941, %v6837
        %v6890 = vadd.f32 %v5948, %v6844
        %v6891 = vadd.f32 %v5955, %v6851
        %v6892 = vadd.f32 %v5962, %v6858
        %v6893 = vadd.f32 %v5969, %v6865
        %v6894 = vadd.f32 %v5976, %v6872
        %v6895 = vadd.f32 %v5983, %v6879
        %v6912 = vsel %vm1947, %v6882, %v6880
        %v6913 = vsel %vm1949, %v6884, %v6912
        %v6914 = vsel %vm1951, %v6886, %v6913
        %v6915 = vsel %vm1953, %v6888, %v6914
        %v6916 = vsel %vm1955, %v6890, %v6915
        %v6917 = vsel %vm1957, %v6892, %v6916
        %v6918 = vsel %vm1959, %v6894, %v6917
        %v6919 = vsel %vm1947, %v6883, %v6881
        %v6920 = vsel %vm1949, %v6885, %v6919
        %v6921 = vsel %vm1951, %v6887, %v6920
        %v6922 = vsel %vm1953, %v6889, %v6921
        %v6923 = vsel %vm1955, %v6891, %v6922
        %v6924 = vsel %vm1957, %v6893, %v6923
        %v6925 = vsel %vm1959, %v6895, %v6924
        %v6928 = vmax.f32 %v6918, %v6925
        %6929 = vmax.xlane.f32.xlu0 %v6928
        %v6930 = vpop.xlane.xlu0 %6929
        %v6932 = vrot.slane %v6930, 1
        %v6933 = vrot.slane %v6930, 2
        %v6934 = vrot.slane %v6930, 3
        %v6935 = vrot.slane %v6930, 4
        %v6936 = vrot.slane %v6930, 5
        %v6937 = vrot.slane %v6930, 6
        %v6938 = vrot.slane %v6930, 7
        %v6947 = vsub.f32 %v6880, %v6930
        %v6948 = vsub.f32 %v6881, %v6930
        %v6949 = vsub.f32 %v6882, %v6932
        %v6950 = vsub.f32 %v6883, %v6932
        %v6951 = vsub.f32 %v6884, %v6933
        %v6952 = vsub.f32 %v6885, %v6933
        %v6953 = vsub.f32 %v6886, %v6934
        %v6954 = vsub.f32 %v6887, %v6934
        %v6955 = vsub.f32 %v6888, %v6935
        %v6956 = vsub.f32 %v6889, %v6935
        %v6957 = vsub.f32 %v6890, %v6936
        %v6958 = vsub.f32 %v6891, %v6936
        %v6959 = vsub.f32 %v6892, %v6937
        %v6960 = vsub.f32 %v6893, %v6937
        %v6961 = vsub.f32 %v6894, %v6938
        %v6962 = vsub.f32 %v6895, %v6938
        %v6963 = vmul.f32 %v6947, 1.442695
        %v6964 = vpow.pop %v6963
        %v6965 = vmul.f32 %v6948, 1.442695
        %v6966 = vpow.pop %v6965
        %v6967 = vmul.f32 %v6949, 1.442695
        %v6968 = vpow.pop %v6967
        %v6969 = vmul.f32 %v6950, 1.442695
        %v6970 = vpow.pop %v6969
        %v6971 = vmul.f32 %v6951, 1.442695
        %v6972 = vpow.pop %v6971
        %v6973 = vmul.f32 %v6952, 1.442695
        %v6974 = vpow.pop %v6973
        %v6975 = vmul.f32 %v6953, 1.442695
        %v6976 = vpow.pop %v6975
        %v6977 = vmul.f32 %v6954, 1.442695
        %v6978 = vpow.pop %v6977
        %v6979 = vmul.f32 %v6955, 1.442695
        %v6980 = vpow.pop %v6979
        %v6981 = vmul.f32 %v6956, 1.442695
        %v6982 = vpow.pop %v6981
        %v6983 = vmul.f32 %v6957, 1.442695
        %v6984 = vpow.pop %v6983
        %v6985 = vmul.f32 %v6958, 1.442695
        %v6986 = vpow.pop %v6985
        %v6987 = vmul.f32 %v6959, 1.442695
        %v6988 = vpow.pop %v6987
        %v6989 = vmul.f32 %v6960, 1.442695
        %v6990 = vpow.pop %v6989
        %v6991 = vmul.f32 %v6961, 1.442695
        %v6992 = vpow.pop %v6991
        %v6993 = vmul.f32 %v6962, 1.442695
        %v6994 = vpow.pop %v6993
        %v7011 = vrot.slane %v6968, 7
        %v7012 = vsel %vm1947, %v7011, %v6964
        %v7013 = vrot.slane %v6972, 6
        %v7014 = vsel %vm1949, %v7013, %v7012
        %v7015 = vrot.slane %v6976, 5
        %v7016 = vsel %vm1951, %v7015, %v7014
        %v7017 = vrot.slane %v6980, 4
        %v7018 = vsel %vm1953, %v7017, %v7016
        %v7019 = vrot.slane %v6984, 3
        %v7020 = vsel %vm1955, %v7019, %v7018
        %v7021 = vrot.slane %v6988, 2
        %v7022 = vsel %vm1957, %v7021, %v7020
        %v7023 = vrot.slane %v6992, 1
        %v7024 = vsel %vm1959, %v7023, %v7022
        %v7025 = vrot.slane %v6970, 7
        %v7026 = vsel %vm1947, %v7025, %v6966
        %v7027 = vrot.slane %v6974, 6
        %v7028 = vsel %vm1949, %v7027, %v7026
        %v7029 = vrot.slane %v6978, 5
        %v7030 = vsel %vm1951, %v7029, %v7028
        %v7031 = vrot.slane %v6982, 4
        %v7032 = vsel %vm1953, %v7031, %v7030
        %v7033 = vrot.slane %v6986, 3
        %v7034 = vsel %vm1955, %v7033, %v7032
        %v7035 = vrot.slane %v6990, 2
        %v7036 = vsel %vm1957, %v7035, %v7034
        %v7037 = vrot.slane %v6994, 1
        %v7038 = vsel %vm1959, %v7037, %v7036
        %v7041 = vadd.f32 %v7024, %v7038
        %7042 = vadd.xlane.f32.xlu0 %v7041
        %v7043 = vpop.xlane.xlu0 %7042
        %v7044 = vlaneseq
        %v7045 = vshrl.u32 %v7044, 7
        %v7046 = vsub.s32 0, %v7045
        %v7047 = vrot.slane %v6964, %v7046
        %v7048 = vlaneseq
        %v7049 = vshrl.u32 %v7048, 7
        %v7050 = vsub.s32 0, %v7049
        %v7051 = vrot.slane %v6966, %v7050
        %v7052 = vlaneseq
        %v7053 = vshrl.u32 %v7052, 7
        %v7054 = vsub.s32 0, %v7053
        %v7055 = vrot.slane %v6968, %v7054
        %v7056 = vlaneseq
        %v7057 = vshrl.u32 %v7056, 7
        %v7058 = vsub.s32 0, %v7057
        %v7059 = vrot.slane %v6970, %v7058
        %v7060 = vlaneseq
        %v7061 = vshrl.u32 %v7060, 7
        %v7062 = vsub.s32 0, %v7061
        %v7063 = vrot.slane %v6972, %v7062
        %v7064 = vlaneseq
        %v7065 = vshrl.u32 %v7064, 7
        %v7066 = vsub.s32 0, %v7065
        %v7067 = vrot.slane %v6974, %v7066
        %v7068 = vlaneseq
        %v7069 = vshrl.u32 %v7068, 7
        %v7070 = vsub.s32 0, %v7069
        %v7071 = vrot.slane %v6976, %v7070
        %v7072 = vlaneseq
        %v7073 = vshrl.u32 %v7072, 7
        %v7074 = vsub.s32 0, %v7073
        %v7075 = vrot.slane %v6978, %v7074
        %v7076 = vlaneseq
        %v7077 = vshrl.u32 %v7076, 7
        %v7078 = vsub.s32 0, %v7077
        %v7079 = vrot.slane %v6980, %v7078
        %v7080 = vlaneseq
        %v7081 = vshrl.u32 %v7080, 7
        %v7082 = vsub.s32 0, %v7081
        %v7083 = vrot.slane %v6982, %v7082
        %v7084 = vlaneseq
        %v7085 = vshrl.u32 %v7084, 7
        %v7086 = vsub.s32 0, %v7085
        %v7087 = vrot.slane %v6984, %v7086
        %v7088 = vlaneseq
        %v7089 = vshrl.u32 %v7088, 7
        %v7090 = vsub.s32 0, %v7089
        %v7091 = vrot.slane %v6986, %v7090
        %v7092 = vlaneseq
        %v7093 = vshrl.u32 %v7092, 7
        %v7094 = vsub.s32 0, %v7093
        %v7095 = vrot.slane %v6988, %v7094
        %v7096 = vlaneseq
        %v7097 = vshrl.u32 %v7096, 7
        %v7098 = vsub.s32 0, %v7097
        %v7099 = vrot.slane %v6990, %v7098
        %v7100 = vlaneseq
        %v7101 = vshrl.u32 %v7100, 7
        %v7102 = vsub.s32 0, %v7101
        %v7103 = vrot.slane %v6992, %v7102
        %v7104 = vlaneseq
        %v7105 = vshrl.u32 %v7104, 7
        %v7106 = vsub.s32 0, %v7105
        %v7107 = vrot.slane %v6994, %v7106
        %v7108 = vmul.f32 %v7047, %v5438
        %v7109 = vmul.f32 %v7051, %v5439
        %v7110 = vmul.f32 %v7047, %v5440
        %v7111 = vmul.f32 %v7051, %v5441
        %v7112 = vmul.f32 %v7055, %v5442
        %v7113 = vmul.f32 %v7059, %v5443
        %v7114 = vmul.f32 %v7055, %v5444
        %v7115 = vmul.f32 %v7059, %v5445
        %v7116 = vmul.f32 %v7063, %v5446
        %v7117 = vmul.f32 %v7067, %v5447
        %v7118 = vmul.f32 %v7063, %v5448
        %v7119 = vmul.f32 %v7067, %v5449
        %v7120 = vmul.f32 %v7071, %v5450
        %v7121 = vmul.f32 %v7075, %v5451
        %v7122 = vmul.f32 %v7071, %v5452
        %v7123 = vmul.f32 %v7075, %v5453
        %v7124 = vmul.f32 %v7079, %v5454
        %v7125 = vmul.f32 %v7083, %v5455
        %v7126 = vmul.f32 %v7079, %v5456
        %v7127 = vmul.f32 %v7083, %v5457
        %v7128 = vmul.f32 %v7087, %v5458
        %v7129 = vmul.f32 %v7091, %v5459
        %v7130 = vmul.f32 %v7087, %v5460
        %v7131 = vmul.f32 %v7091, %v5461
        %v7132 = vmul.f32 %v7095, %v5462
        %v7133 = vmul.f32 %v7099, %v5463
        %v7134 = vmul.f32 %v7095, %v5464
        %v7135 = vmul.f32 %v7099, %v5465
        %v7136 = vmul.f32 %v7103, %v5466
        %v7137 = vmul.f32 %v7107, %v5467
        %v7138 = vmul.f32 %v7103, %v5468
        %v7139 = vmul.f32 %v7107, %v5469
        %v7140 = vadd.f32 %v7108, %v7109
        %7141 = vadd.xlane.f32.xlu0 %v7140
        %v7142 = vpop.xlane.xlu0 %7141
        %v7143 = vadd.f32 %v7110, %v7111
        %7144 = vadd.xlane.f32.xlu0 %v7143
        %v7145 = vpop.xlane.xlu0 %7144
        %v7146 = vadd.f32 %v7112, %v7113
        %7147 = vadd.xlane.f32.xlu0 %v7146
        %v7148 = vpop.xlane.xlu0 %7147
        %v7149 = vadd.f32 %v7114, %v7115
        %7150 = vadd.xlane.f32.xlu0 %v7149
        %v7151 = vpop.xlane.xlu0 %7150
        %v7152 = vadd.f32 %v7116, %v7117
        %7153 = vadd.xlane.f32.xlu0 %v7152
        %v7154 = vpop.xlane.xlu0 %7153
        %v7155 = vadd.f32 %v7118, %v7119
        %7156 = vadd.xlane.f32.xlu0 %v7155
        %v7157 = vpop.xlane.xlu0 %7156
        %v7158 = vadd.f32 %v7120, %v7121
        %7159 = vadd.xlane.f32.xlu0 %v7158
        %v7160 = vpop.xlane.xlu0 %7159
        %v7161 = vadd.f32 %v7122, %v7123
        %7162 = vadd.xlane.f32.xlu0 %v7161
        %v7163 = vpop.xlane.xlu0 %7162
        %v7164 = vadd.f32 %v7124, %v7125
        %7165 = vadd.xlane.f32.xlu0 %v7164
        %v7166 = vpop.xlane.xlu0 %7165
        %v7167 = vadd.f32 %v7126, %v7127
        %7168 = vadd.xlane.f32.xlu0 %v7167
        %v7169 = vpop.xlane.xlu0 %7168
        %v7170 = vadd.f32 %v7128, %v7129
        %7171 = vadd.xlane.f32.xlu0 %v7170
        %v7172 = vpop.xlane.xlu0 %7171
        %v7173 = vadd.f32 %v7130, %v7131
        %7174 = vadd.xlane.f32.xlu0 %v7173
        %v7175 = vpop.xlane.xlu0 %7174
        %v7176 = vadd.f32 %v7132, %v7133
        %7177 = vadd.xlane.f32.xlu0 %v7176
        %v7178 = vpop.xlane.xlu0 %7177
        %v7179 = vadd.f32 %v7134, %v7135
        %7180 = vadd.xlane.f32.xlu0 %v7179
        %v7181 = vpop.xlane.xlu0 %7180
        %v7182 = vadd.f32 %v7136, %v7137
        %7183 = vadd.xlane.f32.xlu0 %v7182
        %v7184 = vpop.xlane.xlu0 %7183
        %v7185 = vadd.f32 %v7138, %v7139
        %7186 = vadd.xlane.f32.xlu0 %v7185
        %v7187 = vpop.xlane.xlu0 %7186
        %v7188 = vrcp.pop %v7043
        %v7190 = vlaneseq
        %v7191 = vshrl.u32 %v7190, 7
        %v7192 = vsub.s32 0, %v7191
        %v7193 = vrot.slane %v7188, %v7192
        %v7194 = vlaneseq
        %v7195 = vshrl.u32 %v7194, 7
        %v7196 = vsub.s32 1, %v7195
        %v7197 = vrot.slane %v7188, %v7196
        %v7198 = vlaneseq
        %v7199 = vshrl.u32 %v7198, 7
        %v7200 = vsub.s32 2, %v7199
        %v7201 = vrot.slane %v7188, %v7200
        %v7202 = vlaneseq
        %v7203 = vshrl.u32 %v7202, 7
        %v7204 = vsub.s32 3, %v7203
        %v7205 = vrot.slane %v7188, %v7204
        %v7206 = vlaneseq
        %v7207 = vshrl.u32 %v7206, 7
        %v7208 = vsub.s32 4, %v7207
        %v7209 = vrot.slane %v7188, %v7208
        %v7210 = vlaneseq
        %v7211 = vshrl.u32 %v7210, 7
        %v7212 = vsub.s32 5, %v7211
        %v7213 = vrot.slane %v7188, %v7212
        %v7214 = vlaneseq
        %v7215 = vshrl.u32 %v7214, 7
        %v7216 = vsub.s32 6, %v7215
        %v7217 = vrot.slane %v7188, %v7216
        %v7218 = vlaneseq
        %v7219 = vshrl.u32 %v7218, 7
        %v7220 = vsub.s32 7, %v7219
        %v7221 = vrot.slane %v7188, %v7220
        %v7230 = vmul.f32 %v7142, %v7193
        %v7231 = vmul.f32 %v7145, %v7193
        %v7232 = vmul.f32 %v7148, %v7197
        %v7233 = vmul.f32 %v7151, %v7197
        %v7234 = vmul.f32 %v7154, %v7201
        %v7235 = vmul.f32 %v7157, %v7201
        %v7236 = vmul.f32 %v7160, %v7205
        %v7237 = vmul.f32 %v7163, %v7205
        %v7238 = vmul.f32 %v7166, %v7209
        %v7239 = vmul.f32 %v7169, %v7209
        %v7240 = vmul.f32 %v7172, %v7213
        %v7241 = vmul.f32 %v7175, %v7213
        %v7242 = vmul.f32 %v7178, %v7217
        %v7243 = vmul.f32 %v7181, %v7217
        %v7244 = vmul.f32 %v7184, %v7221
        %v7245 = vmul.f32 %v7187, %v7221
        %v7246 = vmul.f32 %v7230, %v7230
        %v7247 = vmul.f32 %v7231, %v7231
        %v7248 = vmul.f32 %v7232, %v7232
        %v7249 = vmul.f32 %v7233, %v7233
        %v7250 = vmul.f32 %v7234, %v7234
        %v7251 = vmul.f32 %v7235, %v7235
        %v7252 = vmul.f32 %v7236, %v7236
        %v7253 = vmul.f32 %v7237, %v7237
        %v7254 = vmul.f32 %v7238, %v7238
        %v7255 = vmul.f32 %v7239, %v7239
        %v7256 = vmul.f32 %v7240, %v7240
        %v7257 = vmul.f32 %v7241, %v7241
        %v7258 = vmul.f32 %v7242, %v7242
        %v7259 = vmul.f32 %v7243, %v7243
        %v7260 = vmul.f32 %v7244, %v7244
        %v7261 = vmul.f32 %v7245, %v7245
        %7278 = vset.pattern.permute.xlu0 0
        %7279 = vperm.xlu0 %7278, %v7246
        %v7280 = vpop.permute.xlu0 %7279
        %7281 = vset.pattern.permute.xlu0 0
        %7282 = vperm.xlu0 %7281, %v7247
        %v7283 = vpop.permute.xlu0 %7282
        %7284 = vset.pattern.permute.xlu0 0
        %7285 = vperm.xlu0 %7284, %v7248
        %v7286 = vpop.permute.xlu0 %7285
        %7287 = vset.pattern.permute.xlu0 0
        %7288 = vperm.xlu0 %7287, %v7249
        %v7289 = vpop.permute.xlu0 %7288
        %7290 = vset.pattern.permute.xlu0 0
        %7291 = vperm.xlu0 %7290, %v7250
        %v7292 = vpop.permute.xlu0 %7291
        %7293 = vset.pattern.permute.xlu0 0
        %7294 = vperm.xlu0 %7293, %v7251
        %v7295 = vpop.permute.xlu0 %7294
        %7296 = vset.pattern.permute.xlu0 0
        %7297 = vperm.xlu0 %7296, %v7252
        %v7298 = vpop.permute.xlu0 %7297
        %7299 = vset.pattern.permute.xlu0 0
        %7300 = vperm.xlu0 %7299, %v7253
        %v7301 = vpop.permute.xlu0 %7300
        %7302 = vset.pattern.permute.xlu0 0
        %7303 = vperm.xlu0 %7302, %v7254
        %v7304 = vpop.permute.xlu0 %7303
        %7305 = vset.pattern.permute.xlu0 0
        %7306 = vperm.xlu0 %7305, %v7255
        %v7307 = vpop.permute.xlu0 %7306
        %7308 = vset.pattern.permute.xlu0 0
        %7309 = vperm.xlu0 %7308, %v7256
        %v7310 = vpop.permute.xlu0 %7309
        %7311 = vset.pattern.permute.xlu0 0
        %7312 = vperm.xlu0 %7311, %v7257
        %v7313 = vpop.permute.xlu0 %7312
        %7314 = vset.pattern.permute.xlu0 0
        %7315 = vperm.xlu0 %7314, %v7258
        %v7316 = vpop.permute.xlu0 %7315
        %7317 = vset.pattern.permute.xlu0 0
        %7318 = vperm.xlu0 %7317, %v7259
        %v7319 = vpop.permute.xlu0 %7318
        %7320 = vset.pattern.permute.xlu0 0
        %7321 = vperm.xlu0 %7320, %v7260
        %v7322 = vpop.permute.xlu0 %7321
        %7323 = vset.pattern.permute.xlu0 0
        %7324 = vperm.xlu0 %7323, %v7261
        %v7325 = vpop.permute.xlu0 %7324
        %v7326 = vlaneseq
        %v7327 = vshrl.u32 %v7326, 7
        %v7328 = vsub.s32 %v1872, %v7327
        %v7329 = vrot.slane %v7280, %v7328
        %v7330 = vlaneseq
        %v7331 = vshrl.u32 %v7330, 7
        %v7332 = vsub.s32 %v1877, %v7331
        %v7333 = vrot.slane %v7283, %v7332
        %v7334 = vsel %vm1882, %v7333, %v7329
        %v7335 = vlaneseq
        %v7336 = vshrl.u32 %v7335, 7
        %v7337 = vsub.s32 %v1872, %v7336
        %v7338 = vrot.slane %v7286, %v7337
        %v7339 = vlaneseq
        %v7340 = vshrl.u32 %v7339, 7
        %v7341 = vsub.s32 %v1877, %v7340
        %v7342 = vrot.slane %v7289, %v7341
        %v7343 = vsel %vm1882, %v7342, %v7338
        %v7344 = vlaneseq
        %v7345 = vshrl.u32 %v7344, 7
        %v7346 = vsub.s32 %v1872, %v7345
        %v7347 = vrot.slane %v7292, %v7346
        %v7348 = vlaneseq
        %v7349 = vshrl.u32 %v7348, 7
        %v7350 = vsub.s32 %v1877, %v7349
        %v7351 = vrot.slane %v7295, %v7350
        %v7352 = vsel %vm1882, %v7351, %v7347
        %v7353 = vlaneseq
        %v7354 = vshrl.u32 %v7353, 7
        %v7355 = vsub.s32 %v1872, %v7354
        %v7356 = vrot.slane %v7298, %v7355
        %v7357 = vlaneseq
        %v7358 = vshrl.u32 %v7357, 7
        %v7359 = vsub.s32 %v1877, %v7358
        %v7360 = vrot.slane %v7301, %v7359
        %v7361 = vsel %vm1882, %v7360, %v7356
        %v7362 = vlaneseq
        %v7363 = vshrl.u32 %v7362, 7
        %v7364 = vsub.s32 %v1872, %v7363
        %v7365 = vrot.slane %v7304, %v7364
        %v7366 = vlaneseq
        %v7367 = vshrl.u32 %v7366, 7
        %v7368 = vsub.s32 %v1877, %v7367
        %v7369 = vrot.slane %v7307, %v7368
        %v7370 = vsel %vm1882, %v7369, %v7365
        %v7371 = vlaneseq
        %v7372 = vshrl.u32 %v7371, 7
        %v7373 = vsub.s32 %v1872, %v7372
        %v7374 = vrot.slane %v7310, %v7373
        %v7375 = vlaneseq
        %v7376 = vshrl.u32 %v7375, 7
        %v7377 = vsub.s32 %v1877, %v7376
        %v7378 = vrot.slane %v7313, %v7377
        %v7379 = vsel %vm1882, %v7378, %v7374
        %v7380 = vlaneseq
        %v7381 = vshrl.u32 %v7380, 7
        %v7382 = vsub.s32 %v1872, %v7381
        %v7383 = vrot.slane %v7316, %v7382
        %v7384 = vlaneseq
        %v7385 = vshrl.u32 %v7384, 7
        %v7386 = vsub.s32 %v1877, %v7385
        %v7387 = vrot.slane %v7319, %v7386
        %v7388 = vsel %vm1882, %v7387, %v7383
        %v7389 = vlaneseq
        %v7390 = vshrl.u32 %v7389, 7
        %v7391 = vsub.s32 %v1872, %v7390
        %v7392 = vrot.slane %v7322, %v7391
        %v7393 = vlaneseq
        %v7394 = vshrl.u32 %v7393, 7
        %v7395 = vsub.s32 %v1877, %v7394
        %v7396 = vrot.slane %v7325, %v7395
        %v7397 = vsel %vm1882, %v7396, %v7392
        %v7398 = vsel %vm1947, %v7343, %v7334
        %v7399 = vsel %vm1949, %v7352, %v7398
        %v7400 = vsel %vm1951, %v7361, %v7399
        %v7401 = vsel %vm1953, %v7370, %v7400
        %v7402 = vsel %vm1955, %v7379, %v7401
        %v7403 = vsel %vm1957, %v7388, %v7402
        %v7404 = vsel %vm1959, %v7397, %v7403
        %v7406 = vsel %vm1962, %v7404, 0.0
        %7407 = vadd.xlane.f32.xlu0 %v7406
        %v7408 = vpop.xlane.xlu0 %7407
        %v7409 = vadd.f32 %v7408, 1e-12
        %v7410 = vrsqrt.pop %v7409
        %v7411 = vadd.f32 %v7408, 1.0
        %v7412 = vrcp.pop %v7411
        %v7413 = vmul.f32 %v7408, %v7412
        %v7414 = vmul.f32 %v7413, %v7410
        %7431 = vset.pattern.permute.xlu0 0
        %7432 = vperm.xlu0 %7431, %v7230
        %v7433 = vpop.permute.xlu0 %7432
        %7434 = vset.pattern.permute.xlu0 0
        %7435 = vperm.xlu0 %7434, %v7231
        %v7436 = vpop.permute.xlu0 %7435
        %7437 = vset.pattern.permute.xlu0 0
        %7438 = vperm.xlu0 %7437, %v7232
        %v7439 = vpop.permute.xlu0 %7438
        %7440 = vset.pattern.permute.xlu0 0
        %7441 = vperm.xlu0 %7440, %v7233
        %v7442 = vpop.permute.xlu0 %7441
        %7443 = vset.pattern.permute.xlu0 0
        %7444 = vperm.xlu0 %7443, %v7234
        %v7445 = vpop.permute.xlu0 %7444
        %7446 = vset.pattern.permute.xlu0 0
        %7447 = vperm.xlu0 %7446, %v7235
        %v7448 = vpop.permute.xlu0 %7447
        %7449 = vset.pattern.permute.xlu0 0
        %7450 = vperm.xlu0 %7449, %v7236
        %v7451 = vpop.permute.xlu0 %7450
        %7452 = vset.pattern.permute.xlu0 0
        %7453 = vperm.xlu0 %7452, %v7237
        %v7454 = vpop.permute.xlu0 %7453
        %7455 = vset.pattern.permute.xlu0 0
        %7456 = vperm.xlu0 %7455, %v7238
        %v7457 = vpop.permute.xlu0 %7456
        %7458 = vset.pattern.permute.xlu0 0
        %7459 = vperm.xlu0 %7458, %v7239
        %v7460 = vpop.permute.xlu0 %7459
        %7461 = vset.pattern.permute.xlu0 0
        %7462 = vperm.xlu0 %7461, %v7240
        %v7463 = vpop.permute.xlu0 %7462
        %7464 = vset.pattern.permute.xlu0 0
        %7465 = vperm.xlu0 %7464, %v7241
        %v7466 = vpop.permute.xlu0 %7465
        %7467 = vset.pattern.permute.xlu0 0
        %7468 = vperm.xlu0 %7467, %v7242
        %v7469 = vpop.permute.xlu0 %7468
        %7470 = vset.pattern.permute.xlu0 0
        %7471 = vperm.xlu0 %7470, %v7243
        %v7472 = vpop.permute.xlu0 %7471
        %7473 = vset.pattern.permute.xlu0 0
        %7474 = vperm.xlu0 %7473, %v7244
        %v7475 = vpop.permute.xlu0 %7474
        %7476 = vset.pattern.permute.xlu0 0
        %7477 = vperm.xlu0 %7476, %v7245
        %v7478 = vpop.permute.xlu0 %7477
        %v7479 = vlaneseq
        %v7480 = vshrl.u32 %v7479, 7
        %v7481 = vsub.s32 %v1872, %v7480
        %v7482 = vrot.slane %v7433, %v7481
        %v7483 = vlaneseq
        %v7484 = vshrl.u32 %v7483, 7
        %v7485 = vsub.s32 %v1877, %v7484
        %v7486 = vrot.slane %v7436, %v7485
        %v7487 = vsel %vm1882, %v7486, %v7482
        %v7488 = vlaneseq
        %v7489 = vshrl.u32 %v7488, 7
        %v7490 = vsub.s32 %v1872, %v7489
        %v7491 = vrot.slane %v7439, %v7490
        %v7492 = vlaneseq
        %v7493 = vshrl.u32 %v7492, 7
        %v7494 = vsub.s32 %v1877, %v7493
        %v7495 = vrot.slane %v7442, %v7494
        %v7496 = vsel %vm1882, %v7495, %v7491
        %v7497 = vlaneseq
        %v7498 = vshrl.u32 %v7497, 7
        %v7499 = vsub.s32 %v1872, %v7498
        %v7500 = vrot.slane %v7445, %v7499
        %v7501 = vlaneseq
        %v7502 = vshrl.u32 %v7501, 7
        %v7503 = vsub.s32 %v1877, %v7502
        %v7504 = vrot.slane %v7448, %v7503
        %v7505 = vsel %vm1882, %v7504, %v7500
        %v7506 = vlaneseq
        %v7507 = vshrl.u32 %v7506, 7
        %v7508 = vsub.s32 %v1872, %v7507
        %v7509 = vrot.slane %v7451, %v7508
        %v7510 = vlaneseq
        %v7511 = vshrl.u32 %v7510, 7
        %v7512 = vsub.s32 %v1877, %v7511
        %v7513 = vrot.slane %v7454, %v7512
        %v7514 = vsel %vm1882, %v7513, %v7509
        %v7515 = vlaneseq
        %v7516 = vshrl.u32 %v7515, 7
        %v7517 = vsub.s32 %v1872, %v7516
        %v7518 = vrot.slane %v7457, %v7517
        %v7519 = vlaneseq
        %v7520 = vshrl.u32 %v7519, 7
        %v7521 = vsub.s32 %v1877, %v7520
        %v7522 = vrot.slane %v7460, %v7521
        %v7523 = vsel %vm1882, %v7522, %v7518
        %v7524 = vlaneseq
        %v7525 = vshrl.u32 %v7524, 7
        %v7526 = vsub.s32 %v1872, %v7525
        %v7527 = vrot.slane %v7463, %v7526
        %v7528 = vlaneseq
        %v7529 = vshrl.u32 %v7528, 7
        %v7530 = vsub.s32 %v1877, %v7529
        %v7531 = vrot.slane %v7466, %v7530
        %v7532 = vsel %vm1882, %v7531, %v7527
        %v7533 = vlaneseq
        %v7534 = vshrl.u32 %v7533, 7
        %v7535 = vsub.s32 %v1872, %v7534
        %v7536 = vrot.slane %v7469, %v7535
        %v7537 = vlaneseq
        %v7538 = vshrl.u32 %v7537, 7
        %v7539 = vsub.s32 %v1877, %v7538
        %v7540 = vrot.slane %v7472, %v7539
        %v7541 = vsel %vm1882, %v7540, %v7536
        %v7542 = vlaneseq
        %v7543 = vshrl.u32 %v7542, 7
        %v7544 = vsub.s32 %v1872, %v7543
        %v7545 = vrot.slane %v7475, %v7544
        %v7546 = vlaneseq
        %v7547 = vshrl.u32 %v7546, 7
        %v7548 = vsub.s32 %v1877, %v7547
        %v7549 = vrot.slane %v7478, %v7548
        %v7550 = vsel %vm1882, %v7549, %v7545
        %v7551 = vsel %vm1947, %v7496, %v7487
        %v7552 = vsel %vm1949, %v7505, %v7551
        %v7553 = vsel %vm1951, %v7514, %v7552
        %v7554 = vsel %vm1953, %v7523, %v7553
        %v7555 = vsel %vm1955, %v7532, %v7554
        %v7556 = vsel %vm1957, %v7541, %v7555
        %v7557 = vsel %vm1959, %v7550, %v7556
        %v7559 = vmul.f32 %v7414, %v7557
        %7561 = vrot.lane.b32.xlu0 %v7559, 16
        %v7562 = vpop.permute.xlu0 %7561
        %vm7564 = vcmask 261248
        %7565 = vst.msk [vmem:[%s176] sm:$0xff] %vm7564, %v7562
        %s7566 = scalar_lea.vmem [#allocation2], 512
        %v7567 = vld [vmem:[%s7566] sm:$0xff]
        %v7568 = vld [vmem:[%s7566 + $0x8] sm:$0xff]
        %v7569 = vld [vmem:[%s7566 + $0x10] sm:$0xff]
        %v7570 = vld [vmem:[%s7566 + $0x18] sm:$0xff]
        %v7571 = vld [vmem:[%s156] sm:$0xff]
        %v7572 = vld [vmem:[%s156 + $0x8] sm:$0xff]
        %v7575 = vcombine.low %v7571, %v7572
        %v7576 = vcombine.high %v7571, %v7572
        %v7578 = vunpack.c.l.s4 1966171168
        %v7579 = vunpack.c.0.s8 %v7578
        %v7580 = vlaneseq
        %v7581 = vshrl.u32 %v7580, 7
        %v7582 = vsub.s32 %v7579, %v7581
        %v7583 = vrot.slane %v7575, %v7582
        %v7585 = vunpack.c.l.s4 1966171168
        %v7586 = vunpack.c.0.s8 %v7585
        %v7587 = vlaneseq
        %v7588 = vshrl.u32 %v7587, 7
        %v7589 = vsub.s32 %v7586, %v7588
        %v7590 = vrot.slane %v7576, %v7589
        %v7591 = vcombine.high %v7583, %v7583
        %v7592 = vcombine.high %v7590, %v7590
        %v7594 = vunpack.c.l.s4 1966171168
        %v7595 = vunpack.c.0.s8 %v7594
        %v7596 = vlaneseq
        %v7597 = vshrl.u32 %v7596, 7
        %v7598 = vsub.s32 %v7595, %v7597
        %v7599 = vrot.slane %v7583, %v7598
        %v7601 = vunpack.c.l.s4 1966171168
        %v7602 = vunpack.c.0.s8 %v7601
        %v7603 = vlaneseq
        %v7604 = vshrl.u32 %v7603, 7
        %v7605 = vsub.s32 %v7602, %v7604
        %v7606 = vrot.slane %v7590, %v7605
        %v7608 = vunpack.c.l.s4 1966171168
        %v7609 = vunpack.c.0.s8 %v7608
        %v7610 = vlaneseq
        %v7611 = vshrl.u32 %v7610, 7
        %v7612 = vsub.s32 %v7609, %v7611
        %v7613 = vrot.slane %v7591, %v7612
        %v7615 = vunpack.c.l.s4 1966171168
        %v7616 = vunpack.c.0.s8 %v7615
        %v7617 = vlaneseq
        %v7618 = vshrl.u32 %v7617, 7
        %v7619 = vsub.s32 %v7616, %v7618
        %v7620 = vrot.slane %v7592, %v7619
        %v7621 = vcombine.high %v7599, %v7599
        %v7622 = vcombine.high %v7606, %v7606
        %v7623 = vcombine.high %v7613, %v7613
        %v7624 = vcombine.high %v7620, %v7620
        %v7625 = vlaneseq
        %v7626 = vshrl.u32 %v7625, 7
        %v7627 = vsub.s32 0, %v7626
        %v7628 = vrot.slane %v7599, %v7627
        %v7629 = vlaneseq
        %v7630 = vshrl.u32 %v7629, 7
        %v7631 = vsub.s32 1, %v7630
        %v7632 = vrot.slane %v7599, %v7631
        %v7633 = vlaneseq
        %v7634 = vshrl.u32 %v7633, 7
        %v7635 = vsub.s32 0, %v7634
        %v7636 = vrot.slane %v7613, %v7635
        %v7637 = vlaneseq
        %v7638 = vshrl.u32 %v7637, 7
        %v7639 = vsub.s32 1, %v7638
        %v7640 = vrot.slane %v7613, %v7639
        %v7641 = vlaneseq
        %v7642 = vshrl.u32 %v7641, 7
        %v7643 = vsub.s32 0, %v7642
        %v7644 = vrot.slane %v7621, %v7643
        %v7645 = vlaneseq
        %v7646 = vshrl.u32 %v7645, 7
        %v7647 = vsub.s32 1, %v7646
        %v7648 = vrot.slane %v7621, %v7647
        %v7649 = vlaneseq
        %v7650 = vshrl.u32 %v7649, 7
        %v7651 = vsub.s32 0, %v7650
        %v7652 = vrot.slane %v7623, %v7651
        %v7653 = vlaneseq
        %v7654 = vshrl.u32 %v7653, 7
        %v7655 = vsub.s32 1, %v7654
        %v7656 = vrot.slane %v7623, %v7655
        %v7657 = vlaneseq
        %v7658 = vshrl.u32 %v7657, 7
        %v7659 = vsub.s32 0, %v7658
        %v7660 = vrot.slane %v7606, %v7659
        %v7661 = vlaneseq
        %v7662 = vshrl.u32 %v7661, 7
        %v7663 = vsub.s32 1, %v7662
        %v7664 = vrot.slane %v7606, %v7663
        %v7665 = vlaneseq
        %v7666 = vshrl.u32 %v7665, 7
        %v7667 = vsub.s32 0, %v7666
        %v7668 = vrot.slane %v7620, %v7667
        %v7669 = vlaneseq
        %v7670 = vshrl.u32 %v7669, 7
        %v7671 = vsub.s32 1, %v7670
        %v7672 = vrot.slane %v7620, %v7671
        %v7673 = vlaneseq
        %v7674 = vshrl.u32 %v7673, 7
        %v7675 = vsub.s32 0, %v7674
        %v7676 = vrot.slane %v7622, %v7675
        %v7677 = vlaneseq
        %v7678 = vshrl.u32 %v7677, 7
        %v7679 = vsub.s32 1, %v7678
        %v7680 = vrot.slane %v7622, %v7679
        %v7681 = vlaneseq
        %v7682 = vshrl.u32 %v7681, 7
        %v7683 = vsub.s32 0, %v7682
        %v7684 = vrot.slane %v7624, %v7683
        %v7685 = vlaneseq
        %v7686 = vshrl.u32 %v7685, 7
        %v7687 = vsub.s32 1, %v7686
        %v7688 = vrot.slane %v7624, %v7687
        %v7705 = vmul.f32 %v7567, %v7628
        %v7706 = vmul.f32 %v7568, %v7632
        %v7707 = vmul.f32 %v7569, %v7628
        %v7708 = vmul.f32 %v7570, %v7632
        %v7709 = vmul.f32 %v7567, %v7636
        %v7710 = vmul.f32 %v7568, %v7640
        %v7711 = vmul.f32 %v7569, %v7636
        %v7712 = vmul.f32 %v7570, %v7640
        %v7713 = vmul.f32 %v7567, %v7644
        %v7714 = vmul.f32 %v7568, %v7648
        %v7715 = vmul.f32 %v7569, %v7644
        %v7716 = vmul.f32 %v7570, %v7648
        %v7717 = vmul.f32 %v7567, %v7652
        %v7718 = vmul.f32 %v7568, %v7656
        %v7719 = vmul.f32 %v7569, %v7652
        %v7720 = vmul.f32 %v7570, %v7656
        %v7721 = vmul.f32 %v7567, %v7660
        %v7722 = vmul.f32 %v7568, %v7664
        %v7723 = vmul.f32 %v7569, %v7660
        %v7724 = vmul.f32 %v7570, %v7664
        %v7725 = vmul.f32 %v7567, %v7668
        %v7726 = vmul.f32 %v7568, %v7672
        %v7727 = vmul.f32 %v7569, %v7668
        %v7728 = vmul.f32 %v7570, %v7672
        %v7729 = vmul.f32 %v7567, %v7676
        %v7730 = vmul.f32 %v7568, %v7680
        %v7731 = vmul.f32 %v7569, %v7676
        %v7732 = vmul.f32 %v7570, %v7680
        %v7733 = vmul.f32 %v7567, %v7684
        %v7734 = vmul.f32 %v7568, %v7688
        %v7735 = vmul.f32 %v7569, %v7684
        %v7736 = vmul.f32 %v7570, %v7688
        %s7737 = scalar_lea.vmem [#allocation2], 544
        %v7738 = vld [vmem:[%s7737] sm:$0xff]
        %v7739 = vld [vmem:[%s7737 + $0x8] sm:$0xff]
        %v7740 = vld [vmem:[%s7737 + $0x10] sm:$0xff]
        %v7741 = vld [vmem:[%s7737 + $0x18] sm:$0xff]
        %v7742 = vld [vmem:[%s352] sm:$0xff]
        %v7743 = vld [vmem:[%s352 + $0x8] sm:$0xff]
        %v7746 = vcombine.low %v7742, %v7743
        %v7747 = vcombine.high %v7742, %v7743
        %v7749 = vunpack.c.l.s4 1966171168
        %v7750 = vunpack.c.0.s8 %v7749
        %v7751 = vlaneseq
        %v7752 = vshrl.u32 %v7751, 7
        %v7753 = vsub.s32 %v7750, %v7752
        %v7754 = vrot.slane %v7746, %v7753
        %v7756 = vunpack.c.l.s4 1966171168
        %v7757 = vunpack.c.0.s8 %v7756
        %v7758 = vlaneseq
        %v7759 = vshrl.u32 %v7758, 7
        %v7760 = vsub.s32 %v7757, %v7759
        %v7761 = vrot.slane %v7747, %v7760
        %v7762 = vcombine.high %v7754, %v7754
        %v7763 = vcombine.high %v7761, %v7761
        %v7765 = vunpack.c.l.s4 1966171168
        %v7766 = vunpack.c.0.s8 %v7765
        %v7767 = vlaneseq
        %v7768 = vshrl.u32 %v7767, 7
        %v7769 = vsub.s32 %v7766, %v7768
        %v7770 = vrot.slane %v7754, %v7769
        %v7772 = vunpack.c.l.s4 1966171168
        %v7773 = vunpack.c.0.s8 %v7772
        %v7774 = vlaneseq
        %v7775 = vshrl.u32 %v7774, 7
        %v7776 = vsub.s32 %v7773, %v7775
        %v7777 = vrot.slane %v7761, %v7776
        %v7779 = vunpack.c.l.s4 1966171168
        %v7780 = vunpack.c.0.s8 %v7779
        %v7781 = vlaneseq
        %v7782 = vshrl.u32 %v7781, 7
        %v7783 = vsub.s32 %v7780, %v7782
        %v7784 = vrot.slane %v7762, %v7783
        %v7786 = vunpack.c.l.s4 1966171168
        %v7787 = vunpack.c.0.s8 %v7786
        %v7788 = vlaneseq
        %v7789 = vshrl.u32 %v7788, 7
        %v7790 = vsub.s32 %v7787, %v7789
        %v7791 = vrot.slane %v7763, %v7790
        %v7792 = vcombine.high %v7770, %v7770
        %v7793 = vcombine.high %v7777, %v7777
        %v7794 = vcombine.high %v7784, %v7784
        %v7795 = vcombine.high %v7791, %v7791
        %v7796 = vlaneseq
        %v7797 = vshrl.u32 %v7796, 7
        %v7798 = vsub.s32 0, %v7797
        %v7799 = vrot.slane %v7770, %v7798
        %v7800 = vlaneseq
        %v7801 = vshrl.u32 %v7800, 7
        %v7802 = vsub.s32 1, %v7801
        %v7803 = vrot.slane %v7770, %v7802
        %v7804 = vlaneseq
        %v7805 = vshrl.u32 %v7804, 7
        %v7806 = vsub.s32 0, %v7805
        %v7807 = vrot.slane %v7784, %v7806
        %v7808 = vlaneseq
        %v7809 = vshrl.u32 %v7808, 7
        %v7810 = vsub.s32 1, %v7809
        %v7811 = vrot.slane %v7784, %v7810
        %v7812 = vlaneseq
        %v7813 = vshrl.u32 %v7812, 7
        %v7814 = vsub.s32 0, %v7813
        %v7815 = vrot.slane %v7792, %v7814
        %v7816 = vlaneseq
        %v7817 = vshrl.u32 %v7816, 7
        %v7818 = vsub.s32 1, %v7817
        %v7819 = vrot.slane %v7792, %v7818
        %v7820 = vlaneseq
        %v7821 = vshrl.u32 %v7820, 7
        %v7822 = vsub.s32 0, %v7821
        %v7823 = vrot.slane %v7794, %v7822
        %v7824 = vlaneseq
        %v7825 = vshrl.u32 %v7824, 7
        %v7826 = vsub.s32 1, %v7825
        %v7827 = vrot.slane %v7794, %v7826
        %v7828 = vlaneseq
        %v7829 = vshrl.u32 %v7828, 7
        %v7830 = vsub.s32 0, %v7829
        %v7831 = vrot.slane %v7777, %v7830
        %v7832 = vlaneseq
        %v7833 = vshrl.u32 %v7832, 7
        %v7834 = vsub.s32 1, %v7833
        %v7835 = vrot.slane %v7777, %v7834
        %v7836 = vlaneseq
        %v7837 = vshrl.u32 %v7836, 7
        %v7838 = vsub.s32 0, %v7837
        %v7839 = vrot.slane %v7791, %v7838
        %v7840 = vlaneseq
        %v7841 = vshrl.u32 %v7840, 7
        %v7842 = vsub.s32 1, %v7841
        %v7843 = vrot.slane %v7791, %v7842
        %v7844 = vlaneseq
        %v7845 = vshrl.u32 %v7844, 7
        %v7846 = vsub.s32 0, %v7845
        %v7847 = vrot.slane %v7793, %v7846
        %v7848 = vlaneseq
        %v7849 = vshrl.u32 %v7848, 7
        %v7850 = vsub.s32 1, %v7849
        %v7851 = vrot.slane %v7793, %v7850
        %v7852 = vlaneseq
        %v7853 = vshrl.u32 %v7852, 7
        %v7854 = vsub.s32 0, %v7853
        %v7855 = vrot.slane %v7795, %v7854
        %v7856 = vlaneseq
        %v7857 = vshrl.u32 %v7856, 7
        %v7858 = vsub.s32 1, %v7857
        %v7859 = vrot.slane %v7795, %v7858
        %v7876 = vmul.f32 %v7738, %v7799
        %v7877 = vmul.f32 %v7739, %v7803
        %v7878 = vmul.f32 %v7740, %v7799
        %v7879 = vmul.f32 %v7741, %v7803
        %v7880 = vmul.f32 %v7738, %v7807
        %v7881 = vmul.f32 %v7739, %v7811
        %v7882 = vmul.f32 %v7740, %v7807
        %v7883 = vmul.f32 %v7741, %v7811
        %v7884 = vmul.f32 %v7738, %v7815
        %v7885 = vmul.f32 %v7739, %v7819
        %v7886 = vmul.f32 %v7740, %v7815
        %v7887 = vmul.f32 %v7741, %v7819
        %v7888 = vmul.f32 %v7738, %v7823
        %v7889 = vmul.f32 %v7739, %v7827
        %v7890 = vmul.f32 %v7740, %v7823
        %v7891 = vmul.f32 %v7741, %v7827
        %v7892 = vmul.f32 %v7738, %v7831
        %v7893 = vmul.f32 %v7739, %v7835
        %v7894 = vmul.f32 %v7740, %v7831
        %v7895 = vmul.f32 %v7741, %v7835
        %v7896 = vmul.f32 %v7738, %v7839
        %v7897 = vmul.f32 %v7739, %v7843
        %v7898 = vmul.f32 %v7740, %v7839
        %v7899 = vmul.f32 %v7741, %v7843
        %v7900 = vmul.f32 %v7738, %v7847
        %v7901 = vmul.f32 %v7739, %v7851
        %v7902 = vmul.f32 %v7740, %v7847
        %v7903 = vmul.f32 %v7741, %v7851
        %v7904 = vmul.f32 %v7738, %v7855
        %v7905 = vmul.f32 %v7739, %v7859
        %v7906 = vmul.f32 %v7740, %v7855
        %v7907 = vmul.f32 %v7741, %v7859
        %v7908 = vadd.f32 %v7705, %v7876
        %v7909 = vadd.f32 %v7706, %v7877
        %v7910 = vadd.f32 %v7707, %v7878
        %v7911 = vadd.f32 %v7708, %v7879
        %v7912 = vadd.f32 %v7709, %v7880
        %v7913 = vadd.f32 %v7710, %v7881
        %v7914 = vadd.f32 %v7711, %v7882
        %v7915 = vadd.f32 %v7712, %v7883
        %v7916 = vadd.f32 %v7713, %v7884
        %v7917 = vadd.f32 %v7714, %v7885
        %v7918 = vadd.f32 %v7715, %v7886
        %v7919 = vadd.f32 %v7716, %v7887
        %v7920 = vadd.f32 %v7717, %v7888
        %v7921 = vadd.f32 %v7718, %v7889
        %v7922 = vadd.f32 %v7719, %v7890
        %v7923 = vadd.f32 %v7720, %v7891
        %v7924 = vadd.f32 %v7721, %v7892
        %v7925 = vadd.f32 %v7722, %v7893
        %v7926 = vadd.f32 %v7723, %v7894
        %v7927 = vadd.f32 %v7724, %v7895
        %v7928 = vadd.f32 %v7725, %v7896
        %v7929 = vadd.f32 %v7726, %v7897
        %v7930 = vadd.f32 %v7727, %v7898
        %v7931 = vadd.f32 %v7728, %v7899
        %v7932 = vadd.f32 %v7729, %v7900
        %v7933 = vadd.f32 %v7730, %v7901
        %v7934 = vadd.f32 %v7731, %v7902
        %v7935 = vadd.f32 %v7732, %v7903
        %v7936 = vadd.f32 %v7733, %v7904
        %v7937 = vadd.f32 %v7734, %v7905
        %v7938 = vadd.f32 %v7735, %v7906
        %v7939 = vadd.f32 %v7736, %v7907
        %s7940 = scalar_lea.vmem [#allocation2], 576
        %v7941 = vld [vmem:[%s7940] sm:$0xff]
        %v7942 = vld [vmem:[%s7940 + $0x8] sm:$0xff]
        %v7943 = vld [vmem:[%s7940 + $0x10] sm:$0xff]
        %v7944 = vld [vmem:[%s7940 + $0x18] sm:$0xff]
        %v7945 = vld [vmem:[%s556] sm:$0xff]
        %v7946 = vld [vmem:[%s556 + $0x8] sm:$0xff]
        %v7949 = vcombine.low %v7945, %v7946
        %v7950 = vcombine.high %v7945, %v7946
        %v7952 = vunpack.c.l.s4 1966171168
        %v7953 = vunpack.c.0.s8 %v7952
        %v7954 = vlaneseq
        %v7955 = vshrl.u32 %v7954, 7
        %v7956 = vsub.s32 %v7953, %v7955
        %v7957 = vrot.slane %v7949, %v7956
        %v7959 = vunpack.c.l.s4 1966171168
        %v7960 = vunpack.c.0.s8 %v7959
        %v7961 = vlaneseq
        %v7962 = vshrl.u32 %v7961, 7
        %v7963 = vsub.s32 %v7960, %v7962
        %v7964 = vrot.slane %v7950, %v7963
        %v7965 = vcombine.high %v7957, %v7957
        %v7966 = vcombine.high %v7964, %v7964
        %v7968 = vunpack.c.l.s4 1966171168
        %v7969 = vunpack.c.0.s8 %v7968
        %v7970 = vlaneseq
        %v7971 = vshrl.u32 %v7970, 7
        %v7972 = vsub.s32 %v7969, %v7971
        %v7973 = vrot.slane %v7957, %v7972
        %v7975 = vunpack.c.l.s4 1966171168
        %v7976 = vunpack.c.0.s8 %v7975
        %v7977 = vlaneseq
        %v7978 = vshrl.u32 %v7977, 7
        %v7979 = vsub.s32 %v7976, %v7978
        %v7980 = vrot.slane %v7964, %v7979
        %v7982 = vunpack.c.l.s4 1966171168
        %v7983 = vunpack.c.0.s8 %v7982
        %v7984 = vlaneseq
        %v7985 = vshrl.u32 %v7984, 7
        %v7986 = vsub.s32 %v7983, %v7985
        %v7987 = vrot.slane %v7965, %v7986
        %v7989 = vunpack.c.l.s4 1966171168
        %v7990 = vunpack.c.0.s8 %v7989
        %v7991 = vlaneseq
        %v7992 = vshrl.u32 %v7991, 7
        %v7993 = vsub.s32 %v7990, %v7992
        %v7994 = vrot.slane %v7966, %v7993
        %v7995 = vcombine.high %v7973, %v7973
        %v7996 = vcombine.high %v7980, %v7980
        %v7997 = vcombine.high %v7987, %v7987
        %v7998 = vcombine.high %v7994, %v7994
        %v7999 = vlaneseq
        %v8000 = vshrl.u32 %v7999, 7
        %v8001 = vsub.s32 0, %v8000
        %v8002 = vrot.slane %v7973, %v8001
        %v8003 = vlaneseq
        %v8004 = vshrl.u32 %v8003, 7
        %v8005 = vsub.s32 1, %v8004
        %v8006 = vrot.slane %v7973, %v8005
        %v8007 = vlaneseq
        %v8008 = vshrl.u32 %v8007, 7
        %v8009 = vsub.s32 0, %v8008
        %v8010 = vrot.slane %v7987, %v8009
        %v8011 = vlaneseq
        %v8012 = vshrl.u32 %v8011, 7
        %v8013 = vsub.s32 1, %v8012
        %v8014 = vrot.slane %v7987, %v8013
        %v8015 = vlaneseq
        %v8016 = vshrl.u32 %v8015, 7
        %v8017 = vsub.s32 0, %v8016
        %v8018 = vrot.slane %v7995, %v8017
        %v8019 = vlaneseq
        %v8020 = vshrl.u32 %v8019, 7
        %v8021 = vsub.s32 1, %v8020
        %v8022 = vrot.slane %v7995, %v8021
        %v8023 = vlaneseq
        %v8024 = vshrl.u32 %v8023, 7
        %v8025 = vsub.s32 0, %v8024
        %v8026 = vrot.slane %v7997, %v8025
        %v8027 = vlaneseq
        %v8028 = vshrl.u32 %v8027, 7
        %v8029 = vsub.s32 1, %v8028
        %v8030 = vrot.slane %v7997, %v8029
        %v8031 = vlaneseq
        %v8032 = vshrl.u32 %v8031, 7
        %v8033 = vsub.s32 0, %v8032
        %v8034 = vrot.slane %v7980, %v8033
        %v8035 = vlaneseq
        %v8036 = vshrl.u32 %v8035, 7
        %v8037 = vsub.s32 1, %v8036
        %v8038 = vrot.slane %v7980, %v8037
        %v8039 = vlaneseq
        %v8040 = vshrl.u32 %v8039, 7
        %v8041 = vsub.s32 0, %v8040
        %v8042 = vrot.slane %v7994, %v8041
        %v8043 = vlaneseq
        %v8044 = vshrl.u32 %v8043, 7
        %v8045 = vsub.s32 1, %v8044
        %v8046 = vrot.slane %v7994, %v8045
        %v8047 = vlaneseq
        %v8048 = vshrl.u32 %v8047, 7
        %v8049 = vsub.s32 0, %v8048
        %v8050 = vrot.slane %v7996, %v8049
        %v8051 = vlaneseq
        %v8052 = vshrl.u32 %v8051, 7
        %v8053 = vsub.s32 1, %v8052
        %v8054 = vrot.slane %v7996, %v8053
        %v8055 = vlaneseq
        %v8056 = vshrl.u32 %v8055, 7
        %v8057 = vsub.s32 0, %v8056
        %v8058 = vrot.slane %v7998, %v8057
        %v8059 = vlaneseq
        %v8060 = vshrl.u32 %v8059, 7
        %v8061 = vsub.s32 1, %v8060
        %v8062 = vrot.slane %v7998, %v8061
        %v8079 = vmul.f32 %v7941, %v8002
        %v8080 = vmul.f32 %v7942, %v8006
        %v8081 = vmul.f32 %v7943, %v8002
        %v8082 = vmul.f32 %v7944, %v8006
        %v8083 = vmul.f32 %v7941, %v8010
        %v8084 = vmul.f32 %v7942, %v8014
        %v8085 = vmul.f32 %v7943, %v8010
        %v8086 = vmul.f32 %v7944, %v8014
        %v8087 = vmul.f32 %v7941, %v8018
        %v8088 = vmul.f32 %v7942, %v8022
        %v8089 = vmul.f32 %v7943, %v8018
        %v8090 = vmul.f32 %v7944, %v8022
        %v8091 = vmul.f32 %v7941, %v8026
        %v8092 = vmul.f32 %v7942, %v8030
        %v8093 = vmul.f32 %v7943, %v8026
        %v8094 = vmul.f32 %v7944, %v8030
        %v8095 = vmul.f32 %v7941, %v8034
        %v8096 = vmul.f32 %v7942, %v8038
        %v8097 = vmul.f32 %v7943, %v8034
        %v8098 = vmul.f32 %v7944, %v8038
        %v8099 = vmul.f32 %v7941, %v8042
        %v8100 = vmul.f32 %v7942, %v8046
        %v8101 = vmul.f32 %v7943, %v8042
        %v8102 = vmul.f32 %v7944, %v8046
        %v8103 = vmul.f32 %v7941, %v8050
        %v8104 = vmul.f32 %v7942, %v8054
        %v8105 = vmul.f32 %v7943, %v8050
        %v8106 = vmul.f32 %v7944, %v8054
        %v8107 = vmul.f32 %v7941, %v8058
        %v8108 = vmul.f32 %v7942, %v8062
        %v8109 = vmul.f32 %v7943, %v8058
        %v8110 = vmul.f32 %v7944, %v8062
        %v8111 = vadd.f32 %v7908, %v8079
        %v8112 = vadd.f32 %v7909, %v8080
        %v8113 = vadd.f32 %v7910, %v8081
        %v8114 = vadd.f32 %v7911, %v8082
        %v8115 = vadd.f32 %v7912, %v8083
        %v8116 = vadd.f32 %v7913, %v8084
        %v8117 = vadd.f32 %v7914, %v8085
        %v8118 = vadd.f32 %v7915, %v8086
        %v8119 = vadd.f32 %v7916, %v8087
        %v8120 = vadd.f32 %v7917, %v8088
        %v8121 = vadd.f32 %v7918, %v8089
        %v8122 = vadd.f32 %v7919, %v8090
        %v8123 = vadd.f32 %v7920, %v8091
        %v8124 = vadd.f32 %v7921, %v8092
        %v8125 = vadd.f32 %v7922, %v8093
        %v8126 = vadd.f32 %v7923, %v8094
        %v8127 = vadd.f32 %v7924, %v8095
        %v8128 = vadd.f32 %v7925, %v8096
        %v8129 = vadd.f32 %v7926, %v8097
        %v8130 = vadd.f32 %v7927, %v8098
        %v8131 = vadd.f32 %v7928, %v8099
        %v8132 = vadd.f32 %v7929, %v8100
        %v8133 = vadd.f32 %v7930, %v8101
        %v8134 = vadd.f32 %v7931, %v8102
        %v8135 = vadd.f32 %v7932, %v8103
        %v8136 = vadd.f32 %v7933, %v8104
        %v8137 = vadd.f32 %v7934, %v8105
        %v8138 = vadd.f32 %v7935, %v8106
        %v8139 = vadd.f32 %v7936, %v8107
        %v8140 = vadd.f32 %v7937, %v8108
        %v8141 = vadd.f32 %v7938, %v8109
        %v8142 = vadd.f32 %v7939, %v8110
        %s8143 = scalar_lea.vmem [#allocation2], 608
        %v8144 = vld [vmem:[%s8143] sm:$0xff]
        %v8145 = vld [vmem:[%s8143 + $0x8] sm:$0xff]
        %v8146 = vld [vmem:[%s8143 + $0x10] sm:$0xff]
        %v8147 = vld [vmem:[%s8143 + $0x18] sm:$0xff]
        %v8148 = vld [vmem:[%s760] sm:$0xff]
        %v8149 = vld [vmem:[%s760 + $0x8] sm:$0xff]
        %v8152 = vcombine.low %v8148, %v8149
        %v8153 = vcombine.high %v8148, %v8149
        %v8155 = vunpack.c.l.s4 1966171168
        %v8156 = vunpack.c.0.s8 %v8155
        %v8157 = vlaneseq
        %v8158 = vshrl.u32 %v8157, 7
        %v8159 = vsub.s32 %v8156, %v8158
        %v8160 = vrot.slane %v8152, %v8159
        %v8162 = vunpack.c.l.s4 1966171168
        %v8163 = vunpack.c.0.s8 %v8162
        %v8164 = vlaneseq
        %v8165 = vshrl.u32 %v8164, 7
        %v8166 = vsub.s32 %v8163, %v8165
        %v8167 = vrot.slane %v8153, %v8166
        %v8168 = vcombine.high %v8160, %v8160
        %v8169 = vcombine.high %v8167, %v8167
        %v8171 = vunpack.c.l.s4 1966171168
        %v8172 = vunpack.c.0.s8 %v8171
        %v8173 = vlaneseq
        %v8174 = vshrl.u32 %v8173, 7
        %v8175 = vsub.s32 %v8172, %v8174
        %v8176 = vrot.slane %v8160, %v8175
        %v8178 = vunpack.c.l.s4 1966171168
        %v8179 = vunpack.c.0.s8 %v8178
        %v8180 = vlaneseq
        %v8181 = vshrl.u32 %v8180, 7
        %v8182 = vsub.s32 %v8179, %v8181
        %v8183 = vrot.slane %v8167, %v8182
        %v8185 = vunpack.c.l.s4 1966171168
        %v8186 = vunpack.c.0.s8 %v8185
        %v8187 = vlaneseq
        %v8188 = vshrl.u32 %v8187, 7
        %v8189 = vsub.s32 %v8186, %v8188
        %v8190 = vrot.slane %v8168, %v8189
        %v8192 = vunpack.c.l.s4 1966171168
        %v8193 = vunpack.c.0.s8 %v8192
        %v8194 = vlaneseq
        %v8195 = vshrl.u32 %v8194, 7
        %v8196 = vsub.s32 %v8193, %v8195
        %v8197 = vrot.slane %v8169, %v8196
        %v8198 = vcombine.high %v8176, %v8176
        %v8199 = vcombine.high %v8183, %v8183
        %v8200 = vcombine.high %v8190, %v8190
        %v8201 = vcombine.high %v8197, %v8197
        %v8202 = vlaneseq
        %v8203 = vshrl.u32 %v8202, 7
        %v8204 = vsub.s32 0, %v8203
        %v8205 = vrot.slane %v8176, %v8204
        %v8206 = vlaneseq
        %v8207 = vshrl.u32 %v8206, 7
        %v8208 = vsub.s32 1, %v8207
        %v8209 = vrot.slane %v8176, %v8208
        %v8210 = vlaneseq
        %v8211 = vshrl.u32 %v8210, 7
        %v8212 = vsub.s32 0, %v8211
        %v8213 = vrot.slane %v8190, %v8212
        %v8214 = vlaneseq
        %v8215 = vshrl.u32 %v8214, 7
        %v8216 = vsub.s32 1, %v8215
        %v8217 = vrot.slane %v8190, %v8216
        %v8218 = vlaneseq
        %v8219 = vshrl.u32 %v8218, 7
        %v8220 = vsub.s32 0, %v8219
        %v8221 = vrot.slane %v8198, %v8220
        %v8222 = vlaneseq
        %v8223 = vshrl.u32 %v8222, 7
        %v8224 = vsub.s32 1, %v8223
        %v8225 = vrot.slane %v8198, %v8224
        %v8226 = vlaneseq
        %v8227 = vshrl.u32 %v8226, 7
        %v8228 = vsub.s32 0, %v8227
        %v8229 = vrot.slane %v8200, %v8228
        %v8230 = vlaneseq
        %v8231 = vshrl.u32 %v8230, 7
        %v8232 = vsub.s32 1, %v8231
        %v8233 = vrot.slane %v8200, %v8232
        %v8234 = vlaneseq
        %v8235 = vshrl.u32 %v8234, 7
        %v8236 = vsub.s32 0, %v8235
        %v8237 = vrot.slane %v8183, %v8236
        %v8238 = vlaneseq
        %v8239 = vshrl.u32 %v8238, 7
        %v8240 = vsub.s32 1, %v8239
        %v8241 = vrot.slane %v8183, %v8240
        %v8242 = vlaneseq
        %v8243 = vshrl.u32 %v8242, 7
        %v8244 = vsub.s32 0, %v8243
        %v8245 = vrot.slane %v8197, %v8244
        %v8246 = vlaneseq
        %v8247 = vshrl.u32 %v8246, 7
        %v8248 = vsub.s32 1, %v8247
        %v8249 = vrot.slane %v8197, %v8248
        %v8250 = vlaneseq
        %v8251 = vshrl.u32 %v8250, 7
        %v8252 = vsub.s32 0, %v8251
        %v8253 = vrot.slane %v8199, %v8252
        %v8254 = vlaneseq
        %v8255 = vshrl.u32 %v8254, 7
        %v8256 = vsub.s32 1, %v8255
        %v8257 = vrot.slane %v8199, %v8256
        %v8258 = vlaneseq
        %v8259 = vshrl.u32 %v8258, 7
        %v8260 = vsub.s32 0, %v8259
        %v8261 = vrot.slane %v8201, %v8260
        %v8262 = vlaneseq
        %v8263 = vshrl.u32 %v8262, 7
        %v8264 = vsub.s32 1, %v8263
        %v8265 = vrot.slane %v8201, %v8264
        %v8282 = vmul.f32 %v8144, %v8205
        %v8283 = vmul.f32 %v8145, %v8209
        %v8284 = vmul.f32 %v8146, %v8205
        %v8285 = vmul.f32 %v8147, %v8209
        %v8286 = vmul.f32 %v8144, %v8213
        %v8287 = vmul.f32 %v8145, %v8217
        %v8288 = vmul.f32 %v8146, %v8213
        %v8289 = vmul.f32 %v8147, %v8217
        %v8290 = vmul.f32 %v8144, %v8221
        %v8291 = vmul.f32 %v8145, %v8225
        %v8292 = vmul.f32 %v8146, %v8221
        %v8293 = vmul.f32 %v8147, %v8225
        %v8294 = vmul.f32 %v8144, %v8229
        %v8295 = vmul.f32 %v8145, %v8233
        %v8296 = vmul.f32 %v8146, %v8229
        %v8297 = vmul.f32 %v8147, %v8233
        %v8298 = vmul.f32 %v8144, %v8237
        %v8299 = vmul.f32 %v8145, %v8241
        %v8300 = vmul.f32 %v8146, %v8237
        %v8301 = vmul.f32 %v8147, %v8241
        %v8302 = vmul.f32 %v8144, %v8245
        %v8303 = vmul.f32 %v8145, %v8249
        %v8304 = vmul.f32 %v8146, %v8245
        %v8305 = vmul.f32 %v8147, %v8249
        %v8306 = vmul.f32 %v8144, %v8253
        %v8307 = vmul.f32 %v8145, %v8257
        %v8308 = vmul.f32 %v8146, %v8253
        %v8309 = vmul.f32 %v8147, %v8257
        %v8310 = vmul.f32 %v8144, %v8261
        %v8311 = vmul.f32 %v8145, %v8265
        %v8312 = vmul.f32 %v8146, %v8261
        %v8313 = vmul.f32 %v8147, %v8265
        %v8314 = vadd.f32 %v8111, %v8282
        %v8315 = vadd.f32 %v8112, %v8283
        %v8316 = vadd.f32 %v8113, %v8284
        %v8317 = vadd.f32 %v8114, %v8285
        %v8318 = vadd.f32 %v8115, %v8286
        %v8319 = vadd.f32 %v8116, %v8287
        %v8320 = vadd.f32 %v8117, %v8288
        %v8321 = vadd.f32 %v8118, %v8289
        %v8322 = vadd.f32 %v8119, %v8290
        %v8323 = vadd.f32 %v8120, %v8291
        %v8324 = vadd.f32 %v8121, %v8292
        %v8325 = vadd.f32 %v8122, %v8293
        %v8326 = vadd.f32 %v8123, %v8294
        %v8327 = vadd.f32 %v8124, %v8295
        %v8328 = vadd.f32 %v8125, %v8296
        %v8329 = vadd.f32 %v8126, %v8297
        %v8330 = vadd.f32 %v8127, %v8298
        %v8331 = vadd.f32 %v8128, %v8299
        %v8332 = vadd.f32 %v8129, %v8300
        %v8333 = vadd.f32 %v8130, %v8301
        %v8334 = vadd.f32 %v8131, %v8302
        %v8335 = vadd.f32 %v8132, %v8303
        %v8336 = vadd.f32 %v8133, %v8304
        %v8337 = vadd.f32 %v8134, %v8305
        %v8338 = vadd.f32 %v8135, %v8306
        %v8339 = vadd.f32 %v8136, %v8307
        %v8340 = vadd.f32 %v8137, %v8308
        %v8341 = vadd.f32 %v8138, %v8309
        %v8342 = vadd.f32 %v8139, %v8310
        %v8343 = vadd.f32 %v8140, %v8311
        %v8344 = vadd.f32 %v8141, %v8312
        %v8345 = vadd.f32 %v8142, %v8313
        %s8346 = scalar_lea.vmem [#allocation2], 640
        %v8347 = vld [vmem:[%s8346] sm:$0xff]
        %v8348 = vld [vmem:[%s8346 + $0x8] sm:$0xff]
        %v8349 = vld [vmem:[%s8346 + $0x10] sm:$0xff]
        %v8350 = vld [vmem:[%s8346 + $0x18] sm:$0xff]
        %v8351 = vld [vmem:[%s964] sm:$0xff]
        %v8352 = vld [vmem:[%s964 + $0x8] sm:$0xff]
        %v8355 = vcombine.low %v8351, %v8352
        %v8356 = vcombine.high %v8351, %v8352
        %v8358 = vunpack.c.l.s4 1966171168
        %v8359 = vunpack.c.0.s8 %v8358
        %v8360 = vlaneseq
        %v8361 = vshrl.u32 %v8360, 7
        %v8362 = vsub.s32 %v8359, %v8361
        %v8363 = vrot.slane %v8355, %v8362
        %v8365 = vunpack.c.l.s4 1966171168
        %v8366 = vunpack.c.0.s8 %v8365
        %v8367 = vlaneseq
        %v8368 = vshrl.u32 %v8367, 7
        %v8369 = vsub.s32 %v8366, %v8368
        %v8370 = vrot.slane %v8356, %v8369
        %v8371 = vcombine.high %v8363, %v8363
        %v8372 = vcombine.high %v8370, %v8370
        %v8374 = vunpack.c.l.s4 1966171168
        %v8375 = vunpack.c.0.s8 %v8374
        %v8376 = vlaneseq
        %v8377 = vshrl.u32 %v8376, 7
        %v8378 = vsub.s32 %v8375, %v8377
        %v8379 = vrot.slane %v8363, %v8378
        %v8381 = vunpack.c.l.s4 1966171168
        %v8382 = vunpack.c.0.s8 %v8381
        %v8383 = vlaneseq
        %v8384 = vshrl.u32 %v8383, 7
        %v8385 = vsub.s32 %v8382, %v8384
        %v8386 = vrot.slane %v8370, %v8385
        %v8388 = vunpack.c.l.s4 1966171168
        %v8389 = vunpack.c.0.s8 %v8388
        %v8390 = vlaneseq
        %v8391 = vshrl.u32 %v8390, 7
        %v8392 = vsub.s32 %v8389, %v8391
        %v8393 = vrot.slane %v8371, %v8392
        %v8395 = vunpack.c.l.s4 1966171168
        %v8396 = vunpack.c.0.s8 %v8395
        %v8397 = vlaneseq
        %v8398 = vshrl.u32 %v8397, 7
        %v8399 = vsub.s32 %v8396, %v8398
        %v8400 = vrot.slane %v8372, %v8399
        %v8401 = vcombine.high %v8379, %v8379
        %v8402 = vcombine.high %v8386, %v8386
        %v8403 = vcombine.high %v8393, %v8393
        %v8404 = vcombine.high %v8400, %v8400
        %v8405 = vlaneseq
        %v8406 = vshrl.u32 %v8405, 7
        %v8407 = vsub.s32 0, %v8406
        %v8408 = vrot.slane %v8379, %v8407
        %v8409 = vlaneseq
        %v8410 = vshrl.u32 %v8409, 7
        %v8411 = vsub.s32 1, %v8410
        %v8412 = vrot.slane %v8379, %v8411
        %v8413 = vlaneseq
        %v8414 = vshrl.u32 %v8413, 7
        %v8415 = vsub.s32 0, %v8414
        %v8416 = vrot.slane %v8393, %v8415
        %v8417 = vlaneseq
        %v8418 = vshrl.u32 %v8417, 7
        %v8419 = vsub.s32 1, %v8418
        %v8420 = vrot.slane %v8393, %v8419
        %v8421 = vlaneseq
        %v8422 = vshrl.u32 %v8421, 7
        %v8423 = vsub.s32 0, %v8422
        %v8424 = vrot.slane %v8401, %v8423
        %v8425 = vlaneseq
        %v8426 = vshrl.u32 %v8425, 7
        %v8427 = vsub.s32 1, %v8426
        %v8428 = vrot.slane %v8401, %v8427
        %v8429 = vlaneseq
        %v8430 = vshrl.u32 %v8429, 7
        %v8431 = vsub.s32 0, %v8430
        %v8432 = vrot.slane %v8403, %v8431
        %v8433 = vlaneseq
        %v8434 = vshrl.u32 %v8433, 7
        %v8435 = vsub.s32 1, %v8434
        %v8436 = vrot.slane %v8403, %v8435
        %v8437 = vlaneseq
        %v8438 = vshrl.u32 %v8437, 7
        %v8439 = vsub.s32 0, %v8438
        %v8440 = vrot.slane %v8386, %v8439
        %v8441 = vlaneseq
        %v8442 = vshrl.u32 %v8441, 7
        %v8443 = vsub.s32 1, %v8442
        %v8444 = vrot.slane %v8386, %v8443
        %v8445 = vlaneseq
        %v8446 = vshrl.u32 %v8445, 7
        %v8447 = vsub.s32 0, %v8446
        %v8448 = vrot.slane %v8400, %v8447
        %v8449 = vlaneseq
        %v8450 = vshrl.u32 %v8449, 7
        %v8451 = vsub.s32 1, %v8450
        %v8452 = vrot.slane %v8400, %v8451
        %v8453 = vlaneseq
        %v8454 = vshrl.u32 %v8453, 7
        %v8455 = vsub.s32 0, %v8454
        %v8456 = vrot.slane %v8402, %v8455
        %v8457 = vlaneseq
        %v8458 = vshrl.u32 %v8457, 7
        %v8459 = vsub.s32 1, %v8458
        %v8460 = vrot.slane %v8402, %v8459
        %v8461 = vlaneseq
        %v8462 = vshrl.u32 %v8461, 7
        %v8463 = vsub.s32 0, %v8462
        %v8464 = vrot.slane %v8404, %v8463
        %v8465 = vlaneseq
        %v8466 = vshrl.u32 %v8465, 7
        %v8467 = vsub.s32 1, %v8466
        %v8468 = vrot.slane %v8404, %v8467
        %v8485 = vmul.f32 %v8347, %v8408
        %v8486 = vmul.f32 %v8348, %v8412
        %v8487 = vmul.f32 %v8349, %v8408
        %v8488 = vmul.f32 %v8350, %v8412
        %v8489 = vmul.f32 %v8347, %v8416
        %v8490 = vmul.f32 %v8348, %v8420
        %v8491 = vmul.f32 %v8349, %v8416
        %v8492 = vmul.f32 %v8350, %v8420
        %v8493 = vmul.f32 %v8347, %v8424
        %v8494 = vmul.f32 %v8348, %v8428
        %v8495 = vmul.f32 %v8349, %v8424
        %v8496 = vmul.f32 %v8350, %v8428
        %v8497 = vmul.f32 %v8347, %v8432
        %v8498 = vmul.f32 %v8348, %v8436
        %v8499 = vmul.f32 %v8349, %v8432
        %v8500 = vmul.f32 %v8350, %v8436
        %v8501 = vmul.f32 %v8347, %v8440
        %v8502 = vmul.f32 %v8348, %v8444
        %v8503 = vmul.f32 %v8349, %v8440
        %v8504 = vmul.f32 %v8350, %v8444
        %v8505 = vmul.f32 %v8347, %v8448
        %v8506 = vmul.f32 %v8348, %v8452
        %v8507 = vmul.f32 %v8349, %v8448
        %v8508 = vmul.f32 %v8350, %v8452
        %v8509 = vmul.f32 %v8347, %v8456
        %v8510 = vmul.f32 %v8348, %v8460
        %v8511 = vmul.f32 %v8349, %v8456
        %v8512 = vmul.f32 %v8350, %v8460
        %v8513 = vmul.f32 %v8347, %v8464
        %v8514 = vmul.f32 %v8348, %v8468
        %v8515 = vmul.f32 %v8349, %v8464
        %v8516 = vmul.f32 %v8350, %v8468
        %v8517 = vadd.f32 %v8314, %v8485
        %v8518 = vadd.f32 %v8315, %v8486
        %v8519 = vadd.f32 %v8316, %v8487
        %v8520 = vadd.f32 %v8317, %v8488
        %v8521 = vadd.f32 %v8318, %v8489
        %v8522 = vadd.f32 %v8319, %v8490
        %v8523 = vadd.f32 %v8320, %v8491
        %v8524 = vadd.f32 %v8321, %v8492
        %v8525 = vadd.f32 %v8322, %v8493
        %v8526 = vadd.f32 %v8323, %v8494
        %v8527 = vadd.f32 %v8324, %v8495
        %v8528 = vadd.f32 %v8325, %v8496
        %v8529 = vadd.f32 %v8326, %v8497
        %v8530 = vadd.f32 %v8327, %v8498
        %v8531 = vadd.f32 %v8328, %v8499
        %v8532 = vadd.f32 %v8329, %v8500
        %v8533 = vadd.f32 %v8330, %v8501
        %v8534 = vadd.f32 %v8331, %v8502
        %v8535 = vadd.f32 %v8332, %v8503
        %v8536 = vadd.f32 %v8333, %v8504
        %v8537 = vadd.f32 %v8334, %v8505
        %v8538 = vadd.f32 %v8335, %v8506
        %v8539 = vadd.f32 %v8336, %v8507
        %v8540 = vadd.f32 %v8337, %v8508
        %v8541 = vadd.f32 %v8338, %v8509
        %v8542 = vadd.f32 %v8339, %v8510
        %v8543 = vadd.f32 %v8340, %v8511
        %v8544 = vadd.f32 %v8341, %v8512
        %v8545 = vadd.f32 %v8342, %v8513
        %v8546 = vadd.f32 %v8343, %v8514
        %v8547 = vadd.f32 %v8344, %v8515
        %v8548 = vadd.f32 %v8345, %v8516
        %s8549 = scalar_lea.vmem [#allocation2], 672
        %v8550 = vld [vmem:[%s8549] sm:$0xff]
        %v8551 = vld [vmem:[%s8549 + $0x8] sm:$0xff]
        %v8552 = vld [vmem:[%s8549 + $0x10] sm:$0xff]
        %v8553 = vld [vmem:[%s8549 + $0x18] sm:$0xff]
        %v8554 = vld [vmem:[%s1168] sm:$0xff]
        %v8555 = vld [vmem:[%s1168 + $0x8] sm:$0xff]
        %v8558 = vcombine.low %v8554, %v8555
        %v8559 = vcombine.high %v8554, %v8555
        %v8561 = vunpack.c.l.s4 1966171168
        %v8562 = vunpack.c.0.s8 %v8561
        %v8563 = vlaneseq
        %v8564 = vshrl.u32 %v8563, 7
        %v8565 = vsub.s32 %v8562, %v8564
        %v8566 = vrot.slane %v8558, %v8565
        %v8568 = vunpack.c.l.s4 1966171168
        %v8569 = vunpack.c.0.s8 %v8568
        %v8570 = vlaneseq
        %v8571 = vshrl.u32 %v8570, 7
        %v8572 = vsub.s32 %v8569, %v8571
        %v8573 = vrot.slane %v8559, %v8572
        %v8574 = vcombine.high %v8566, %v8566
        %v8575 = vcombine.high %v8573, %v8573
        %v8577 = vunpack.c.l.s4 1966171168
        %v8578 = vunpack.c.0.s8 %v8577
        %v8579 = vlaneseq
        %v8580 = vshrl.u32 %v8579, 7
        %v8581 = vsub.s32 %v8578, %v8580
        %v8582 = vrot.slane %v8566, %v8581
        %v8584 = vunpack.c.l.s4 1966171168
        %v8585 = vunpack.c.0.s8 %v8584
        %v8586 = vlaneseq
        %v8587 = vshrl.u32 %v8586, 7
        %v8588 = vsub.s32 %v8585, %v8587
        %v8589 = vrot.slane %v8573, %v8588
        %v8591 = vunpack.c.l.s4 1966171168
        %v8592 = vunpack.c.0.s8 %v8591
        %v8593 = vlaneseq
        %v8594 = vshrl.u32 %v8593, 7
        %v8595 = vsub.s32 %v8592, %v8594
        %v8596 = vrot.slane %v8574, %v8595
        %v8598 = vunpack.c.l.s4 1966171168
        %v8599 = vunpack.c.0.s8 %v8598
        %v8600 = vlaneseq
        %v8601 = vshrl.u32 %v8600, 7
        %v8602 = vsub.s32 %v8599, %v8601
        %v8603 = vrot.slane %v8575, %v8602
        %v8604 = vcombine.high %v8582, %v8582
        %v8605 = vcombine.high %v8589, %v8589
        %v8606 = vcombine.high %v8596, %v8596
        %v8607 = vcombine.high %v8603, %v8603
        %v8608 = vlaneseq
        %v8609 = vshrl.u32 %v8608, 7
        %v8610 = vsub.s32 0, %v8609
        %v8611 = vrot.slane %v8582, %v8610
        %v8612 = vlaneseq
        %v8613 = vshrl.u32 %v8612, 7
        %v8614 = vsub.s32 1, %v8613
        %v8615 = vrot.slane %v8582, %v8614
        %v8616 = vlaneseq
        %v8617 = vshrl.u32 %v8616, 7
        %v8618 = vsub.s32 0, %v8617
        %v8619 = vrot.slane %v8596, %v8618
        %v8620 = vlaneseq
        %v8621 = vshrl.u32 %v8620, 7
        %v8622 = vsub.s32 1, %v8621
        %v8623 = vrot.slane %v8596, %v8622
        %v8624 = vlaneseq
        %v8625 = vshrl.u32 %v8624, 7
        %v8626 = vsub.s32 0, %v8625
        %v8627 = vrot.slane %v8604, %v8626
        %v8628 = vlaneseq
        %v8629 = vshrl.u32 %v8628, 7
        %v8630 = vsub.s32 1, %v8629
        %v8631 = vrot.slane %v8604, %v8630
        %v8632 = vlaneseq
        %v8633 = vshrl.u32 %v8632, 7
        %v8634 = vsub.s32 0, %v8633
        %v8635 = vrot.slane %v8606, %v8634
        %v8636 = vlaneseq
        %v8637 = vshrl.u32 %v8636, 7
        %v8638 = vsub.s32 1, %v8637
        %v8639 = vrot.slane %v8606, %v8638
        %v8640 = vlaneseq
        %v8641 = vshrl.u32 %v8640, 7
        %v8642 = vsub.s32 0, %v8641
        %v8643 = vrot.slane %v8589, %v8642
        %v8644 = vlaneseq
        %v8645 = vshrl.u32 %v8644, 7
        %v8646 = vsub.s32 1, %v8645
        %v8647 = vrot.slane %v8589, %v8646
        %v8648 = vlaneseq
        %v8649 = vshrl.u32 %v8648, 7
        %v8650 = vsub.s32 0, %v8649
        %v8651 = vrot.slane %v8603, %v8650
        %v8652 = vlaneseq
        %v8653 = vshrl.u32 %v8652, 7
        %v8654 = vsub.s32 1, %v8653
        %v8655 = vrot.slane %v8603, %v8654
        %v8656 = vlaneseq
        %v8657 = vshrl.u32 %v8656, 7
        %v8658 = vsub.s32 0, %v8657
        %v8659 = vrot.slane %v8605, %v8658
        %v8660 = vlaneseq
        %v8661 = vshrl.u32 %v8660, 7
        %v8662 = vsub.s32 1, %v8661
        %v8663 = vrot.slane %v8605, %v8662
        %v8664 = vlaneseq
        %v8665 = vshrl.u32 %v8664, 7
        %v8666 = vsub.s32 0, %v8665
        %v8667 = vrot.slane %v8607, %v8666
        %v8668 = vlaneseq
        %v8669 = vshrl.u32 %v8668, 7
        %v8670 = vsub.s32 1, %v8669
        %v8671 = vrot.slane %v8607, %v8670
        %v8688 = vmul.f32 %v8550, %v8611
        %v8689 = vmul.f32 %v8551, %v8615
        %v8690 = vmul.f32 %v8552, %v8611
        %v8691 = vmul.f32 %v8553, %v8615
        %v8692 = vmul.f32 %v8550, %v8619
        %v8693 = vmul.f32 %v8551, %v8623
        %v8694 = vmul.f32 %v8552, %v8619
        %v8695 = vmul.f32 %v8553, %v8623
        %v8696 = vmul.f32 %v8550, %v8627
        %v8697 = vmul.f32 %v8551, %v8631
        %v8698 = vmul.f32 %v8552, %v8627
        %v8699 = vmul.f32 %v8553, %v8631
        %v8700 = vmul.f32 %v8550, %v8635
        %v8701 = vmul.f32 %v8551, %v8639
        %v8702 = vmul.f32 %v8552, %v8635
        %v8703 = vmul.f32 %v8553, %v8639
        %v8704 = vmul.f32 %v8550, %v8643
        %v8705 = vmul.f32 %v8551, %v8647
        %v8706 = vmul.f32 %v8552, %v8643
        %v8707 = vmul.f32 %v8553, %v8647
        %v8708 = vmul.f32 %v8550, %v8651
        %v8709 = vmul.f32 %v8551, %v8655
        %v8710 = vmul.f32 %v8552, %v8651
        %v8711 = vmul.f32 %v8553, %v8655
        %v8712 = vmul.f32 %v8550, %v8659
        %v8713 = vmul.f32 %v8551, %v8663
        %v8714 = vmul.f32 %v8552, %v8659
        %v8715 = vmul.f32 %v8553, %v8663
        %v8716 = vmul.f32 %v8550, %v8667
        %v8717 = vmul.f32 %v8551, %v8671
        %v8718 = vmul.f32 %v8552, %v8667
        %v8719 = vmul.f32 %v8553, %v8671
        %v8720 = vadd.f32 %v8517, %v8688
        %v8721 = vadd.f32 %v8518, %v8689
        %v8722 = vadd.f32 %v8519, %v8690
        %v8723 = vadd.f32 %v8520, %v8691
        %v8724 = vadd.f32 %v8521, %v8692
        %v8725 = vadd.f32 %v8522, %v8693
        %v8726 = vadd.f32 %v8523, %v8694
        %v8727 = vadd.f32 %v8524, %v8695
        %v8728 = vadd.f32 %v8525, %v8696
        %v8729 = vadd.f32 %v8526, %v8697
        %v8730 = vadd.f32 %v8527, %v8698
        %v8731 = vadd.f32 %v8528, %v8699
        %v8732 = vadd.f32 %v8529, %v8700
        %v8733 = vadd.f32 %v8530, %v8701
        %v8734 = vadd.f32 %v8531, %v8702
        %v8735 = vadd.f32 %v8532, %v8703
        %v8736 = vadd.f32 %v8533, %v8704
        %v8737 = vadd.f32 %v8534, %v8705
        %v8738 = vadd.f32 %v8535, %v8706
        %v8739 = vadd.f32 %v8536, %v8707
        %v8740 = vadd.f32 %v8537, %v8708
        %v8741 = vadd.f32 %v8538, %v8709
        %v8742 = vadd.f32 %v8539, %v8710
        %v8743 = vadd.f32 %v8540, %v8711
        %v8744 = vadd.f32 %v8541, %v8712
        %v8745 = vadd.f32 %v8542, %v8713
        %v8746 = vadd.f32 %v8543, %v8714
        %v8747 = vadd.f32 %v8544, %v8715
        %v8748 = vadd.f32 %v8545, %v8716
        %v8749 = vadd.f32 %v8546, %v8717
        %v8750 = vadd.f32 %v8547, %v8718
        %v8751 = vadd.f32 %v8548, %v8719
        %s8752 = scalar_lea.vmem [#allocation2], 704
        %v8753 = vld [vmem:[%s8752] sm:$0xff]
        %v8754 = vld [vmem:[%s8752 + $0x8] sm:$0xff]
        %v8755 = vld [vmem:[%s8752 + $0x10] sm:$0xff]
        %v8756 = vld [vmem:[%s8752 + $0x18] sm:$0xff]
        %v8757 = vld [vmem:[%s1372] sm:$0xff]
        %v8758 = vld [vmem:[%s1372 + $0x8] sm:$0xff]
        %v8761 = vcombine.low %v8757, %v8758
        %v8762 = vcombine.high %v8757, %v8758
        %v8764 = vunpack.c.l.s4 1966171168
        %v8765 = vunpack.c.0.s8 %v8764
        %v8766 = vlaneseq
        %v8767 = vshrl.u32 %v8766, 7
        %v8768 = vsub.s32 %v8765, %v8767
        %v8769 = vrot.slane %v8761, %v8768
        %v8771 = vunpack.c.l.s4 1966171168
        %v8772 = vunpack.c.0.s8 %v8771
        %v8773 = vlaneseq
        %v8774 = vshrl.u32 %v8773, 7
        %v8775 = vsub.s32 %v8772, %v8774
        %v8776 = vrot.slane %v8762, %v8775
        %v8777 = vcombine.high %v8769, %v8769
        %v8778 = vcombine.high %v8776, %v8776
        %v8780 = vunpack.c.l.s4 1966171168
        %v8781 = vunpack.c.0.s8 %v8780
        %v8782 = vlaneseq
        %v8783 = vshrl.u32 %v8782, 7
        %v8784 = vsub.s32 %v8781, %v8783
        %v8785 = vrot.slane %v8769, %v8784
        %v8787 = vunpack.c.l.s4 1966171168
        %v8788 = vunpack.c.0.s8 %v8787
        %v8789 = vlaneseq
        %v8790 = vshrl.u32 %v8789, 7
        %v8791 = vsub.s32 %v8788, %v8790
        %v8792 = vrot.slane %v8776, %v8791
        %v8794 = vunpack.c.l.s4 1966171168
        %v8795 = vunpack.c.0.s8 %v8794
        %v8796 = vlaneseq
        %v8797 = vshrl.u32 %v8796, 7
        %v8798 = vsub.s32 %v8795, %v8797
        %v8799 = vrot.slane %v8777, %v8798
        %v8801 = vunpack.c.l.s4 1966171168
        %v8802 = vunpack.c.0.s8 %v8801
        %v8803 = vlaneseq
        %v8804 = vshrl.u32 %v8803, 7
        %v8805 = vsub.s32 %v8802, %v8804
        %v8806 = vrot.slane %v8778, %v8805
        %v8807 = vcombine.high %v8785, %v8785
        %v8808 = vcombine.high %v8792, %v8792
        %v8809 = vcombine.high %v8799, %v8799
        %v8810 = vcombine.high %v8806, %v8806
        %v8811 = vlaneseq
        %v8812 = vshrl.u32 %v8811, 7
        %v8813 = vsub.s32 0, %v8812
        %v8814 = vrot.slane %v8785, %v8813
        %v8815 = vlaneseq
        %v8816 = vshrl.u32 %v8815, 7
        %v8817 = vsub.s32 1, %v8816
        %v8818 = vrot.slane %v8785, %v8817
        %v8819 = vlaneseq
        %v8820 = vshrl.u32 %v8819, 7
        %v8821 = vsub.s32 0, %v8820
        %v8822 = vrot.slane %v8799, %v8821
        %v8823 = vlaneseq
        %v8824 = vshrl.u32 %v8823, 7
        %v8825 = vsub.s32 1, %v8824
        %v8826 = vrot.slane %v8799, %v8825
        %v8827 = vlaneseq
        %v8828 = vshrl.u32 %v8827, 7
        %v8829 = vsub.s32 0, %v8828
        %v8830 = vrot.slane %v8807, %v8829
        %v8831 = vlaneseq
        %v8832 = vshrl.u32 %v8831, 7
        %v8833 = vsub.s32 1, %v8832
        %v8834 = vrot.slane %v8807, %v8833
        %v8835 = vlaneseq
        %v8836 = vshrl.u32 %v8835, 7
        %v8837 = vsub.s32 0, %v8836
        %v8838 = vrot.slane %v8809, %v8837
        %v8839 = vlaneseq
        %v8840 = vshrl.u32 %v8839, 7
        %v8841 = vsub.s32 1, %v8840
        %v8842 = vrot.slane %v8809, %v8841
        %v8843 = vlaneseq
        %v8844 = vshrl.u32 %v8843, 7
        %v8845 = vsub.s32 0, %v8844
        %v8846 = vrot.slane %v8792, %v8845
        %v8847 = vlaneseq
        %v8848 = vshrl.u32 %v8847, 7
        %v8849 = vsub.s32 1, %v8848
        %v8850 = vrot.slane %v8792, %v8849
        %v8851 = vlaneseq
        %v8852 = vshrl.u32 %v8851, 7
        %v8853 = vsub.s32 0, %v8852
        %v8854 = vrot.slane %v8806, %v8853
        %v8855 = vlaneseq
        %v8856 = vshrl.u32 %v8855, 7
        %v8857 = vsub.s32 1, %v8856
        %v8858 = vrot.slane %v8806, %v8857
        %v8859 = vlaneseq
        %v8860 = vshrl.u32 %v8859, 7
        %v8861 = vsub.s32 0, %v8860
        %v8862 = vrot.slane %v8808, %v8861
        %v8863 = vlaneseq
        %v8864 = vshrl.u32 %v8863, 7
        %v8865 = vsub.s32 1, %v8864
        %v8866 = vrot.slane %v8808, %v8865
        %v8867 = vlaneseq
        %v8868 = vshrl.u32 %v8867, 7
        %v8869 = vsub.s32 0, %v8868
        %v8870 = vrot.slane %v8810, %v8869
        %v8871 = vlaneseq
        %v8872 = vshrl.u32 %v8871, 7
        %v8873 = vsub.s32 1, %v8872
        %v8874 = vrot.slane %v8810, %v8873
        %v8891 = vmul.f32 %v8753, %v8814
        %v8892 = vmul.f32 %v8754, %v8818
        %v8893 = vmul.f32 %v8755, %v8814
        %v8894 = vmul.f32 %v8756, %v8818
        %v8895 = vmul.f32 %v8753, %v8822
        %v8896 = vmul.f32 %v8754, %v8826
        %v8897 = vmul.f32 %v8755, %v8822
        %v8898 = vmul.f32 %v8756, %v8826
        %v8899 = vmul.f32 %v8753, %v8830
        %v8900 = vmul.f32 %v8754, %v8834
        %v8901 = vmul.f32 %v8755, %v8830
        %v8902 = vmul.f32 %v8756, %v8834
        %v8903 = vmul.f32 %v8753, %v8838
        %v8904 = vmul.f32 %v8754, %v8842
        %v8905 = vmul.f32 %v8755, %v8838
        %v8906 = vmul.f32 %v8756, %v8842
        %v8907 = vmul.f32 %v8753, %v8846
        %v8908 = vmul.f32 %v8754, %v8850
        %v8909 = vmul.f32 %v8755, %v8846
        %v8910 = vmul.f32 %v8756, %v8850
        %v8911 = vmul.f32 %v8753, %v8854
        %v8912 = vmul.f32 %v8754, %v8858
        %v8913 = vmul.f32 %v8755, %v8854
        %v8914 = vmul.f32 %v8756, %v8858
        %v8915 = vmul.f32 %v8753, %v8862
        %v8916 = vmul.f32 %v8754, %v8866
        %v8917 = vmul.f32 %v8755, %v8862
        %v8918 = vmul.f32 %v8756, %v8866
        %v8919 = vmul.f32 %v8753, %v8870
        %v8920 = vmul.f32 %v8754, %v8874
        %v8921 = vmul.f32 %v8755, %v8870
        %v8922 = vmul.f32 %v8756, %v8874
        %v8923 = vadd.f32 %v8720, %v8891
        %v8924 = vadd.f32 %v8721, %v8892
        %v8925 = vadd.f32 %v8722, %v8893
        %v8926 = vadd.f32 %v8723, %v8894
        %v8927 = vadd.f32 %v8724, %v8895
        %v8928 = vadd.f32 %v8725, %v8896
        %v8929 = vadd.f32 %v8726, %v8897
        %v8930 = vadd.f32 %v8727, %v8898
        %v8931 = vadd.f32 %v8728, %v8899
        %v8932 = vadd.f32 %v8729, %v8900
        %v8933 = vadd.f32 %v8730, %v8901
        %v8934 = vadd.f32 %v8731, %v8902
        %v8935 = vadd.f32 %v8732, %v8903
        %v8936 = vadd.f32 %v8733, %v8904
        %v8937 = vadd.f32 %v8734, %v8905
        %v8938 = vadd.f32 %v8735, %v8906
        %v8939 = vadd.f32 %v8736, %v8907
        %v8940 = vadd.f32 %v8737, %v8908
        %v8941 = vadd.f32 %v8738, %v8909
        %v8942 = vadd.f32 %v8739, %v8910
        %v8943 = vadd.f32 %v8740, %v8911
        %v8944 = vadd.f32 %v8741, %v8912
        %v8945 = vadd.f32 %v8742, %v8913
        %v8946 = vadd.f32 %v8743, %v8914
        %v8947 = vadd.f32 %v8744, %v8915
        %v8948 = vadd.f32 %v8745, %v8916
        %v8949 = vadd.f32 %v8746, %v8917
        %v8950 = vadd.f32 %v8747, %v8918
        %v8951 = vadd.f32 %v8748, %v8919
        %v8952 = vadd.f32 %v8749, %v8920
        %v8953 = vadd.f32 %v8750, %v8921
        %v8954 = vadd.f32 %v8751, %v8922
        %s8955 = scalar_lea.vmem [#allocation2], 736
        %v8956 = vld [vmem:[%s8955] sm:$0xff]
        %v8957 = vld [vmem:[%s8955 + $0x8] sm:$0xff]
        %v8958 = vld [vmem:[%s8955 + $0x10] sm:$0xff]
        %v8959 = vld [vmem:[%s8955 + $0x18] sm:$0xff]
        %v8960 = vld [vmem:[%s1576] sm:$0xff]
        %v8961 = vld [vmem:[%s1576 + $0x8] sm:$0xff]
        %v8964 = vcombine.low %v8960, %v8961
        %v8965 = vcombine.high %v8960, %v8961
        %v8967 = vunpack.c.l.s4 1966171168
        %v8968 = vunpack.c.0.s8 %v8967
        %v8969 = vlaneseq
        %v8970 = vshrl.u32 %v8969, 7
        %v8971 = vsub.s32 %v8968, %v8970
        %v8972 = vrot.slane %v8964, %v8971
        %v8974 = vunpack.c.l.s4 1966171168
        %v8975 = vunpack.c.0.s8 %v8974
        %v8976 = vlaneseq
        %v8977 = vshrl.u32 %v8976, 7
        %v8978 = vsub.s32 %v8975, %v8977
        %v8979 = vrot.slane %v8965, %v8978
        %v8980 = vcombine.high %v8972, %v8972
        %v8981 = vcombine.high %v8979, %v8979
        %v8983 = vunpack.c.l.s4 1966171168
        %v8984 = vunpack.c.0.s8 %v8983
        %v8985 = vlaneseq
        %v8986 = vshrl.u32 %v8985, 7
        %v8987 = vsub.s32 %v8984, %v8986
        %v8988 = vrot.slane %v8972, %v8987
        %v8990 = vunpack.c.l.s4 1966171168
        %v8991 = vunpack.c.0.s8 %v8990
        %v8992 = vlaneseq
        %v8993 = vshrl.u32 %v8992, 7
        %v8994 = vsub.s32 %v8991, %v8993
        %v8995 = vrot.slane %v8979, %v8994
        %v8997 = vunpack.c.l.s4 1966171168
        %v8998 = vunpack.c.0.s8 %v8997
        %v8999 = vlaneseq
        %v9000 = vshrl.u32 %v8999, 7
        %v9001 = vsub.s32 %v8998, %v9000
        %v9002 = vrot.slane %v8980, %v9001
        %v9004 = vunpack.c.l.s4 1966171168
        %v9005 = vunpack.c.0.s8 %v9004
        %v9006 = vlaneseq
        %v9007 = vshrl.u32 %v9006, 7
        %v9008 = vsub.s32 %v9005, %v9007
        %v9009 = vrot.slane %v8981, %v9008
        %v9010 = vcombine.high %v8988, %v8988
        %v9011 = vcombine.high %v8995, %v8995
        %v9012 = vcombine.high %v9002, %v9002
        %v9013 = vcombine.high %v9009, %v9009
        %v9014 = vlaneseq
        %v9015 = vshrl.u32 %v9014, 7
        %v9016 = vsub.s32 0, %v9015
        %v9017 = vrot.slane %v8988, %v9016
        %v9018 = vlaneseq
        %v9019 = vshrl.u32 %v9018, 7
        %v9020 = vsub.s32 1, %v9019
        %v9021 = vrot.slane %v8988, %v9020
        %v9022 = vlaneseq
        %v9023 = vshrl.u32 %v9022, 7
        %v9024 = vsub.s32 0, %v9023
        %v9025 = vrot.slane %v9002, %v9024
        %v9026 = vlaneseq
        %v9027 = vshrl.u32 %v9026, 7
        %v9028 = vsub.s32 1, %v9027
        %v9029 = vrot.slane %v9002, %v9028
        %v9030 = vlaneseq
        %v9031 = vshrl.u32 %v9030, 7
        %v9032 = vsub.s32 0, %v9031
        %v9033 = vrot.slane %v9010, %v9032
        %v9034 = vlaneseq
        %v9035 = vshrl.u32 %v9034, 7
        %v9036 = vsub.s32 1, %v9035
        %v9037 = vrot.slane %v9010, %v9036
        %v9038 = vlaneseq
        %v9039 = vshrl.u32 %v9038, 7
        %v9040 = vsub.s32 0, %v9039
        %v9041 = vrot.slane %v9012, %v9040
        %v9042 = vlaneseq
        %v9043 = vshrl.u32 %v9042, 7
        %v9044 = vsub.s32 1, %v9043
        %v9045 = vrot.slane %v9012, %v9044
        %v9046 = vlaneseq
        %v9047 = vshrl.u32 %v9046, 7
        %v9048 = vsub.s32 0, %v9047
        %v9049 = vrot.slane %v8995, %v9048
        %v9050 = vlaneseq
        %v9051 = vshrl.u32 %v9050, 7
        %v9052 = vsub.s32 1, %v9051
        %v9053 = vrot.slane %v8995, %v9052
        %v9054 = vlaneseq
        %v9055 = vshrl.u32 %v9054, 7
        %v9056 = vsub.s32 0, %v9055
        %v9057 = vrot.slane %v9009, %v9056
        %v9058 = vlaneseq
        %v9059 = vshrl.u32 %v9058, 7
        %v9060 = vsub.s32 1, %v9059
        %v9061 = vrot.slane %v9009, %v9060
        %v9062 = vlaneseq
        %v9063 = vshrl.u32 %v9062, 7
        %v9064 = vsub.s32 0, %v9063
        %v9065 = vrot.slane %v9011, %v9064
        %v9066 = vlaneseq
        %v9067 = vshrl.u32 %v9066, 7
        %v9068 = vsub.s32 1, %v9067
        %v9069 = vrot.slane %v9011, %v9068
        %v9070 = vlaneseq
        %v9071 = vshrl.u32 %v9070, 7
        %v9072 = vsub.s32 0, %v9071
        %v9073 = vrot.slane %v9013, %v9072
        %v9074 = vlaneseq
        %v9075 = vshrl.u32 %v9074, 7
        %v9076 = vsub.s32 1, %v9075
        %v9077 = vrot.slane %v9013, %v9076
        %v9094 = vmul.f32 %v8956, %v9017
        %v9095 = vmul.f32 %v8957, %v9021
        %v9096 = vmul.f32 %v8958, %v9017
        %v9097 = vmul.f32 %v8959, %v9021
        %v9098 = vmul.f32 %v8956, %v9025
        %v9099 = vmul.f32 %v8957, %v9029
        %v9100 = vmul.f32 %v8958, %v9025
        %v9101 = vmul.f32 %v8959, %v9029
        %v9102 = vmul.f32 %v8956, %v9033
        %v9103 = vmul.f32 %v8957, %v9037
        %v9104 = vmul.f32 %v8958, %v9033
        %v9105 = vmul.f32 %v8959, %v9037
        %v9106 = vmul.f32 %v8956, %v9041
        %v9107 = vmul.f32 %v8957, %v9045
        %v9108 = vmul.f32 %v8958, %v9041
        %v9109 = vmul.f32 %v8959, %v9045
        %v9110 = vmul.f32 %v8956, %v9049
        %v9111 = vmul.f32 %v8957, %v9053
        %v9112 = vmul.f32 %v8958, %v9049
        %v9113 = vmul.f32 %v8959, %v9053
        %v9114 = vmul.f32 %v8956, %v9057
        %v9115 = vmul.f32 %v8957, %v9061
        %v9116 = vmul.f32 %v8958, %v9057
        %v9117 = vmul.f32 %v8959, %v9061
        %v9118 = vmul.f32 %v8956, %v9065
        %v9119 = vmul.f32 %v8957, %v9069
        %v9120 = vmul.f32 %v8958, %v9065
        %v9121 = vmul.f32 %v8959, %v9069
        %v9122 = vmul.f32 %v8956, %v9073
        %v9123 = vmul.f32 %v8957, %v9077
        %v9124 = vmul.f32 %v8958, %v9073
        %v9125 = vmul.f32 %v8959, %v9077
        %v9126 = vadd.f32 %v8923, %v9094
        %v9127 = vadd.f32 %v8924, %v9095
        %v9128 = vadd.f32 %v8925, %v9096
        %v9129 = vadd.f32 %v8926, %v9097
        %v9130 = vadd.f32 %v8927, %v9098
        %v9131 = vadd.f32 %v8928, %v9099
        %v9132 = vadd.f32 %v8929, %v9100
        %v9133 = vadd.f32 %v8930, %v9101
        %v9134 = vadd.f32 %v8931, %v9102
        %v9135 = vadd.f32 %v8932, %v9103
        %v9136 = vadd.f32 %v8933, %v9104
        %v9137 = vadd.f32 %v8934, %v9105
        %v9138 = vadd.f32 %v8935, %v9106
        %v9139 = vadd.f32 %v8936, %v9107
        %v9140 = vadd.f32 %v8937, %v9108
        %v9141 = vadd.f32 %v8938, %v9109
        %v9142 = vadd.f32 %v8939, %v9110
        %v9143 = vadd.f32 %v8940, %v9111
        %v9144 = vadd.f32 %v8941, %v9112
        %v9145 = vadd.f32 %v8942, %v9113
        %v9146 = vadd.f32 %v8943, %v9114
        %v9147 = vadd.f32 %v8944, %v9115
        %v9148 = vadd.f32 %v8945, %v9116
        %v9149 = vadd.f32 %v8946, %v9117
        %v9150 = vadd.f32 %v8947, %v9118
        %v9151 = vadd.f32 %v8948, %v9119
        %v9152 = vadd.f32 %v8949, %v9120
        %v9153 = vadd.f32 %v8950, %v9121
        %v9154 = vadd.f32 %v8951, %v9122
        %v9155 = vadd.f32 %v8952, %v9123
        %v9156 = vadd.f32 %v8953, %v9124
        %v9157 = vadd.f32 %v8954, %v9125
        %v9158 = vadd.f32 %v9126, %v9127
        %9159 = vadd.xlane.f32.xlu0 %v9158
        %v9160 = vpop.xlane.xlu0 %9159
        %v9161 = vadd.f32 %v9128, %v9129
        %9162 = vadd.xlane.f32.xlu0 %v9161
        %v9163 = vpop.xlane.xlu0 %9162
        %v9164 = vadd.f32 %v9130, %v9131
        %9165 = vadd.xlane.f32.xlu0 %v9164
        %v9166 = vpop.xlane.xlu0 %9165
        %v9167 = vadd.f32 %v9132, %v9133
        %9168 = vadd.xlane.f32.xlu0 %v9167
        %v9169 = vpop.xlane.xlu0 %9168
        %v9170 = vadd.f32 %v9134, %v9135
        %9171 = vadd.xlane.f32.xlu0 %v9170
        %v9172 = vpop.xlane.xlu0 %9171
        %v9173 = vadd.f32 %v9136, %v9137
        %9174 = vadd.xlane.f32.xlu0 %v9173
        %v9175 = vpop.xlane.xlu0 %9174
        %v9176 = vadd.f32 %v9138, %v9139
        %9177 = vadd.xlane.f32.xlu0 %v9176
        %v9178 = vpop.xlane.xlu0 %9177
        %v9179 = vadd.f32 %v9140, %v9141
        %9180 = vadd.xlane.f32.xlu0 %v9179
        %v9181 = vpop.xlane.xlu0 %9180
        %v9182 = vadd.f32 %v9142, %v9143
        %9183 = vadd.xlane.f32.xlu0 %v9182
        %v9184 = vpop.xlane.xlu0 %9183
        %v9185 = vadd.f32 %v9144, %v9145
        %9186 = vadd.xlane.f32.xlu0 %v9185
        %v9187 = vpop.xlane.xlu0 %9186
        %v9188 = vadd.f32 %v9146, %v9147
        %9189 = vadd.xlane.f32.xlu0 %v9188
        %v9190 = vpop.xlane.xlu0 %9189
        %v9191 = vadd.f32 %v9148, %v9149
        %9192 = vadd.xlane.f32.xlu0 %v9191
        %v9193 = vpop.xlane.xlu0 %9192
        %v9194 = vadd.f32 %v9150, %v9151
        %9195 = vadd.xlane.f32.xlu0 %v9194
        %v9196 = vpop.xlane.xlu0 %9195
        %v9197 = vadd.f32 %v9152, %v9153
        %9198 = vadd.xlane.f32.xlu0 %v9197
        %v9199 = vpop.xlane.xlu0 %9198
        %v9200 = vadd.f32 %v9154, %v9155
        %9201 = vadd.xlane.f32.xlu0 %v9200
        %v9202 = vpop.xlane.xlu0 %9201
        %v9203 = vadd.f32 %v9156, %v9157
        %9204 = vadd.xlane.f32.xlu0 %v9203
        %v9205 = vpop.xlane.xlu0 %9204
        %v9206 = vmul.f32 %v9160, 0.00390625
        %v9207 = vmul.f32 %v9163, 0.00390625
        %v9208 = vmul.f32 %v9166, 0.00390625
        %v9209 = vmul.f32 %v9169, 0.00390625
        %v9210 = vmul.f32 %v9172, 0.00390625
        %v9211 = vmul.f32 %v9175, 0.00390625
        %v9212 = vmul.f32 %v9178, 0.00390625
        %v9213 = vmul.f32 %v9181, 0.00390625
        %v9214 = vmul.f32 %v9184, 0.00390625
        %v9215 = vmul.f32 %v9187, 0.00390625
        %v9216 = vmul.f32 %v9190, 0.00390625
        %v9217 = vmul.f32 %v9193, 0.00390625
        %v9218 = vmul.f32 %v9196, 0.00390625
        %v9219 = vmul.f32 %v9199, 0.00390625
        %v9220 = vmul.f32 %v9202, 0.00390625
        %v9221 = vmul.f32 %v9205, 0.00390625
        %v9222 = vmul.f32 %v9206, %v9206
        %v9223 = vmul.f32 %v9207, %v9207
        %v9224 = vmul.f32 %v9208, %v9208
        %v9225 = vmul.f32 %v9209, %v9209
        %v9226 = vmul.f32 %v9210, %v9210
        %v9227 = vmul.f32 %v9211, %v9211
        %v9228 = vmul.f32 %v9212, %v9212
        %v9229 = vmul.f32 %v9213, %v9213
        %v9230 = vmul.f32 %v9214, %v9214
        %v9231 = vmul.f32 %v9215, %v9215
        %v9232 = vmul.f32 %v9216, %v9216
        %v9233 = vmul.f32 %v9217, %v9217
        %v9234 = vmul.f32 %v9218, %v9218
        %v9235 = vmul.f32 %v9219, %v9219
        %v9236 = vmul.f32 %v9220, %v9220
        %v9237 = vmul.f32 %v9221, %v9221
        %v9254 = vlaneseq
        %v9255 = vshrl.u32 %v9254, 7
        %v9256 = vsub.s32 %v1872, %v9255
        %v9257 = vrot.slane %v9222, %v9256
        %v9258 = vlaneseq
        %v9259 = vshrl.u32 %v9258, 7
        %v9260 = vsub.s32 %v1877, %v9259
        %v9261 = vrot.slane %v9223, %v9260
        %v9262 = vsel %vm1882, %v9261, %v9257
        %v9263 = vlaneseq
        %v9264 = vshrl.u32 %v9263, 7
        %v9265 = vsub.s32 %v1872, %v9264
        %v9266 = vrot.slane %v9224, %v9265
        %v9267 = vlaneseq
        %v9268 = vshrl.u32 %v9267, 7
        %v9269 = vsub.s32 %v1877, %v9268
        %v9270 = vrot.slane %v9225, %v9269
        %v9271 = vsel %vm1882, %v9270, %v9266
        %v9272 = vlaneseq
        %v9273 = vshrl.u32 %v9272, 7
        %v9274 = vsub.s32 %v1872, %v9273
        %v9275 = vrot.slane %v9226, %v9274
        %v9276 = vlaneseq
        %v9277 = vshrl.u32 %v9276, 7
        %v9278 = vsub.s32 %v1877, %v9277
        %v9279 = vrot.slane %v9227, %v9278
        %v9280 = vsel %vm1882, %v9279, %v9275
        %v9281 = vlaneseq
        %v9282 = vshrl.u32 %v9281, 7
        %v9283 = vsub.s32 %v1872, %v9282
        %v9284 = vrot.slane %v9228, %v9283
        %v9285 = vlaneseq
        %v9286 = vshrl.u32 %v9285, 7
        %v9287 = vsub.s32 %v1877, %v9286
        %v9288 = vrot.slane %v9229, %v9287
        %v9289 = vsel %vm1882, %v9288, %v9284
        %v9290 = vlaneseq
        %v9291 = vshrl.u32 %v9290, 7
        %v9292 = vsub.s32 %v1872, %v9291
        %v9293 = vrot.slane %v9230, %v9292
        %v9294 = vlaneseq
        %v9295 = vshrl.u32 %v9294, 7
        %v9296 = vsub.s32 %v1877, %v9295
        %v9297 = vrot.slane %v9231, %v9296
        %v9298 = vsel %vm1882, %v9297, %v9293
        %v9299 = vlaneseq
        %v9300 = vshrl.u32 %v9299, 7
        %v9301 = vsub.s32 %v1872, %v9300
        %v9302 = vrot.slane %v9232, %v9301
        %v9303 = vlaneseq
        %v9304 = vshrl.u32 %v9303, 7
        %v9305 = vsub.s32 %v1877, %v9304
        %v9306 = vrot.slane %v9233, %v9305
        %v9307 = vsel %vm1882, %v9306, %v9302
        %v9308 = vlaneseq
        %v9309 = vshrl.u32 %v9308, 7
        %v9310 = vsub.s32 %v1872, %v9309
        %v9311 = vrot.slane %v9234, %v9310
        %v9312 = vlaneseq
        %v9313 = vshrl.u32 %v9312, 7
        %v9314 = vsub.s32 %v1877, %v9313
        %v9315 = vrot.slane %v9235, %v9314
        %v9316 = vsel %vm1882, %v9315, %v9311
        %v9317 = vlaneseq
        %v9318 = vshrl.u32 %v9317, 7
        %v9319 = vsub.s32 %v1872, %v9318
        %v9320 = vrot.slane %v9236, %v9319
        %v9321 = vlaneseq
        %v9322 = vshrl.u32 %v9321, 7
        %v9323 = vsub.s32 %v1877, %v9322
        %v9324 = vrot.slane %v9237, %v9323
        %v9325 = vsel %vm1882, %v9324, %v9320
        %v9326 = vsel %vm1947, %v9271, %v9262
        %v9327 = vsel %vm1949, %v9280, %v9326
        %v9328 = vsel %vm1951, %v9289, %v9327
        %v9329 = vsel %vm1953, %v9298, %v9328
        %v9330 = vsel %vm1955, %v9307, %v9329
        %v9331 = vsel %vm1957, %v9316, %v9330
        %v9332 = vsel %vm1959, %v9325, %v9331
        %v9334 = vsel %vm1962, %v9332, 0.0
        %9335 = vadd.xlane.f32.xlu0 %v9334
        %v9336 = vpop.xlane.xlu0 %9335
        %v9337 = vadd.f32 %v9336, 1e-12
        %v9338 = vrsqrt.pop %v9337
        %v9339 = vadd.f32 %v9336, 1.0
        %v9340 = vrcp.pop %v9339
        %v9341 = vmul.f32 %v9336, %v9340
        %v9342 = vmul.f32 %v9341, %v9338
        %v9359 = vlaneseq
        %v9360 = vshrl.u32 %v9359, 7
        %v9361 = vsub.s32 %v1872, %v9360
        %v9362 = vrot.slane %v9206, %v9361
        %v9363 = vlaneseq
        %v9364 = vshrl.u32 %v9363, 7
        %v9365 = vsub.s32 %v1877, %v9364
        %v9366 = vrot.slane %v9207, %v9365
        %v9367 = vsel %vm1882, %v9366, %v9362
        %v9368 = vlaneseq
        %v9369 = vshrl.u32 %v9368, 7
        %v9370 = vsub.s32 %v1872, %v9369
        %v9371 = vrot.slane %v9208, %v9370
        %v9372 = vlaneseq
        %v9373 = vshrl.u32 %v9372, 7
        %v9374 = vsub.s32 %v1877, %v9373
        %v9375 = vrot.slane %v9209, %v9374
        %v9376 = vsel %vm1882, %v9375, %v9371
        %v9377 = vlaneseq
        %v9378 = vshrl.u32 %v9377, 7
        %v9379 = vsub.s32 %v1872, %v9378
        %v9380 = vrot.slane %v9210, %v9379
        %v9381 = vlaneseq
        %v9382 = vshrl.u32 %v9381, 7
        %v9383 = vsub.s32 %v1877, %v9382
        %v9384 = vrot.slane %v9211, %v9383
        %v9385 = vsel %vm1882, %v9384, %v9380
        %v9386 = vlaneseq
        %v9387 = vshrl.u32 %v9386, 7
        %v9388 = vsub.s32 %v1872, %v9387
        %v9389 = vrot.slane %v9212, %v9388
        %v9390 = vlaneseq
        %v9391 = vshrl.u32 %v9390, 7
        %v9392 = vsub.s32 %v1877, %v9391
        %v9393 = vrot.slane %v9213, %v9392
        %v9394 = vsel %vm1882, %v9393, %v9389
        %v9395 = vlaneseq
        %v9396 = vshrl.u32 %v9395, 7
        %v9397 = vsub.s32 %v1872, %v9396
        %v9398 = vrot.slane %v9214, %v9397
        %v9399 = vlaneseq
        %v9400 = vshrl.u32 %v9399, 7
        %v9401 = vsub.s32 %v1877, %v9400
        %v9402 = vrot.slane %v9215, %v9401
        %v9403 = vsel %vm1882, %v9402, %v9398
        %v9404 = vlaneseq
        %v9405 = vshrl.u32 %v9404, 7
        %v9406 = vsub.s32 %v1872, %v9405
        %v9407 = vrot.slane %v9216, %v9406
        %v9408 = vlaneseq
        %v9409 = vshrl.u32 %v9408, 7
        %v9410 = vsub.s32 %v1877, %v9409
        %v9411 = vrot.slane %v9217, %v9410
        %v9412 = vsel %vm1882, %v9411, %v9407
        %v9413 = vlaneseq
        %v9414 = vshrl.u32 %v9413, 7
        %v9415 = vsub.s32 %v1872, %v9414
        %v9416 = vrot.slane %v9218, %v9415
        %v9417 = vlaneseq
        %v9418 = vshrl.u32 %v9417, 7
        %v9419 = vsub.s32 %v1877, %v9418
        %v9420 = vrot.slane %v9219, %v9419
        %v9421 = vsel %vm1882, %v9420, %v9416
        %v9422 = vlaneseq
        %v9423 = vshrl.u32 %v9422, 7
        %v9424 = vsub.s32 %v1872, %v9423
        %v9425 = vrot.slane %v9220, %v9424
        %v9426 = vlaneseq
        %v9427 = vshrl.u32 %v9426, 7
        %v9428 = vsub.s32 %v1877, %v9427
        %v9429 = vrot.slane %v9221, %v9428
        %v9430 = vsel %vm1882, %v9429, %v9425
        %v9431 = vsel %vm1947, %v9376, %v9367
        %v9432 = vsel %vm1949, %v9385, %v9431
        %v9433 = vsel %vm1951, %v9394, %v9432
        %v9434 = vsel %vm1953, %v9403, %v9433
        %v9435 = vsel %vm1955, %v9412, %v9434
        %v9436 = vsel %vm1957, %v9421, %v9435
        %v9437 = vsel %vm1959, %v9430, %v9436
        %v9439 = vmul.f32 %v9342, %v9437
        %v9440 = vlaneseq
        %v9441 = vshrl.u32 %v9440, 7
        %v9442 = vsub.s32 0, %v9441
        %v9443 = vrot.slane %v9439, %v9442
        %9445 = vbcast.lane.b32.xlu0 %v9443, 256
        %v9446 = vpop.permute.xlu0 %9445
        %s9448 = sor.u32 256, 8
        %9449 = vbcast.lane.b32.xlu0 %v9443, %s9448
        %v9450 = vpop.permute.xlu0 %9449
        %v9451 = vlaneseq
        %v9452 = vshrl.u32 %v9451, 7
        %v9453 = vsub.s32 1, %v9452
        %v9454 = vrot.slane %v9439, %v9453
        %9456 = vbcast.lane.b32.xlu0 %v9454, 256
        %v9457 = vpop.permute.xlu0 %9456
        %s9459 = sor.u32 256, 8
        %9460 = vbcast.lane.b32.xlu0 %v9454, %s9459
        %v9461 = vpop.permute.xlu0 %9460
        %v9462 = vlaneseq
        %v9463 = vshrl.u32 %v9462, 7
        %v9464 = vsub.s32 2, %v9463
        %v9465 = vrot.slane %v9439, %v9464
        %9467 = vbcast.lane.b32.xlu0 %v9465, 256
        %v9468 = vpop.permute.xlu0 %9467
        %s9470 = sor.u32 256, 8
        %9471 = vbcast.lane.b32.xlu0 %v9465, %s9470
        %v9472 = vpop.permute.xlu0 %9471
        %v9473 = vlaneseq
        %v9474 = vshrl.u32 %v9473, 7
        %v9475 = vsub.s32 3, %v9474
        %v9476 = vrot.slane %v9439, %v9475
        %9478 = vbcast.lane.b32.xlu0 %v9476, 256
        %v9479 = vpop.permute.xlu0 %9478
        %s9481 = sor.u32 256, 8
        %9482 = vbcast.lane.b32.xlu0 %v9476, %s9481
        %v9483 = vpop.permute.xlu0 %9482
        %v9484 = vlaneseq
        %v9485 = vshrl.u32 %v9484, 7
        %v9486 = vsub.s32 4, %v9485
        %v9487 = vrot.slane %v9439, %v9486
        %9489 = vbcast.lane.b32.xlu0 %v9487, 256
        %v9490 = vpop.permute.xlu0 %9489
        %s9492 = sor.u32 256, 8
        %9493 = vbcast.lane.b32.xlu0 %v9487, %s9492
        %v9494 = vpop.permute.xlu0 %9493
        %v9495 = vlaneseq
        %v9496 = vshrl.u32 %v9495, 7
        %v9497 = vsub.s32 5, %v9496
        %v9498 = vrot.slane %v9439, %v9497
        %9500 = vbcast.lane.b32.xlu0 %v9498, 256
        %v9501 = vpop.permute.xlu0 %9500
        %s9503 = sor.u32 256, 8
        %9504 = vbcast.lane.b32.xlu0 %v9498, %s9503
        %v9505 = vpop.permute.xlu0 %9504
        %v9506 = vlaneseq
        %v9507 = vshrl.u32 %v9506, 7
        %v9508 = vsub.s32 6, %v9507
        %v9509 = vrot.slane %v9439, %v9508
        %9511 = vbcast.lane.b32.xlu0 %v9509, 256
        %v9512 = vpop.permute.xlu0 %9511
        %s9514 = sor.u32 256, 8
        %9515 = vbcast.lane.b32.xlu0 %v9509, %s9514
        %v9516 = vpop.permute.xlu0 %9515
        %v9517 = vlaneseq
        %v9518 = vshrl.u32 %v9517, 7
        %v9519 = vsub.s32 7, %v9518
        %v9520 = vrot.slane %v9439, %v9519
        %9522 = vbcast.lane.b32.xlu0 %v9520, 256
        %v9523 = vpop.permute.xlu0 %9522
        %s9525 = sor.u32 256, 8
        %9526 = vbcast.lane.b32.xlu0 %v9520, %s9525
        %v9527 = vpop.permute.xlu0 %9526
        %v9528 = vmul.f32 %v9446, %v9126
        %v9529 = vmul.f32 %v9446, %v9127
        %v9530 = vmul.f32 %v9450, %v9128
        %v9531 = vmul.f32 %v9450, %v9129
        %v9532 = vmul.f32 %v9457, %v9130
        %v9533 = vmul.f32 %v9457, %v9131
        %v9534 = vmul.f32 %v9461, %v9132
        %v9535 = vmul.f32 %v9461, %v9133
        %v9536 = vmul.f32 %v9468, %v9134
        %v9537 = vmul.f32 %v9468, %v9135
        %v9538 = vmul.f32 %v9472, %v9136
        %v9539 = vmul.f32 %v9472, %v9137
        %v9540 = vmul.f32 %v9479, %v9138
        %v9541 = vmul.f32 %v9479, %v9139
        %v9542 = vmul.f32 %v9483, %v9140
        %v9543 = vmul.f32 %v9483, %v9141
        %v9544 = vmul.f32 %v9490, %v9142
        %v9545 = vmul.f32 %v9490, %v9143
        %v9546 = vmul.f32 %v9494, %v9144
        %v9547 = vmul.f32 %v9494, %v9145
        %v9548 = vmul.f32 %v9501, %v9146
        %v9549 = vmul.f32 %v9501, %v9147
        %v9550 = vmul.f32 %v9505, %v9148
        %v9551 = vmul.f32 %v9505, %v9149
        %v9552 = vmul.f32 %v9512, %v9150
        %v9553 = vmul.f32 %v9512, %v9151
        %v9554 = vmul.f32 %v9516, %v9152
        %v9555 = vmul.f32 %v9516, %v9153
        %v9556 = vmul.f32 %v9523, %v9154
        %v9557 = vmul.f32 %v9523, %v9155
        %v9558 = vmul.f32 %v9527, %v9156
        %v9559 = vmul.f32 %v9527, %v9157
        %v9560 = vadd.f32 %v9528, %v9530
        %v9561 = vrot.slane %v9560, 4
        %v9562 = vadd.f32 %v9560, %v9561
        %v9563 = vrot.slane %v9562, 2
        %v9564 = vadd.f32 %v9562, %v9563
        %v9565 = vrot.slane %v9564, 1
        %v9566 = vadd.f32 %v9564, %v9565
        %v9567 = vadd.f32 %v9529, %v9531
        %v9568 = vrot.slane %v9567, 4
        %v9569 = vadd.f32 %v9567, %v9568
        %v9570 = vrot.slane %v9569, 2
        %v9571 = vadd.f32 %v9569, %v9570
        %v9572 = vrot.slane %v9571, 1
        %v9573 = vadd.f32 %v9571, %v9572
        %v9574 = vadd.f32 %v9532, %v9534
        %v9575 = vrot.slane %v9574, 4
        %v9576 = vadd.f32 %v9574, %v9575
        %v9577 = vrot.slane %v9576, 2
        %v9578 = vadd.f32 %v9576, %v9577
        %v9579 = vrot.slane %v9578, 1
        %v9580 = vadd.f32 %v9578, %v9579
        %v9581 = vadd.f32 %v9533, %v9535
        %v9582 = vrot.slane %v9581, 4
        %v9583 = vadd.f32 %v9581, %v9582
        %v9584 = vrot.slane %v9583, 2
        %v9585 = vadd.f32 %v9583, %v9584
        %v9586 = vrot.slane %v9585, 1
        %v9587 = vadd.f32 %v9585, %v9586
        %v9588 = vadd.f32 %v9536, %v9538
        %v9589 = vrot.slane %v9588, 4
        %v9590 = vadd.f32 %v9588, %v9589
        %v9591 = vrot.slane %v9590, 2
        %v9592 = vadd.f32 %v9590, %v9591
        %v9593 = vrot.slane %v9592, 1
        %v9594 = vadd.f32 %v9592, %v9593
        %v9595 = vadd.f32 %v9537, %v9539
        %v9596 = vrot.slane %v9595, 4
        %v9597 = vadd.f32 %v9595, %v9596
        %v9598 = vrot.slane %v9597, 2
        %v9599 = vadd.f32 %v9597, %v9598
        %v9600 = vrot.slane %v9599, 1
        %v9601 = vadd.f32 %v9599, %v9600
        %v9602 = vadd.f32 %v9540, %v9542
        %v9603 = vrot.slane %v9602, 4
        %v9604 = vadd.f32 %v9602, %v9603
        %v9605 = vrot.slane %v9604, 2
        %v9606 = vadd.f32 %v9604, %v9605
        %v9607 = vrot.slane %v9606, 1
        %v9608 = vadd.f32 %v9606, %v9607
        %v9609 = vadd.f32 %v9541, %v9543
        %v9610 = vrot.slane %v9609, 4
        %v9611 = vadd.f32 %v9609, %v9610
        %v9612 = vrot.slane %v9611, 2
        %v9613 = vadd.f32 %v9611, %v9612
        %v9614 = vrot.slane %v9613, 1
        %v9615 = vadd.f32 %v9613, %v9614
        %v9616 = vadd.f32 %v9544, %v9546
        %v9617 = vrot.slane %v9616, 4
        %v9618 = vadd.f32 %v9616, %v9617
        %v9619 = vrot.slane %v9618, 2
        %v9620 = vadd.f32 %v9618, %v9619
        %v9621 = vrot.slane %v9620, 1
        %v9622 = vadd.f32 %v9620, %v9621
        %v9623 = vadd.f32 %v9545, %v9547
        %v9624 = vrot.slane %v9623, 4
        %v9625 = vadd.f32 %v9623, %v9624
        %v9626 = vrot.slane %v9625, 2
        %v9627 = vadd.f32 %v9625, %v9626
        %v9628 = vrot.slane %v9627, 1
        %v9629 = vadd.f32 %v9627, %v9628
        %v9630 = vadd.f32 %v9548, %v9550
        %v9631 = vrot.slane %v9630, 4
        %v9632 = vadd.f32 %v9630, %v9631
        %v9633 = vrot.slane %v9632, 2
        %v9634 = vadd.f32 %v9632, %v9633
        %v9635 = vrot.slane %v9634, 1
        %v9636 = vadd.f32 %v9634, %v9635
        %v9637 = vadd.f32 %v9549, %v9551
        %v9638 = vrot.slane %v9637, 4
        %v9639 = vadd.f32 %v9637, %v9638
        %v9640 = vrot.slane %v9639, 2
        %v9641 = vadd.f32 %v9639, %v9640
        %v9642 = vrot.slane %v9641, 1
        %v9643 = vadd.f32 %v9641, %v9642
        %v9644 = vadd.f32 %v9552, %v9554
        %v9645 = vrot.slane %v9644, 4
        %v9646 = vadd.f32 %v9644, %v9645
        %v9647 = vrot.slane %v9646, 2
        %v9648 = vadd.f32 %v9646, %v9647
        %v9649 = vrot.slane %v9648, 1
        %v9650 = vadd.f32 %v9648, %v9649
        %v9651 = vadd.f32 %v9553, %v9555
        %v9652 = vrot.slane %v9651, 4
        %v9653 = vadd.f32 %v9651, %v9652
        %v9654 = vrot.slane %v9653, 2
        %v9655 = vadd.f32 %v9653, %v9654
        %v9656 = vrot.slane %v9655, 1
        %v9657 = vadd.f32 %v9655, %v9656
        %v9658 = vadd.f32 %v9556, %v9558
        %v9659 = vrot.slane %v9658, 4
        %v9660 = vadd.f32 %v9658, %v9659
        %v9661 = vrot.slane %v9660, 2
        %v9662 = vadd.f32 %v9660, %v9661
        %v9663 = vrot.slane %v9662, 1
        %v9664 = vadd.f32 %v9662, %v9663
        %v9665 = vadd.f32 %v9557, %v9559
        %v9666 = vrot.slane %v9665, 4
        %v9667 = vadd.f32 %v9665, %v9666
        %v9668 = vrot.slane %v9667, 2
        %v9669 = vadd.f32 %v9667, %v9668
        %v9670 = vrot.slane %v9669, 1
        %v9671 = vadd.f32 %v9669, %v9670
        %v9688 = vsel %vm1947, %v9580, %v9566
        %v9689 = vsel %vm1949, %v9594, %v9688
        %v9690 = vsel %vm1951, %v9608, %v9689
        %v9691 = vsel %vm1953, %v9622, %v9690
        %v9692 = vsel %vm1955, %v9636, %v9691
        %v9693 = vsel %vm1957, %v9650, %v9692
        %v9694 = vsel %vm1959, %v9664, %v9693
        %v9695 = vsel %vm1947, %v9587, %v9573
        %v9696 = vsel %vm1949, %v9601, %v9695
        %v9697 = vsel %vm1951, %v9615, %v9696
        %v9698 = vsel %vm1953, %v9629, %v9697
        %v9699 = vsel %vm1955, %v9643, %v9698
        %v9700 = vsel %vm1957, %v9657, %v9699
        %v9701 = vsel %vm1959, %v9671, %v9700
        %v9704 = vmax.f32 %v9694, %v9701
        %9705 = vmax.xlane.f32.xlu0 %v9704
        %v9706 = vpop.xlane.xlu0 %9705
        %v9708 = vrot.slane %v9706, 1
        %v9709 = vrot.slane %v9706, 2
        %v9710 = vrot.slane %v9706, 3
        %v9711 = vrot.slane %v9706, 4
        %v9712 = vrot.slane %v9706, 5
        %v9713 = vrot.slane %v9706, 6
        %v9714 = vrot.slane %v9706, 7
        %v9723 = vsub.f32 %v9566, %v9706
        %v9724 = vsub.f32 %v9573, %v9706
        %v9725 = vsub.f32 %v9580, %v9708
        %v9726 = vsub.f32 %v9587, %v9708
        %v9727 = vsub.f32 %v9594, %v9709
        %v9728 = vsub.f32 %v9601, %v9709
        %v9729 = vsub.f32 %v9608, %v9710
        %v9730 = vsub.f32 %v9615, %v9710
        %v9731 = vsub.f32 %v9622, %v9711
        %v9732 = vsub.f32 %v9629, %v9711
        %v9733 = vsub.f32 %v9636, %v9712
        %v9734 = vsub.f32 %v9643, %v9712
        %v9735 = vsub.f32 %v9650, %v9713
        %v9736 = vsub.f32 %v9657, %v9713
        %v9737 = vsub.f32 %v9664, %v9714
        %v9738 = vsub.f32 %v9671, %v9714
        %v9739 = vmul.f32 %v9723, 1.442695
        %v9740 = vpow.pop %v9739
        %v9741 = vmul.f32 %v9724, 1.442695
        %v9742 = vpow.pop %v9741
        %v9743 = vmul.f32 %v9725, 1.442695
        %v9744 = vpow.pop %v9743
        %v9745 = vmul.f32 %v9726, 1.442695
        %v9746 = vpow.pop %v9745
        %v9747 = vmul.f32 %v9727, 1.442695
        %v9748 = vpow.pop %v9747
        %v9749 = vmul.f32 %v9728, 1.442695
        %v9750 = vpow.pop %v9749
        %v9751 = vmul.f32 %v9729, 1.442695
        %v9752 = vpow.pop %v9751
        %v9753 = vmul.f32 %v9730, 1.442695
        %v9754 = vpow.pop %v9753
        %v9755 = vmul.f32 %v9731, 1.442695
        %v9756 = vpow.pop %v9755
        %v9757 = vmul.f32 %v9732, 1.442695
        %v9758 = vpow.pop %v9757
        %v9759 = vmul.f32 %v9733, 1.442695
        %v9760 = vpow.pop %v9759
        %v9761 = vmul.f32 %v9734, 1.442695
        %v9762 = vpow.pop %v9761
        %v9763 = vmul.f32 %v9735, 1.442695
        %v9764 = vpow.pop %v9763
        %v9765 = vmul.f32 %v9736, 1.442695
        %v9766 = vpow.pop %v9765
        %v9767 = vmul.f32 %v9737, 1.442695
        %v9768 = vpow.pop %v9767
        %v9769 = vmul.f32 %v9738, 1.442695
        %v9770 = vpow.pop %v9769
        %v9787 = vrot.slane %v9744, 7
        %v9788 = vsel %vm1947, %v9787, %v9740
        %v9789 = vrot.slane %v9748, 6
        %v9790 = vsel %vm1949, %v9789, %v9788
        %v9791 = vrot.slane %v9752, 5
        %v9792 = vsel %vm1951, %v9791, %v9790
        %v9793 = vrot.slane %v9756, 4
        %v9794 = vsel %vm1953, %v9793, %v9792
        %v9795 = vrot.slane %v9760, 3
        %v9796 = vsel %vm1955, %v9795, %v9794
        %v9797 = vrot.slane %v9764, 2
        %v9798 = vsel %vm1957, %v9797, %v9796
        %v9799 = vrot.slane %v9768, 1
        %v9800 = vsel %vm1959, %v9799, %v9798
        %v9801 = vrot.slane %v9746, 7
        %v9802 = vsel %vm1947, %v9801, %v9742
        %v9803 = vrot.slane %v9750, 6
        %v9804 = vsel %vm1949, %v9803, %v9802
        %v9805 = vrot.slane %v9754, 5
        %v9806 = vsel %vm1951, %v9805, %v9804
        %v9807 = vrot.slane %v9758, 4
        %v9808 = vsel %vm1953, %v9807, %v9806
        %v9809 = vrot.slane %v9762, 3
        %v9810 = vsel %vm1955, %v9809, %v9808
        %v9811 = vrot.slane %v9766, 2
        %v9812 = vsel %vm1957, %v9811, %v9810
        %v9813 = vrot.slane %v9770, 1
        %v9814 = vsel %vm1959, %v9813, %v9812
        %v9817 = vadd.f32 %v9800, %v9814
        %9818 = vadd.xlane.f32.xlu0 %v9817
        %v9819 = vpop.xlane.xlu0 %9818
        %v9820 = vlaneseq
        %v9821 = vshrl.u32 %v9820, 7
        %v9822 = vsub.s32 0, %v9821
        %v9823 = vrot.slane %v9740, %v9822
        %v9824 = vlaneseq
        %v9825 = vshrl.u32 %v9824, 7
        %v9826 = vsub.s32 0, %v9825
        %v9827 = vrot.slane %v9742, %v9826
        %v9828 = vlaneseq
        %v9829 = vshrl.u32 %v9828, 7
        %v9830 = vsub.s32 0, %v9829
        %v9831 = vrot.slane %v9744, %v9830
        %v9832 = vlaneseq
        %v9833 = vshrl.u32 %v9832, 7
        %v9834 = vsub.s32 0, %v9833
        %v9835 = vrot.slane %v9746, %v9834
        %v9836 = vlaneseq
        %v9837 = vshrl.u32 %v9836, 7
        %v9838 = vsub.s32 0, %v9837
        %v9839 = vrot.slane %v9748, %v9838
        %v9840 = vlaneseq
        %v9841 = vshrl.u32 %v9840, 7
        %v9842 = vsub.s32 0, %v9841
        %v9843 = vrot.slane %v9750, %v9842
        %v9844 = vlaneseq
        %v9845 = vshrl.u32 %v9844, 7
        %v9846 = vsub.s32 0, %v9845
        %v9847 = vrot.slane %v9752, %v9846
        %v9848 = vlaneseq
        %v9849 = vshrl.u32 %v9848, 7
        %v9850 = vsub.s32 0, %v9849
        %v9851 = vrot.slane %v9754, %v9850
        %v9852 = vlaneseq
        %v9853 = vshrl.u32 %v9852, 7
        %v9854 = vsub.s32 0, %v9853
        %v9855 = vrot.slane %v9756, %v9854
        %v9856 = vlaneseq
        %v9857 = vshrl.u32 %v9856, 7
        %v9858 = vsub.s32 0, %v9857
        %v9859 = vrot.slane %v9758, %v9858
        %v9860 = vlaneseq
        %v9861 = vshrl.u32 %v9860, 7
        %v9862 = vsub.s32 0, %v9861
        %v9863 = vrot.slane %v9760, %v9862
        %v9864 = vlaneseq
        %v9865 = vshrl.u32 %v9864, 7
        %v9866 = vsub.s32 0, %v9865
        %v9867 = vrot.slane %v9762, %v9866
        %v9868 = vlaneseq
        %v9869 = vshrl.u32 %v9868, 7
        %v9870 = vsub.s32 0, %v9869
        %v9871 = vrot.slane %v9764, %v9870
        %v9872 = vlaneseq
        %v9873 = vshrl.u32 %v9872, 7
        %v9874 = vsub.s32 0, %v9873
        %v9875 = vrot.slane %v9766, %v9874
        %v9876 = vlaneseq
        %v9877 = vshrl.u32 %v9876, 7
        %v9878 = vsub.s32 0, %v9877
        %v9879 = vrot.slane %v9768, %v9878
        %v9880 = vlaneseq
        %v9881 = vshrl.u32 %v9880, 7
        %v9882 = vsub.s32 0, %v9881
        %v9883 = vrot.slane %v9770, %v9882
        %v9884 = vmul.f32 %v9823, %v9126
        %v9885 = vmul.f32 %v9827, %v9127
        %v9886 = vmul.f32 %v9823, %v9128
        %v9887 = vmul.f32 %v9827, %v9129
        %v9888 = vmul.f32 %v9831, %v9130
        %v9889 = vmul.f32 %v9835, %v9131
        %v9890 = vmul.f32 %v9831, %v9132
        %v9891 = vmul.f32 %v9835, %v9133
        %v9892 = vmul.f32 %v9839, %v9134
        %v9893 = vmul.f32 %v9843, %v9135
        %v9894 = vmul.f32 %v9839, %v9136
        %v9895 = vmul.f32 %v9843, %v9137
        %v9896 = vmul.f32 %v9847, %v9138
        %v9897 = vmul.f32 %v9851, %v9139
        %v9898 = vmul.f32 %v9847, %v9140
        %v9899 = vmul.f32 %v9851, %v9141
        %v9900 = vmul.f32 %v9855, %v9142
        %v9901 = vmul.f32 %v9859, %v9143
        %v9902 = vmul.f32 %v9855, %v9144
        %v9903 = vmul.f32 %v9859, %v9145
        %v9904 = vmul.f32 %v9863, %v9146
        %v9905 = vmul.f32 %v9867, %v9147
        %v9906 = vmul.f32 %v9863, %v9148
        %v9907 = vmul.f32 %v9867, %v9149
        %v9908 = vmul.f32 %v9871, %v9150
        %v9909 = vmul.f32 %v9875, %v9151
        %v9910 = vmul.f32 %v9871, %v9152
        %v9911 = vmul.f32 %v9875, %v9153
        %v9912 = vmul.f32 %v9879, %v9154
        %v9913 = vmul.f32 %v9883, %v9155
        %v9914 = vmul.f32 %v9879, %v9156
        %v9915 = vmul.f32 %v9883, %v9157
        %v9916 = vadd.f32 %v9884, %v9885
        %9917 = vadd.xlane.f32.xlu0 %v9916
        %v9918 = vpop.xlane.xlu0 %9917
        %v9919 = vadd.f32 %v9886, %v9887
        %9920 = vadd.xlane.f32.xlu0 %v9919
        %v9921 = vpop.xlane.xlu0 %9920
        %v9922 = vadd.f32 %v9888, %v9889
        %9923 = vadd.xlane.f32.xlu0 %v9922
        %v9924 = vpop.xlane.xlu0 %9923
        %v9925 = vadd.f32 %v9890, %v9891
        %9926 = vadd.xlane.f32.xlu0 %v9925
        %v9927 = vpop.xlane.xlu0 %9926
        %v9928 = vadd.f32 %v9892, %v9893
        %9929 = vadd.xlane.f32.xlu0 %v9928
        %v9930 = vpop.xlane.xlu0 %9929
        %v9931 = vadd.f32 %v9894, %v9895
        %9932 = vadd.xlane.f32.xlu0 %v9931
        %v9933 = vpop.xlane.xlu0 %9932
        %v9934 = vadd.f32 %v9896, %v9897
        %9935 = vadd.xlane.f32.xlu0 %v9934
        %v9936 = vpop.xlane.xlu0 %9935
        %v9937 = vadd.f32 %v9898, %v9899
        %9938 = vadd.xlane.f32.xlu0 %v9937
        %v9939 = vpop.xlane.xlu0 %9938
        %v9940 = vadd.f32 %v9900, %v9901
        %9941 = vadd.xlane.f32.xlu0 %v9940
        %v9942 = vpop.xlane.xlu0 %9941
        %v9943 = vadd.f32 %v9902, %v9903
        %9944 = vadd.xlane.f32.xlu0 %v9943
        %v9945 = vpop.xlane.xlu0 %9944
        %v9946 = vadd.f32 %v9904, %v9905
        %9947 = vadd.xlane.f32.xlu0 %v9946
        %v9948 = vpop.xlane.xlu0 %9947
        %v9949 = vadd.f32 %v9906, %v9907
        %9950 = vadd.xlane.f32.xlu0 %v9949
        %v9951 = vpop.xlane.xlu0 %9950
        %v9952 = vadd.f32 %v9908, %v9909
        %9953 = vadd.xlane.f32.xlu0 %v9952
        %v9954 = vpop.xlane.xlu0 %9953
        %v9955 = vadd.f32 %v9910, %v9911
        %9956 = vadd.xlane.f32.xlu0 %v9955
        %v9957 = vpop.xlane.xlu0 %9956
        %v9958 = vadd.f32 %v9912, %v9913
        %9959 = vadd.xlane.f32.xlu0 %v9958
        %v9960 = vpop.xlane.xlu0 %9959
        %v9961 = vadd.f32 %v9914, %v9915
        %9962 = vadd.xlane.f32.xlu0 %v9961
        %v9963 = vpop.xlane.xlu0 %9962
        %v9964 = vrcp.pop %v9819
        %v9966 = vlaneseq
        %v9967 = vshrl.u32 %v9966, 7
        %v9968 = vsub.s32 0, %v9967
        %v9969 = vrot.slane %v9964, %v9968
        %v9970 = vlaneseq
        %v9971 = vshrl.u32 %v9970, 7
        %v9972 = vsub.s32 1, %v9971
        %v9973 = vrot.slane %v9964, %v9972
        %v9974 = vlaneseq
        %v9975 = vshrl.u32 %v9974, 7
        %v9976 = vsub.s32 2, %v9975
        %v9977 = vrot.slane %v9964, %v9976
        %v9978 = vlaneseq
        %v9979 = vshrl.u32 %v9978, 7
        %v9980 = vsub.s32 3, %v9979
        %v9981 = vrot.slane %v9964, %v9980
        %v9982 = vlaneseq
        %v9983 = vshrl.u32 %v9982, 7
        %v9984 = vsub.s32 4, %v9983
        %v9985 = vrot.slane %v9964, %v9984
        %v9986 = vlaneseq
        %v9987 = vshrl.u32 %v9986, 7
        %v9988 = vsub.s32 5, %v9987
        %v9989 = vrot.slane %v9964, %v9988
        %v9990 = vlaneseq
        %v9991 = vshrl.u32 %v9990, 7
        %v9992 = vsub.s32 6, %v9991
        %v9993 = vrot.slane %v9964, %v9992
        %v9994 = vlaneseq
        %v9995 = vshrl.u32 %v9994, 7
        %v9996 = vsub.s32 7, %v9995
        %v9997 = vrot.slane %v9964, %v9996
        %v10006 = vmul.f32 %v9918, %v9969
        %v10007 = vmul.f32 %v9921, %v9969
        %v10008 = vmul.f32 %v9924, %v9973
        %v10009 = vmul.f32 %v9927, %v9973
        %v10010 = vmul.f32 %v9930, %v9977
        %v10011 = vmul.f32 %v9933, %v9977
        %v10012 = vmul.f32 %v9936, %v9981
        %v10013 = vmul.f32 %v9939, %v9981
        %v10014 = vmul.f32 %v9942, %v9985
        %v10015 = vmul.f32 %v9945, %v9985
        %v10016 = vmul.f32 %v9948, %v9989
        %v10017 = vmul.f32 %v9951, %v9989
        %v10018 = vmul.f32 %v9954, %v9993
        %v10019 = vmul.f32 %v9957, %v9993
        %v10020 = vmul.f32 %v9960, %v9997
        %v10021 = vmul.f32 %v9963, %v9997
        %v10022 = vmul.f32 %v10006, %v10006
        %v10023 = vmul.f32 %v10007, %v10007
        %v10024 = vmul.f32 %v10008, %v10008
        %v10025 = vmul.f32 %v10009, %v10009
        %v10026 = vmul.f32 %v10010, %v10010
        %v10027 = vmul.f32 %v10011, %v10011
        %v10028 = vmul.f32 %v10012, %v10012
        %v10029 = vmul.f32 %v10013, %v10013
        %v10030 = vmul.f32 %v10014, %v10014
        %v10031 = vmul.f32 %v10015, %v10015
        %v10032 = vmul.f32 %v10016, %v10016
        %v10033 = vmul.f32 %v10017, %v10017
        %v10034 = vmul.f32 %v10018, %v10018
        %v10035 = vmul.f32 %v10019, %v10019
        %v10036 = vmul.f32 %v10020, %v10020
        %v10037 = vmul.f32 %v10021, %v10021
        %10054 = vset.pattern.permute.xlu0 0
        %10055 = vperm.xlu0 %10054, %v10022
        %v10056 = vpop.permute.xlu0 %10055
        %10057 = vset.pattern.permute.xlu0 0
        %10058 = vperm.xlu0 %10057, %v10023
        %v10059 = vpop.permute.xlu0 %10058
        %10060 = vset.pattern.permute.xlu0 0
        %10061 = vperm.xlu0 %10060, %v10024
        %v10062 = vpop.permute.xlu0 %10061
        %10063 = vset.pattern.permute.xlu0 0
        %10064 = vperm.xlu0 %10063, %v10025
        %v10065 = vpop.permute.xlu0 %10064
        %10066 = vset.pattern.permute.xlu0 0
        %10067 = vperm.xlu0 %10066, %v10026
        %v10068 = vpop.permute.xlu0 %10067
        %10069 = vset.pattern.permute.xlu0 0
        %10070 = vperm.xlu0 %10069, %v10027
        %v10071 = vpop.permute.xlu0 %10070
        %10072 = vset.pattern.permute.xlu0 0
        %10073 = vperm.xlu0 %10072, %v10028
        %v10074 = vpop.permute.xlu0 %10073
        %10075 = vset.pattern.permute.xlu0 0
        %10076 = vperm.xlu0 %10075, %v10029
        %v10077 = vpop.permute.xlu0 %10076
        %10078 = vset.pattern.permute.xlu0 0
        %10079 = vperm.xlu0 %10078, %v10030
        %v10080 = vpop.permute.xlu0 %10079
        %10081 = vset.pattern.permute.xlu0 0
        %10082 = vperm.xlu0 %10081, %v10031
        %v10083 = vpop.permute.xlu0 %10082
        %10084 = vset.pattern.permute.xlu0 0
        %10085 = vperm.xlu0 %10084, %v10032
        %v10086 = vpop.permute.xlu0 %10085
        %10087 = vset.pattern.permute.xlu0 0
        %10088 = vperm.xlu0 %10087, %v10033
        %v10089 = vpop.permute.xlu0 %10088
        %10090 = vset.pattern.permute.xlu0 0
        %10091 = vperm.xlu0 %10090, %v10034
        %v10092 = vpop.permute.xlu0 %10091
        %10093 = vset.pattern.permute.xlu0 0
        %10094 = vperm.xlu0 %10093, %v10035
        %v10095 = vpop.permute.xlu0 %10094
        %10096 = vset.pattern.permute.xlu0 0
        %10097 = vperm.xlu0 %10096, %v10036
        %v10098 = vpop.permute.xlu0 %10097
        %10099 = vset.pattern.permute.xlu0 0
        %10100 = vperm.xlu0 %10099, %v10037
        %v10101 = vpop.permute.xlu0 %10100
        %v10102 = vlaneseq
        %v10103 = vshrl.u32 %v10102, 7
        %v10104 = vsub.s32 %v1872, %v10103
        %v10105 = vrot.slane %v10056, %v10104
        %v10106 = vlaneseq
        %v10107 = vshrl.u32 %v10106, 7
        %v10108 = vsub.s32 %v1877, %v10107
        %v10109 = vrot.slane %v10059, %v10108
        %v10110 = vsel %vm1882, %v10109, %v10105
        %v10111 = vlaneseq
        %v10112 = vshrl.u32 %v10111, 7
        %v10113 = vsub.s32 %v1872, %v10112
        %v10114 = vrot.slane %v10062, %v10113
        %v10115 = vlaneseq
        %v10116 = vshrl.u32 %v10115, 7
        %v10117 = vsub.s32 %v1877, %v10116
        %v10118 = vrot.slane %v10065, %v10117
        %v10119 = vsel %vm1882, %v10118, %v10114
        %v10120 = vlaneseq
        %v10121 = vshrl.u32 %v10120, 7
        %v10122 = vsub.s32 %v1872, %v10121
        %v10123 = vrot.slane %v10068, %v10122
        %v10124 = vlaneseq
        %v10125 = vshrl.u32 %v10124, 7
        %v10126 = vsub.s32 %v1877, %v10125
        %v10127 = vrot.slane %v10071, %v10126
        %v10128 = vsel %vm1882, %v10127, %v10123
        %v10129 = vlaneseq
        %v10130 = vshrl.u32 %v10129, 7
        %v10131 = vsub.s32 %v1872, %v10130
        %v10132 = vrot.slane %v10074, %v10131
        %v10133 = vlaneseq
        %v10134 = vshrl.u32 %v10133, 7
        %v10135 = vsub.s32 %v1877, %v10134
        %v10136 = vrot.slane %v10077, %v10135
        %v10137 = vsel %vm1882, %v10136, %v10132
        %v10138 = vlaneseq
        %v10139 = vshrl.u32 %v10138, 7
        %v10140 = vsub.s32 %v1872, %v10139
        %v10141 = vrot.slane %v10080, %v10140
        %v10142 = vlaneseq
        %v10143 = vshrl.u32 %v10142, 7
        %v10144 = vsub.s32 %v1877, %v10143
        %v10145 = vrot.slane %v10083, %v10144
        %v10146 = vsel %vm1882, %v10145, %v10141
        %v10147 = vlaneseq
        %v10148 = vshrl.u32 %v10147, 7
        %v10149 = vsub.s32 %v1872, %v10148
        %v10150 = vrot.slane %v10086, %v10149
        %v10151 = vlaneseq
        %v10152 = vshrl.u32 %v10151, 7
        %v10153 = vsub.s32 %v1877, %v10152
        %v10154 = vrot.slane %v10089, %v10153
        %v10155 = vsel %vm1882, %v10154, %v10150
        %v10156 = vlaneseq
        %v10157 = vshrl.u32 %v10156, 7
        %v10158 = vsub.s32 %v1872, %v10157
        %v10159 = vrot.slane %v10092, %v10158
        %v10160 = vlaneseq
        %v10161 = vshrl.u32 %v10160, 7
        %v10162 = vsub.s32 %v1877, %v10161
        %v10163 = vrot.slane %v10095, %v10162
        %v10164 = vsel %vm1882, %v10163, %v10159
        %v10165 = vlaneseq
        %v10166 = vshrl.u32 %v10165, 7
        %v10167 = vsub.s32 %v1872, %v10166
        %v10168 = vrot.slane %v10098, %v10167
        %v10169 = vlaneseq
        %v10170 = vshrl.u32 %v10169, 7
        %v10171 = vsub.s32 %v1877, %v10170
        %v10172 = vrot.slane %v10101, %v10171
        %v10173 = vsel %vm1882, %v10172, %v10168
        %v10174 = vsel %vm1947, %v10119, %v10110
        %v10175 = vsel %vm1949, %v10128, %v10174
        %v10176 = vsel %vm1951, %v10137, %v10175
        %v10177 = vsel %vm1953, %v10146, %v10176
        %v10178 = vsel %vm1955, %v10155, %v10177
        %v10179 = vsel %vm1957, %v10164, %v10178
        %v10180 = vsel %vm1959, %v10173, %v10179
        %v10182 = vsel %vm1962, %v10180, 0.0
        %10183 = vadd.xlane.f32.xlu0 %v10182
        %v10184 = vpop.xlane.xlu0 %10183
        %v10185 = vadd.f32 %v10184, 1e-12
        %v10186 = vrsqrt.pop %v10185
        %v10187 = vadd.f32 %v10184, 1.0
        %v10188 = vrcp.pop %v10187
        %v10189 = vmul.f32 %v10184, %v10188
        %v10190 = vmul.f32 %v10189, %v10186
        %10207 = vset.pattern.permute.xlu0 0
        %10208 = vperm.xlu0 %10207, %v10006
        %v10209 = vpop.permute.xlu0 %10208
        %10210 = vset.pattern.permute.xlu0 0
        %10211 = vperm.xlu0 %10210, %v10007
        %v10212 = vpop.permute.xlu0 %10211
        %10213 = vset.pattern.permute.xlu0 0
        %10214 = vperm.xlu0 %10213, %v10008
        %v10215 = vpop.permute.xlu0 %10214
        %10216 = vset.pattern.permute.xlu0 0
        %10217 = vperm.xlu0 %10216, %v10009
        %v10218 = vpop.permute.xlu0 %10217
        %10219 = vset.pattern.permute.xlu0 0
        %10220 = vperm.xlu0 %10219, %v10010
        %v10221 = vpop.permute.xlu0 %10220
        %10222 = vset.pattern.permute.xlu0 0
        %10223 = vperm.xlu0 %10222, %v10011
        %v10224 = vpop.permute.xlu0 %10223
        %10225 = vset.pattern.permute.xlu0 0
        %10226 = vperm.xlu0 %10225, %v10012
        %v10227 = vpop.permute.xlu0 %10226
        %10228 = vset.pattern.permute.xlu0 0
        %10229 = vperm.xlu0 %10228, %v10013
        %v10230 = vpop.permute.xlu0 %10229
        %10231 = vset.pattern.permute.xlu0 0
        %10232 = vperm.xlu0 %10231, %v10014
        %v10233 = vpop.permute.xlu0 %10232
        %10234 = vset.pattern.permute.xlu0 0
        %10235 = vperm.xlu0 %10234, %v10015
        %v10236 = vpop.permute.xlu0 %10235
        %10237 = vset.pattern.permute.xlu0 0
        %10238 = vperm.xlu0 %10237, %v10016
        %v10239 = vpop.permute.xlu0 %10238
        %10240 = vset.pattern.permute.xlu0 0
        %10241 = vperm.xlu0 %10240, %v10017
        %v10242 = vpop.permute.xlu0 %10241
        %10243 = vset.pattern.permute.xlu0 0
        %10244 = vperm.xlu0 %10243, %v10018
        %v10245 = vpop.permute.xlu0 %10244
        %10246 = vset.pattern.permute.xlu0 0
        %10247 = vperm.xlu0 %10246, %v10019
        %v10248 = vpop.permute.xlu0 %10247
        %10249 = vset.pattern.permute.xlu0 0
        %10250 = vperm.xlu0 %10249, %v10020
        %v10251 = vpop.permute.xlu0 %10250
        %10252 = vset.pattern.permute.xlu0 0
        %10253 = vperm.xlu0 %10252, %v10021
        %v10254 = vpop.permute.xlu0 %10253
        %v10255 = vlaneseq
        %v10256 = vshrl.u32 %v10255, 7
        %v10257 = vsub.s32 %v1872, %v10256
        %v10258 = vrot.slane %v10209, %v10257
        %v10259 = vlaneseq
        %v10260 = vshrl.u32 %v10259, 7
        %v10261 = vsub.s32 %v1877, %v10260
        %v10262 = vrot.slane %v10212, %v10261
        %v10263 = vsel %vm1882, %v10262, %v10258
        %v10264 = vlaneseq
        %v10265 = vshrl.u32 %v10264, 7
        %v10266 = vsub.s32 %v1872, %v10265
        %v10267 = vrot.slane %v10215, %v10266
        %v10268 = vlaneseq
        %v10269 = vshrl.u32 %v10268, 7
        %v10270 = vsub.s32 %v1877, %v10269
        %v10271 = vrot.slane %v10218, %v10270
        %v10272 = vsel %vm1882, %v10271, %v10267
        %v10273 = vlaneseq
        %v10274 = vshrl.u32 %v10273, 7
        %v10275 = vsub.s32 %v1872, %v10274
        %v10276 = vrot.slane %v10221, %v10275
        %v10277 = vlaneseq
        %v10278 = vshrl.u32 %v10277, 7
        %v10279 = vsub.s32 %v1877, %v10278
        %v10280 = vrot.slane %v10224, %v10279
        %v10281 = vsel %vm1882, %v10280, %v10276
        %v10282 = vlaneseq
        %v10283 = vshrl.u32 %v10282, 7
        %v10284 = vsub.s32 %v1872, %v10283
        %v10285 = vrot.slane %v10227, %v10284
        %v10286 = vlaneseq
        %v10287 = vshrl.u32 %v10286, 7
        %v10288 = vsub.s32 %v1877, %v10287
        %v10289 = vrot.slane %v10230, %v10288
        %v10290 = vsel %vm1882, %v10289, %v10285
        %v10291 = vlaneseq
        %v10292 = vshrl.u32 %v10291, 7
        %v10293 = vsub.s32 %v1872, %v10292
        %v10294 = vrot.slane %v10233, %v10293
        %v10295 = vlaneseq
        %v10296 = vshrl.u32 %v10295, 7
        %v10297 = vsub.s32 %v1877, %v10296
        %v10298 = vrot.slane %v10236, %v10297
        %v10299 = vsel %vm1882, %v10298, %v10294
        %v10300 = vlaneseq
        %v10301 = vshrl.u32 %v10300, 7
        %v10302 = vsub.s32 %v1872, %v10301
        %v10303 = vrot.slane %v10239, %v10302
        %v10304 = vlaneseq
        %v10305 = vshrl.u32 %v10304, 7
        %v10306 = vsub.s32 %v1877, %v10305
        %v10307 = vrot.slane %v10242, %v10306
        %v10308 = vsel %vm1882, %v10307, %v10303
        %v10309 = vlaneseq
        %v10310 = vshrl.u32 %v10309, 7
        %v10311 = vsub.s32 %v1872, %v10310
        %v10312 = vrot.slane %v10245, %v10311
        %v10313 = vlaneseq
        %v10314 = vshrl.u32 %v10313, 7
        %v10315 = vsub.s32 %v1877, %v10314
        %v10316 = vrot.slane %v10248, %v10315
        %v10317 = vsel %vm1882, %v10316, %v10312
        %v10318 = vlaneseq
        %v10319 = vshrl.u32 %v10318, 7
        %v10320 = vsub.s32 %v1872, %v10319
        %v10321 = vrot.slane %v10251, %v10320
        %v10322 = vlaneseq
        %v10323 = vshrl.u32 %v10322, 7
        %v10324 = vsub.s32 %v1877, %v10323
        %v10325 = vrot.slane %v10254, %v10324
        %v10326 = vsel %vm1882, %v10325, %v10321
        %v10327 = vsel %vm1947, %v10272, %v10263
        %v10328 = vsel %vm1949, %v10281, %v10327
        %v10329 = vsel %vm1951, %v10290, %v10328
        %v10330 = vsel %vm1953, %v10299, %v10329
        %v10331 = vsel %vm1955, %v10308, %v10330
        %v10332 = vsel %vm1957, %v10317, %v10331
        %v10333 = vsel %vm1959, %v10326, %v10332
        %v10335 = vmul.f32 %v10190, %v10333
        %v10336 = vlaneseq
        %v10337 = vshrl.u32 %v10336, 7
        %v10338 = vsub.s32 0, %v10337
        %v10339 = vrot.slane %v10335, %v10338
        %10341 = vbcast.lane.b32.xlu0 %v10339, 256
        %v10342 = vpop.permute.xlu0 %10341
        %s10344 = sor.u32 256, 8
        %10345 = vbcast.lane.b32.xlu0 %v10339, %s10344
        %v10346 = vpop.permute.xlu0 %10345
        %v10347 = vlaneseq
        %v10348 = vshrl.u32 %v10347, 7
        %v10349 = vsub.s32 1, %v10348
        %v10350 = vrot.slane %v10335, %v10349
        %10352 = vbcast.lane.b32.xlu0 %v10350, 256
        %v10353 = vpop.permute.xlu0 %10352
        %s10355 = sor.u32 256, 8
        %10356 = vbcast.lane.b32.xlu0 %v10350, %s10355
        %v10357 = vpop.permute.xlu0 %10356
        %v10358 = vlaneseq
        %v10359 = vshrl.u32 %v10358, 7
        %v10360 = vsub.s32 2, %v10359
        %v10361 = vrot.slane %v10335, %v10360
        %10363 = vbcast.lane.b32.xlu0 %v10361, 256
        %v10364 = vpop.permute.xlu0 %10363
        %s10366 = sor.u32 256, 8
        %10367 = vbcast.lane.b32.xlu0 %v10361, %s10366
        %v10368 = vpop.permute.xlu0 %10367
        %v10369 = vlaneseq
        %v10370 = vshrl.u32 %v10369, 7
        %v10371 = vsub.s32 3, %v10370
        %v10372 = vrot.slane %v10335, %v10371
        %10374 = vbcast.lane.b32.xlu0 %v10372, 256
        %v10375 = vpop.permute.xlu0 %10374
        %s10377 = sor.u32 256, 8
        %10378 = vbcast.lane.b32.xlu0 %v10372, %s10377
        %v10379 = vpop.permute.xlu0 %10378
        %v10380 = vlaneseq
        %v10381 = vshrl.u32 %v10380, 7
        %v10382 = vsub.s32 4, %v10381
        %v10383 = vrot.slane %v10335, %v10382
        %10385 = vbcast.lane.b32.xlu0 %v10383, 256
        %v10386 = vpop.permute.xlu0 %10385
        %s10388 = sor.u32 256, 8
        %10389 = vbcast.lane.b32.xlu0 %v10383, %s10388
        %v10390 = vpop.permute.xlu0 %10389
        %v10391 = vlaneseq
        %v10392 = vshrl.u32 %v10391, 7
        %v10393 = vsub.s32 5, %v10392
        %v10394 = vrot.slane %v10335, %v10393
        %10396 = vbcast.lane.b32.xlu0 %v10394, 256
        %v10397 = vpop.permute.xlu0 %10396
        %s10399 = sor.u32 256, 8
        %10400 = vbcast.lane.b32.xlu0 %v10394, %s10399
        %v10401 = vpop.permute.xlu0 %10400
        %v10402 = vlaneseq
        %v10403 = vshrl.u32 %v10402, 7
        %v10404 = vsub.s32 6, %v10403
        %v10405 = vrot.slane %v10335, %v10404
        %10407 = vbcast.lane.b32.xlu0 %v10405, 256
        %v10408 = vpop.permute.xlu0 %10407
        %s10410 = sor.u32 256, 8
        %10411 = vbcast.lane.b32.xlu0 %v10405, %s10410
        %v10412 = vpop.permute.xlu0 %10411
        %v10413 = vlaneseq
        %v10414 = vshrl.u32 %v10413, 7
        %v10415 = vsub.s32 7, %v10414
        %v10416 = vrot.slane %v10335, %v10415
        %10418 = vbcast.lane.b32.xlu0 %v10416, 256
        %v10419 = vpop.permute.xlu0 %10418
        %s10421 = sor.u32 256, 8
        %10422 = vbcast.lane.b32.xlu0 %v10416, %s10421
        %v10423 = vpop.permute.xlu0 %10422
        %v10424 = vmul.f32 %v10342, %v9126
        %v10425 = vmul.f32 %v10342, %v9127
        %v10426 = vmul.f32 %v10346, %v9128
        %v10427 = vmul.f32 %v10346, %v9129
        %v10428 = vmul.f32 %v10353, %v9130
        %v10429 = vmul.f32 %v10353, %v9131
        %v10430 = vmul.f32 %v10357, %v9132
        %v10431 = vmul.f32 %v10357, %v9133
        %v10432 = vmul.f32 %v10364, %v9134
        %v10433 = vmul.f32 %v10364, %v9135
        %v10434 = vmul.f32 %v10368, %v9136
        %v10435 = vmul.f32 %v10368, %v9137
        %v10436 = vmul.f32 %v10375, %v9138
        %v10437 = vmul.f32 %v10375, %v9139
        %v10438 = vmul.f32 %v10379, %v9140
        %v10439 = vmul.f32 %v10379, %v9141
        %v10440 = vmul.f32 %v10386, %v9142
        %v10441 = vmul.f32 %v10386, %v9143
        %v10442 = vmul.f32 %v10390, %v9144
        %v10443 = vmul.f32 %v10390, %v9145
        %v10444 = vmul.f32 %v10397, %v9146
        %v10445 = vmul.f32 %v10397, %v9147
        %v10446 = vmul.f32 %v10401, %v9148
        %v10447 = vmul.f32 %v10401, %v9149
        %v10448 = vmul.f32 %v10408, %v9150
        %v10449 = vmul.f32 %v10408, %v9151
        %v10450 = vmul.f32 %v10412, %v9152
        %v10451 = vmul.f32 %v10412, %v9153
        %v10452 = vmul.f32 %v10419, %v9154
        %v10453 = vmul.f32 %v10419, %v9155
        %v10454 = vmul.f32 %v10423, %v9156
        %v10455 = vmul.f32 %v10423, %v9157
        %v10456 = vadd.f32 %v10424, %v10426
        %v10457 = vrot.slane %v10456, 4
        %v10458 = vadd.f32 %v10456, %v10457
        %v10459 = vrot.slane %v10458, 2
        %v10460 = vadd.f32 %v10458, %v10459
        %v10461 = vrot.slane %v10460, 1
        %v10462 = vadd.f32 %v10460, %v10461
        %v10463 = vadd.f32 %v10425, %v10427
        %v10464 = vrot.slane %v10463, 4
        %v10465 = vadd.f32 %v10463, %v10464
        %v10466 = vrot.slane %v10465, 2
        %v10467 = vadd.f32 %v10465, %v10466
        %v10468 = vrot.slane %v10467, 1
        %v10469 = vadd.f32 %v10467, %v10468
        %v10470 = vadd.f32 %v10428, %v10430
        %v10471 = vrot.slane %v10470, 4
        %v10472 = vadd.f32 %v10470, %v10471
        %v10473 = vrot.slane %v10472, 2
        %v10474 = vadd.f32 %v10472, %v10473
        %v10475 = vrot.slane %v10474, 1
        %v10476 = vadd.f32 %v10474, %v10475
        %v10477 = vadd.f32 %v10429, %v10431
        %v10478 = vrot.slane %v10477, 4
        %v10479 = vadd.f32 %v10477, %v10478
        %v10480 = vrot.slane %v10479, 2
        %v10481 = vadd.f32 %v10479, %v10480
        %v10482 = vrot.slane %v10481, 1
        %v10483 = vadd.f32 %v10481, %v10482
        %v10484 = vadd.f32 %v10432, %v10434
        %v10485 = vrot.slane %v10484, 4
        %v10486 = vadd.f32 %v10484, %v10485
        %v10487 = vrot.slane %v10486, 2
        %v10488 = vadd.f32 %v10486, %v10487
        %v10489 = vrot.slane %v10488, 1
        %v10490 = vadd.f32 %v10488, %v10489
        %v10491 = vadd.f32 %v10433, %v10435
        %v10492 = vrot.slane %v10491, 4
        %v10493 = vadd.f32 %v10491, %v10492
        %v10494 = vrot.slane %v10493, 2
        %v10495 = vadd.f32 %v10493, %v10494
        %v10496 = vrot.slane %v10495, 1
        %v10497 = vadd.f32 %v10495, %v10496
        %v10498 = vadd.f32 %v10436, %v10438
        %v10499 = vrot.slane %v10498, 4
        %v10500 = vadd.f32 %v10498, %v10499
        %v10501 = vrot.slane %v10500, 2
        %v10502 = vadd.f32 %v10500, %v10501
        %v10503 = vrot.slane %v10502, 1
        %v10504 = vadd.f32 %v10502, %v10503
        %v10505 = vadd.f32 %v10437, %v10439
        %v10506 = vrot.slane %v10505, 4
        %v10507 = vadd.f32 %v10505, %v10506
        %v10508 = vrot.slane %v10507, 2
        %v10509 = vadd.f32 %v10507, %v10508
        %v10510 = vrot.slane %v10509, 1
        %v10511 = vadd.f32 %v10509, %v10510
        %v10512 = vadd.f32 %v10440, %v10442
        %v10513 = vrot.slane %v10512, 4
        %v10514 = vadd.f32 %v10512, %v10513
        %v10515 = vrot.slane %v10514, 2
        %v10516 = vadd.f32 %v10514, %v10515
        %v10517 = vrot.slane %v10516, 1
        %v10518 = vadd.f32 %v10516, %v10517
        %v10519 = vadd.f32 %v10441, %v10443
        %v10520 = vrot.slane %v10519, 4
        %v10521 = vadd.f32 %v10519, %v10520
        %v10522 = vrot.slane %v10521, 2
        %v10523 = vadd.f32 %v10521, %v10522
        %v10524 = vrot.slane %v10523, 1
        %v10525 = vadd.f32 %v10523, %v10524
        %v10526 = vadd.f32 %v10444, %v10446
        %v10527 = vrot.slane %v10526, 4
        %v10528 = vadd.f32 %v10526, %v10527
        %v10529 = vrot.slane %v10528, 2
        %v10530 = vadd.f32 %v10528, %v10529
        %v10531 = vrot.slane %v10530, 1
        %v10532 = vadd.f32 %v10530, %v10531
        %v10533 = vadd.f32 %v10445, %v10447
        %v10534 = vrot.slane %v10533, 4
        %v10535 = vadd.f32 %v10533, %v10534
        %v10536 = vrot.slane %v10535, 2
        %v10537 = vadd.f32 %v10535, %v10536
        %v10538 = vrot.slane %v10537, 1
        %v10539 = vadd.f32 %v10537, %v10538
        %v10540 = vadd.f32 %v10448, %v10450
        %v10541 = vrot.slane %v10540, 4
        %v10542 = vadd.f32 %v10540, %v10541
        %v10543 = vrot.slane %v10542, 2
        %v10544 = vadd.f32 %v10542, %v10543
        %v10545 = vrot.slane %v10544, 1
        %v10546 = vadd.f32 %v10544, %v10545
        %v10547 = vadd.f32 %v10449, %v10451
        %v10548 = vrot.slane %v10547, 4
        %v10549 = vadd.f32 %v10547, %v10548
        %v10550 = vrot.slane %v10549, 2
        %v10551 = vadd.f32 %v10549, %v10550
        %v10552 = vrot.slane %v10551, 1
        %v10553 = vadd.f32 %v10551, %v10552
        %v10554 = vadd.f32 %v10452, %v10454
        %v10555 = vrot.slane %v10554, 4
        %v10556 = vadd.f32 %v10554, %v10555
        %v10557 = vrot.slane %v10556, 2
        %v10558 = vadd.f32 %v10556, %v10557
        %v10559 = vrot.slane %v10558, 1
        %v10560 = vadd.f32 %v10558, %v10559
        %v10561 = vadd.f32 %v10453, %v10455
        %v10562 = vrot.slane %v10561, 4
        %v10563 = vadd.f32 %v10561, %v10562
        %v10564 = vrot.slane %v10563, 2
        %v10565 = vadd.f32 %v10563, %v10564
        %v10566 = vrot.slane %v10565, 1
        %v10567 = vadd.f32 %v10565, %v10566
        %v10568 = vadd.f32 %v9566, %v10462
        %v10569 = vadd.f32 %v9573, %v10469
        %v10570 = vadd.f32 %v9580, %v10476
        %v10571 = vadd.f32 %v9587, %v10483
        %v10572 = vadd.f32 %v9594, %v10490
        %v10573 = vadd.f32 %v9601, %v10497
        %v10574 = vadd.f32 %v9608, %v10504
        %v10575 = vadd.f32 %v9615, %v10511
        %v10576 = vadd.f32 %v9622, %v10518
        %v10577 = vadd.f32 %v9629, %v10525
        %v10578 = vadd.f32 %v9636, %v10532
        %v10579 = vadd.f32 %v9643, %v10539
        %v10580 = vadd.f32 %v9650, %v10546
        %v10581 = vadd.f32 %v9657, %v10553
        %v10582 = vadd.f32 %v9664, %v10560
        %v10583 = vadd.f32 %v9671, %v10567
        %v10600 = vsel %vm1947, %v10570, %v10568
        %v10601 = vsel %vm1949, %v10572, %v10600
        %v10602 = vsel %vm1951, %v10574, %v10601
        %v10603 = vsel %vm1953, %v10576, %v10602
        %v10604 = vsel %vm1955, %v10578, %v10603
        %v10605 = vsel %vm1957, %v10580, %v10604
        %v10606 = vsel %vm1959, %v10582, %v10605
        %v10607 = vsel %vm1947, %v10571, %v10569
        %v10608 = vsel %vm1949, %v10573, %v10607
        %v10609 = vsel %vm1951, %v10575, %v10608
        %v10610 = vsel %vm1953, %v10577, %v10609
        %v10611 = vsel %vm1955, %v10579, %v10610
        %v10612 = vsel %vm1957, %v10581, %v10611
        %v10613 = vsel %vm1959, %v10583, %v10612
        %v10616 = vmax.f32 %v10606, %v10613
        %10617 = vmax.xlane.f32.xlu0 %v10616
        %v10618 = vpop.xlane.xlu0 %10617
        %v10620 = vrot.slane %v10618, 1
        %v10621 = vrot.slane %v10618, 2
        %v10622 = vrot.slane %v10618, 3
        %v10623 = vrot.slane %v10618, 4
        %v10624 = vrot.slane %v10618, 5
        %v10625 = vrot.slane %v10618, 6
        %v10626 = vrot.slane %v10618, 7
        %v10635 = vsub.f32 %v10568, %v10618
        %v10636 = vsub.f32 %v10569, %v10618
        %v10637 = vsub.f32 %v10570, %v10620
        %v10638 = vsub.f32 %v10571, %v10620
        %v10639 = vsub.f32 %v10572, %v10621
        %v10640 = vsub.f32 %v10573, %v10621
        %v10641 = vsub.f32 %v10574, %v10622
        %v10642 = vsub.f32 %v10575, %v10622
        %v10643 = vsub.f32 %v10576, %v10623
        %v10644 = vsub.f32 %v10577, %v10623
        %v10645 = vsub.f32 %v10578, %v10624
        %v10646 = vsub.f32 %v10579, %v10624
        %v10647 = vsub.f32 %v10580, %v10625
        %v10648 = vsub.f32 %v10581, %v10625
        %v10649 = vsub.f32 %v10582, %v10626
        %v10650 = vsub.f32 %v10583, %v10626
        %v10651 = vmul.f32 %v10635, 1.442695
        %v10652 = vpow.pop %v10651
        %v10653 = vmul.f32 %v10636, 1.442695
        %v10654 = vpow.pop %v10653
        %v10655 = vmul.f32 %v10637, 1.442695
        %v10656 = vpow.pop %v10655
        %v10657 = vmul.f32 %v10638, 1.442695
        %v10658 = vpow.pop %v10657
        %v10659 = vmul.f32 %v10639, 1.442695
        %v10660 = vpow.pop %v10659
        %v10661 = vmul.f32 %v10640, 1.442695
        %v10662 = vpow.pop %v10661
        %v10663 = vmul.f32 %v10641, 1.442695
        %v10664 = vpow.pop %v10663
        %v10665 = vmul.f32 %v10642, 1.442695
        %v10666 = vpow.pop %v10665
        %v10667 = vmul.f32 %v10643, 1.442695
        %v10668 = vpow.pop %v10667
        %v10669 = vmul.f32 %v10644, 1.442695
        %v10670 = vpow.pop %v10669
        %v10671 = vmul.f32 %v10645, 1.442695
        %v10672 = vpow.pop %v10671
        %v10673 = vmul.f32 %v10646, 1.442695
        %v10674 = vpow.pop %v10673
        %v10675 = vmul.f32 %v10647, 1.442695
        %v10676 = vpow.pop %v10675
        %v10677 = vmul.f32 %v10648, 1.442695
        %v10678 = vpow.pop %v10677
        %v10679 = vmul.f32 %v10649, 1.442695
        %v10680 = vpow.pop %v10679
        %v10681 = vmul.f32 %v10650, 1.442695
        %v10682 = vpow.pop %v10681
        %v10699 = vrot.slane %v10656, 7
        %v10700 = vsel %vm1947, %v10699, %v10652
        %v10701 = vrot.slane %v10660, 6
        %v10702 = vsel %vm1949, %v10701, %v10700
        %v10703 = vrot.slane %v10664, 5
        %v10704 = vsel %vm1951, %v10703, %v10702
        %v10705 = vrot.slane %v10668, 4
        %v10706 = vsel %vm1953, %v10705, %v10704
        %v10707 = vrot.slane %v10672, 3
        %v10708 = vsel %vm1955, %v10707, %v10706
        %v10709 = vrot.slane %v10676, 2
        %v10710 = vsel %vm1957, %v10709, %v10708
        %v10711 = vrot.slane %v10680, 1
        %v10712 = vsel %vm1959, %v10711, %v10710
        %v10713 = vrot.slane %v10658, 7
        %v10714 = vsel %vm1947, %v10713, %v10654
        %v10715 = vrot.slane %v10662, 6
        %v10716 = vsel %vm1949, %v10715, %v10714
        %v10717 = vrot.slane %v10666, 5
        %v10718 = vsel %vm1951, %v10717, %v10716
        %v10719 = vrot.slane %v10670, 4
        %v10720 = vsel %vm1953, %v10719, %v10718
        %v10721 = vrot.slane %v10674, 3
        %v10722 = vsel %vm1955, %v10721, %v10720
        %v10723 = vrot.slane %v10678, 2
        %v10724 = vsel %vm1957, %v10723, %v10722
        %v10725 = vrot.slane %v10682, 1
        %v10726 = vsel %vm1959, %v10725, %v10724
        %v10729 = vadd.f32 %v10712, %v10726
        %10730 = vadd.xlane.f32.xlu0 %v10729
        %v10731 = vpop.xlane.xlu0 %10730
        %v10732 = vlaneseq
        %v10733 = vshrl.u32 %v10732, 7
        %v10734 = vsub.s32 0, %v10733
        %v10735 = vrot.slane %v10652, %v10734
        %v10736 = vlaneseq
        %v10737 = vshrl.u32 %v10736, 7
        %v10738 = vsub.s32 0, %v10737
        %v10739 = vrot.slane %v10654, %v10738
        %v10740 = vlaneseq
        %v10741 = vshrl.u32 %v10740, 7
        %v10742 = vsub.s32 0, %v10741
        %v10743 = vrot.slane %v10656, %v10742
        %v10744 = vlaneseq
        %v10745 = vshrl.u32 %v10744, 7
        %v10746 = vsub.s32 0, %v10745
        %v10747 = vrot.slane %v10658, %v10746
        %v10748 = vlaneseq
        %v10749 = vshrl.u32 %v10748, 7
        %v10750 = vsub.s32 0, %v10749
        %v10751 = vrot.slane %v10660, %v10750
        %v10752 = vlaneseq
        %v10753 = vshrl.u32 %v10752, 7
        %v10754 = vsub.s32 0, %v10753
        %v10755 = vrot.slane %v10662, %v10754
        %v10756 = vlaneseq
        %v10757 = vshrl.u32 %v10756, 7
        %v10758 = vsub.s32 0, %v10757
        %v10759 = vrot.slane %v10664, %v10758
        %v10760 = vlaneseq
        %v10761 = vshrl.u32 %v10760, 7
        %v10762 = vsub.s32 0, %v10761
        %v10763 = vrot.slane %v10666, %v10762
        %v10764 = vlaneseq
        %v10765 = vshrl.u32 %v10764, 7
        %v10766 = vsub.s32 0, %v10765
        %v10767 = vrot.slane %v10668, %v10766
        %v10768 = vlaneseq
        %v10769 = vshrl.u32 %v10768, 7
        %v10770 = vsub.s32 0, %v10769
        %v10771 = vrot.slane %v10670, %v10770
        %v10772 = vlaneseq
        %v10773 = vshrl.u32 %v10772, 7
        %v10774 = vsub.s32 0, %v10773
        %v10775 = vrot.slane %v10672, %v10774
        %v10776 = vlaneseq
        %v10777 = vshrl.u32 %v10776, 7
        %v10778 = vsub.s32 0, %v10777
        %v10779 = vrot.slane %v10674, %v10778
        %v10780 = vlaneseq
        %v10781 = vshrl.u32 %v10780, 7
        %v10782 = vsub.s32 0, %v10781
        %v10783 = vrot.slane %v10676, %v10782
        %v10784 = vlaneseq
        %v10785 = vshrl.u32 %v10784, 7
        %v10786 = vsub.s32 0, %v10785
        %v10787 = vrot.slane %v10678, %v10786
        %v10788 = vlaneseq
        %v10789 = vshrl.u32 %v10788, 7
        %v10790 = vsub.s32 0, %v10789
        %v10791 = vrot.slane %v10680, %v10790
        %v10792 = vlaneseq
        %v10793 = vshrl.u32 %v10792, 7
        %v10794 = vsub.s32 0, %v10793
        %v10795 = vrot.slane %v10682, %v10794
        %v10796 = vmul.f32 %v10735, %v9126
        %v10797 = vmul.f32 %v10739, %v9127
        %v10798 = vmul.f32 %v10735, %v9128
        %v10799 = vmul.f32 %v10739, %v9129
        %v10800 = vmul.f32 %v10743, %v9130
        %v10801 = vmul.f32 %v10747, %v9131
        %v10802 = vmul.f32 %v10743, %v9132
        %v10803 = vmul.f32 %v10747, %v9133
        %v10804 = vmul.f32 %v10751, %v9134
        %v10805 = vmul.f32 %v10755, %v9135
        %v10806 = vmul.f32 %v10751, %v9136
        %v10807 = vmul.f32 %v10755, %v9137
        %v10808 = vmul.f32 %v10759, %v9138
        %v10809 = vmul.f32 %v10763, %v9139
        %v10810 = vmul.f32 %v10759, %v9140
        %v10811 = vmul.f32 %v10763, %v9141
        %v10812 = vmul.f32 %v10767, %v9142
        %v10813 = vmul.f32 %v10771, %v9143
        %v10814 = vmul.f32 %v10767, %v9144
        %v10815 = vmul.f32 %v10771, %v9145
        %v10816 = vmul.f32 %v10775, %v9146
        %v10817 = vmul.f32 %v10779, %v9147
        %v10818 = vmul.f32 %v10775, %v9148
        %v10819 = vmul.f32 %v10779, %v9149
        %v10820 = vmul.f32 %v10783, %v9150
        %v10821 = vmul.f32 %v10787, %v9151
        %v10822 = vmul.f32 %v10783, %v9152
        %v10823 = vmul.f32 %v10787, %v9153
        %v10824 = vmul.f32 %v10791, %v9154
        %v10825 = vmul.f32 %v10795, %v9155
        %v10826 = vmul.f32 %v10791, %v9156
        %v10827 = vmul.f32 %v10795, %v9157
        %v10828 = vadd.f32 %v10796, %v10797
        %10829 = vadd.xlane.f32.xlu0 %v10828
        %v10830 = vpop.xlane.xlu0 %10829
        %v10831 = vadd.f32 %v10798, %v10799
        %10832 = vadd.xlane.f32.xlu0 %v10831
        %v10833 = vpop.xlane.xlu0 %10832
        %v10834 = vadd.f32 %v10800, %v10801
        %10835 = vadd.xlane.f32.xlu0 %v10834
        %v10836 = vpop.xlane.xlu0 %10835
        %v10837 = vadd.f32 %v10802, %v10803
        %10838 = vadd.xlane.f32.xlu0 %v10837
        %v10839 = vpop.xlane.xlu0 %10838
        %v10840 = vadd.f32 %v10804, %v10805
        %10841 = vadd.xlane.f32.xlu0 %v10840
        %v10842 = vpop.xlane.xlu0 %10841
        %v10843 = vadd.f32 %v10806, %v10807
        %10844 = vadd.xlane.f32.xlu0 %v10843
        %v10845 = vpop.xlane.xlu0 %10844
        %v10846 = vadd.f32 %v10808, %v10809
        %10847 = vadd.xlane.f32.xlu0 %v10846
        %v10848 = vpop.xlane.xlu0 %10847
        %v10849 = vadd.f32 %v10810, %v10811
        %10850 = vadd.xlane.f32.xlu0 %v10849
        %v10851 = vpop.xlane.xlu0 %10850
        %v10852 = vadd.f32 %v10812, %v10813
        %10853 = vadd.xlane.f32.xlu0 %v10852
        %v10854 = vpop.xlane.xlu0 %10853
        %v10855 = vadd.f32 %v10814, %v10815
        %10856 = vadd.xlane.f32.xlu0 %v10855
        %v10857 = vpop.xlane.xlu0 %10856
        %v10858 = vadd.f32 %v10816, %v10817
        %10859 = vadd.xlane.f32.xlu0 %v10858
        %v10860 = vpop.xlane.xlu0 %10859
        %v10861 = vadd.f32 %v10818, %v10819
        %10862 = vadd.xlane.f32.xlu0 %v10861
        %v10863 = vpop.xlane.xlu0 %10862
        %v10864 = vadd.f32 %v10820, %v10821
        %10865 = vadd.xlane.f32.xlu0 %v10864
        %v10866 = vpop.xlane.xlu0 %10865
        %v10867 = vadd.f32 %v10822, %v10823
        %10868 = vadd.xlane.f32.xlu0 %v10867
        %v10869 = vpop.xlane.xlu0 %10868
        %v10870 = vadd.f32 %v10824, %v10825
        %10871 = vadd.xlane.f32.xlu0 %v10870
        %v10872 = vpop.xlane.xlu0 %10871
        %v10873 = vadd.f32 %v10826, %v10827
        %10874 = vadd.xlane.f32.xlu0 %v10873
        %v10875 = vpop.xlane.xlu0 %10874
        %v10876 = vrcp.pop %v10731
        %v10878 = vlaneseq
        %v10879 = vshrl.u32 %v10878, 7
        %v10880 = vsub.s32 0, %v10879
        %v10881 = vrot.slane %v10876, %v10880
        %v10882 = vlaneseq
        %v10883 = vshrl.u32 %v10882, 7
        %v10884 = vsub.s32 1, %v10883
        %v10885 = vrot.slane %v10876, %v10884
        %v10886 = vlaneseq
        %v10887 = vshrl.u32 %v10886, 7
        %v10888 = vsub.s32 2, %v10887
        %v10889 = vrot.slane %v10876, %v10888
        %v10890 = vlaneseq
        %v10891 = vshrl.u32 %v10890, 7
        %v10892 = vsub.s32 3, %v10891
        %v10893 = vrot.slane %v10876, %v10892
        %v10894 = vlaneseq
        %v10895 = vshrl.u32 %v10894, 7
        %v10896 = vsub.s32 4, %v10895
        %v10897 = vrot.slane %v10876, %v10896
        %v10898 = vlaneseq
        %v10899 = vshrl.u32 %v10898, 7
        %v10900 = vsub.s32 5, %v10899
        %v10901 = vrot.slane %v10876, %v10900
        %v10902 = vlaneseq
        %v10903 = vshrl.u32 %v10902, 7
        %v10904 = vsub.s32 6, %v10903
        %v10905 = vrot.slane %v10876, %v10904
        %v10906 = vlaneseq
        %v10907 = vshrl.u32 %v10906, 7
        %v10908 = vsub.s32 7, %v10907
        %v10909 = vrot.slane %v10876, %v10908
        %v10918 = vmul.f32 %v10830, %v10881
        %v10919 = vmul.f32 %v10833, %v10881
        %v10920 = vmul.f32 %v10836, %v10885
        %v10921 = vmul.f32 %v10839, %v10885
        %v10922 = vmul.f32 %v10842, %v10889
        %v10923 = vmul.f32 %v10845, %v10889
        %v10924 = vmul.f32 %v10848, %v10893
        %v10925 = vmul.f32 %v10851, %v10893
        %v10926 = vmul.f32 %v10854, %v10897
        %v10927 = vmul.f32 %v10857, %v10897
        %v10928 = vmul.f32 %v10860, %v10901
        %v10929 = vmul.f32 %v10863, %v10901
        %v10930 = vmul.f32 %v10866, %v10905
        %v10931 = vmul.f32 %v10869, %v10905
        %v10932 = vmul.f32 %v10872, %v10909
        %v10933 = vmul.f32 %v10875, %v10909
        %v10934 = vmul.f32 %v10918, %v10918
        %v10935 = vmul.f32 %v10919, %v10919
        %v10936 = vmul.f32 %v10920, %v10920
        %v10937 = vmul.f32 %v10921, %v10921
        %v10938 = vmul.f32 %v10922, %v10922
        %v10939 = vmul.f32 %v10923, %v10923
        %v10940 = vmul.f32 %v10924, %v10924
        %v10941 = vmul.f32 %v10925, %v10925
        %v10942 = vmul.f32 %v10926, %v10926
        %v10943 = vmul.f32 %v10927, %v10927
        %v10944 = vmul.f32 %v10928, %v10928
        %v10945 = vmul.f32 %v10929, %v10929
        %v10946 = vmul.f32 %v10930, %v10930
        %v10947 = vmul.f32 %v10931, %v10931
        %v10948 = vmul.f32 %v10932, %v10932
        %v10949 = vmul.f32 %v10933, %v10933
        %10966 = vset.pattern.permute.xlu0 0
        %10967 = vperm.xlu0 %10966, %v10934
        %v10968 = vpop.permute.xlu0 %10967
        %10969 = vset.pattern.permute.xlu0 0
        %10970 = vperm.xlu0 %10969, %v10935
        %v10971 = vpop.permute.xlu0 %10970
        %10972 = vset.pattern.permute.xlu0 0
        %10973 = vperm.xlu0 %10972, %v10936
        %v10974 = vpop.permute.xlu0 %10973
        %10975 = vset.pattern.permute.xlu0 0
        %10976 = vperm.xlu0 %10975, %v10937
        %v10977 = vpop.permute.xlu0 %10976
        %10978 = vset.pattern.permute.xlu0 0
        %10979 = vperm.xlu0 %10978, %v10938
        %v10980 = vpop.permute.xlu0 %10979
        %10981 = vset.pattern.permute.xlu0 0
        %10982 = vperm.xlu0 %10981, %v10939
        %v10983 = vpop.permute.xlu0 %10982
        %10984 = vset.pattern.permute.xlu0 0
        %10985 = vperm.xlu0 %10984, %v10940
        %v10986 = vpop.permute.xlu0 %10985
        %10987 = vset.pattern.permute.xlu0 0
        %10988 = vperm.xlu0 %10987, %v10941
        %v10989 = vpop.permute.xlu0 %10988
        %10990 = vset.pattern.permute.xlu0 0
        %10991 = vperm.xlu0 %10990, %v10942
        %v10992 = vpop.permute.xlu0 %10991
        %10993 = vset.pattern.permute.xlu0 0
        %10994 = vperm.xlu0 %10993, %v10943
        %v10995 = vpop.permute.xlu0 %10994
        %10996 = vset.pattern.permute.xlu0 0
        %10997 = vperm.xlu0 %10996, %v10944
        %v10998 = vpop.permute.xlu0 %10997
        %10999 = vset.pattern.permute.xlu0 0
        %11000 = vperm.xlu0 %10999, %v10945
        %v11001 = vpop.permute.xlu0 %11000
        %11002 = vset.pattern.permute.xlu0 0
        %11003 = vperm.xlu0 %11002, %v10946
        %v11004 = vpop.permute.xlu0 %11003
        %11005 = vset.pattern.permute.xlu0 0
        %11006 = vperm.xlu0 %11005, %v10947
        %v11007 = vpop.permute.xlu0 %11006
        %11008 = vset.pattern.permute.xlu0 0
        %11009 = vperm.xlu0 %11008, %v10948
        %v11010 = vpop.permute.xlu0 %11009
        %11011 = vset.pattern.permute.xlu0 0
        %11012 = vperm.xlu0 %11011, %v10949
        %v11013 = vpop.permute.xlu0 %11012
        %v11014 = vlaneseq
        %v11015 = vshrl.u32 %v11014, 7
        %v11016 = vsub.s32 %v1872, %v11015
        %v11017 = vrot.slane %v10968, %v11016
        %v11018 = vlaneseq
        %v11019 = vshrl.u32 %v11018, 7
        %v11020 = vsub.s32 %v1877, %v11019
        %v11021 = vrot.slane %v10971, %v11020
        %v11022 = vsel %vm1882, %v11021, %v11017
        %v11023 = vlaneseq
        %v11024 = vshrl.u32 %v11023, 7
        %v11025 = vsub.s32 %v1872, %v11024
        %v11026 = vrot.slane %v10974, %v11025
        %v11027 = vlaneseq
        %v11028 = vshrl.u32 %v11027, 7
        %v11029 = vsub.s32 %v1877, %v11028
        %v11030 = vrot.slane %v10977, %v11029
        %v11031 = vsel %vm1882, %v11030, %v11026
        %v11032 = vlaneseq
        %v11033 = vshrl.u32 %v11032, 7
        %v11034 = vsub.s32 %v1872, %v11033
        %v11035 = vrot.slane %v10980, %v11034
        %v11036 = vlaneseq
        %v11037 = vshrl.u32 %v11036, 7
        %v11038 = vsub.s32 %v1877, %v11037
        %v11039 = vrot.slane %v10983, %v11038
        %v11040 = vsel %vm1882, %v11039, %v11035
        %v11041 = vlaneseq
        %v11042 = vshrl.u32 %v11041, 7
        %v11043 = vsub.s32 %v1872, %v11042
        %v11044 = vrot.slane %v10986, %v11043
        %v11045 = vlaneseq
        %v11046 = vshrl.u32 %v11045, 7
        %v11047 = vsub.s32 %v1877, %v11046
        %v11048 = vrot.slane %v10989, %v11047
        %v11049 = vsel %vm1882, %v11048, %v11044
        %v11050 = vlaneseq
        %v11051 = vshrl.u32 %v11050, 7
        %v11052 = vsub.s32 %v1872, %v11051
        %v11053 = vrot.slane %v10992, %v11052
        %v11054 = vlaneseq
        %v11055 = vshrl.u32 %v11054, 7
        %v11056 = vsub.s32 %v1877, %v11055
        %v11057 = vrot.slane %v10995, %v11056
        %v11058 = vsel %vm1882, %v11057, %v11053
        %v11059 = vlaneseq
        %v11060 = vshrl.u32 %v11059, 7
        %v11061 = vsub.s32 %v1872, %v11060
        %v11062 = vrot.slane %v10998, %v11061
        %v11063 = vlaneseq
        %v11064 = vshrl.u32 %v11063, 7
        %v11065 = vsub.s32 %v1877, %v11064
        %v11066 = vrot.slane %v11001, %v11065
        %v11067 = vsel %vm1882, %v11066, %v11062
        %v11068 = vlaneseq
        %v11069 = vshrl.u32 %v11068, 7
        %v11070 = vsub.s32 %v1872, %v11069
        %v11071 = vrot.slane %v11004, %v11070
        %v11072 = vlaneseq
        %v11073 = vshrl.u32 %v11072, 7
        %v11074 = vsub.s32 %v1877, %v11073
        %v11075 = vrot.slane %v11007, %v11074
        %v11076 = vsel %vm1882, %v11075, %v11071
        %v11077 = vlaneseq
        %v11078 = vshrl.u32 %v11077, 7
        %v11079 = vsub.s32 %v1872, %v11078
        %v11080 = vrot.slane %v11010, %v11079
        %v11081 = vlaneseq
        %v11082 = vshrl.u32 %v11081, 7
        %v11083 = vsub.s32 %v1877, %v11082
        %v11084 = vrot.slane %v11013, %v11083
        %v11085 = vsel %vm1882, %v11084, %v11080
        %v11086 = vsel %vm1947, %v11031, %v11022
        %v11087 = vsel %vm1949, %v11040, %v11086
        %v11088 = vsel %vm1951, %v11049, %v11087
        %v11089 = vsel %vm1953, %v11058, %v11088
        %v11090 = vsel %vm1955, %v11067, %v11089
        %v11091 = vsel %vm1957, %v11076, %v11090
        %v11092 = vsel %vm1959, %v11085, %v11091
        %v11094 = vsel %vm1962, %v11092, 0.0
        %11095 = vadd.xlane.f32.xlu0 %v11094
        %v11096 = vpop.xlane.xlu0 %11095
        %v11097 = vadd.f32 %v11096, 1e-12
        %v11098 = vrsqrt.pop %v11097
        %v11099 = vadd.f32 %v11096, 1.0
        %v11100 = vrcp.pop %v11099
        %v11101 = vmul.f32 %v11096, %v11100
        %v11102 = vmul.f32 %v11101, %v11098
        %11119 = vset.pattern.permute.xlu0 0
        %11120 = vperm.xlu0 %11119, %v10918
        %v11121 = vpop.permute.xlu0 %11120
        %11122 = vset.pattern.permute.xlu0 0
        %11123 = vperm.xlu0 %11122, %v10919
        %v11124 = vpop.permute.xlu0 %11123
        %11125 = vset.pattern.permute.xlu0 0
        %11126 = vperm.xlu0 %11125, %v10920
        %v11127 = vpop.permute.xlu0 %11126
        %11128 = vset.pattern.permute.xlu0 0
        %11129 = vperm.xlu0 %11128, %v10921
        %v11130 = vpop.permute.xlu0 %11129
        %11131 = vset.pattern.permute.xlu0 0
        %11132 = vperm.xlu0 %11131, %v10922
        %v11133 = vpop.permute.xlu0 %11132
        %11134 = vset.pattern.permute.xlu0 0
        %11135 = vperm.xlu0 %11134, %v10923
        %v11136 = vpop.permute.xlu0 %11135
        %11137 = vset.pattern.permute.xlu0 0
        %11138 = vperm.xlu0 %11137, %v10924
        %v11139 = vpop.permute.xlu0 %11138
        %11140 = vset.pattern.permute.xlu0 0
        %11141 = vperm.xlu0 %11140, %v10925
        %v11142 = vpop.permute.xlu0 %11141
        %11143 = vset.pattern.permute.xlu0 0
        %11144 = vperm.xlu0 %11143, %v10926
        %v11145 = vpop.permute.xlu0 %11144
        %11146 = vset.pattern.permute.xlu0 0
        %11147 = vperm.xlu0 %11146, %v10927
        %v11148 = vpop.permute.xlu0 %11147
        %11149 = vset.pattern.permute.xlu0 0
        %11150 = vperm.xlu0 %11149, %v10928
        %v11151 = vpop.permute.xlu0 %11150
        %11152 = vset.pattern.permute.xlu0 0
        %11153 = vperm.xlu0 %11152, %v10929
        %v11154 = vpop.permute.xlu0 %11153
        %11155 = vset.pattern.permute.xlu0 0
        %11156 = vperm.xlu0 %11155, %v10930
        %v11157 = vpop.permute.xlu0 %11156
        %11158 = vset.pattern.permute.xlu0 0
        %11159 = vperm.xlu0 %11158, %v10931
        %v11160 = vpop.permute.xlu0 %11159
        %11161 = vset.pattern.permute.xlu0 0
        %11162 = vperm.xlu0 %11161, %v10932
        %v11163 = vpop.permute.xlu0 %11162
        %11164 = vset.pattern.permute.xlu0 0
        %11165 = vperm.xlu0 %11164, %v10933
        %v11166 = vpop.permute.xlu0 %11165
        %v11167 = vlaneseq
        %v11168 = vshrl.u32 %v11167, 7
        %v11169 = vsub.s32 %v1872, %v11168
        %v11170 = vrot.slane %v11121, %v11169
        %v11171 = vlaneseq
        %v11172 = vshrl.u32 %v11171, 7
        %v11173 = vsub.s32 %v1877, %v11172
        %v11174 = vrot.slane %v11124, %v11173
        %v11175 = vsel %vm1882, %v11174, %v11170
        %v11176 = vlaneseq
        %v11177 = vshrl.u32 %v11176, 7
        %v11178 = vsub.s32 %v1872, %v11177
        %v11179 = vrot.slane %v11127, %v11178
        %v11180 = vlaneseq
        %v11181 = vshrl.u32 %v11180, 7
        %v11182 = vsub.s32 %v1877, %v11181
        %v11183 = vrot.slane %v11130, %v11182
        %v11184 = vsel %vm1882, %v11183, %v11179
        %v11185 = vlaneseq
        %v11186 = vshrl.u32 %v11185, 7
        %v11187 = vsub.s32 %v1872, %v11186
        %v11188 = vrot.slane %v11133, %v11187
        %v11189 = vlaneseq
        %v11190 = vshrl.u32 %v11189, 7
        %v11191 = vsub.s32 %v1877, %v11190
        %v11192 = vrot.slane %v11136, %v11191
        %v11193 = vsel %vm1882, %v11192, %v11188
        %v11194 = vlaneseq
        %v11195 = vshrl.u32 %v11194, 7
        %v11196 = vsub.s32 %v1872, %v11195
        %v11197 = vrot.slane %v11139, %v11196
        %v11198 = vlaneseq
        %v11199 = vshrl.u32 %v11198, 7
        %v11200 = vsub.s32 %v1877, %v11199
        %v11201 = vrot.slane %v11142, %v11200
        %v11202 = vsel %vm1882, %v11201, %v11197
        %v11203 = vlaneseq
        %v11204 = vshrl.u32 %v11203, 7
        %v11205 = vsub.s32 %v1872, %v11204
        %v11206 = vrot.slane %v11145, %v11205
        %v11207 = vlaneseq
        %v11208 = vshrl.u32 %v11207, 7
        %v11209 = vsub.s32 %v1877, %v11208
        %v11210 = vrot.slane %v11148, %v11209
        %v11211 = vsel %vm1882, %v11210, %v11206
        %v11212 = vlaneseq
        %v11213 = vshrl.u32 %v11212, 7
        %v11214 = vsub.s32 %v1872, %v11213
        %v11215 = vrot.slane %v11151, %v11214
        %v11216 = vlaneseq
        %v11217 = vshrl.u32 %v11216, 7
        %v11218 = vsub.s32 %v1877, %v11217
        %v11219 = vrot.slane %v11154, %v11218
        %v11220 = vsel %vm1882, %v11219, %v11215
        %v11221 = vlaneseq
        %v11222 = vshrl.u32 %v11221, 7
        %v11223 = vsub.s32 %v1872, %v11222
        %v11224 = vrot.slane %v11157, %v11223
        %v11225 = vlaneseq
        %v11226 = vshrl.u32 %v11225, 7
        %v11227 = vsub.s32 %v1877, %v11226
        %v11228 = vrot.slane %v11160, %v11227
        %v11229 = vsel %vm1882, %v11228, %v11224
        %v11230 = vlaneseq
        %v11231 = vshrl.u32 %v11230, 7
        %v11232 = vsub.s32 %v1872, %v11231
        %v11233 = vrot.slane %v11163, %v11232
        %v11234 = vlaneseq
        %v11235 = vshrl.u32 %v11234, 7
        %v11236 = vsub.s32 %v1877, %v11235
        %v11237 = vrot.slane %v11166, %v11236
        %v11238 = vsel %vm1882, %v11237, %v11233
        %v11239 = vsel %vm1947, %v11184, %v11175
        %v11240 = vsel %vm1949, %v11193, %v11239
        %v11241 = vsel %vm1951, %v11202, %v11240
        %v11242 = vsel %vm1953, %v11211, %v11241
        %v11243 = vsel %vm1955, %v11220, %v11242
        %v11244 = vsel %vm1957, %v11229, %v11243
        %v11245 = vsel %vm1959, %v11238, %v11244
        %v11247 = vmul.f32 %v11102, %v11245
        %11249 = vrot.lane.b32.xlu0 %v11247, 32
        %v11250 = vpop.permute.xlu0 %11249
        %vm11252 = vcmask 392448
        %11253 = vst.msk [vmem:[%s176] sm:$0xff] %vm11252, %v11250
        %s11254 = sand.u32 %s75, 1
        %s11255 = scalar_lea.sflag [#allocation4], %s11254
        %s11256 = sand.u32 %s75, 1
        %s11257 = smul.addr %s11256, 8
        %s11258 = scalar_lea.vmem [#allocation7], %s11257
        // Predicated region
        $region37: #{tpu_custom_call.1} parent=27 // pred_check
          %p11259 = pneg %p85
        $region38: #{tpu_custom_call.1} parent=27 // pred_check_branch
          %11261 = sbr.rel (%p11259) target = $region40
        $region39: #{tpu_custom_call.1} parent=27 // pred_region
          %s11263 = ssub.s32 128, 128
          %11264 = vsyncadd %s11255, %s11263
          %s11265 = smul.addr %s20, 128
          %s11266 = scalar_lea.hbm %s2, %s11265
          %s11268 = sshll.u32 %s11258, 4
          %s11269 = int_to_ptr.vmem [resolvable:$true] %s11268
          %11271 = dma.vmem_to_hbm [thread:$0]  %s11269, 128, %s11266, %s11255
        $region40: #{tpu_custom_call.1} parent=27 // pred_fallthru
          _
      $region28: #{tpu_custom_call.1} parent=5 // pred_fallthru
        _
      %p11272 = scmp.le.s32.totalorder 2, %s15
      // Predicated region
      $region41: #{tpu_custom_call.1} parent=5 // pred_check
        %p11273 = pneg %p11272
      $region42: #{tpu_custom_call.1} parent=5 // pred_check_branch
        %11275 = sbr.rel (%p11273) target = $region44
      $region43: #{tpu_custom_call.1} parent=5 // pred_region
        %s11276 = ssub.s32 %s15, 2
        // Predicated region
        $region45: #{tpu_custom_call.1} parent=43 // pred_check
          %p11277 = pneg %p91
        $region46: #{tpu_custom_call.1} parent=43 // pred_check_branch
          %11279 = sbr.rel (%p11277) target = $region48
        $region47: #{tpu_custom_call.1} parent=43 // pred_region
          %s11280 = sand.u32 %s76, 1
          %s11281 = scalar_lea.sflag [#allocation4], %s11280
          %s11282 = sand.u32 %s76, 1
          %s11283 = smul.addr %s11282, 8
          %s11284 = scalar_lea.vmem [#allocation7], %s11283
          %11285 = dma.done %s11281, 128
        $region48: #{tpu_custom_call.1} parent=43 // pred_fallthru
          _
      $region44: #{tpu_custom_call.1} parent=5 // pred_fallthru
        _
    $region6: #{tpu_custom_call.1} parent=1 // loop_footer
      %s19 = sadd.s32 1, %s15
    $region7: #{tpu_custom_call.1} parent=1 // loop_footer_branch
      %14 = sbr.rel target = $region3
    $region8: #{tpu_custom_call.1} parent=1 // loop_exit
      _
    %11286 = vsyncpa [#allocation3], 1
    %s11287 = scalar_lea.sflag [#allocation3], 1
    %11288 = vsyncpa %s11287, 1
    %11289 = vsyncpa [#allocation6], 1
    %s11290 = scalar_lea.sflag [#allocation6], 1
    %11291 = vsyncpa %s11290, 1
    %11292 = vsyncpa [#allocation4], 1
    %s11293 = scalar_lea.sflag [#allocation4], 1
    %11294 = vsyncpa %s11293, 1

</llo_original>
